<compile_context>
chip_gen: v5e
topology: v5e:2x2
jax: 0.10.0
libtpu: 0.0.40
codegen_flags: <defaults>
</compile_context>

<pallas_src>
import jax
import jax.numpy as jnp
from jax.experimental import pallas as pl
from jax.experimental.pallas import tpu as pltpu

EPS = 1e-5
LAT_PAD = 128          # latent padded to one full lane group


def _round_up(a, m):
    return ((a + m - 1) // m) * m


# --------------------------------------------------------------------------
# Fused kernel: conv+BN+ReLU+maxpool -> linear -> linear -> unpool+ReLU+BN+deconv
#   x_ref    : (Bt, 256)        flattened 16x16 input tile
#   cmat_ref : (4, 256, 1152)   encoder conv operator per pool phase (f32)
#   b1_ref   : (1, 1152)        conv bias + BN1 shift (folded)
#   ew_ref   : (1152, 128)      encoder linear weight (cols permuted, L padded)
#   eb_ref   : (1, 128)         encoder linear bias (padded)
#   dw_ref   : (128, 1152)      decoder linear weight (rows padded, cols permuted)
#   db_ref   : (1, 1152)        decoder linear bias (permuted)
#   dmat_ref : (4, 1152, 256)   deconv operator per pool phase (BN2 scale folded)
#   b2_ref   : (1, 256)         deconv bias + BN2 shift contribution (folded)
#   outputs  : recon (Bt, 256), latent (Bt, 128)
# --------------------------------------------------------------------------
def _cae_fused_kernel(x_ref, cmat_ref, b1_ref, ew_ref, eb_ref,
                      dw_ref, db_ref, dmat_ref, b2_ref,
                      recon_ref, latent_ref):
    x = x_ref[...]                                        # (Bt, 256) f32
    b1 = b1_ref[...]                                      # (1, 1152) f32

    # ---- encoder: Conv2d + bias + BN1 (folded) as 4 phase matmuls, ReLU,
    #      incremental 2x2 max-pool with argmax code -------------------------
    m = None
    code = None
    for ph in range(4):                                   # ph = di*2 + dj
        h = jnp.dot(x, cmat_ref[ph], preferred_element_type=jnp.float32) + b1
        h = jnp.maximum(h, 0.0)
        if ph == 0:
            m = h
            code = jnp.zeros_like(h)
        else:
            take = h > m                                  # first max wins ties
            code = jnp.where(take, float(ph), code)
            m = jnp.maximum(m, h)

    # ---- encoder / decoder linear layers (MXU, bf16 in / f32 accumulate) ----
    lat = jnp.dot(m.astype(ew_ref.dtype), ew_ref[...],
                  preferred_element_type=jnp.float32) + eb_ref[...]
    latent_ref[...] = lat
    dec = jnp.dot(lat.astype(dw_ref.dtype), dw_ref[...],
                  preferred_element_type=jnp.float32) + db_ref[...]

    # ---- decoder: MaxUnpool + ReLU + BN2 + ConvTranspose2d (folded) ---------
    acc = jnp.zeros(recon_ref.shape, jnp.float32)
    for ph in range(4):
        g = jnp.maximum(jnp.where(code == float(ph), dec, 0.0), 0.0)
        acc = acc + jnp.dot(g.astype(dmat_ref.dtype), dmat_ref[ph],
                            preferred_element_type=jnp.float32)
    recon_ref[...] = acc + b2_ref[...]                    # single lane-dense store


# --------------------------------------------------------------------------
# Parameter preprocessing (plain JAX glue): fold BN / biases, build dense
# per-phase conv & deconv operator matrices and permuted linear weights.
# --------------------------------------------------------------------------
def _build_operators(p, use_bf16):
    f32 = jnp.float32
    wdt = jnp.bfloat16 if use_bf16 else jnp.float32

    conv_w = p['conv_w'].astype(f32)[:, 0]                # (32, 5, 5)
    deconv_w = p['deconv_w'].astype(f32)[:, 0]            # (32, 5, 5)

    s1 = p['bn1_gamma'] / jnp.sqrt(p['bn1_var'] + EPS)
    t1 = p['bn1_beta'] - p['bn1_mean'] * s1
    s2 = p['bn2_gamma'] / jnp.sqrt(p['bn2_var'] + EPS)
    t2 = p['bn2_beta'] - p['bn2_mean'] * s2

    # A[i, o, k] = 1 iff i == o + k   (i: 0..15 image coord, o: 0..11, k: 0..4)
    A = (jnp.arange(16)[:, None, None]
         == jnp.arange(12)[None, :, None] + jnp.arange(5)[None, None, :]
         ).astype(f32)                                    # (16, 12, 5)

    # Encoder operator: cmat[ph, i*16+j, (p*6+q)*32+c]
    #   = conv_w[c, i-(2p+di), j-(2q+dj)] * s1[c]   (valid taps only)
    wc = conv_w * s1[:, None, None]
    T = jnp.einsum('iak,jbl,ckl->ijabc', A, A, wc)        # (16,16,12,12,32)
    T = T.reshape(16, 16, 6, 2, 6, 2, 32).transpose(3, 5, 0, 1, 2, 4, 6)
    cmat = T.reshape(4, 256, 1152).astype(f32)            # f32: keep argmax exact
    bias1 = jnp.tile(p['conv_b'] * s1 + t1, 36).reshape(1, 1152).astype(f32)

    # column permutation: our order (p*6+q)*32+c  <->  PyTorch order c*36+(p*6+q)
    perm = (jnp.arange(32)[None, :] * 36 + jnp.arange(36)[:, None]).reshape(-1)

    L = p['enc_w'].shape[0]
    ew = jnp.zeros((1152, LAT_PAD), f32).at[:, :L].set(p['enc_w'][:, perm].T)
    eb = jnp.zeros((1, LAT_PAD), f32).at[0, :L].set(p['enc_b'])
    dw = jnp.zeros((LAT_PAD, 1152), f32).at[:L, :].set(p['dec_w'][perm, :].T)
    db = p['dec_b'][perm].reshape(1, 1152).astype(f32)

    # Decoder operator: dmat[ph, (p*6+q)*32+c, i*16+j]
    #   = deconv_w[c, i-(2p+di), j-(2q+dj)] * s2[c]  ; BN2 shift -> bias2 row.
    wd = deconv_w * s2[:, None, None]
    D = jnp.einsum('iak,jbl,ckl->abcij', A, A, wd)        # (12,12,32,16,16)
    D = D.reshape(6, 2, 6, 2, 32, 16, 16).transpose(1, 3, 0, 2, 4, 5, 6)
    dmat = D.reshape(4, 1152, 256)
    Av = A.sum(axis=1)                                    # [0 <= i-k <= 11]
    bias2 = (p['deconv_b'][0]
             + jnp.einsum('ik,jl,ckl,c->ij', Av, Av, deconv_w, t2)
             ).reshape(1, 256).astype(f32)

    return (cmat, bias1, ew.astype(wdt), eb, dw.astype(wdt), db,
            dmat.astype(wdt), bias2, L)


# --------------------------------------------------------------------------
# Wrapper: batch-tiled, megacore-parallel fused forward pass.
# --------------------------------------------------------------------------
def conv_autoencoder_forward(x, p, *, block_rows=256, use_bf16=True):
    B = x.shape[0]
    cmat, b1, ew, eb, dw, db, dmat, b2, L = _build_operators(p, use_bf16)

    x = x.reshape(B, 256).astype(jnp.float32)
    block_b = min(block_rows, _round_up(B, 8))            # >=8 sublanes per tile
    Bp = _round_up(B, block_b)
    if Bp != B:
        x = jnp.pad(x, ((0, Bp - B), (0, 0)))

    def full_spec(arr):
        if arr.ndim == 2:
            return pl.BlockSpec(arr.shape, lambda b: (0, 0))
        return pl.BlockSpec(arr.shape, lambda b: (0, 0, 0))

    recon, latent = pl.pallas_call(
        _cae_fused_kernel,
        out_shape=(jax.ShapeDtypeStruct((Bp, 256), jnp.float32),
                   jax.ShapeDtypeStruct((Bp, LAT_PAD), jnp.float32)),
        grid=(Bp // block_b,),
        in_specs=[pl.BlockSpec((block_b, 256), lambda b: (b, 0)),
                  full_spec(cmat), full_spec(b1),
                  full_spec(ew), full_spec(eb),
                  full_spec(dw), full_spec(db),
                  full_spec(dmat), full_spec(b2)],
        out_specs=(pl.BlockSpec((block_b, 256), lambda b: (b, 0)),
                   pl.BlockSpec((block_b, LAT_PAD), lambda b: (b, 0))),
        compiler_params=pltpu.CompilerParams(
            dimension_semantics=("parallel",),
            vmem_limit_bytes=48 * 1024 * 1024),
    )(x, cmat, b1, ew, eb, dw, db, dmat, b2)

    return recon[:B], latent[:B, :L]


# --------------------------------------------------------------------------
# Pure-JAX reference (for correctness check)
# --------------------------------------------------------------------------
def reference_forward(x, p):
    B = x.shape[0]
    img = x.reshape(B, 1, 16, 16)
    h = jax.lax.conv_general_dilated(
        img, p['conv_w'], window_strides=(1, 1), padding='VALID',
        dimension_numbers=('NCHW', 'OIHW', 'NCHW'),
        precision=jax.lax.Precision.HIGHEST)
    h = h + p['conv_b'].reshape(1, 32, 1, 1)
    h = ((h - p['bn1_mean'].reshape(1, 32, 1, 1))
         / jnp.sqrt(p['bn1_var'].reshape(1, 32, 1, 1) + EPS)
         * p['bn1_gamma'].reshape(1, 32, 1, 1)
         + p['bn1_beta'].reshape(1, 32, 1, 1))
    h = jnp.maximum(h, 0.0)

    hw = h.reshape(B, 32, 6, 2, 6, 2)
    a = hw[:, :, :, 0, :, 0]; b = hw[:, :, :, 0, :, 1]
    c = hw[:, :, :, 1, :, 0]; d = hw[:, :, :, 1, :, 1]
    m = jnp.maximum(jnp.maximum(a, b), jnp.maximum(c, d))
    is_a = a >= m
    is_b = (b >= m) & ~is_a
    is_c = (c >= m) & ~(is_a | is_b)
    is_d = ~(is_a | is_b | is_c)

    lat = jnp.dot(m.reshape(B, 1152), p['enc_w'].T,
                  precision=jax.lax.Precision.HIGHEST) + p['enc_b']
    dec = jnp.dot(lat, p['dec_w'].T,
                  precision=jax.lax.Precision.HIGHEST) + p['dec_b']
    d6 = dec.reshape(B, 32, 6, 6)

    u = jnp.zeros((B, 32, 6, 2, 6, 2), jnp.float32)
    u = u.at[:, :, :, 0, :, 0].set(jnp.where(is_a, d6, 0.0))
    u = u.at[:, :, :, 0, :, 1].set(jnp.where(is_b, d6, 0.0))
    u = u.at[:, :, :, 1, :, 0].set(jnp.where(is_c, d6, 0.0))
    u = u.at[:, :, :, 1, :, 1].set(jnp.where(is_d, d6, 0.0))
    u = u.reshape(B, 32, 12, 12)

    g = jnp.maximum(u, 0.0)
    g = ((g - p['bn2_mean'].reshape(1, 32, 1, 1))
         / jnp.sqrt(p['bn2_var'].reshape(1, 32, 1, 1) + EPS)
         * p['bn2_gamma'].reshape(1, 32, 1, 1)
         + p['bn2_beta'].reshape(1, 32, 1, 1))

    out = jnp.zeros((B, 16, 16), jnp.float32)
    for kh in range(5):
        for kw in range(5):
            contrib = jnp.einsum('bchw,c->bhw', g, p['deconv_w'][:, 0, kh, kw],
                                 precision=jax.lax.Precision.HIGHEST)
            out = out.at[:, kh:kh + 12, kw:kw + 12].add(contrib)
    out = out + p['deconv_b'][0]
    return out.reshape(B, 256), lat


# --------------------------------------------------------------------------
if __name__ == "__main__":
    key = jax.random.PRNGKey(0)
    ks = jax.random.split(key, 20)
    B, L = 2, 10

    def u(k, shape, lo, hi):
        return jax.random.uniform(k, shape, jnp.float32, lo, hi)

    params = {
        'conv_w':    u(ks[0],  (32, 1, 5, 5), -0.2, 0.2),
        'conv_b':    u(ks[1],  (32,),         -0.2, 0.2),
        'bn1_gamma': u(ks[2],  (32,),          0.5, 1.5),
        'bn1_beta':  u(ks[3],  (32,),         -0.1, 0.1),
        'bn1_mean':  u(ks[4],  (32,),         -0.1, 0.1),
        'bn1_var':   u(ks[5],  (32,),          0.5, 1.5),
        'enc_w':     u(ks[6],  (L, 1152),     -0.03, 0.03),
        'enc_b':     u(ks[7],  (L,),          -0.03, 0.03),
        'dec_w':     u(ks[8],  (1152, L),     -0.3, 0.3),
        'dec_b':     u(ks[9],  (1152,),       -0.3, 0.3),
        'bn2_gamma': u(ks[10], (32,),          0.5, 1.5),
        'bn2_beta':  u(ks[11], (32,),         -0.1, 0.1),
        'bn2_mean':  u(ks[12], (32,),         -0.1, 0.1),
        'bn2_var':   u(ks[13], (32,),          0.5, 1.5),
        'deconv_w':  u(ks[14], (32, 1, 5, 5), -0.1, 0.1),
        'deconv_b':  u(ks[15], (1,),          -0.1, 0.1),
    }
    x = jax.random.normal(ks[16], (B, 256), jnp.float32)

    fwd = jax.jit(conv_autoencoder_forward)
    recon, latent = fwd(x, params)
    recon = jax.block_until_ready(recon)
    latent = jax.block_until_ready(latent)

    ref_recon, ref_latent = reference_forward(x, params)
    err_r = float(jnp.max(jnp.abs(recon - ref_recon)))
    err_l = float(jnp.max(jnp.abs(latent - ref_latent)))
    scale_r = float(jnp.max(jnp.abs(ref_recon))) + 1e-6
    scale_l = float(jnp.max(jnp.abs(ref_latent))) + 1e-6
    # decoder-side matmuls run with bf16 operands (f32 accumulate); tolerances
    # are sized accordingly (encoder conv / maxpool argmax path is full f32).
    assert err_l / scale_l < 2e-2, ("latent mismatch", err_l, scale_l)
    assert err_r / scale_r < 3e-2, ("recon mismatch", err_r, scale_r)
    print("KERNEL_OK")
</pallas_src>

<mosaic_0001>
module attributes {stable_mosaic.version = 11 : i64} {
  func.func @_cae_fused_kernel(%arg0: i32, %arg1: memref<8x256xf32, #tpu.memory_space<vmem>>, %arg2: memref<4x256x1152xf32, #tpu.memory_space<vmem>>, %arg3: memref<1x1152xf32, #tpu.memory_space<vmem>>, %arg4: memref<1152x128xbf16, #tpu.memory_space<vmem>>, %arg5: memref<1x128xf32, #tpu.memory_space<vmem>>, %arg6: memref<128x1152xbf16, #tpu.memory_space<vmem>>, %arg7: memref<1x1152xf32, #tpu.memory_space<vmem>>, %arg8: memref<4x1152x256xbf16, #tpu.memory_space<vmem>>, %arg9: memref<1x256xf32, #tpu.memory_space<vmem>>, %arg10: memref<8x256xf32, #tpu.memory_space<vmem>>, %arg11: memref<8x128xf32, #tpu.memory_space<vmem>>) attributes {dimension_semantics = [#tpu.dimension_semantics<parallel>], iteration_bounds = array<i64: 1>, scalar_prefetch = 0 : i64, scratch_operands = 0 : i64, tpu.core_type = #tpu.core_type<tc>, window_params = [{transform_indices = @transform_0, window_bounds = array<i64: 8, 256>}, {pipeline_mode = #tpu.pipeline_mode<synchronous>, transform_indices = @transform_1, window_bounds = array<i64: 4, 256, 1152>}, {pipeline_mode = #tpu.pipeline_mode<synchronous>, transform_indices = @transform_2, window_bounds = array<i64: 1, 1152>}, {pipeline_mode = #tpu.pipeline_mode<synchronous>, transform_indices = @transform_3, window_bounds = array<i64: 1152, 128>}, {pipeline_mode = #tpu.pipeline_mode<synchronous>, transform_indices = @transform_4, window_bounds = array<i64: 1, 128>}, {pipeline_mode = #tpu.pipeline_mode<synchronous>, transform_indices = @transform_5, window_bounds = array<i64: 128, 1152>}, {pipeline_mode = #tpu.pipeline_mode<synchronous>, transform_indices = @transform_6, window_bounds = array<i64: 1, 1152>}, {pipeline_mode = #tpu.pipeline_mode<synchronous>, transform_indices = @transform_7, window_bounds = array<i64: 4, 1152, 256>}, {pipeline_mode = #tpu.pipeline_mode<synchronous>, transform_indices = @transform_8, window_bounds = array<i64: 1, 256>}, {transform_indices = @transform_9, window_bounds = array<i64: 8, 256>}, {transform_indices = @transform_10, window_bounds = array<i64: 8, 128>}]} {
    %c0 = arith.constant 0 : index
    %c0_0 = arith.constant 0 : index
    %0 = vector.load %arg1[%c0, %c0_0] : memref<8x256xf32, #tpu.memory_space<vmem>>, vector<8x256xf32>
    %c0_1 = arith.constant 0 : index
    %c0_2 = arith.constant 0 : index
    %1 = vector.load %arg3[%c0_1, %c0_2] : memref<1x1152xf32, #tpu.memory_space<vmem>>, vector<1x1152xf32>
    %c0_3 = arith.constant 0 : index
    %c0_4 = arith.constant 0 : index
    %c0_5 = arith.constant 0 : index
    %2 = vector.load %arg2[%c0_3, %c0_4, %c0_5] : memref<4x256x1152xf32, #tpu.memory_space<vmem>>, vector<1x256x1152xf32>
    %3 = vector.shape_cast %2 : vector<1x256x1152xf32> to vector<256x1152xf32>
    %cst = arith.constant dense<0.000000e+00> : vector<8x1152xf32>
    %4 = tpu.matmul %0, %3, %cst {dimension_numbers = #tpu.dot_dimension_numbers<[1], [0], [0], [1], [0, 0, 1, 1], [], []>} : vector<8x256xf32>, vector<256x1152xf32>, vector<8x1152xf32> -> vector<8x1152xf32>
    %5 = vector.broadcast %1 : vector<1x1152xf32> to vector<8x1152xf32>
    %6 = arith.addf %4, %5 : vector<8x1152xf32>
    %cst_6 = arith.constant 0.000000e+00 : f32
    %7 = vector.broadcast %cst_6 : f32 to vector<8x1152xf32>
    %8 = arith.maximumf %6, %7 : vector<8x1152xf32>
    %cst_7 = arith.constant 0.000000e+00 : f32
    %9 = vector.broadcast %cst_7 : f32 to vector<8x1152xf32>
    %c1 = arith.constant 1 : index
    %c0_8 = arith.constant 0 : index
    %c0_9 = arith.constant 0 : index
    %10 = vector.load %arg2[%c1, %c0_8, %c0_9] : memref<4x256x1152xf32, #tpu.memory_space<vmem>>, vector<1x256x1152xf32>
    %11 = vector.shape_cast %10 : vector<1x256x1152xf32> to vector<256x1152xf32>
    %cst_10 = arith.constant dense<0.000000e+00> : vector<8x1152xf32>
    %12 = tpu.matmul %0, %11, %cst_10 {dimension_numbers = #tpu.dot_dimension_numbers<[1], [0], [0], [1], [0, 0, 1, 1], [], []>} : vector<8x256xf32>, vector<256x1152xf32>, vector<8x1152xf32> -> vector<8x1152xf32>
    %13 = vector.broadcast %1 : vector<1x1152xf32> to vector<8x1152xf32>
    %14 = arith.addf %12, %13 : vector<8x1152xf32>
    %cst_11 = arith.constant 0.000000e+00 : f32
    %15 = vector.broadcast %cst_11 : f32 to vector<8x1152xf32>
    %16 = arith.maximumf %14, %15 : vector<8x1152xf32>
    %17 = arith.cmpf ogt, %16, %8 : vector<8x1152xf32>
    %cst_12 = arith.constant 1.000000e+00 : f32
    %18 = vector.broadcast %cst_12 : f32 to vector<8x1152xf32>
    %19 = arith.select %17, %18, %9 : vector<8x1152xi1>, vector<8x1152xf32>
    %20 = arith.maximumf %8, %16 : vector<8x1152xf32>
    %c2 = arith.constant 2 : index
    %c0_13 = arith.constant 0 : index
    %c0_14 = arith.constant 0 : index
    %21 = vector.load %arg2[%c2, %c0_13, %c0_14] : memref<4x256x1152xf32, #tpu.memory_space<vmem>>, vector<1x256x1152xf32>
    %22 = vector.shape_cast %21 : vector<1x256x1152xf32> to vector<256x1152xf32>
    %cst_15 = arith.constant dense<0.000000e+00> : vector<8x1152xf32>
    %23 = tpu.matmul %0, %22, %cst_15 {dimension_numbers = #tpu.dot_dimension_numbers<[1], [0], [0], [1], [0, 0, 1, 1], [], []>} : vector<8x256xf32>, vector<256x1152xf32>, vector<8x1152xf32> -> vector<8x1152xf32>
    %24 = vector.broadcast %1 : vector<1x1152xf32> to vector<8x1152xf32>
    %25 = arith.addf %23, %24 : vector<8x1152xf32>
    %cst_16 = arith.constant 0.000000e+00 : f32
    %26 = vector.broadcast %cst_16 : f32 to vector<8x1152xf32>
    %27 = arith.maximumf %25, %26 : vector<8x1152xf32>
    %28 = arith.cmpf ogt, %27, %20 : vector<8x1152xf32>
    %cst_17 = arith.constant 2.000000e+00 : f32
    %29 = vector.broadcast %cst_17 : f32 to vector<8x1152xf32>
    %30 = arith.select %28, %29, %19 : vector<8x1152xi1>, vector<8x1152xf32>
    %31 = arith.maximumf %20, %27 : vector<8x1152xf32>
    %c3 = arith.constant 3 : index
    %c0_18 = arith.constant 0 : index
    %c0_19 = arith.constant 0 : index
    %32 = vector.load %arg2[%c3, %c0_18, %c0_19] : memref<4x256x1152xf32, #tpu.memory_space<vmem>>, vector<1x256x1152xf32>
    %33 = vector.shape_cast %32 : vector<1x256x1152xf32> to vector<256x1152xf32>
    %cst_20 = arith.constant dense<0.000000e+00> : vector<8x1152xf32>
    %34 = tpu.matmul %0, %33, %cst_20 {dimension_numbers = #tpu.dot_dimension_numbers<[1], [0], [0], [1], [0, 0, 1, 1], [], []>} : vector<8x256xf32>, vector<256x1152xf32>, vector<8x1152xf32> -> vector<8x1152xf32>
    %35 = vector.broadcast %1 : vector<1x1152xf32> to vector<8x1152xf32>
    %36 = arith.addf %34, %35 : vector<8x1152xf32>
    %cst_21 = arith.constant 0.000000e+00 : f32
    %37 = vector.broadcast %cst_21 : f32 to vector<8x1152xf32>
    %38 = arith.maximumf %36, %37 : vector<8x1152xf32>
    %39 = arith.cmpf ogt, %38, %31 : vector<8x1152xf32>
    %cst_22 = arith.constant 3.000000e+00 : f32
    %40 = vector.broadcast %cst_22 : f32 to vector<8x1152xf32>
    %41 = arith.select %39, %40, %30 : vector<8x1152xi1>, vector<8x1152xf32>
    %42 = arith.maximumf %31, %38 : vector<8x1152xf32>
    %43 = arith.truncf %42 : vector<8x1152xf32> to vector<8x1152xbf16>
    %c0_23 = arith.constant 0 : index
    %c0_24 = arith.constant 0 : index
    %44 = vector.load %arg4[%c0_23, %c0_24] : memref<1152x128xbf16, #tpu.memory_space<vmem>>, vector<1152x128xbf16>
    %cst_25 = arith.constant dense<0.000000e+00> : vector<8x128xf32>
    %45 = tpu.matmul %43, %44, %cst_25 {dimension_numbers = #tpu.dot_dimension_numbers<[1], [0], [0], [1], [0, 0, 1, 1], [], []>} : vector<8x1152xbf16>, vector<1152x128xbf16>, vector<8x128xf32> -> vector<8x128xf32>
    %c0_26 = arith.constant 0 : index
    %c0_27 = arith.constant 0 : index
    %46 = vector.load %arg5[%c0_26, %c0_27] : memref<1x128xf32, #tpu.memory_space<vmem>>, vector<1x128xf32>
    %47 = vector.broadcast %46 : vector<1x128xf32> to vector<8x128xf32>
    %48 = arith.addf %45, %47 : vector<8x128xf32>
    %c0_28 = arith.constant 0 : index
    %c0_29 = arith.constant 0 : index
    %49 = vector.load %arg11[%c0_28, %c0_29] : memref<8x128xf32, #tpu.memory_space<vmem>>, vector<8x128xf32>
    tpu.vector_store %arg11[%c0_28, %c0_29], %48 {strides = array<i32>} : memref<8x128xf32, #tpu.memory_space<vmem>>, vector<8x128xf32>,
    %50 = arith.truncf %48 : vector<8x128xf32> to vector<8x128xbf16>
    %c0_30 = arith.constant 0 : index
    %c0_31 = arith.constant 0 : index
    %51 = vector.load %arg6[%c0_30, %c0_31] : memref<128x1152xbf16, #tpu.memory_space<vmem>>, vector<128x1152xbf16>
    %cst_32 = arith.constant dense<0.000000e+00> : vector<8x1152xf32>
    %52 = tpu.matmul %50, %51, %cst_32 {dimension_numbers = #tpu.dot_dimension_numbers<[1], [0], [0], [1], [0, 0, 1, 1], [], []>} : vector<8x128xbf16>, vector<128x1152xbf16>, vector<8x1152xf32> -> vector<8x1152xf32>
    %c0_33 = arith.constant 0 : index
    %c0_34 = arith.constant 0 : index
    %53 = vector.load %arg7[%c0_33, %c0_34] : memref<1x1152xf32, #tpu.memory_space<vmem>>, vector<1x1152xf32>
    %54 = vector.broadcast %53 : vector<1x1152xf32> to vector<8x1152xf32>
    %55 = arith.addf %52, %54 : vector<8x1152xf32>
    %cst_35 = arith.constant 0.000000e+00 : f32
    %56 = vector.broadcast %cst_35 : f32 to vector<8x256xf32>
    %cst_36 = arith.constant 0.000000e+00 : f32
    %57 = vector.broadcast %cst_36 : f32 to vector<8x1152xf32>
    %58 = arith.cmpf oeq, %41, %57 : vector<8x1152xf32>
    %cst_37 = arith.constant 0.000000e+00 : f32
    %59 = vector.broadcast %cst_37 : f32 to vector<8x1152xf32>
    %60 = arith.select %58, %55, %59 : vector<8x1152xi1>, vector<8x1152xf32>
    %cst_38 = arith.constant 0.000000e+00 : f32
    %61 = vector.broadcast %cst_38 : f32 to vector<8x1152xf32>
    %62 = arith.maximumf %60, %61 : vector<8x1152xf32>
    %63 = arith.truncf %62 : vector<8x1152xf32> to vector<8x1152xbf16>
    %c0_39 = arith.constant 0 : index
    %c0_40 = arith.constant 0 : index
    %c0_41 = arith.constant 0 : index
    %64 = vector.load %arg8[%c0_39, %c0_40, %c0_41] : memref<4x1152x256xbf16, #tpu.memory_space<vmem>>, vector<1x1152x256xbf16>
    %65 = vector.shape_cast %64 : vector<1x1152x256xbf16> to vector<1152x256xbf16>
    %cst_42 = arith.constant dense<0.000000e+00> : vector<8x256xf32>
    %66 = tpu.matmul %63, %65, %cst_42 {dimension_numbers = #tpu.dot_dimension_numbers<[1], [0], [0], [1], [0, 0, 1, 1], [], []>} : vector<8x1152xbf16>, vector<1152x256xbf16>, vector<8x256xf32> -> vector<8x256xf32>
    %67 = arith.addf %56, %66 : vector<8x256xf32>
    %cst_43 = arith.constant 1.000000e+00 : f32
    %68 = vector.broadcast %cst_43 : f32 to vector<8x1152xf32>
    %69 = arith.cmpf oeq, %41, %68 : vector<8x1152xf32>
    %cst_44 = arith.constant 0.000000e+00 : f32
    %70 = vector.broadcast %cst_44 : f32 to vector<8x1152xf32>
    %71 = arith.select %69, %55, %70 : vector<8x1152xi1>, vector<8x1152xf32>
    %cst_45 = arith.constant 0.000000e+00 : f32
    %72 = vector.broadcast %cst_45 : f32 to vector<8x1152xf32>
    %73 = arith.maximumf %71, %72 : vector<8x1152xf32>
    %74 = arith.truncf %73 : vector<8x1152xf32> to vector<8x1152xbf16>
    %c1_46 = arith.constant 1 : index
    %c0_47 = arith.constant 0 : index
    %c0_48 = arith.constant 0 : index
    %75 = vector.load %arg8[%c1_46, %c0_47, %c0_48] : memref<4x1152x256xbf16, #tpu.memory_space<vmem>>, vector<1x1152x256xbf16>
    %76 = vector.shape_cast %75 : vector<1x1152x256xbf16> to vector<1152x256xbf16>
    %cst_49 = arith.constant dense<0.000000e+00> : vector<8x256xf32>
    %77 = tpu.matmul %74, %76, %cst_49 {dimension_numbers = #tpu.dot_dimension_numbers<[1], [0], [0], [1], [0, 0, 1, 1], [], []>} : vector<8x1152xbf16>, vector<1152x256xbf16>, vector<8x256xf32> -> vector<8x256xf32>
    %78 = arith.addf %67, %77 : vector<8x256xf32>
    %cst_50 = arith.constant 2.000000e+00 : f32
    %79 = vector.broadcast %cst_50 : f32 to vector<8x1152xf32>
    %80 = arith.cmpf oeq, %41, %79 : vector<8x1152xf32>
    %cst_51 = arith.constant 0.000000e+00 : f32
    %81 = vector.broadcast %cst_51 : f32 to vector<8x1152xf32>
    %82 = arith.select %80, %55, %81 : vector<8x1152xi1>, vector<8x1152xf32>
    %cst_52 = arith.constant 0.000000e+00 : f32
    %83 = vector.broadcast %cst_52 : f32 to vector<8x1152xf32>
    %84 = arith.maximumf %82, %83 : vector<8x1152xf32>
    %85 = arith.truncf %84 : vector<8x1152xf32> to vector<8x1152xbf16>
    %c2_53 = arith.constant 2 : index
    %c0_54 = arith.constant 0 : index
    %c0_55 = arith.constant 0 : index
    %86 = vector.load %arg8[%c2_53, %c0_54, %c0_55] : memref<4x1152x256xbf16, #tpu.memory_space<vmem>>, vector<1x1152x256xbf16>
    %87 = vector.shape_cast %86 : vector<1x1152x256xbf16> to vector<1152x256xbf16>
    %cst_56 = arith.constant dense<0.000000e+00> : vector<8x256xf32>
    %88 = tpu.matmul %85, %87, %cst_56 {dimension_numbers = #tpu.dot_dimension_numbers<[1], [0], [0], [1], [0, 0, 1, 1], [], []>} : vector<8x1152xbf16>, vector<1152x256xbf16>, vector<8x256xf32> -> vector<8x256xf32>
    %89 = arith.addf %78, %88 : vector<8x256xf32>
    %cst_57 = arith.constant 3.000000e+00 : f32
    %90 = vector.broadcast %cst_57 : f32 to vector<8x1152xf32>
    %91 = arith.cmpf oeq, %41, %90 : vector<8x1152xf32>
    %cst_58 = arith.constant 0.000000e+00 : f32
    %92 = vector.broadcast %cst_58 : f32 to vector<8x1152xf32>
    %93 = arith.select %91, %55, %92 : vector<8x1152xi1>, vector<8x1152xf32>
    %cst_59 = arith.constant 0.000000e+00 : f32
    %94 = vector.broadcast %cst_59 : f32 to vector<8x1152xf32>
    %95 = arith.maximumf %93, %94 : vector<8x1152xf32>
    %96 = arith.truncf %95 : vector<8x1152xf32> to vector<8x1152xbf16>
    %c3_60 = arith.constant 3 : index
    %c0_61 = arith.constant 0 : index
    %c0_62 = arith.constant 0 : index
    %97 = vector.load %arg8[%c3_60, %c0_61, %c0_62] : memref<4x1152x256xbf16, #tpu.memory_space<vmem>>, vector<1x1152x256xbf16>
    %98 = vector.shape_cast %97 : vector<1x1152x256xbf16> to vector<1152x256xbf16>
    %cst_63 = arith.constant dense<0.000000e+00> : vector<8x256xf32>
    %99 = tpu.matmul %96, %98, %cst_63 {dimension_numbers = #tpu.dot_dimension_numbers<[1], [0], [0], [1], [0, 0, 1, 1], [], []>} : vector<8x1152xbf16>, vector<1152x256xbf16>, vector<8x256xf32> -> vector<8x256xf32>
    %100 = arith.addf %89, %99 : vector<8x256xf32>
    %c0_64 = arith.constant 0 : index
    %c0_65 = arith.constant 0 : index
    %101 = vector.load %arg9[%c0_64, %c0_65] : memref<1x256xf32, #tpu.memory_space<vmem>>, vector<1x256xf32>
    %102 = vector.broadcast %101 : vector<1x256xf32> to vector<8x256xf32>
    %103 = arith.addf %100, %102 : vector<8x256xf32>
    %c0_66 = arith.constant 0 : index
    %c0_67 = arith.constant 0 : index
    %104 = vector.load %arg10[%c0_66, %c0_67] : memref<8x256xf32, #tpu.memory_space<vmem>>, vector<8x256xf32>
    tpu.vector_store %arg10[%c0_66, %c0_67], %103 {strides = array<i32>} : memref<8x256xf32, #tpu.memory_space<vmem>>, vector<8x256xf32>,
    return
  }
  func.func @transform_0(%arg0: i32) -> (i32, i32) {
    %c0_i32 = arith.constant 0 : i32
    %c0_i32_0 = arith.constant 0 : i32
    return %arg0, %c0_i32 : i32, i32
  }
  func.func @transform_1(%arg0: i32) -> (i32, i32, i32) {
    %c0_i32 = arith.constant 0 : i32
    %c0_i32_0 = arith.constant 0 : i32
    %c0_i32_1 = arith.constant 0 : i32
    %c0_i32_2 = arith.constant 0 : i32
    return %c0_i32, %c0_i32_0, %c0_i32_1 : i32, i32, i32
  }
  func.func @transform_2(%arg0: i32) -> (i32, i32) {
    %c0_i32 = arith.constant 0 : i32
    %c0_i32_0 = arith.constant 0 : i32
    %c0_i32_1 = arith.constant 0 : i32
    return %c0_i32, %c0_i32_0 : i32, i32
  }
  func.func @transform_3(%arg0: i32) -> (i32, i32) {
    %c0_i32 = arith.constant 0 : i32
    %c0_i32_0 = arith.constant 0 : i32
    %c0_i32_1 = arith.constant 0 : i32
    return %c0_i32, %c0_i32_0 : i32, i32
  }
  func.func @transform_4(%arg0: i32) -> (i32, i32) {
    %c0_i32 = arith.constant 0 : i32
    %c0_i32_0 = arith.constant 0 : i32
    %c0_i32_1 = arith.constant 0 : i32
    return %c0_i32, %c0_i32_0 : i32, i32
  }
  func.func @transform_5(%arg0: i32) -> (i32, i32) {
    %c0_i32 = arith.constant 0 : i32
    %c0_i32_0 = arith.constant 0 : i32
    %c0_i32_1 = arith.constant 0 : i32
    return %c0_i32, %c0_i32_0 : i32, i32
  }
  func.func @transform_6(%arg0: i32) -> (i32, i32) {
    %c0_i32 = arith.constant 0 : i32
    %c0_i32_0 = arith.constant 0 : i32
    %c0_i32_1 = arith.constant 0 : i32
    return %c0_i32, %c0_i32_0 : i32, i32
  }
  func.func @transform_7(%arg0: i32) -> (i32, i32, i32) {
    %c0_i32 = arith.constant 0 : i32
    %c0_i32_0 = arith.constant 0 : i32
    %c0_i32_1 = arith.constant 0 : i32
    %c0_i32_2 = arith.constant 0 : i32
    return %c0_i32, %c0_i32_0, %c0_i32_1 : i32, i32, i32
  }
  func.func @transform_8(%arg0: i32) -> (i32, i32) {
    %c0_i32 = arith.constant 0 : i32
    %c0_i32_0 = arith.constant 0 : i32
    %c0_i32_1 = arith.constant 0 : i32
    return %c0_i32, %c0_i32_0 : i32, i32
  }
  func.func @transform_9(%arg0: i32) -> (i32, i32) {
    %c0_i32 = arith.constant 0 : i32
    %c0_i32_0 = arith.constant 0 : i32
    return %arg0, %c0_i32 : i32, i32
  }
  func.func @transform_10(%arg0: i32) -> (i32, i32) {
    %c0_i32 = arith.constant 0 : i32
    %c0_i32_0 = arith.constant 0 : i32
    return %arg0, %c0_i32 : i32, i32
  }
}

</mosaic_0001>

<llo_original>
// kernel: tile.8
$region0: #{tile.8}
  #allocation0 [shape = 's32[1]{0}', space=sflag, size = 0x4, scoped, tag = 'scoped memory for tile.8']
  %s0 = inlined_call_operand.vmem [shape: f32[32], index: 0, kind: input, shape index: {}]
  %s1 = inlined_call_operand.vmem [shape: f32[36,32], index: 1, kind: output, shape index: {}]
  // Predicated region
  $region2: #{tile.8} parent=0 // pred_check
    _
  $region3: #{tile.8} parent=0 // pred_check_branch
    %3 = sbr.rel (0) target = $region5
  $region4: #{tile.8} parent=0 // pred_region
    _
  $region5: #{tile.8} parent=0 // pred_fallthru
    _
  %v4 = vld [vmem:[%s0] ss:$0 sm:$0xff]
  %5 = vst [vmem:[%s1] sm:$0xff] %v4
  %s6 = scalar_lea.vmem %s1, 8
  %7 = vst [vmem:[%s6] sm:$0xff] %v4
  %s8 = scalar_lea.vmem %s1, 16
  %9 = vst [vmem:[%s8] sm:$0xff] %v4
  %s10 = scalar_lea.vmem %s1, 24
  %11 = vst [vmem:[%s10] sm:$0xff] %v4
  %s12 = scalar_lea.vmem %s1, 32
  %13 = vst [vmem:[%s12] sm:$0xff] %v4

// kernel: tile.9
$region0: #{tile.9}
  %s0 = inlined_call_operand.vmem [shape: f32[36,32], index: 0, kind: input, shape index: {}]
  %s1 = inlined_call_operand.vmem [shape: f32[1,1152], index: 1, kind: output, shape index: {}]
  $region1: #{tile.9} parent=0
    #allocation0 [shape = 'u8[36864]{0}', space=vmem, size = 0x9000, scoped, tag = 'scoped mem for output reshape']
    %v2 = vld [vmem:[%s0] ss:$4 sm:$0xff]
    %vm3 = vcmask 261120
    %4 = vst.msk [vmem:[#allocation0] ss:$8 sm:$0xf] %vm3, %v2
    %5 = vst.msk [vmem:[#allocation0] ss:$8 sm:$0xf0] %vm3, %v2
    %s6 = scalar_lea.vmem %s0, 32
    %v7 = vld [vmem:[%s6] sm:$0x1]
    %vm8 = vcmask 261120
    %s9 = scalar_lea.vmem [#allocation0], 64
    %10 = vst.msk [vmem:[%s9] sm:$0x1] %vm8, %v7
    %s11 = scalar_lea.vmem %s0, 3
    %v12 = vld [vmem:[%s11] ss:$4 sm:$0xff]
    %13 = vrot.lane.b32.xlu0 %v12, 96
    %v14 = vpop.permute.xlu0 %13
    %vm15 = vcmask 1048320
    %16 = vst.msk [vmem:[#allocation0] ss:$8 sm:$0xf] %vm15, %v14
    %17 = vst.msk [vmem:[#allocation0] ss:$8 sm:$0xf0] %vm15, %v14
    %s18 = scalar_lea.vmem %s0, 35
    %v19 = vld [vmem:[%s18] sm:$0x1]
    %20 = vrot.lane.b32.xlu0 %v19, 96
    %v21 = vpop.permute.xlu0 %20
    %vm22 = vcmask 1048320
    %s23 = scalar_lea.vmem [#allocation0], 64
    %24 = vst.msk [vmem:[%s23] sm:$0x1] %vm22, %v21
    %s25 = scalar_lea.vmem %s0, 2
    %v26 = vld [vmem:[%s25] ss:$4 sm:$0xff]
    %27 = vrot.lane.b32.xlu0 %v26, 64
    %v28 = vpop.permute.xlu0 %27
    %vm29 = vcmask 785920
    %30 = vst.msk [vmem:[#allocation0] ss:$8 sm:$0xf] %vm29, %v28
    %31 = vst.msk [vmem:[#allocation0] ss:$8 sm:$0xf0] %vm29, %v28
    %s32 = scalar_lea.vmem %s0, 34
    %v33 = vld [vmem:[%s32] sm:$0x1]
    %34 = vrot.lane.b32.xlu0 %v33, 64
    %v35 = vpop.permute.xlu0 %34
    %vm36 = vcmask 785920
    %s37 = scalar_lea.vmem [#allocation0], 64
    %38 = vst.msk [vmem:[%s37] sm:$0x1] %vm36, %v35
    %s39 = scalar_lea.vmem %s0, 1
    %v40 = vld [vmem:[%s39] ss:$4 sm:$0xff]
    %41 = vrot.lane.b32.xlu0 %v40, 32
    %v42 = vpop.permute.xlu0 %41
    %vm43 = vcmask 523520
    %44 = vst.msk [vmem:[#allocation0] ss:$8 sm:$0xf] %vm43, %v42
    %45 = vst.msk [vmem:[#allocation0] ss:$8 sm:$0xf0] %vm43, %v42
    %s46 = scalar_lea.vmem %s0, 33
    %v47 = vld [vmem:[%s46] sm:$0x1]
    %48 = vrot.lane.b32.xlu0 %v47, 32
    %v49 = vpop.permute.xlu0 %48
    %vm50 = vcmask 523520
    %s51 = scalar_lea.vmem [#allocation0], 64
    %52 = vst.msk [vmem:[%s51] sm:$0x1] %vm50, %v49
    %s54 = ssub.s32 2, 1
    %v55 = vld [vmem:[#allocation0] sm:%s54]
    %s57 = ssub.s32 2, 1
    %58 = vst [vmem:[%s1] sm:%s57] %v55
    %s59 = scalar_lea.vmem [#allocation0], 8
    %v60 = vld [vmem:[%s59] sm:%s54]
    %s62 = ssub.s32 2, 1
    %s63 = scalar_lea.vmem %s1, 1
    %64 = vst [vmem:[%s63] sm:%s62] %v60
    %s65 = scalar_lea.vmem [#allocation0], 16
    %v66 = vld [vmem:[%s65] sm:%s54]
    %s68 = ssub.s32 2, 1
    %s69 = scalar_lea.vmem %s1, 2
    %70 = vst [vmem:[%s69] sm:%s68] %v66
    %s71 = scalar_lea.vmem [#allocation0], 24
    %v72 = vld [vmem:[%s71] sm:%s54]
    %s74 = ssub.s32 2, 1
    %s75 = scalar_lea.vmem %s1, 3
    %76 = vst [vmem:[%s75] sm:%s74] %v72
    %s77 = scalar_lea.vmem [#allocation0], 32
    %v78 = vld [vmem:[%s77] sm:%s54]
    %s80 = ssub.s32 2, 1
    %s81 = scalar_lea.vmem %s1, 4
    %82 = vst [vmem:[%s81] sm:%s80] %v78
    %s83 = scalar_lea.vmem [#allocation0], 40
    %v84 = vld [vmem:[%s83] sm:%s54]
    %s86 = ssub.s32 2, 1
    %s87 = scalar_lea.vmem %s1, 5
    %88 = vst [vmem:[%s87] sm:%s86] %v84
    %s89 = scalar_lea.vmem [#allocation0], 48
    %v90 = vld [vmem:[%s89] sm:%s54]
    %s92 = ssub.s32 2, 1
    %s93 = scalar_lea.vmem %s1, 6
    %94 = vst [vmem:[%s93] sm:%s92] %v90
    %s95 = scalar_lea.vmem [#allocation0], 56
    %v96 = vld [vmem:[%s95] sm:%s54]
    %s98 = ssub.s32 2, 1
    %s99 = scalar_lea.vmem %s1, 7
    %100 = vst [vmem:[%s99] sm:%s98] %v96
    %s101 = scalar_lea.vmem [#allocation0], 64
    %v102 = vld [vmem:[%s101] sm:%s54]
    %s104 = ssub.s32 2, 1
    %s105 = scalar_lea.vmem %s1, 8
    %106 = vst [vmem:[%s105] sm:%s104] %v102

// kernel: conv_autoencoder_forward.1
$region0: #{conv_autoencoder_forward.1}
  #allocation0 [shape = 'u32[]', space=smem, size = 0x4, offset = 0x4, fixed_abs, tag = 'smem constant byte address 0x4 - core index']
  #allocation1 [shape = 'u32[72,128]{1,0:T(1,128)}', space=vmem, size = 0x9000, scoped, tag = 'internal scratch']
  %s0 = inlined_call_operand.vmem [shape: f32[8,256], index: 0, kind: input, shape index: {}]
  %s1 = inlined_call_operand.vmem [shape: f32[4,256,1152], index: 1, kind: input, shape index: {}]
  %s2 = inlined_call_operand.vmem [shape: f32[1,1152], index: 2, kind: input, shape index: {}]
  %s3 = inlined_call_operand.vmem [shape: bf16[1152,128], index: 3, kind: input, shape index: {}]
  %s4 = inlined_call_operand.vmem [shape: f32[1,128], index: 4, kind: input, shape index: {}]
  %s5 = inlined_call_operand.vmem [shape: bf16[128,1152], index: 5, kind: input, shape index: {}]
  %s6 = inlined_call_operand.vmem [shape: f32[1,1152], index: 6, kind: input, shape index: {}]
  %s7 = inlined_call_operand.vmem [shape: bf16[4,1152,256], index: 7, kind: input, shape index: {}]
  %s8 = inlined_call_operand.vmem [shape: f32[1,256], index: 8, kind: input, shape index: {}]
  %s9 = inlined_call_operand.vmem [shape: f32[8,256], index: 9, kind: output, shape index: {0}]
  %s10 = inlined_call_operand.vmem [shape: f32[8,128], index: 10, kind: output, shape index: {1}]
  %11 = xla_tuple %s9, %s10
  %s12 = sld [smem:[#allocation0]]
  $region54: #{conv_autoencoder_forward.1} parent=0
    _
  %s14 = ssub.s32 1, %s12
  %s15 = scalar_select 0, %s14, %s12
  // Predicated region
  $region2: #{conv_autoencoder_forward.1} parent=0 // pred_check
    _
  $region3: #{conv_autoencoder_forward.1} parent=0 // pred_check_branch
    %17 = sbr.rel (0) target = $region5
  $region4: #{conv_autoencoder_forward.1} parent=0 // pred_region
    _
  $region5: #{conv_autoencoder_forward.1} parent=0 // pred_fallthru
    _
  // Predicated region
  $region6: #{conv_autoencoder_forward.1} parent=0 // pred_check
    _
  $region7: #{conv_autoencoder_forward.1} parent=0 // pred_check_branch
    %19 = sbr.rel (0) target = $region9
  $region8: #{conv_autoencoder_forward.1} parent=0 // pred_region
    _
  $region9: #{conv_autoencoder_forward.1} parent=0 // pred_fallthru
    _
  // Predicated region
  $region10: #{conv_autoencoder_forward.1} parent=0 // pred_check
    _
  $region11: #{conv_autoencoder_forward.1} parent=0 // pred_check_branch
    %21 = sbr.rel (0) target = $region13
  $region12: #{conv_autoencoder_forward.1} parent=0 // pred_region
    _
  $region13: #{conv_autoencoder_forward.1} parent=0 // pred_fallthru
    _
  // Predicated region
  $region14: #{conv_autoencoder_forward.1} parent=0 // pred_check
    _
  $region15: #{conv_autoencoder_forward.1} parent=0 // pred_check_branch
    %23 = sbr.rel (0) target = $region17
  $region16: #{conv_autoencoder_forward.1} parent=0 // pred_region
    _
  $region17: #{conv_autoencoder_forward.1} parent=0 // pred_fallthru
    _
  // Predicated region
  $region18: #{conv_autoencoder_forward.1} parent=0 // pred_check
    _
  $region19: #{conv_autoencoder_forward.1} parent=0 // pred_check_branch
    %25 = sbr.rel (0) target = $region21
  $region20: #{conv_autoencoder_forward.1} parent=0 // pred_region
    _
  $region21: #{conv_autoencoder_forward.1} parent=0 // pred_fallthru
    _
  // Predicated region
  $region22: #{conv_autoencoder_forward.1} parent=0 // pred_check
    _
  $region23: #{conv_autoencoder_forward.1} parent=0 // pred_check_branch
    %27 = sbr.rel (0) target = $region25
  $region24: #{conv_autoencoder_forward.1} parent=0 // pred_region
    _
  $region25: #{conv_autoencoder_forward.1} parent=0 // pred_fallthru
    _
  // Predicated region
  $region26: #{conv_autoencoder_forward.1} parent=0 // pred_check
    _
  $region27: #{conv_autoencoder_forward.1} parent=0 // pred_check_branch
    %29 = sbr.rel (0) target = $region29
  $region28: #{conv_autoencoder_forward.1} parent=0 // pred_region
    _
  $region29: #{conv_autoencoder_forward.1} parent=0 // pred_fallthru
    _
  // Predicated region
  $region30: #{conv_autoencoder_forward.1} parent=0 // pred_check
    _
  $region31: #{conv_autoencoder_forward.1} parent=0 // pred_check_branch
    %31 = sbr.rel (0) target = $region33
  $region32: #{conv_autoencoder_forward.1} parent=0 // pred_region
    _
  $region33: #{conv_autoencoder_forward.1} parent=0 // pred_fallthru
    _
  // Predicated region
  $region34: #{conv_autoencoder_forward.1} parent=0 // pred_check
    _
  $region35: #{conv_autoencoder_forward.1} parent=0 // pred_check_branch
    %33 = sbr.rel (0) target = $region37
  $region36: #{conv_autoencoder_forward.1} parent=0 // pred_region
    _
  $region37: #{conv_autoencoder_forward.1} parent=0 // pred_fallthru
    _
  %v34 = vld [vmem:[%s0] sm:$0xff]
  %v35 = vld [vmem:[%s0 + $0x8] sm:$0xff]
  %v36 = vld [vmem:[%s2] sm:$0xff]
  %v37 = vld [vmem:[%s2 + $0x8] sm:$0x1]
  %v38 = vld [vmem:[%s1] sm:$0xff]
  %v39 = vld [vmem:[%s1 + $0x8] sm:$0xff]
  %v40 = vld [vmem:[%s1 + $0x10] sm:$0xff]
  %v41 = vld [vmem:[%s1 + $0x18] sm:$0xff]
  %v42 = vld [vmem:[%s1 + $0x20] sm:$0xff]
  %v43 = vld [vmem:[%s1 + $0x28] sm:$0xff]
  %v44 = vld [vmem:[%s1 + $0x30] sm:$0xff]
  %v45 = vld [vmem:[%s1 + $0x38] sm:$0xff]
  %v46 = vld [vmem:[%s1 + $0x40] sm:$0xff]
  %v47 = vld [vmem:[%s1 + $0x48] sm:$0xff]
  %v48 = vld [vmem:[%s1 + $0x50] sm:$0xff]
  %v49 = vld [vmem:[%s1 + $0x58] sm:$0xff]
  %v50 = vld [vmem:[%s1 + $0x60] sm:$0xff]
  %v51 = vld [vmem:[%s1 + $0x68] sm:$0xff]
  %v52 = vld [vmem:[%s1 + $0x70] sm:$0xff]
  %v53 = vld [vmem:[%s1 + $0x78] sm:$0xff]
  %v54 = vld [vmem:[%s1 + $0x80] sm:$0xff]
  %v55 = vld [vmem:[%s1 + $0x88] sm:$0xff]
  %v56 = vld [vmem:[%s1 + $0x90] sm:$0xff]
  %v57 = vld [vmem:[%s1 + $0x98] sm:$0xff]
  %v58 = vld [vmem:[%s1 + $0xa0] sm:$0xff]
  %v59 = vld [vmem:[%s1 + $0xa8] sm:$0xff]
  %v60 = vld [vmem:[%s1 + $0xb0] sm:$0xff]
  %v61 = vld [vmem:[%s1 + $0xb8] sm:$0xff]
  %v62 = vld [vmem:[%s1 + $0xc0] sm:$0xff]
  %v63 = vld [vmem:[%s1 + $0xc8] sm:$0xff]
  %v64 = vld [vmem:[%s1 + $0xd0] sm:$0xff]
  %v65 = vld [vmem:[%s1 + $0xd8] sm:$0xff]
  %v66 = vld [vmem:[%s1 + $0xe0] sm:$0xff]
  %v67 = vld [vmem:[%s1 + $0xe8] sm:$0xff]
  %v68 = vld [vmem:[%s1 + $0xf0] sm:$0xff]
  %v69 = vld [vmem:[%s1 + $0xf8] sm:$0xff]
  %v70 = vld [vmem:[%s1 + $0x100] sm:$0xff]
  %v71 = vld [vmem:[%s1 + $0x108] sm:$0xff]
  %v72 = vld [vmem:[%s1 + $0x110] sm:$0xff]
  %v73 = vld [vmem:[%s1 + $0x118] sm:$0xff]
  %v74 = vld [vmem:[%s1 + $0x120] sm:$0xff]
  %v75 = vld [vmem:[%s1 + $0x128] sm:$0xff]
  %v76 = vld [vmem:[%s1 + $0x130] sm:$0xff]
  %v77 = vld [vmem:[%s1 + $0x138] sm:$0xff]
  %v78 = vld [vmem:[%s1 + $0x140] sm:$0xff]
  %v79 = vld [vmem:[%s1 + $0x148] sm:$0xff]
  %v80 = vld [vmem:[%s1 + $0x150] sm:$0xff]
  %v81 = vld [vmem:[%s1 + $0x158] sm:$0xff]
  %v82 = vld [vmem:[%s1 + $0x160] sm:$0xff]
  %v83 = vld [vmem:[%s1 + $0x168] sm:$0xff]
  %v84 = vld [vmem:[%s1 + $0x170] sm:$0xff]
  %v85 = vld [vmem:[%s1 + $0x178] sm:$0xff]
  %v86 = vld [vmem:[%s1 + $0x180] sm:$0xff]
  %v87 = vld [vmem:[%s1 + $0x188] sm:$0xff]
  %v88 = vld [vmem:[%s1 + $0x190] sm:$0xff]
  %v89 = vld [vmem:[%s1 + $0x198] sm:$0xff]
  %v90 = vld [vmem:[%s1 + $0x1a0] sm:$0xff]
  %v91 = vld [vmem:[%s1 + $0x1a8] sm:$0xff]
  %v92 = vld [vmem:[%s1 + $0x1b0] sm:$0xff]
  %v93 = vld [vmem:[%s1 + $0x1b8] sm:$0xff]
  %v94 = vld [vmem:[%s1 + $0x1c0] sm:$0xff]
  %v95 = vld [vmem:[%s1 + $0x1c8] sm:$0xff]
  %v96 = vld [vmem:[%s1 + $0x1d0] sm:$0xff]
  %v97 = vld [vmem:[%s1 + $0x1d8] sm:$0xff]
  %v98 = vld [vmem:[%s1 + $0x1e0] sm:$0xff]
  %v99 = vld [vmem:[%s1 + $0x1e8] sm:$0xff]
  %v100 = vld [vmem:[%s1 + $0x1f0] sm:$0xff]
  %v101 = vld [vmem:[%s1 + $0x1f8] sm:$0xff]
  %v102 = vld [vmem:[%s1 + $0x200] sm:$0xff]
  %v103 = vld [vmem:[%s1 + $0x208] sm:$0xff]
  %v104 = vld [vmem:[%s1 + $0x210] sm:$0xff]
  %v105 = vld [vmem:[%s1 + $0x218] sm:$0xff]
  %v106 = vld [vmem:[%s1 + $0x220] sm:$0xff]
  %v107 = vld [vmem:[%s1 + $0x228] sm:$0xff]
  %v108 = vld [vmem:[%s1 + $0x230] sm:$0xff]
  %v109 = vld [vmem:[%s1 + $0x238] sm:$0xff]
  %v110 = vld [vmem:[%s1 + $0x240] sm:$0xff]
  %v111 = vld [vmem:[%s1 + $0x248] sm:$0xff]
  %v112 = vld [vmem:[%s1 + $0x250] sm:$0xff]
  %v113 = vld [vmem:[%s1 + $0x258] sm:$0xff]
  %v114 = vld [vmem:[%s1 + $0x260] sm:$0xff]
  %v115 = vld [vmem:[%s1 + $0x268] sm:$0xff]
  %v116 = vld [vmem:[%s1 + $0x270] sm:$0xff]
  %v117 = vld [vmem:[%s1 + $0x278] sm:$0xff]
  %v118 = vld [vmem:[%s1 + $0x280] sm:$0xff]
  %v119 = vld [vmem:[%s1 + $0x288] sm:$0xff]
  %v120 = vld [vmem:[%s1 + $0x290] sm:$0xff]
  %v121 = vld [vmem:[%s1 + $0x298] sm:$0xff]
  %v122 = vld [vmem:[%s1 + $0x2a0] sm:$0xff]
  %v123 = vld [vmem:[%s1 + $0x2a8] sm:$0xff]
  %v124 = vld [vmem:[%s1 + $0x2b0] sm:$0xff]
  %v125 = vld [vmem:[%s1 + $0x2b8] sm:$0xff]
  %v126 = vld [vmem:[%s1 + $0x2c0] sm:$0xff]
  %v127 = vld [vmem:[%s1 + $0x2c8] sm:$0xff]
  %v128 = vld [vmem:[%s1 + $0x2d0] sm:$0xff]
  %v129 = vld [vmem:[%s1 + $0x2d8] sm:$0xff]
  %v130 = vld [vmem:[%s1 + $0x2e0] sm:$0xff]
  %v131 = vld [vmem:[%s1 + $0x2e8] sm:$0xff]
  %v132 = vld [vmem:[%s1 + $0x2f0] sm:$0xff]
  %v133 = vld [vmem:[%s1 + $0x2f8] sm:$0xff]
  %v134 = vld [vmem:[%s1 + $0x300] sm:$0xff]
  %v135 = vld [vmem:[%s1 + $0x308] sm:$0xff]
  %v136 = vld [vmem:[%s1 + $0x310] sm:$0xff]
  %v137 = vld [vmem:[%s1 + $0x318] sm:$0xff]
  %v138 = vld [vmem:[%s1 + $0x320] sm:$0xff]
  %v139 = vld [vmem:[%s1 + $0x328] sm:$0xff]
  %v140 = vld [vmem:[%s1 + $0x330] sm:$0xff]
  %v141 = vld [vmem:[%s1 + $0x338] sm:$0xff]
  %v142 = vld [vmem:[%s1 + $0x340] sm:$0xff]
  %v143 = vld [vmem:[%s1 + $0x348] sm:$0xff]
  %v144 = vld [vmem:[%s1 + $0x350] sm:$0xff]
  %v145 = vld [vmem:[%s1 + $0x358] sm:$0xff]
  %v146 = vld [vmem:[%s1 + $0x360] sm:$0xff]
  %v147 = vld [vmem:[%s1 + $0x368] sm:$0xff]
  %v148 = vld [vmem:[%s1 + $0x370] sm:$0xff]
  %v149 = vld [vmem:[%s1 + $0x378] sm:$0xff]
  %v150 = vld [vmem:[%s1 + $0x380] sm:$0xff]
  %v151 = vld [vmem:[%s1 + $0x388] sm:$0xff]
  %v152 = vld [vmem:[%s1 + $0x390] sm:$0xff]
  %v153 = vld [vmem:[%s1 + $0x398] sm:$0xff]
  %v154 = vld [vmem:[%s1 + $0x3a0] sm:$0xff]
  %v155 = vld [vmem:[%s1 + $0x3a8] sm:$0xff]
  %v156 = vld [vmem:[%s1 + $0x3b0] sm:$0xff]
  %v157 = vld [vmem:[%s1 + $0x3b8] sm:$0xff]
  %v158 = vld [vmem:[%s1 + $0x3c0] sm:$0xff]
  %v159 = vld [vmem:[%s1 + $0x3c8] sm:$0xff]
  %v160 = vld [vmem:[%s1 + $0x3d0] sm:$0xff]
  %v161 = vld [vmem:[%s1 + $0x3d8] sm:$0xff]
  %v162 = vld [vmem:[%s1 + $0x3e0] sm:$0xff]
  %v163 = vld [vmem:[%s1 + $0x3e8] sm:$0xff]
  %v164 = vld [vmem:[%s1 + $0x3f0] sm:$0xff]
  %v165 = vld [vmem:[%s1 + $0x3f8] sm:$0xff]
  %v166 = vld [vmem:[%s1 + $0x400] sm:$0xff]
  %v167 = vld [vmem:[%s1 + $0x408] sm:$0xff]
  %v168 = vld [vmem:[%s1 + $0x410] sm:$0xff]
  %v169 = vld [vmem:[%s1 + $0x418] sm:$0xff]
  %v170 = vld [vmem:[%s1 + $0x420] sm:$0xff]
  %v171 = vld [vmem:[%s1 + $0x428] sm:$0xff]
  %v172 = vld [vmem:[%s1 + $0x430] sm:$0xff]
  %v173 = vld [vmem:[%s1 + $0x438] sm:$0xff]
  %v174 = vld [vmem:[%s1 + $0x440] sm:$0xff]
  %v175 = vld [vmem:[%s1 + $0x448] sm:$0xff]
  %v176 = vld [vmem:[%s1 + $0x450] sm:$0xff]
  %v177 = vld [vmem:[%s1 + $0x458] sm:$0xff]
  %v178 = vld [vmem:[%s1 + $0x460] sm:$0xff]
  %v179 = vld [vmem:[%s1 + $0x468] sm:$0xff]
  %v180 = vld [vmem:[%s1 + $0x470] sm:$0xff]
  %v181 = vld [vmem:[%s1 + $0x478] sm:$0xff]
  %v182 = vld [vmem:[%s1 + $0x480] sm:$0xff]
  %v183 = vld [vmem:[%s1 + $0x488] sm:$0xff]
  %v184 = vld [vmem:[%s1 + $0x490] sm:$0xff]
  %v185 = vld [vmem:[%s1 + $0x498] sm:$0xff]
  %v186 = vld [vmem:[%s1 + $0x4a0] sm:$0xff]
  %v187 = vld [vmem:[%s1 + $0x4a8] sm:$0xff]
  %v188 = vld [vmem:[%s1 + $0x4b0] sm:$0xff]
  %v189 = vld [vmem:[%s1 + $0x4b8] sm:$0xff]
  %v190 = vld [vmem:[%s1 + $0x4c0] sm:$0xff]
  %v191 = vld [vmem:[%s1 + $0x4c8] sm:$0xff]
  %v192 = vld [vmem:[%s1 + $0x4d0] sm:$0xff]
  %v193 = vld [vmem:[%s1 + $0x4d8] sm:$0xff]
  %v194 = vld [vmem:[%s1 + $0x4e0] sm:$0xff]
  %v195 = vld [vmem:[%s1 + $0x4e8] sm:$0xff]
  %v196 = vld [vmem:[%s1 + $0x4f0] sm:$0xff]
  %v197 = vld [vmem:[%s1 + $0x4f8] sm:$0xff]
  %v198 = vld [vmem:[%s1 + $0x500] sm:$0xff]
  %v199 = vld [vmem:[%s1 + $0x508] sm:$0xff]
  %v200 = vld [vmem:[%s1 + $0x510] sm:$0xff]
  %v201 = vld [vmem:[%s1 + $0x518] sm:$0xff]
  %v202 = vld [vmem:[%s1 + $0x520] sm:$0xff]
  %v203 = vld [vmem:[%s1 + $0x528] sm:$0xff]
  %v204 = vld [vmem:[%s1 + $0x530] sm:$0xff]
  %v205 = vld [vmem:[%s1 + $0x538] sm:$0xff]
  %v206 = vld [vmem:[%s1 + $0x540] sm:$0xff]
  %v207 = vld [vmem:[%s1 + $0x548] sm:$0xff]
  %v208 = vld [vmem:[%s1 + $0x550] sm:$0xff]
  %v209 = vld [vmem:[%s1 + $0x558] sm:$0xff]
  %v210 = vld [vmem:[%s1 + $0x560] sm:$0xff]
  %v211 = vld [vmem:[%s1 + $0x568] sm:$0xff]
  %v212 = vld [vmem:[%s1 + $0x570] sm:$0xff]
  %v213 = vld [vmem:[%s1 + $0x578] sm:$0xff]
  %v214 = vld [vmem:[%s1 + $0x580] sm:$0xff]
  %v215 = vld [vmem:[%s1 + $0x588] sm:$0xff]
  %v216 = vld [vmem:[%s1 + $0x590] sm:$0xff]
  %v217 = vld [vmem:[%s1 + $0x598] sm:$0xff]
  %v218 = vld [vmem:[%s1 + $0x5a0] sm:$0xff]
  %v219 = vld [vmem:[%s1 + $0x5a8] sm:$0xff]
  %v220 = vld [vmem:[%s1 + $0x5b0] sm:$0xff]
  %v221 = vld [vmem:[%s1 + $0x5b8] sm:$0xff]
  %v222 = vld [vmem:[%s1 + $0x5c0] sm:$0xff]
  %v223 = vld [vmem:[%s1 + $0x5c8] sm:$0xff]
  %v224 = vld [vmem:[%s1 + $0x5d0] sm:$0xff]
  %v225 = vld [vmem:[%s1 + $0x5d8] sm:$0xff]
  %v226 = vld [vmem:[%s1 + $0x5e0] sm:$0xff]
  %v227 = vld [vmem:[%s1 + $0x5e8] sm:$0xff]
  %v228 = vld [vmem:[%s1 + $0x5f0] sm:$0xff]
  %v229 = vld [vmem:[%s1 + $0x5f8] sm:$0xff]
  %v230 = vld [vmem:[%s1 + $0x600] sm:$0xff]
  %v231 = vld [vmem:[%s1 + $0x608] sm:$0xff]
  %v232 = vld [vmem:[%s1 + $0x610] sm:$0xff]
  %v233 = vld [vmem:[%s1 + $0x618] sm:$0xff]
  %v234 = vld [vmem:[%s1 + $0x620] sm:$0xff]
  %v235 = vld [vmem:[%s1 + $0x628] sm:$0xff]
  %v236 = vld [vmem:[%s1 + $0x630] sm:$0xff]
  %v237 = vld [vmem:[%s1 + $0x638] sm:$0xff]
  %v238 = vld [vmem:[%s1 + $0x640] sm:$0xff]
  %v239 = vld [vmem:[%s1 + $0x648] sm:$0xff]
  %v240 = vld [vmem:[%s1 + $0x650] sm:$0xff]
  %v241 = vld [vmem:[%s1 + $0x658] sm:$0xff]
  %v242 = vld [vmem:[%s1 + $0x660] sm:$0xff]
  %v243 = vld [vmem:[%s1 + $0x668] sm:$0xff]
  %v244 = vld [vmem:[%s1 + $0x670] sm:$0xff]
  %v245 = vld [vmem:[%s1 + $0x678] sm:$0xff]
  %v246 = vld [vmem:[%s1 + $0x680] sm:$0xff]
  %v247 = vld [vmem:[%s1 + $0x688] sm:$0xff]
  %v248 = vld [vmem:[%s1 + $0x690] sm:$0xff]
  %v249 = vld [vmem:[%s1 + $0x698] sm:$0xff]
  %v250 = vld [vmem:[%s1 + $0x6a0] sm:$0xff]
  %v251 = vld [vmem:[%s1 + $0x6a8] sm:$0xff]
  %v252 = vld [vmem:[%s1 + $0x6b0] sm:$0xff]
  %v253 = vld [vmem:[%s1 + $0x6b8] sm:$0xff]
  %v254 = vld [vmem:[%s1 + $0x6c0] sm:$0xff]
  %v255 = vld [vmem:[%s1 + $0x6c8] sm:$0xff]
  %v256 = vld [vmem:[%s1 + $0x6d0] sm:$0xff]
  %v257 = vld [vmem:[%s1 + $0x6d8] sm:$0xff]
  %v258 = vld [vmem:[%s1 + $0x6e0] sm:$0xff]
  %v259 = vld [vmem:[%s1 + $0x6e8] sm:$0xff]
  %v260 = vld [vmem:[%s1 + $0x6f0] sm:$0xff]
  %v261 = vld [vmem:[%s1 + $0x6f8] sm:$0xff]
  %v262 = vld [vmem:[%s1 + $0x700] sm:$0xff]
  %v263 = vld [vmem:[%s1 + $0x708] sm:$0xff]
  %v264 = vld [vmem:[%s1 + $0x710] sm:$0xff]
  %v265 = vld [vmem:[%s1 + $0x718] sm:$0xff]
  %v266 = vld [vmem:[%s1 + $0x720] sm:$0xff]
  %v267 = vld [vmem:[%s1 + $0x728] sm:$0xff]
  %v268 = vld [vmem:[%s1 + $0x730] sm:$0xff]
  %v269 = vld [vmem:[%s1 + $0x738] sm:$0xff]
  %v270 = vld [vmem:[%s1 + $0x740] sm:$0xff]
  %v271 = vld [vmem:[%s1 + $0x748] sm:$0xff]
  %v272 = vld [vmem:[%s1 + $0x750] sm:$0xff]
  %v273 = vld [vmem:[%s1 + $0x758] sm:$0xff]
  %v274 = vld [vmem:[%s1 + $0x760] sm:$0xff]
  %v275 = vld [vmem:[%s1 + $0x768] sm:$0xff]
  %v276 = vld [vmem:[%s1 + $0x770] sm:$0xff]
  %v277 = vld [vmem:[%s1 + $0x778] sm:$0xff]
  %v278 = vld [vmem:[%s1 + $0x780] sm:$0xff]
  %v279 = vld [vmem:[%s1 + $0x788] sm:$0xff]
  %v280 = vld [vmem:[%s1 + $0x790] sm:$0xff]
  %v281 = vld [vmem:[%s1 + $0x798] sm:$0xff]
  %v282 = vld [vmem:[%s1 + $0x7a0] sm:$0xff]
  %v283 = vld [vmem:[%s1 + $0x7a8] sm:$0xff]
  %v284 = vld [vmem:[%s1 + $0x7b0] sm:$0xff]
  %v285 = vld [vmem:[%s1 + $0x7b8] sm:$0xff]
  %v286 = vld [vmem:[%s1 + $0x7c0] sm:$0xff]
  %v287 = vld [vmem:[%s1 + $0x7c8] sm:$0xff]
  %v288 = vld [vmem:[%s1 + $0x7d0] sm:$0xff]
  %v289 = vld [vmem:[%s1 + $0x7d8] sm:$0xff]
  %v290 = vld [vmem:[%s1 + $0x7e0] sm:$0xff]
  %v291 = vld [vmem:[%s1 + $0x7e8] sm:$0xff]
  %v292 = vld [vmem:[%s1 + $0x7f0] sm:$0xff]
  %v293 = vld [vmem:[%s1 + $0x7f8] sm:$0xff]
  %v294 = vld [vmem:[%s1 + $0x800] sm:$0xff]
  %v295 = vld [vmem:[%s1 + $0x808] sm:$0xff]
  %v296 = vld [vmem:[%s1 + $0x810] sm:$0xff]
  %v297 = vld [vmem:[%s1 + $0x818] sm:$0xff]
  %v298 = vld [vmem:[%s1 + $0x820] sm:$0xff]
  %v299 = vld [vmem:[%s1 + $0x828] sm:$0xff]
  %v300 = vld [vmem:[%s1 + $0x830] sm:$0xff]
  %v301 = vld [vmem:[%s1 + $0x838] sm:$0xff]
  %v302 = vld [vmem:[%s1 + $0x840] sm:$0xff]
  %v303 = vld [vmem:[%s1 + $0x848] sm:$0xff]
  %v304 = vld [vmem:[%s1 + $0x850] sm:$0xff]
  %v305 = vld [vmem:[%s1 + $0x858] sm:$0xff]
  %v306 = vld [vmem:[%s1 + $0x860] sm:$0xff]
  %v307 = vld [vmem:[%s1 + $0x868] sm:$0xff]
  %v308 = vld [vmem:[%s1 + $0x870] sm:$0xff]
  %v309 = vld [vmem:[%s1 + $0x878] sm:$0xff]
  %v310 = vld [vmem:[%s1 + $0x880] sm:$0xff]
  %v311 = vld [vmem:[%s1 + $0x888] sm:$0xff]
  %v312 = vld [vmem:[%s1 + $0x890] sm:$0xff]
  %v313 = vld [vmem:[%s1 + $0x898] sm:$0xff]
  %v314 = vld [vmem:[%s1 + $0x8a0] sm:$0xff]
  %v315 = vld [vmem:[%s1 + $0x8a8] sm:$0xff]
  %v316 = vld [vmem:[%s1 + $0x8b0] sm:$0xff]
  %v317 = vld [vmem:[%s1 + $0x8b8] sm:$0xff]
  %v318 = vld [vmem:[%s1 + $0x8c0] sm:$0xff]
  %v319 = vld [vmem:[%s1 + $0x8c8] sm:$0xff]
  %v320 = vld [vmem:[%s1 + $0x8d0] sm:$0xff]
  %v321 = vld [vmem:[%s1 + $0x8d8] sm:$0xff]
  %v322 = vld [vmem:[%s1 + $0x8e0] sm:$0xff]
  %v323 = vld [vmem:[%s1 + $0x8e8] sm:$0xff]
  %v324 = vld [vmem:[%s1 + $0x8f0] sm:$0xff]
  %v325 = vld [vmem:[%s1 + $0x8f8] sm:$0xff]
  %v328 = vperm.slane %v36, 0
  %v329 = vperm.slane %v36, 1
  %v330 = vperm.slane %v36, 2
  %v331 = vperm.slane %v36, 3
  %v332 = vperm.slane %v36, 4
  %v333 = vperm.slane %v36, 5
  %v334 = vperm.slane %v36, 6
  %v335 = vperm.slane %v36, 7
  %v336 = vperm.slane %v37, 0
  %346 = vmatpush.msra.mxu0 %v173
  %347 = vmatpush.msra.mxu0 %v164
  %348 = vmatpush.msra.mxu0 %v155
  %349 = vmatpush.msra.mxu0 %v146
  %350 = vmatpush.msra.mxu0 %v137
  %351 = vmatpush.msra.mxu0 %v128
  %352 = vmatpush.msra.mxu0 %v119
  %353 = vmatpush.msra.mxu0 %v110
  %354 = vmatpush.msra.mxu0 %v101
  %355 = vmatpush.msra.mxu0 %v92
  %356 = vmatpush.msra.mxu0 %v83
  %357 = vmatpush.msra.mxu0 %v74
  %358 = vmatpush.msra.mxu0 %v65
  %359 = vmatpush.msra.mxu0 %v56
  %360 = vmatpush.msra.mxu0 %v47
  %361 = vmatpush.msra.mxu0 %v38
  %362 = vmatmul.f32.gmra.mxu0 %v34
  %v363 = vpop.f32.mrf.mxu0
  %v364 = vadd.f32 %v328, %v363
  %365 = vdwg.mxu0
  %366 = vmatpush.msra.mxu0 %v317
  %367 = vmatpush.msra.mxu0 %v308
  %368 = vmatpush.msra.mxu0 %v299
  %369 = vmatpush.msra.mxu0 %v290
  %370 = vmatpush.msra.mxu0 %v281
  %371 = vmatpush.msra.mxu0 %v272
  %372 = vmatpush.msra.mxu0 %v263
  %373 = vmatpush.msra.mxu0 %v254
  %374 = vmatpush.msra.mxu0 %v245
  %375 = vmatpush.msra.mxu0 %v236
  %376 = vmatpush.msra.mxu0 %v227
  %377 = vmatpush.msra.mxu0 %v218
  %378 = vmatpush.msra.mxu0 %v209
  %379 = vmatpush.msra.mxu0 %v200
  %380 = vmatpush.msra.mxu0 %v191
  %381 = vmatpush.msra.mxu0 %v182
  %382 = vmatmul.f32.gmra.mxu0 %v35
  %v383 = vpop.f32.mrf.mxu0
  %v384 = vadd.f32 %v364, %v383
  %385 = vdwg.mxu0
  %386 = vmatpush.msra.mxu0 %v174
  %387 = vmatpush.msra.mxu0 %v165
  %388 = vmatpush.msra.mxu0 %v156
  %389 = vmatpush.msra.mxu0 %v147
  %390 = vmatpush.msra.mxu0 %v138
  %391 = vmatpush.msra.mxu0 %v129
  %392 = vmatpush.msra.mxu0 %v120
  %393 = vmatpush.msra.mxu0 %v111
  %394 = vmatpush.msra.mxu0 %v102
  %395 = vmatpush.msra.mxu0 %v93
  %396 = vmatpush.msra.mxu0 %v84
  %397 = vmatpush.msra.mxu0 %v75
  %398 = vmatpush.msra.mxu0 %v66
  %399 = vmatpush.msra.mxu0 %v57
  %400 = vmatpush.msra.mxu0 %v48
  %401 = vmatpush.msra.mxu0 %v39
  %402 = vmatmul.f32.gmra.mxu0 %v34
  %v403 = vpop.f32.mrf.mxu0
  %v404 = vadd.f32 %v329, %v403
  %405 = vdwg.mxu0
  %406 = vmatpush.msra.mxu0 %v318
  %407 = vmatpush.msra.mxu0 %v309
  %408 = vmatpush.msra.mxu0 %v300
  %409 = vmatpush.msra.mxu0 %v291
  %410 = vmatpush.msra.mxu0 %v282
  %411 = vmatpush.msra.mxu0 %v273
  %412 = vmatpush.msra.mxu0 %v264
  %413 = vmatpush.msra.mxu0 %v255
  %414 = vmatpush.msra.mxu0 %v246
  %415 = vmatpush.msra.mxu0 %v237
  %416 = vmatpush.msra.mxu0 %v228
  %417 = vmatpush.msra.mxu0 %v219
  %418 = vmatpush.msra.mxu0 %v210
  %419 = vmatpush.msra.mxu0 %v201
  %420 = vmatpush.msra.mxu0 %v192
  %421 = vmatpush.msra.mxu0 %v183
  %422 = vmatmul.f32.gmra.mxu0 %v35
  %v423 = vpop.f32.mrf.mxu0
  %v424 = vadd.f32 %v404, %v423
  %425 = vdwg.mxu0
  %426 = vmatpush.msra.mxu0 %v175
  %427 = vmatpush.msra.mxu0 %v166
  %428 = vmatpush.msra.mxu0 %v157
  %429 = vmatpush.msra.mxu0 %v148
  %430 = vmatpush.msra.mxu0 %v139
  %431 = vmatpush.msra.mxu0 %v130
  %432 = vmatpush.msra.mxu0 %v121
  %433 = vmatpush.msra.mxu0 %v112
  %434 = vmatpush.msra.mxu0 %v103
  %435 = vmatpush.msra.mxu0 %v94
  %436 = vmatpush.msra.mxu0 %v85
  %437 = vmatpush.msra.mxu0 %v76
  %438 = vmatpush.msra.mxu0 %v67
  %439 = vmatpush.msra.mxu0 %v58
  %440 = vmatpush.msra.mxu0 %v49
  %441 = vmatpush.msra.mxu0 %v40
  %442 = vmatmul.f32.gmra.mxu0 %v34
  %v443 = vpop.f32.mrf.mxu0
  %v444 = vadd.f32 %v330, %v443
  %445 = vdwg.mxu0
  %446 = vmatpush.msra.mxu0 %v319
  %447 = vmatpush.msra.mxu0 %v310
  %448 = vmatpush.msra.mxu0 %v301
  %449 = vmatpush.msra.mxu0 %v292
  %450 = vmatpush.msra.mxu0 %v283
  %451 = vmatpush.msra.mxu0 %v274
  %452 = vmatpush.msra.mxu0 %v265
  %453 = vmatpush.msra.mxu0 %v256
  %454 = vmatpush.msra.mxu0 %v247
  %455 = vmatpush.msra.mxu0 %v238
  %456 = vmatpush.msra.mxu0 %v229
  %457 = vmatpush.msra.mxu0 %v220
  %458 = vmatpush.msra.mxu0 %v211
  %459 = vmatpush.msra.mxu0 %v202
  %460 = vmatpush.msra.mxu0 %v193
  %461 = vmatpush.msra.mxu0 %v184
  %462 = vmatmul.f32.gmra.mxu0 %v35
  %v463 = vpop.f32.mrf.mxu0
  %v464 = vadd.f32 %v444, %v463
  %465 = vdwg.mxu0
  %466 = vmatpush.msra.mxu0 %v176
  %467 = vmatpush.msra.mxu0 %v167
  %468 = vmatpush.msra.mxu0 %v158
  %469 = vmatpush.msra.mxu0 %v149
  %470 = vmatpush.msra.mxu0 %v140
  %471 = vmatpush.msra.mxu0 %v131
  %472 = vmatpush.msra.mxu0 %v122
  %473 = vmatpush.msra.mxu0 %v113
  %474 = vmatpush.msra.mxu0 %v104
  %475 = vmatpush.msra.mxu0 %v95
  %476 = vmatpush.msra.mxu0 %v86
  %477 = vmatpush.msra.mxu0 %v77
  %478 = vmatpush.msra.mxu0 %v68
  %479 = vmatpush.msra.mxu0 %v59
  %480 = vmatpush.msra.mxu0 %v50
  %481 = vmatpush.msra.mxu0 %v41
  %482 = vmatmul.f32.gmra.mxu0 %v34
  %v483 = vpop.f32.mrf.mxu0
  %v484 = vadd.f32 %v331, %v483
  %485 = vdwg.mxu0
  %486 = vmatpush.msra.mxu0 %v320
  %487 = vmatpush.msra.mxu0 %v311
  %488 = vmatpush.msra.mxu0 %v302
  %489 = vmatpush.msra.mxu0 %v293
  %490 = vmatpush.msra.mxu0 %v284
  %491 = vmatpush.msra.mxu0 %v275
  %492 = vmatpush.msra.mxu0 %v266
  %493 = vmatpush.msra.mxu0 %v257
  %494 = vmatpush.msra.mxu0 %v248
  %495 = vmatpush.msra.mxu0 %v239
  %496 = vmatpush.msra.mxu0 %v230
  %497 = vmatpush.msra.mxu0 %v221
  %498 = vmatpush.msra.mxu0 %v212
  %499 = vmatpush.msra.mxu0 %v203
  %500 = vmatpush.msra.mxu0 %v194
  %501 = vmatpush.msra.mxu0 %v185
  %502 = vmatmul.f32.gmra.mxu0 %v35
  %v503 = vpop.f32.mrf.mxu0
  %v504 = vadd.f32 %v484, %v503
  %505 = vdwg.mxu0
  %506 = vmatpush.msra.mxu0 %v177
  %507 = vmatpush.msra.mxu0 %v168
  %508 = vmatpush.msra.mxu0 %v159
  %509 = vmatpush.msra.mxu0 %v150
  %510 = vmatpush.msra.mxu0 %v141
  %511 = vmatpush.msra.mxu0 %v132
  %512 = vmatpush.msra.mxu0 %v123
  %513 = vmatpush.msra.mxu0 %v114
  %514 = vmatpush.msra.mxu0 %v105
  %515 = vmatpush.msra.mxu0 %v96
  %516 = vmatpush.msra.mxu0 %v87
  %517 = vmatpush.msra.mxu0 %v78
  %518 = vmatpush.msra.mxu0 %v69
  %519 = vmatpush.msra.mxu0 %v60
  %520 = vmatpush.msra.mxu0 %v51
  %521 = vmatpush.msra.mxu0 %v42
  %522 = vmatmul.f32.gmra.mxu0 %v34
  %v523 = vpop.f32.mrf.mxu0
  %v524 = vadd.f32 %v332, %v523
  %525 = vdwg.mxu0
  %526 = vmatpush.msra.mxu0 %v321
  %527 = vmatpush.msra.mxu0 %v312
  %528 = vmatpush.msra.mxu0 %v303
  %529 = vmatpush.msra.mxu0 %v294
  %530 = vmatpush.msra.mxu0 %v285
  %531 = vmatpush.msra.mxu0 %v276
  %532 = vmatpush.msra.mxu0 %v267
  %533 = vmatpush.msra.mxu0 %v258
  %534 = vmatpush.msra.mxu0 %v249
  %535 = vmatpush.msra.mxu0 %v240
  %536 = vmatpush.msra.mxu0 %v231
  %537 = vmatpush.msra.mxu0 %v222
  %538 = vmatpush.msra.mxu0 %v213
  %539 = vmatpush.msra.mxu0 %v204
  %540 = vmatpush.msra.mxu0 %v195
  %541 = vmatpush.msra.mxu0 %v186
  %542 = vmatmul.f32.gmra.mxu0 %v35
  %v543 = vpop.f32.mrf.mxu0
  %v544 = vadd.f32 %v524, %v543
  %545 = vdwg.mxu0
  %546 = vmatpush.msra.mxu0 %v178
  %547 = vmatpush.msra.mxu0 %v169
  %548 = vmatpush.msra.mxu0 %v160
  %549 = vmatpush.msra.mxu0 %v151
  %550 = vmatpush.msra.mxu0 %v142
  %551 = vmatpush.msra.mxu0 %v133
  %552 = vmatpush.msra.mxu0 %v124
  %553 = vmatpush.msra.mxu0 %v115
  %554 = vmatpush.msra.mxu0 %v106
  %555 = vmatpush.msra.mxu0 %v97
  %556 = vmatpush.msra.mxu0 %v88
  %557 = vmatpush.msra.mxu0 %v79
  %558 = vmatpush.msra.mxu0 %v70
  %559 = vmatpush.msra.mxu0 %v61
  %560 = vmatpush.msra.mxu0 %v52
  %561 = vmatpush.msra.mxu0 %v43
  %562 = vmatmul.f32.gmra.mxu0 %v34
  %v563 = vpop.f32.mrf.mxu0
  %v564 = vadd.f32 %v333, %v563
  %565 = vdwg.mxu0
  %566 = vmatpush.msra.mxu0 %v322
  %567 = vmatpush.msra.mxu0 %v313
  %568 = vmatpush.msra.mxu0 %v304
  %569 = vmatpush.msra.mxu0 %v295
  %570 = vmatpush.msra.mxu0 %v286
  %571 = vmatpush.msra.mxu0 %v277
  %572 = vmatpush.msra.mxu0 %v268
  %573 = vmatpush.msra.mxu0 %v259
  %574 = vmatpush.msra.mxu0 %v250
  %575 = vmatpush.msra.mxu0 %v241
  %576 = vmatpush.msra.mxu0 %v232
  %577 = vmatpush.msra.mxu0 %v223
  %578 = vmatpush.msra.mxu0 %v214
  %579 = vmatpush.msra.mxu0 %v205
  %580 = vmatpush.msra.mxu0 %v196
  %581 = vmatpush.msra.mxu0 %v187
  %582 = vmatmul.f32.gmra.mxu0 %v35
  %v583 = vpop.f32.mrf.mxu0
  %v584 = vadd.f32 %v564, %v583
  %585 = vdwg.mxu0
  %586 = vmatpush.msra.mxu0 %v179
  %587 = vmatpush.msra.mxu0 %v170
  %588 = vmatpush.msra.mxu0 %v161
  %589 = vmatpush.msra.mxu0 %v152
  %590 = vmatpush.msra.mxu0 %v143
  %591 = vmatpush.msra.mxu0 %v134
  %592 = vmatpush.msra.mxu0 %v125
  %593 = vmatpush.msra.mxu0 %v116
  %594 = vmatpush.msra.mxu0 %v107
  %595 = vmatpush.msra.mxu0 %v98
  %596 = vmatpush.msra.mxu0 %v89
  %597 = vmatpush.msra.mxu0 %v80
  %598 = vmatpush.msra.mxu0 %v71
  %599 = vmatpush.msra.mxu0 %v62
  %600 = vmatpush.msra.mxu0 %v53
  %601 = vmatpush.msra.mxu0 %v44
  %602 = vmatmul.f32.gmra.mxu0 %v34
  %v603 = vpop.f32.mrf.mxu0
  %v604 = vadd.f32 %v334, %v603
  %605 = vdwg.mxu0
  %606 = vmatpush.msra.mxu0 %v323
  %607 = vmatpush.msra.mxu0 %v314
  %608 = vmatpush.msra.mxu0 %v305
  %609 = vmatpush.msra.mxu0 %v296
  %610 = vmatpush.msra.mxu0 %v287
  %611 = vmatpush.msra.mxu0 %v278
  %612 = vmatpush.msra.mxu0 %v269
  %613 = vmatpush.msra.mxu0 %v260
  %614 = vmatpush.msra.mxu0 %v251
  %615 = vmatpush.msra.mxu0 %v242
  %616 = vmatpush.msra.mxu0 %v233
  %617 = vmatpush.msra.mxu0 %v224
  %618 = vmatpush.msra.mxu0 %v215
  %619 = vmatpush.msra.mxu0 %v206
  %620 = vmatpush.msra.mxu0 %v197
  %621 = vmatpush.msra.mxu0 %v188
  %622 = vmatmul.f32.gmra.mxu0 %v35
  %v623 = vpop.f32.mrf.mxu0
  %v624 = vadd.f32 %v604, %v623
  %625 = vdwg.mxu0
  %626 = vmatpush.msra.mxu0 %v180
  %627 = vmatpush.msra.mxu0 %v171
  %628 = vmatpush.msra.mxu0 %v162
  %629 = vmatpush.msra.mxu0 %v153
  %630 = vmatpush.msra.mxu0 %v144
  %631 = vmatpush.msra.mxu0 %v135
  %632 = vmatpush.msra.mxu0 %v126
  %633 = vmatpush.msra.mxu0 %v117
  %634 = vmatpush.msra.mxu0 %v108
  %635 = vmatpush.msra.mxu0 %v99
  %636 = vmatpush.msra.mxu0 %v90
  %637 = vmatpush.msra.mxu0 %v81
  %638 = vmatpush.msra.mxu0 %v72
  %639 = vmatpush.msra.mxu0 %v63
  %640 = vmatpush.msra.mxu0 %v54
  %641 = vmatpush.msra.mxu0 %v45
  %642 = vmatmul.f32.gmra.mxu0 %v34
  %v643 = vpop.f32.mrf.mxu0
  %v644 = vadd.f32 %v335, %v643
  %645 = vdwg.mxu0
  %646 = vmatpush.msra.mxu0 %v324
  %647 = vmatpush.msra.mxu0 %v315
  %648 = vmatpush.msra.mxu0 %v306
  %649 = vmatpush.msra.mxu0 %v297
  %650 = vmatpush.msra.mxu0 %v288
  %651 = vmatpush.msra.mxu0 %v279
  %652 = vmatpush.msra.mxu0 %v270
  %653 = vmatpush.msra.mxu0 %v261
  %654 = vmatpush.msra.mxu0 %v252
  %655 = vmatpush.msra.mxu0 %v243
  %656 = vmatpush.msra.mxu0 %v234
  %657 = vmatpush.msra.mxu0 %v225
  %658 = vmatpush.msra.mxu0 %v216
  %659 = vmatpush.msra.mxu0 %v207
  %660 = vmatpush.msra.mxu0 %v198
  %661 = vmatpush.msra.mxu0 %v189
  %662 = vmatmul.f32.gmra.mxu0 %v35
  %v663 = vpop.f32.mrf.mxu0
  %v664 = vadd.f32 %v644, %v663
  %665 = vdwg.mxu0
  %666 = vmatpush.msra.mxu0 %v181
  %667 = vmatpush.msra.mxu0 %v172
  %668 = vmatpush.msra.mxu0 %v163
  %669 = vmatpush.msra.mxu0 %v154
  %670 = vmatpush.msra.mxu0 %v145
  %671 = vmatpush.msra.mxu0 %v136
  %672 = vmatpush.msra.mxu0 %v127
  %673 = vmatpush.msra.mxu0 %v118
  %674 = vmatpush.msra.mxu0 %v109
  %675 = vmatpush.msra.mxu0 %v100
  %676 = vmatpush.msra.mxu0 %v91
  %677 = vmatpush.msra.mxu0 %v82
  %678 = vmatpush.msra.mxu0 %v73
  %679 = vmatpush.msra.mxu0 %v64
  %680 = vmatpush.msra.mxu0 %v55
  %681 = vmatpush.msra.mxu0 %v46
  %682 = vmatmul.f32.gmra.mxu0 %v34
  %v683 = vpop.f32.mrf.mxu0
  %v684 = vadd.f32 %v336, %v683
  %685 = vdwg.mxu0
  %686 = vmatpush.msra.mxu0 %v325
  %687 = vmatpush.msra.mxu0 %v316
  %688 = vmatpush.msra.mxu0 %v307
  %689 = vmatpush.msra.mxu0 %v298
  %690 = vmatpush.msra.mxu0 %v289
  %691 = vmatpush.msra.mxu0 %v280
  %692 = vmatpush.msra.mxu0 %v271
  %693 = vmatpush.msra.mxu0 %v262
  %694 = vmatpush.msra.mxu0 %v253
  %695 = vmatpush.msra.mxu0 %v244
  %696 = vmatpush.msra.mxu0 %v235
  %697 = vmatpush.msra.mxu0 %v226
  %698 = vmatpush.msra.mxu0 %v217
  %699 = vmatpush.msra.mxu0 %v208
  %700 = vmatpush.msra.mxu0 %v199
  %701 = vmatpush.msra.mxu0 %v190
  %702 = vmatmul.f32.gmra.mxu0 %v35
  %v703 = vpop.f32.mrf.mxu0
  %v704 = vadd.f32 %v684, %v703
  %705 = vdwg.mxu0
  %v706 = vmax.f32 %v384, 0.0
  %v707 = vmax.f32 %v424, 0.0
  %v708 = vmax.f32 %v464, 0.0
  %v709 = vmax.f32 %v504, 0.0
  %v710 = vmax.f32 %v544, 0.0
  %v711 = vmax.f32 %v584, 0.0
  %v712 = vmax.f32 %v624, 0.0
  %v713 = vmax.f32 %v664, 0.0
  %v714 = vmax.f32 %v704, 0.0
  %s715 = scalar_lea.vmem %s1, 2304
  %v716 = vld [vmem:[%s715] sm:$0xff]
  %v717 = vld [vmem:[%s715 + $0x8] sm:$0xff]
  %v718 = vld [vmem:[%s715 + $0x10] sm:$0xff]
  %v719 = vld [vmem:[%s715 + $0x18] sm:$0xff]
  %v720 = vld [vmem:[%s715 + $0x20] sm:$0xff]
  %v721 = vld [vmem:[%s715 + $0x28] sm:$0xff]
  %v722 = vld [vmem:[%s715 + $0x30] sm:$0xff]
  %v723 = vld [vmem:[%s715 + $0x38] sm:$0xff]
  %v724 = vld [vmem:[%s715 + $0x40] sm:$0xff]
  %v725 = vld [vmem:[%s715 + $0x48] sm:$0xff]
  %v726 = vld [vmem:[%s715 + $0x50] sm:$0xff]
  %v727 = vld [vmem:[%s715 + $0x58] sm:$0xff]
  %v728 = vld [vmem:[%s715 + $0x60] sm:$0xff]
  %v729 = vld [vmem:[%s715 + $0x68] sm:$0xff]
  %v730 = vld [vmem:[%s715 + $0x70] sm:$0xff]
  %v731 = vld [vmem:[%s715 + $0x78] sm:$0xff]
  %v732 = vld [vmem:[%s715 + $0x80] sm:$0xff]
  %v733 = vld [vmem:[%s715 + $0x88] sm:$0xff]
  %v734 = vld [vmem:[%s715 + $0x90] sm:$0xff]
  %v735 = vld [vmem:[%s715 + $0x98] sm:$0xff]
  %v736 = vld [vmem:[%s715 + $0xa0] sm:$0xff]
  %v737 = vld [vmem:[%s715 + $0xa8] sm:$0xff]
  %v738 = vld [vmem:[%s715 + $0xb0] sm:$0xff]
  %v739 = vld [vmem:[%s715 + $0xb8] sm:$0xff]
  %v740 = vld [vmem:[%s715 + $0xc0] sm:$0xff]
  %v741 = vld [vmem:[%s715 + $0xc8] sm:$0xff]
  %v742 = vld [vmem:[%s715 + $0xd0] sm:$0xff]
  %v743 = vld [vmem:[%s715 + $0xd8] sm:$0xff]
  %v744 = vld [vmem:[%s715 + $0xe0] sm:$0xff]
  %v745 = vld [vmem:[%s715 + $0xe8] sm:$0xff]
  %v746 = vld [vmem:[%s715 + $0xf0] sm:$0xff]
  %v747 = vld [vmem:[%s715 + $0xf8] sm:$0xff]
  %v748 = vld [vmem:[%s715 + $0x100] sm:$0xff]
  %v749 = vld [vmem:[%s715 + $0x108] sm:$0xff]
  %v750 = vld [vmem:[%s715 + $0x110] sm:$0xff]
  %v751 = vld [vmem:[%s715 + $0x118] sm:$0xff]
  %v752 = vld [vmem:[%s715 + $0x120] sm:$0xff]
  %v753 = vld [vmem:[%s715 + $0x128] sm:$0xff]
  %v754 = vld [vmem:[%s715 + $0x130] sm:$0xff]
  %v755 = vld [vmem:[%s715 + $0x138] sm:$0xff]
  %v756 = vld [vmem:[%s715 + $0x140] sm:$0xff]
  %v757 = vld [vmem:[%s715 + $0x148] sm:$0xff]
  %v758 = vld [vmem:[%s715 + $0x150] sm:$0xff]
  %v759 = vld [vmem:[%s715 + $0x158] sm:$0xff]
  %v760 = vld [vmem:[%s715 + $0x160] sm:$0xff]
  %v761 = vld [vmem:[%s715 + $0x168] sm:$0xff]
  %v762 = vld [vmem:[%s715 + $0x170] sm:$0xff]
  %v763 = vld [vmem:[%s715 + $0x178] sm:$0xff]
  %v764 = vld [vmem:[%s715 + $0x180] sm:$0xff]
  %v765 = vld [vmem:[%s715 + $0x188] sm:$0xff]
  %v766 = vld [vmem:[%s715 + $0x190] sm:$0xff]
  %v767 = vld [vmem:[%s715 + $0x198] sm:$0xff]
  %v768 = vld [vmem:[%s715 + $0x1a0] sm:$0xff]
  %v769 = vld [vmem:[%s715 + $0x1a8] sm:$0xff]
  %v770 = vld [vmem:[%s715 + $0x1b0] sm:$0xff]
  %v771 = vld [vmem:[%s715 + $0x1b8] sm:$0xff]
  %v772 = vld [vmem:[%s715 + $0x1c0] sm:$0xff]
  %v773 = vld [vmem:[%s715 + $0x1c8] sm:$0xff]
  %v774 = vld [vmem:[%s715 + $0x1d0] sm:$0xff]
  %v775 = vld [vmem:[%s715 + $0x1d8] sm:$0xff]
  %v776 = vld [vmem:[%s715 + $0x1e0] sm:$0xff]
  %v777 = vld [vmem:[%s715 + $0x1e8] sm:$0xff]
  %v778 = vld [vmem:[%s715 + $0x1f0] sm:$0xff]
  %v779 = vld [vmem:[%s715 + $0x1f8] sm:$0xff]
  %v780 = vld [vmem:[%s715 + $0x200] sm:$0xff]
  %v781 = vld [vmem:[%s715 + $0x208] sm:$0xff]
  %v782 = vld [vmem:[%s715 + $0x210] sm:$0xff]
  %v783 = vld [vmem:[%s715 + $0x218] sm:$0xff]
  %v784 = vld [vmem:[%s715 + $0x220] sm:$0xff]
  %v785 = vld [vmem:[%s715 + $0x228] sm:$0xff]
  %v786 = vld [vmem:[%s715 + $0x230] sm:$0xff]
  %v787 = vld [vmem:[%s715 + $0x238] sm:$0xff]
  %v788 = vld [vmem:[%s715 + $0x240] sm:$0xff]
  %v789 = vld [vmem:[%s715 + $0x248] sm:$0xff]
  %v790 = vld [vmem:[%s715 + $0x250] sm:$0xff]
  %v791 = vld [vmem:[%s715 + $0x258] sm:$0xff]
  %v792 = vld [vmem:[%s715 + $0x260] sm:$0xff]
  %v793 = vld [vmem:[%s715 + $0x268] sm:$0xff]
  %v794 = vld [vmem:[%s715 + $0x270] sm:$0xff]
  %v795 = vld [vmem:[%s715 + $0x278] sm:$0xff]
  %v796 = vld [vmem:[%s715 + $0x280] sm:$0xff]
  %v797 = vld [vmem:[%s715 + $0x288] sm:$0xff]
  %v798 = vld [vmem:[%s715 + $0x290] sm:$0xff]
  %v799 = vld [vmem:[%s715 + $0x298] sm:$0xff]
  %v800 = vld [vmem:[%s715 + $0x2a0] sm:$0xff]
  %v801 = vld [vmem:[%s715 + $0x2a8] sm:$0xff]
  %v802 = vld [vmem:[%s715 + $0x2b0] sm:$0xff]
  %v803 = vld [vmem:[%s715 + $0x2b8] sm:$0xff]
  %v804 = vld [vmem:[%s715 + $0x2c0] sm:$0xff]
  %v805 = vld [vmem:[%s715 + $0x2c8] sm:$0xff]
  %v806 = vld [vmem:[%s715 + $0x2d0] sm:$0xff]
  %v807 = vld [vmem:[%s715 + $0x2d8] sm:$0xff]
  %v808 = vld [vmem:[%s715 + $0x2e0] sm:$0xff]
  %v809 = vld [vmem:[%s715 + $0x2e8] sm:$0xff]
  %v810 = vld [vmem:[%s715 + $0x2f0] sm:$0xff]
  %v811 = vld [vmem:[%s715 + $0x2f8] sm:$0xff]
  %v812 = vld [vmem:[%s715 + $0x300] sm:$0xff]
  %v813 = vld [vmem:[%s715 + $0x308] sm:$0xff]
  %v814 = vld [vmem:[%s715 + $0x310] sm:$0xff]
  %v815 = vld [vmem:[%s715 + $0x318] sm:$0xff]
  %v816 = vld [vmem:[%s715 + $0x320] sm:$0xff]
  %v817 = vld [vmem:[%s715 + $0x328] sm:$0xff]
  %v818 = vld [vmem:[%s715 + $0x330] sm:$0xff]
  %v819 = vld [vmem:[%s715 + $0x338] sm:$0xff]
  %v820 = vld [vmem:[%s715 + $0x340] sm:$0xff]
  %v821 = vld [vmem:[%s715 + $0x348] sm:$0xff]
  %v822 = vld [vmem:[%s715 + $0x350] sm:$0xff]
  %v823 = vld [vmem:[%s715 + $0x358] sm:$0xff]
  %v824 = vld [vmem:[%s715 + $0x360] sm:$0xff]
  %v825 = vld [vmem:[%s715 + $0x368] sm:$0xff]
  %v826 = vld [vmem:[%s715 + $0x370] sm:$0xff]
  %v827 = vld [vmem:[%s715 + $0x378] sm:$0xff]
  %v828 = vld [vmem:[%s715 + $0x380] sm:$0xff]
  %v829 = vld [vmem:[%s715 + $0x388] sm:$0xff]
  %v830 = vld [vmem:[%s715 + $0x390] sm:$0xff]
  %v831 = vld [vmem:[%s715 + $0x398] sm:$0xff]
  %v832 = vld [vmem:[%s715 + $0x3a0] sm:$0xff]
  %v833 = vld [vmem:[%s715 + $0x3a8] sm:$0xff]
  %v834 = vld [vmem:[%s715 + $0x3b0] sm:$0xff]
  %v835 = vld [vmem:[%s715 + $0x3b8] sm:$0xff]
  %v836 = vld [vmem:[%s715 + $0x3c0] sm:$0xff]
  %v837 = vld [vmem:[%s715 + $0x3c8] sm:$0xff]
  %v838 = vld [vmem:[%s715 + $0x3d0] sm:$0xff]
  %v839 = vld [vmem:[%s715 + $0x3d8] sm:$0xff]
  %v840 = vld [vmem:[%s715 + $0x3e0] sm:$0xff]
  %v841 = vld [vmem:[%s715 + $0x3e8] sm:$0xff]
  %v842 = vld [vmem:[%s715 + $0x3f0] sm:$0xff]
  %v843 = vld [vmem:[%s715 + $0x3f8] sm:$0xff]
  %v844 = vld [vmem:[%s715 + $0x400] sm:$0xff]
  %v845 = vld [vmem:[%s715 + $0x408] sm:$0xff]
  %v846 = vld [vmem:[%s715 + $0x410] sm:$0xff]
  %v847 = vld [vmem:[%s715 + $0x418] sm:$0xff]
  %v848 = vld [vmem:[%s715 + $0x420] sm:$0xff]
  %v849 = vld [vmem:[%s715 + $0x428] sm:$0xff]
  %v850 = vld [vmem:[%s715 + $0x430] sm:$0xff]
  %v851 = vld [vmem:[%s715 + $0x438] sm:$0xff]
  %v852 = vld [vmem:[%s715 + $0x440] sm:$0xff]
  %v853 = vld [vmem:[%s715 + $0x448] sm:$0xff]
  %v854 = vld [vmem:[%s715 + $0x450] sm:$0xff]
  %v855 = vld [vmem:[%s715 + $0x458] sm:$0xff]
  %v856 = vld [vmem:[%s715 + $0x460] sm:$0xff]
  %v857 = vld [vmem:[%s715 + $0x468] sm:$0xff]
  %v858 = vld [vmem:[%s715 + $0x470] sm:$0xff]
  %v859 = vld [vmem:[%s715 + $0x478] sm:$0xff]
  %v860 = vld [vmem:[%s715 + $0x480] sm:$0xff]
  %v861 = vld [vmem:[%s715 + $0x488] sm:$0xff]
  %v862 = vld [vmem:[%s715 + $0x490] sm:$0xff]
  %v863 = vld [vmem:[%s715 + $0x498] sm:$0xff]
  %v864 = vld [vmem:[%s715 + $0x4a0] sm:$0xff]
  %v865 = vld [vmem:[%s715 + $0x4a8] sm:$0xff]
  %v866 = vld [vmem:[%s715 + $0x4b0] sm:$0xff]
  %v867 = vld [vmem:[%s715 + $0x4b8] sm:$0xff]
  %v868 = vld [vmem:[%s715 + $0x4c0] sm:$0xff]
  %v869 = vld [vmem:[%s715 + $0x4c8] sm:$0xff]
  %v870 = vld [vmem:[%s715 + $0x4d0] sm:$0xff]
  %v871 = vld [vmem:[%s715 + $0x4d8] sm:$0xff]
  %v872 = vld [vmem:[%s715 + $0x4e0] sm:$0xff]
  %v873 = vld [vmem:[%s715 + $0x4e8] sm:$0xff]
  %v874 = vld [vmem:[%s715 + $0x4f0] sm:$0xff]
  %v875 = vld [vmem:[%s715 + $0x4f8] sm:$0xff]
  %v876 = vld [vmem:[%s715 + $0x500] sm:$0xff]
  %v877 = vld [vmem:[%s715 + $0x508] sm:$0xff]
  %v878 = vld [vmem:[%s715 + $0x510] sm:$0xff]
  %v879 = vld [vmem:[%s715 + $0x518] sm:$0xff]
  %v880 = vld [vmem:[%s715 + $0x520] sm:$0xff]
  %v881 = vld [vmem:[%s715 + $0x528] sm:$0xff]
  %v882 = vld [vmem:[%s715 + $0x530] sm:$0xff]
  %v883 = vld [vmem:[%s715 + $0x538] sm:$0xff]
  %v884 = vld [vmem:[%s715 + $0x540] sm:$0xff]
  %v885 = vld [vmem:[%s715 + $0x548] sm:$0xff]
  %v886 = vld [vmem:[%s715 + $0x550] sm:$0xff]
  %v887 = vld [vmem:[%s715 + $0x558] sm:$0xff]
  %v888 = vld [vmem:[%s715 + $0x560] sm:$0xff]
  %v889 = vld [vmem:[%s715 + $0x568] sm:$0xff]
  %v890 = vld [vmem:[%s715 + $0x570] sm:$0xff]
  %v891 = vld [vmem:[%s715 + $0x578] sm:$0xff]
  %v892 = vld [vmem:[%s715 + $0x580] sm:$0xff]
  %v893 = vld [vmem:[%s715 + $0x588] sm:$0xff]
  %v894 = vld [vmem:[%s715 + $0x590] sm:$0xff]
  %v895 = vld [vmem:[%s715 + $0x598] sm:$0xff]
  %v896 = vld [vmem:[%s715 + $0x5a0] sm:$0xff]
  %v897 = vld [vmem:[%s715 + $0x5a8] sm:$0xff]
  %v898 = vld [vmem:[%s715 + $0x5b0] sm:$0xff]
  %v899 = vld [vmem:[%s715 + $0x5b8] sm:$0xff]
  %v900 = vld [vmem:[%s715 + $0x5c0] sm:$0xff]
  %v901 = vld [vmem:[%s715 + $0x5c8] sm:$0xff]
  %v902 = vld [vmem:[%s715 + $0x5d0] sm:$0xff]
  %v903 = vld [vmem:[%s715 + $0x5d8] sm:$0xff]
  %v904 = vld [vmem:[%s715 + $0x5e0] sm:$0xff]
  %v905 = vld [vmem:[%s715 + $0x5e8] sm:$0xff]
  %v906 = vld [vmem:[%s715 + $0x5f0] sm:$0xff]
  %v907 = vld [vmem:[%s715 + $0x5f8] sm:$0xff]
  %v908 = vld [vmem:[%s715 + $0x600] sm:$0xff]
  %v909 = vld [vmem:[%s715 + $0x608] sm:$0xff]
  %v910 = vld [vmem:[%s715 + $0x610] sm:$0xff]
  %v911 = vld [vmem:[%s715 + $0x618] sm:$0xff]
  %v912 = vld [vmem:[%s715 + $0x620] sm:$0xff]
  %v913 = vld [vmem:[%s715 + $0x628] sm:$0xff]
  %v914 = vld [vmem:[%s715 + $0x630] sm:$0xff]
  %v915 = vld [vmem:[%s715 + $0x638] sm:$0xff]
  %v916 = vld [vmem:[%s715 + $0x640] sm:$0xff]
  %v917 = vld [vmem:[%s715 + $0x648] sm:$0xff]
  %v918 = vld [vmem:[%s715 + $0x650] sm:$0xff]
  %v919 = vld [vmem:[%s715 + $0x658] sm:$0xff]
  %v920 = vld [vmem:[%s715 + $0x660] sm:$0xff]
  %v921 = vld [vmem:[%s715 + $0x668] sm:$0xff]
  %v922 = vld [vmem:[%s715 + $0x670] sm:$0xff]
  %v923 = vld [vmem:[%s715 + $0x678] sm:$0xff]
  %v924 = vld [vmem:[%s715 + $0x680] sm:$0xff]
  %v925 = vld [vmem:[%s715 + $0x688] sm:$0xff]
  %v926 = vld [vmem:[%s715 + $0x690] sm:$0xff]
  %v927 = vld [vmem:[%s715 + $0x698] sm:$0xff]
  %v928 = vld [vmem:[%s715 + $0x6a0] sm:$0xff]
  %v929 = vld [vmem:[%s715 + $0x6a8] sm:$0xff]
  %v930 = vld [vmem:[%s715 + $0x6b0] sm:$0xff]
  %v931 = vld [vmem:[%s715 + $0x6b8] sm:$0xff]
  %v932 = vld [vmem:[%s715 + $0x6c0] sm:$0xff]
  %v933 = vld [vmem:[%s715 + $0x6c8] sm:$0xff]
  %v934 = vld [vmem:[%s715 + $0x6d0] sm:$0xff]
  %v935 = vld [vmem:[%s715 + $0x6d8] sm:$0xff]
  %v936 = vld [vmem:[%s715 + $0x6e0] sm:$0xff]
  %v937 = vld [vmem:[%s715 + $0x6e8] sm:$0xff]
  %v938 = vld [vmem:[%s715 + $0x6f0] sm:$0xff]
  %v939 = vld [vmem:[%s715 + $0x6f8] sm:$0xff]
  %v940 = vld [vmem:[%s715 + $0x700] sm:$0xff]
  %v941 = vld [vmem:[%s715 + $0x708] sm:$0xff]
  %v942 = vld [vmem:[%s715 + $0x710] sm:$0xff]
  %v943 = vld [vmem:[%s715 + $0x718] sm:$0xff]
  %v944 = vld [vmem:[%s715 + $0x720] sm:$0xff]
  %v945 = vld [vmem:[%s715 + $0x728] sm:$0xff]
  %v946 = vld [vmem:[%s715 + $0x730] sm:$0xff]
  %v947 = vld [vmem:[%s715 + $0x738] sm:$0xff]
  %v948 = vld [vmem:[%s715 + $0x740] sm:$0xff]
  %v949 = vld [vmem:[%s715 + $0x748] sm:$0xff]
  %v950 = vld [vmem:[%s715 + $0x750] sm:$0xff]
  %v951 = vld [vmem:[%s715 + $0x758] sm:$0xff]
  %v952 = vld [vmem:[%s715 + $0x760] sm:$0xff]
  %v953 = vld [vmem:[%s715 + $0x768] sm:$0xff]
  %v954 = vld [vmem:[%s715 + $0x770] sm:$0xff]
  %v955 = vld [vmem:[%s715 + $0x778] sm:$0xff]
  %v956 = vld [vmem:[%s715 + $0x780] sm:$0xff]
  %v957 = vld [vmem:[%s715 + $0x788] sm:$0xff]
  %v958 = vld [vmem:[%s715 + $0x790] sm:$0xff]
  %v959 = vld [vmem:[%s715 + $0x798] sm:$0xff]
  %v960 = vld [vmem:[%s715 + $0x7a0] sm:$0xff]
  %v961 = vld [vmem:[%s715 + $0x7a8] sm:$0xff]
  %v962 = vld [vmem:[%s715 + $0x7b0] sm:$0xff]
  %v963 = vld [vmem:[%s715 + $0x7b8] sm:$0xff]
  %v964 = vld [vmem:[%s715 + $0x7c0] sm:$0xff]
  %v965 = vld [vmem:[%s715 + $0x7c8] sm:$0xff]
  %v966 = vld [vmem:[%s715 + $0x7d0] sm:$0xff]
  %v967 = vld [vmem:[%s715 + $0x7d8] sm:$0xff]
  %v968 = vld [vmem:[%s715 + $0x7e0] sm:$0xff]
  %v969 = vld [vmem:[%s715 + $0x7e8] sm:$0xff]
  %v970 = vld [vmem:[%s715 + $0x7f0] sm:$0xff]
  %v971 = vld [vmem:[%s715 + $0x7f8] sm:$0xff]
  %v972 = vld [vmem:[%s715 + $0x800] sm:$0xff]
  %v973 = vld [vmem:[%s715 + $0x808] sm:$0xff]
  %v974 = vld [vmem:[%s715 + $0x810] sm:$0xff]
  %v975 = vld [vmem:[%s715 + $0x818] sm:$0xff]
  %v976 = vld [vmem:[%s715 + $0x820] sm:$0xff]
  %v977 = vld [vmem:[%s715 + $0x828] sm:$0xff]
  %v978 = vld [vmem:[%s715 + $0x830] sm:$0xff]
  %v979 = vld [vmem:[%s715 + $0x838] sm:$0xff]
  %v980 = vld [vmem:[%s715 + $0x840] sm:$0xff]
  %v981 = vld [vmem:[%s715 + $0x848] sm:$0xff]
  %v982 = vld [vmem:[%s715 + $0x850] sm:$0xff]
  %v983 = vld [vmem:[%s715 + $0x858] sm:$0xff]
  %v984 = vld [vmem:[%s715 + $0x860] sm:$0xff]
  %v985 = vld [vmem:[%s715 + $0x868] sm:$0xff]
  %v986 = vld [vmem:[%s715 + $0x870] sm:$0xff]
  %v987 = vld [vmem:[%s715 + $0x878] sm:$0xff]
  %v988 = vld [vmem:[%s715 + $0x880] sm:$0xff]
  %v989 = vld [vmem:[%s715 + $0x888] sm:$0xff]
  %v990 = vld [vmem:[%s715 + $0x890] sm:$0xff]
  %v991 = vld [vmem:[%s715 + $0x898] sm:$0xff]
  %v992 = vld [vmem:[%s715 + $0x8a0] sm:$0xff]
  %v993 = vld [vmem:[%s715 + $0x8a8] sm:$0xff]
  %v994 = vld [vmem:[%s715 + $0x8b0] sm:$0xff]
  %v995 = vld [vmem:[%s715 + $0x8b8] sm:$0xff]
  %v996 = vld [vmem:[%s715 + $0x8c0] sm:$0xff]
  %v997 = vld [vmem:[%s715 + $0x8c8] sm:$0xff]
  %v998 = vld [vmem:[%s715 + $0x8d0] sm:$0xff]
  %v999 = vld [vmem:[%s715 + $0x8d8] sm:$0xff]
  %v1000 = vld [vmem:[%s715 + $0x8e0] sm:$0xff]
  %v1001 = vld [vmem:[%s715 + $0x8e8] sm:$0xff]
  %v1002 = vld [vmem:[%s715 + $0x8f0] sm:$0xff]
  %v1003 = vld [vmem:[%s715 + $0x8f8] sm:$0xff]
  %1004 = vmatpush.msra.mxu0 %v851
  %1005 = vmatpush.msra.mxu0 %v842
  %1006 = vmatpush.msra.mxu0 %v833
  %1007 = vmatpush.msra.mxu0 %v824
  %1008 = vmatpush.msra.mxu0 %v815
  %1009 = vmatpush.msra.mxu0 %v806
  %1010 = vmatpush.msra.mxu0 %v797
  %1011 = vmatpush.msra.mxu0 %v788
  %1012 = vmatpush.msra.mxu0 %v779
  %1013 = vmatpush.msra.mxu0 %v770
  %1014 = vmatpush.msra.mxu0 %v761
  %1015 = vmatpush.msra.mxu0 %v752
  %1016 = vmatpush.msra.mxu0 %v743
  %1017 = vmatpush.msra.mxu0 %v734
  %1018 = vmatpush.msra.mxu0 %v725
  %1019 = vmatpush.msra.mxu0 %v716
  %1020 = vmatmul.f32.gmra.mxu0 %v34
  %v1021 = vpop.f32.mrf.mxu0
  %v1022 = vadd.f32 %v328, %v1021
  %1023 = vdwg.mxu0
  %1024 = vmatpush.msra.mxu0 %v995
  %1025 = vmatpush.msra.mxu0 %v986
  %1026 = vmatpush.msra.mxu0 %v977
  %1027 = vmatpush.msra.mxu0 %v968
  %1028 = vmatpush.msra.mxu0 %v959
  %1029 = vmatpush.msra.mxu0 %v950
  %1030 = vmatpush.msra.mxu0 %v941
  %1031 = vmatpush.msra.mxu0 %v932
  %1032 = vmatpush.msra.mxu0 %v923
  %1033 = vmatpush.msra.mxu0 %v914
  %1034 = vmatpush.msra.mxu0 %v905
  %1035 = vmatpush.msra.mxu0 %v896
  %1036 = vmatpush.msra.mxu0 %v887
  %1037 = vmatpush.msra.mxu0 %v878
  %1038 = vmatpush.msra.mxu0 %v869
  %1039 = vmatpush.msra.mxu0 %v860
  %1040 = vmatmul.f32.gmra.mxu0 %v35
  %v1041 = vpop.f32.mrf.mxu0
  %v1042 = vadd.f32 %v1022, %v1041
  %1043 = vdwg.mxu0
  %1044 = vmatpush.msra.mxu0 %v852
  %1045 = vmatpush.msra.mxu0 %v843
  %1046 = vmatpush.msra.mxu0 %v834
  %1047 = vmatpush.msra.mxu0 %v825
  %1048 = vmatpush.msra.mxu0 %v816
  %1049 = vmatpush.msra.mxu0 %v807
  %1050 = vmatpush.msra.mxu0 %v798
  %1051 = vmatpush.msra.mxu0 %v789
  %1052 = vmatpush.msra.mxu0 %v780
  %1053 = vmatpush.msra.mxu0 %v771
  %1054 = vmatpush.msra.mxu0 %v762
  %1055 = vmatpush.msra.mxu0 %v753
  %1056 = vmatpush.msra.mxu0 %v744
  %1057 = vmatpush.msra.mxu0 %v735
  %1058 = vmatpush.msra.mxu0 %v726
  %1059 = vmatpush.msra.mxu0 %v717
  %1060 = vmatmul.f32.gmra.mxu0 %v34
  %v1061 = vpop.f32.mrf.mxu0
  %v1062 = vadd.f32 %v329, %v1061
  %1063 = vdwg.mxu0
  %1064 = vmatpush.msra.mxu0 %v996
  %1065 = vmatpush.msra.mxu0 %v987
  %1066 = vmatpush.msra.mxu0 %v978
  %1067 = vmatpush.msra.mxu0 %v969
  %1068 = vmatpush.msra.mxu0 %v960
  %1069 = vmatpush.msra.mxu0 %v951
  %1070 = vmatpush.msra.mxu0 %v942
  %1071 = vmatpush.msra.mxu0 %v933
  %1072 = vmatpush.msra.mxu0 %v924
  %1073 = vmatpush.msra.mxu0 %v915
  %1074 = vmatpush.msra.mxu0 %v906
  %1075 = vmatpush.msra.mxu0 %v897
  %1076 = vmatpush.msra.mxu0 %v888
  %1077 = vmatpush.msra.mxu0 %v879
  %1078 = vmatpush.msra.mxu0 %v870
  %1079 = vmatpush.msra.mxu0 %v861
  %1080 = vmatmul.f32.gmra.mxu0 %v35
  %v1081 = vpop.f32.mrf.mxu0
  %v1082 = vadd.f32 %v1062, %v1081
  %1083 = vdwg.mxu0
  %1084 = vmatpush.msra.mxu0 %v853
  %1085 = vmatpush.msra.mxu0 %v844
  %1086 = vmatpush.msra.mxu0 %v835
  %1087 = vmatpush.msra.mxu0 %v826
  %1088 = vmatpush.msra.mxu0 %v817
  %1089 = vmatpush.msra.mxu0 %v808
  %1090 = vmatpush.msra.mxu0 %v799
  %1091 = vmatpush.msra.mxu0 %v790
  %1092 = vmatpush.msra.mxu0 %v781
  %1093 = vmatpush.msra.mxu0 %v772
  %1094 = vmatpush.msra.mxu0 %v763
  %1095 = vmatpush.msra.mxu0 %v754
  %1096 = vmatpush.msra.mxu0 %v745
  %1097 = vmatpush.msra.mxu0 %v736
  %1098 = vmatpush.msra.mxu0 %v727
  %1099 = vmatpush.msra.mxu0 %v718
  %1100 = vmatmul.f32.gmra.mxu0 %v34
  %v1101 = vpop.f32.mrf.mxu0
  %v1102 = vadd.f32 %v330, %v1101
  %1103 = vdwg.mxu0
  %1104 = vmatpush.msra.mxu0 %v997
  %1105 = vmatpush.msra.mxu0 %v988
  %1106 = vmatpush.msra.mxu0 %v979
  %1107 = vmatpush.msra.mxu0 %v970
  %1108 = vmatpush.msra.mxu0 %v961
  %1109 = vmatpush.msra.mxu0 %v952
  %1110 = vmatpush.msra.mxu0 %v943
  %1111 = vmatpush.msra.mxu0 %v934
  %1112 = vmatpush.msra.mxu0 %v925
  %1113 = vmatpush.msra.mxu0 %v916
  %1114 = vmatpush.msra.mxu0 %v907
  %1115 = vmatpush.msra.mxu0 %v898
  %1116 = vmatpush.msra.mxu0 %v889
  %1117 = vmatpush.msra.mxu0 %v880
  %1118 = vmatpush.msra.mxu0 %v871
  %1119 = vmatpush.msra.mxu0 %v862
  %1120 = vmatmul.f32.gmra.mxu0 %v35
  %v1121 = vpop.f32.mrf.mxu0
  %v1122 = vadd.f32 %v1102, %v1121
  %1123 = vdwg.mxu0
  %1124 = vmatpush.msra.mxu0 %v854
  %1125 = vmatpush.msra.mxu0 %v845
  %1126 = vmatpush.msra.mxu0 %v836
  %1127 = vmatpush.msra.mxu0 %v827
  %1128 = vmatpush.msra.mxu0 %v818
  %1129 = vmatpush.msra.mxu0 %v809
  %1130 = vmatpush.msra.mxu0 %v800
  %1131 = vmatpush.msra.mxu0 %v791
  %1132 = vmatpush.msra.mxu0 %v782
  %1133 = vmatpush.msra.mxu0 %v773
  %1134 = vmatpush.msra.mxu0 %v764
  %1135 = vmatpush.msra.mxu0 %v755
  %1136 = vmatpush.msra.mxu0 %v746
  %1137 = vmatpush.msra.mxu0 %v737
  %1138 = vmatpush.msra.mxu0 %v728
  %1139 = vmatpush.msra.mxu0 %v719
  %1140 = vmatmul.f32.gmra.mxu0 %v34
  %v1141 = vpop.f32.mrf.mxu0
  %v1142 = vadd.f32 %v331, %v1141
  %1143 = vdwg.mxu0
  %1144 = vmatpush.msra.mxu0 %v998
  %1145 = vmatpush.msra.mxu0 %v989
  %1146 = vmatpush.msra.mxu0 %v980
  %1147 = vmatpush.msra.mxu0 %v971
  %1148 = vmatpush.msra.mxu0 %v962
  %1149 = vmatpush.msra.mxu0 %v953
  %1150 = vmatpush.msra.mxu0 %v944
  %1151 = vmatpush.msra.mxu0 %v935
  %1152 = vmatpush.msra.mxu0 %v926
  %1153 = vmatpush.msra.mxu0 %v917
  %1154 = vmatpush.msra.mxu0 %v908
  %1155 = vmatpush.msra.mxu0 %v899
  %1156 = vmatpush.msra.mxu0 %v890
  %1157 = vmatpush.msra.mxu0 %v881
  %1158 = vmatpush.msra.mxu0 %v872
  %1159 = vmatpush.msra.mxu0 %v863
  %1160 = vmatmul.f32.gmra.mxu0 %v35
  %v1161 = vpop.f32.mrf.mxu0
  %v1162 = vadd.f32 %v1142, %v1161
  %1163 = vdwg.mxu0
  %1164 = vmatpush.msra.mxu0 %v855
  %1165 = vmatpush.msra.mxu0 %v846
  %1166 = vmatpush.msra.mxu0 %v837
  %1167 = vmatpush.msra.mxu0 %v828
  %1168 = vmatpush.msra.mxu0 %v819
  %1169 = vmatpush.msra.mxu0 %v810
  %1170 = vmatpush.msra.mxu0 %v801
  %1171 = vmatpush.msra.mxu0 %v792
  %1172 = vmatpush.msra.mxu0 %v783
  %1173 = vmatpush.msra.mxu0 %v774
  %1174 = vmatpush.msra.mxu0 %v765
  %1175 = vmatpush.msra.mxu0 %v756
  %1176 = vmatpush.msra.mxu0 %v747
  %1177 = vmatpush.msra.mxu0 %v738
  %1178 = vmatpush.msra.mxu0 %v729
  %1179 = vmatpush.msra.mxu0 %v720
  %1180 = vmatmul.f32.gmra.mxu0 %v34
  %v1181 = vpop.f32.mrf.mxu0
  %v1182 = vadd.f32 %v332, %v1181
  %1183 = vdwg.mxu0
  %1184 = vmatpush.msra.mxu0 %v999
  %1185 = vmatpush.msra.mxu0 %v990
  %1186 = vmatpush.msra.mxu0 %v981
  %1187 = vmatpush.msra.mxu0 %v972
  %1188 = vmatpush.msra.mxu0 %v963
  %1189 = vmatpush.msra.mxu0 %v954
  %1190 = vmatpush.msra.mxu0 %v945
  %1191 = vmatpush.msra.mxu0 %v936
  %1192 = vmatpush.msra.mxu0 %v927
  %1193 = vmatpush.msra.mxu0 %v918
  %1194 = vmatpush.msra.mxu0 %v909
  %1195 = vmatpush.msra.mxu0 %v900
  %1196 = vmatpush.msra.mxu0 %v891
  %1197 = vmatpush.msra.mxu0 %v882
  %1198 = vmatpush.msra.mxu0 %v873
  %1199 = vmatpush.msra.mxu0 %v864
  %1200 = vmatmul.f32.gmra.mxu0 %v35
  %v1201 = vpop.f32.mrf.mxu0
  %v1202 = vadd.f32 %v1182, %v1201
  %1203 = vdwg.mxu0
  %1204 = vmatpush.msra.mxu0 %v856
  %1205 = vmatpush.msra.mxu0 %v847
  %1206 = vmatpush.msra.mxu0 %v838
  %1207 = vmatpush.msra.mxu0 %v829
  %1208 = vmatpush.msra.mxu0 %v820
  %1209 = vmatpush.msra.mxu0 %v811
  %1210 = vmatpush.msra.mxu0 %v802
  %1211 = vmatpush.msra.mxu0 %v793
  %1212 = vmatpush.msra.mxu0 %v784
  %1213 = vmatpush.msra.mxu0 %v775
  %1214 = vmatpush.msra.mxu0 %v766
  %1215 = vmatpush.msra.mxu0 %v757
  %1216 = vmatpush.msra.mxu0 %v748
  %1217 = vmatpush.msra.mxu0 %v739
  %1218 = vmatpush.msra.mxu0 %v730
  %1219 = vmatpush.msra.mxu0 %v721
  %1220 = vmatmul.f32.gmra.mxu0 %v34
  %v1221 = vpop.f32.mrf.mxu0
  %v1222 = vadd.f32 %v333, %v1221
  %1223 = vdwg.mxu0
  %1224 = vmatpush.msra.mxu0 %v1000
  %1225 = vmatpush.msra.mxu0 %v991
  %1226 = vmatpush.msra.mxu0 %v982
  %1227 = vmatpush.msra.mxu0 %v973
  %1228 = vmatpush.msra.mxu0 %v964
  %1229 = vmatpush.msra.mxu0 %v955
  %1230 = vmatpush.msra.mxu0 %v946
  %1231 = vmatpush.msra.mxu0 %v937
  %1232 = vmatpush.msra.mxu0 %v928
  %1233 = vmatpush.msra.mxu0 %v919
  %1234 = vmatpush.msra.mxu0 %v910
  %1235 = vmatpush.msra.mxu0 %v901
  %1236 = vmatpush.msra.mxu0 %v892
  %1237 = vmatpush.msra.mxu0 %v883
  %1238 = vmatpush.msra.mxu0 %v874
  %1239 = vmatpush.msra.mxu0 %v865
  %1240 = vmatmul.f32.gmra.mxu0 %v35
  %v1241 = vpop.f32.mrf.mxu0
  %v1242 = vadd.f32 %v1222, %v1241
  %1243 = vdwg.mxu0
  %1244 = vmatpush.msra.mxu0 %v857
  %1245 = vmatpush.msra.mxu0 %v848
  %1246 = vmatpush.msra.mxu0 %v839
  %1247 = vmatpush.msra.mxu0 %v830
  %1248 = vmatpush.msra.mxu0 %v821
  %1249 = vmatpush.msra.mxu0 %v812
  %1250 = vmatpush.msra.mxu0 %v803
  %1251 = vmatpush.msra.mxu0 %v794
  %1252 = vmatpush.msra.mxu0 %v785
  %1253 = vmatpush.msra.mxu0 %v776
  %1254 = vmatpush.msra.mxu0 %v767
  %1255 = vmatpush.msra.mxu0 %v758
  %1256 = vmatpush.msra.mxu0 %v749
  %1257 = vmatpush.msra.mxu0 %v740
  %1258 = vmatpush.msra.mxu0 %v731
  %1259 = vmatpush.msra.mxu0 %v722
  %1260 = vmatmul.f32.gmra.mxu0 %v34
  %v1261 = vpop.f32.mrf.mxu0
  %v1262 = vadd.f32 %v334, %v1261
  %1263 = vdwg.mxu0
  %1264 = vmatpush.msra.mxu0 %v1001
  %1265 = vmatpush.msra.mxu0 %v992
  %1266 = vmatpush.msra.mxu0 %v983
  %1267 = vmatpush.msra.mxu0 %v974
  %1268 = vmatpush.msra.mxu0 %v965
  %1269 = vmatpush.msra.mxu0 %v956
  %1270 = vmatpush.msra.mxu0 %v947
  %1271 = vmatpush.msra.mxu0 %v938
  %1272 = vmatpush.msra.mxu0 %v929
  %1273 = vmatpush.msra.mxu0 %v920
  %1274 = vmatpush.msra.mxu0 %v911
  %1275 = vmatpush.msra.mxu0 %v902
  %1276 = vmatpush.msra.mxu0 %v893
  %1277 = vmatpush.msra.mxu0 %v884
  %1278 = vmatpush.msra.mxu0 %v875
  %1279 = vmatpush.msra.mxu0 %v866
  %1280 = vmatmul.f32.gmra.mxu0 %v35
  %v1281 = vpop.f32.mrf.mxu0
  %v1282 = vadd.f32 %v1262, %v1281
  %1283 = vdwg.mxu0
  %1284 = vmatpush.msra.mxu0 %v858
  %1285 = vmatpush.msra.mxu0 %v849
  %1286 = vmatpush.msra.mxu0 %v840
  %1287 = vmatpush.msra.mxu0 %v831
  %1288 = vmatpush.msra.mxu0 %v822
  %1289 = vmatpush.msra.mxu0 %v813
  %1290 = vmatpush.msra.mxu0 %v804
  %1291 = vmatpush.msra.mxu0 %v795
  %1292 = vmatpush.msra.mxu0 %v786
  %1293 = vmatpush.msra.mxu0 %v777
  %1294 = vmatpush.msra.mxu0 %v768
  %1295 = vmatpush.msra.mxu0 %v759
  %1296 = vmatpush.msra.mxu0 %v750
  %1297 = vmatpush.msra.mxu0 %v741
  %1298 = vmatpush.msra.mxu0 %v732
  %1299 = vmatpush.msra.mxu0 %v723
  %1300 = vmatmul.f32.gmra.mxu0 %v34
  %v1301 = vpop.f32.mrf.mxu0
  %v1302 = vadd.f32 %v335, %v1301
  %1303 = vdwg.mxu0
  %1304 = vmatpush.msra.mxu0 %v1002
  %1305 = vmatpush.msra.mxu0 %v993
  %1306 = vmatpush.msra.mxu0 %v984
  %1307 = vmatpush.msra.mxu0 %v975
  %1308 = vmatpush.msra.mxu0 %v966
  %1309 = vmatpush.msra.mxu0 %v957
  %1310 = vmatpush.msra.mxu0 %v948
  %1311 = vmatpush.msra.mxu0 %v939
  %1312 = vmatpush.msra.mxu0 %v930
  %1313 = vmatpush.msra.mxu0 %v921
  %1314 = vmatpush.msra.mxu0 %v912
  %1315 = vmatpush.msra.mxu0 %v903
  %1316 = vmatpush.msra.mxu0 %v894
  %1317 = vmatpush.msra.mxu0 %v885
  %1318 = vmatpush.msra.mxu0 %v876
  %1319 = vmatpush.msra.mxu0 %v867
  %1320 = vmatmul.f32.gmra.mxu0 %v35
  %v1321 = vpop.f32.mrf.mxu0
  %v1322 = vadd.f32 %v1302, %v1321
  %1323 = vdwg.mxu0
  %1324 = vmatpush.msra.mxu0 %v859
  %1325 = vmatpush.msra.mxu0 %v850
  %1326 = vmatpush.msra.mxu0 %v841
  %1327 = vmatpush.msra.mxu0 %v832
  %1328 = vmatpush.msra.mxu0 %v823
  %1329 = vmatpush.msra.mxu0 %v814
  %1330 = vmatpush.msra.mxu0 %v805
  %1331 = vmatpush.msra.mxu0 %v796
  %1332 = vmatpush.msra.mxu0 %v787
  %1333 = vmatpush.msra.mxu0 %v778
  %1334 = vmatpush.msra.mxu0 %v769
  %1335 = vmatpush.msra.mxu0 %v760
  %1336 = vmatpush.msra.mxu0 %v751
  %1337 = vmatpush.msra.mxu0 %v742
  %1338 = vmatpush.msra.mxu0 %v733
  %1339 = vmatpush.msra.mxu0 %v724
  %1340 = vmatmul.f32.gmra.mxu0 %v34
  %v1341 = vpop.f32.mrf.mxu0
  %v1342 = vadd.f32 %v336, %v1341
  %1343 = vdwg.mxu0
  %1344 = vmatpush.msra.mxu0 %v1003
  %1345 = vmatpush.msra.mxu0 %v994
  %1346 = vmatpush.msra.mxu0 %v985
  %1347 = vmatpush.msra.mxu0 %v976
  %1348 = vmatpush.msra.mxu0 %v967
  %1349 = vmatpush.msra.mxu0 %v958
  %1350 = vmatpush.msra.mxu0 %v949
  %1351 = vmatpush.msra.mxu0 %v940
  %1352 = vmatpush.msra.mxu0 %v931
  %1353 = vmatpush.msra.mxu0 %v922
  %1354 = vmatpush.msra.mxu0 %v913
  %1355 = vmatpush.msra.mxu0 %v904
  %1356 = vmatpush.msra.mxu0 %v895
  %1357 = vmatpush.msra.mxu0 %v886
  %1358 = vmatpush.msra.mxu0 %v877
  %1359 = vmatpush.msra.mxu0 %v868
  %1360 = vmatmul.f32.gmra.mxu0 %v35
  %v1361 = vpop.f32.mrf.mxu0
  %v1362 = vadd.f32 %v1342, %v1361
  %1363 = vdwg.mxu0
  %v1364 = vmax.f32 %v1042, 0.0
  %v1365 = vmax.f32 %v1082, 0.0
  %v1366 = vmax.f32 %v1122, 0.0
  %v1367 = vmax.f32 %v1162, 0.0
  %v1368 = vmax.f32 %v1202, 0.0
  %v1369 = vmax.f32 %v1242, 0.0
  %v1370 = vmax.f32 %v1282, 0.0
  %v1371 = vmax.f32 %v1322, 0.0
  %v1372 = vmax.f32 %v1362, 0.0
  %vm1373 = vcmp.gt.f32.partialorder %v1364, %v706
  %vm1374 = vcmp.gt.f32.partialorder %v1365, %v707
  %vm1375 = vcmp.gt.f32.partialorder %v1366, %v708
  %vm1376 = vcmp.gt.f32.partialorder %v1367, %v709
  %vm1377 = vcmp.gt.f32.partialorder %v1368, %v710
  %vm1378 = vcmp.gt.f32.partialorder %v1369, %v711
  %vm1379 = vcmp.gt.f32.partialorder %v1370, %v712
  %vm1380 = vcmp.gt.f32.partialorder %v1371, %v713
  %vm1381 = vcmp.gt.f32.partialorder %v1372, %v714
  %v1382 = vsel %vm1373, 1.0, 0.0
  %v1383 = vsel %vm1374, 1.0, 0.0
  %v1384 = vsel %vm1375, 1.0, 0.0
  %v1385 = vsel %vm1376, 1.0, 0.0
  %v1386 = vsel %vm1377, 1.0, 0.0
  %v1387 = vsel %vm1378, 1.0, 0.0
  %v1388 = vsel %vm1379, 1.0, 0.0
  %v1389 = vsel %vm1380, 1.0, 0.0
  %v1390 = vsel %vm1381, 1.0, 0.0
  %v1391 = vmax.f32 %v706, %v1364
  %v1392 = vmax.f32 %v707, %v1365
  %v1393 = vmax.f32 %v708, %v1366
  %v1394 = vmax.f32 %v709, %v1367
  %v1395 = vmax.f32 %v710, %v1368
  %v1396 = vmax.f32 %v711, %v1369
  %v1397 = vmax.f32 %v712, %v1370
  %v1398 = vmax.f32 %v713, %v1371
  %v1399 = vmax.f32 %v714, %v1372
  %s1400 = scalar_lea.vmem %s1, 4608
  %v1401 = vld [vmem:[%s1400] sm:$0xff]
  %v1402 = vld [vmem:[%s1400 + $0x8] sm:$0xff]
  %v1403 = vld [vmem:[%s1400 + $0x10] sm:$0xff]
  %v1404 = vld [vmem:[%s1400 + $0x18] sm:$0xff]
  %v1405 = vld [vmem:[%s1400 + $0x20] sm:$0xff]
  %v1406 = vld [vmem:[%s1400 + $0x28] sm:$0xff]
  %v1407 = vld [vmem:[%s1400 + $0x30] sm:$0xff]
  %v1408 = vld [vmem:[%s1400 + $0x38] sm:$0xff]
  %v1409 = vld [vmem:[%s1400 + $0x40] sm:$0xff]
  %v1410 = vld [vmem:[%s1400 + $0x48] sm:$0xff]
  %v1411 = vld [vmem:[%s1400 + $0x50] sm:$0xff]
  %v1412 = vld [vmem:[%s1400 + $0x58] sm:$0xff]
  %v1413 = vld [vmem:[%s1400 + $0x60] sm:$0xff]
  %v1414 = vld [vmem:[%s1400 + $0x68] sm:$0xff]
  %v1415 = vld [vmem:[%s1400 + $0x70] sm:$0xff]
  %v1416 = vld [vmem:[%s1400 + $0x78] sm:$0xff]
  %v1417 = vld [vmem:[%s1400 + $0x80] sm:$0xff]
  %v1418 = vld [vmem:[%s1400 + $0x88] sm:$0xff]
  %v1419 = vld [vmem:[%s1400 + $0x90] sm:$0xff]
  %v1420 = vld [vmem:[%s1400 + $0x98] sm:$0xff]
  %v1421 = vld [vmem:[%s1400 + $0xa0] sm:$0xff]
  %v1422 = vld [vmem:[%s1400 + $0xa8] sm:$0xff]
  %v1423 = vld [vmem:[%s1400 + $0xb0] sm:$0xff]
  %v1424 = vld [vmem:[%s1400 + $0xb8] sm:$0xff]
  %v1425 = vld [vmem:[%s1400 + $0xc0] sm:$0xff]
  %v1426 = vld [vmem:[%s1400 + $0xc8] sm:$0xff]
  %v1427 = vld [vmem:[%s1400 + $0xd0] sm:$0xff]
  %v1428 = vld [vmem:[%s1400 + $0xd8] sm:$0xff]
  %v1429 = vld [vmem:[%s1400 + $0xe0] sm:$0xff]
  %v1430 = vld [vmem:[%s1400 + $0xe8] sm:$0xff]
  %v1431 = vld [vmem:[%s1400 + $0xf0] sm:$0xff]
  %v1432 = vld [vmem:[%s1400 + $0xf8] sm:$0xff]
  %v1433 = vld [vmem:[%s1400 + $0x100] sm:$0xff]
  %v1434 = vld [vmem:[%s1400 + $0x108] sm:$0xff]
  %v1435 = vld [vmem:[%s1400 + $0x110] sm:$0xff]
  %v1436 = vld [vmem:[%s1400 + $0x118] sm:$0xff]
  %v1437 = vld [vmem:[%s1400 + $0x120] sm:$0xff]
  %v1438 = vld [vmem:[%s1400 + $0x128] sm:$0xff]
  %v1439 = vld [vmem:[%s1400 + $0x130] sm:$0xff]
  %v1440 = vld [vmem:[%s1400 + $0x138] sm:$0xff]
  %v1441 = vld [vmem:[%s1400 + $0x140] sm:$0xff]
  %v1442 = vld [vmem:[%s1400 + $0x148] sm:$0xff]
  %v1443 = vld [vmem:[%s1400 + $0x150] sm:$0xff]
  %v1444 = vld [vmem:[%s1400 + $0x158] sm:$0xff]
  %v1445 = vld [vmem:[%s1400 + $0x160] sm:$0xff]
  %v1446 = vld [vmem:[%s1400 + $0x168] sm:$0xff]
  %v1447 = vld [vmem:[%s1400 + $0x170] sm:$0xff]
  %v1448 = vld [vmem:[%s1400 + $0x178] sm:$0xff]
  %v1449 = vld [vmem:[%s1400 + $0x180] sm:$0xff]
  %v1450 = vld [vmem:[%s1400 + $0x188] sm:$0xff]
  %v1451 = vld [vmem:[%s1400 + $0x190] sm:$0xff]
  %v1452 = vld [vmem:[%s1400 + $0x198] sm:$0xff]
  %v1453 = vld [vmem:[%s1400 + $0x1a0] sm:$0xff]
  %v1454 = vld [vmem:[%s1400 + $0x1a8] sm:$0xff]
  %v1455 = vld [vmem:[%s1400 + $0x1b0] sm:$0xff]
  %v1456 = vld [vmem:[%s1400 + $0x1b8] sm:$0xff]
  %v1457 = vld [vmem:[%s1400 + $0x1c0] sm:$0xff]
  %v1458 = vld [vmem:[%s1400 + $0x1c8] sm:$0xff]
  %v1459 = vld [vmem:[%s1400 + $0x1d0] sm:$0xff]
  %v1460 = vld [vmem:[%s1400 + $0x1d8] sm:$0xff]
  %v1461 = vld [vmem:[%s1400 + $0x1e0] sm:$0xff]
  %v1462 = vld [vmem:[%s1400 + $0x1e8] sm:$0xff]
  %v1463 = vld [vmem:[%s1400 + $0x1f0] sm:$0xff]
  %v1464 = vld [vmem:[%s1400 + $0x1f8] sm:$0xff]
  %v1465 = vld [vmem:[%s1400 + $0x200] sm:$0xff]
  %v1466 = vld [vmem:[%s1400 + $0x208] sm:$0xff]
  %v1467 = vld [vmem:[%s1400 + $0x210] sm:$0xff]
  %v1468 = vld [vmem:[%s1400 + $0x218] sm:$0xff]
  %v1469 = vld [vmem:[%s1400 + $0x220] sm:$0xff]
  %v1470 = vld [vmem:[%s1400 + $0x228] sm:$0xff]
  %v1471 = vld [vmem:[%s1400 + $0x230] sm:$0xff]
  %v1472 = vld [vmem:[%s1400 + $0x238] sm:$0xff]
  %v1473 = vld [vmem:[%s1400 + $0x240] sm:$0xff]
  %v1474 = vld [vmem:[%s1400 + $0x248] sm:$0xff]
  %v1475 = vld [vmem:[%s1400 + $0x250] sm:$0xff]
  %v1476 = vld [vmem:[%s1400 + $0x258] sm:$0xff]
  %v1477 = vld [vmem:[%s1400 + $0x260] sm:$0xff]
  %v1478 = vld [vmem:[%s1400 + $0x268] sm:$0xff]
  %v1479 = vld [vmem:[%s1400 + $0x270] sm:$0xff]
  %v1480 = vld [vmem:[%s1400 + $0x278] sm:$0xff]
  %v1481 = vld [vmem:[%s1400 + $0x280] sm:$0xff]
  %v1482 = vld [vmem:[%s1400 + $0x288] sm:$0xff]
  %v1483 = vld [vmem:[%s1400 + $0x290] sm:$0xff]
  %v1484 = vld [vmem:[%s1400 + $0x298] sm:$0xff]
  %v1485 = vld [vmem:[%s1400 + $0x2a0] sm:$0xff]
  %v1486 = vld [vmem:[%s1400 + $0x2a8] sm:$0xff]
  %v1487 = vld [vmem:[%s1400 + $0x2b0] sm:$0xff]
  %v1488 = vld [vmem:[%s1400 + $0x2b8] sm:$0xff]
  %v1489 = vld [vmem:[%s1400 + $0x2c0] sm:$0xff]
  %v1490 = vld [vmem:[%s1400 + $0x2c8] sm:$0xff]
  %v1491 = vld [vmem:[%s1400 + $0x2d0] sm:$0xff]
  %v1492 = vld [vmem:[%s1400 + $0x2d8] sm:$0xff]
  %v1493 = vld [vmem:[%s1400 + $0x2e0] sm:$0xff]
  %v1494 = vld [vmem:[%s1400 + $0x2e8] sm:$0xff]
  %v1495 = vld [vmem:[%s1400 + $0x2f0] sm:$0xff]
  %v1496 = vld [vmem:[%s1400 + $0x2f8] sm:$0xff]
  %v1497 = vld [vmem:[%s1400 + $0x300] sm:$0xff]
  %v1498 = vld [vmem:[%s1400 + $0x308] sm:$0xff]
  %v1499 = vld [vmem:[%s1400 + $0x310] sm:$0xff]
  %v1500 = vld [vmem:[%s1400 + $0x318] sm:$0xff]
  %v1501 = vld [vmem:[%s1400 + $0x320] sm:$0xff]
  %v1502 = vld [vmem:[%s1400 + $0x328] sm:$0xff]
  %v1503 = vld [vmem:[%s1400 + $0x330] sm:$0xff]
  %v1504 = vld [vmem:[%s1400 + $0x338] sm:$0xff]
  %v1505 = vld [vmem:[%s1400 + $0x340] sm:$0xff]
  %v1506 = vld [vmem:[%s1400 + $0x348] sm:$0xff]
  %v1507 = vld [vmem:[%s1400 + $0x350] sm:$0xff]
  %v1508 = vld [vmem:[%s1400 + $0x358] sm:$0xff]
  %v1509 = vld [vmem:[%s1400 + $0x360] sm:$0xff]
  %v1510 = vld [vmem:[%s1400 + $0x368] sm:$0xff]
  %v1511 = vld [vmem:[%s1400 + $0x370] sm:$0xff]
  %v1512 = vld [vmem:[%s1400 + $0x378] sm:$0xff]
  %v1513 = vld [vmem:[%s1400 + $0x380] sm:$0xff]
  %v1514 = vld [vmem:[%s1400 + $0x388] sm:$0xff]
  %v1515 = vld [vmem:[%s1400 + $0x390] sm:$0xff]
  %v1516 = vld [vmem:[%s1400 + $0x398] sm:$0xff]
  %v1517 = vld [vmem:[%s1400 + $0x3a0] sm:$0xff]
  %v1518 = vld [vmem:[%s1400 + $0x3a8] sm:$0xff]
  %v1519 = vld [vmem:[%s1400 + $0x3b0] sm:$0xff]
  %v1520 = vld [vmem:[%s1400 + $0x3b8] sm:$0xff]
  %v1521 = vld [vmem:[%s1400 + $0x3c0] sm:$0xff]
  %v1522 = vld [vmem:[%s1400 + $0x3c8] sm:$0xff]
  %v1523 = vld [vmem:[%s1400 + $0x3d0] sm:$0xff]
  %v1524 = vld [vmem:[%s1400 + $0x3d8] sm:$0xff]
  %v1525 = vld [vmem:[%s1400 + $0x3e0] sm:$0xff]
  %v1526 = vld [vmem:[%s1400 + $0x3e8] sm:$0xff]
  %v1527 = vld [vmem:[%s1400 + $0x3f0] sm:$0xff]
  %v1528 = vld [vmem:[%s1400 + $0x3f8] sm:$0xff]
  %v1529 = vld [vmem:[%s1400 + $0x400] sm:$0xff]
  %v1530 = vld [vmem:[%s1400 + $0x408] sm:$0xff]
  %v1531 = vld [vmem:[%s1400 + $0x410] sm:$0xff]
  %v1532 = vld [vmem:[%s1400 + $0x418] sm:$0xff]
  %v1533 = vld [vmem:[%s1400 + $0x420] sm:$0xff]
  %v1534 = vld [vmem:[%s1400 + $0x428] sm:$0xff]
  %v1535 = vld [vmem:[%s1400 + $0x430] sm:$0xff]
  %v1536 = vld [vmem:[%s1400 + $0x438] sm:$0xff]
  %v1537 = vld [vmem:[%s1400 + $0x440] sm:$0xff]
  %v1538 = vld [vmem:[%s1400 + $0x448] sm:$0xff]
  %v1539 = vld [vmem:[%s1400 + $0x450] sm:$0xff]
  %v1540 = vld [vmem:[%s1400 + $0x458] sm:$0xff]
  %v1541 = vld [vmem:[%s1400 + $0x460] sm:$0xff]
  %v1542 = vld [vmem:[%s1400 + $0x468] sm:$0xff]
  %v1543 = vld [vmem:[%s1400 + $0x470] sm:$0xff]
  %v1544 = vld [vmem:[%s1400 + $0x478] sm:$0xff]
  %v1545 = vld [vmem:[%s1400 + $0x480] sm:$0xff]
  %v1546 = vld [vmem:[%s1400 + $0x488] sm:$0xff]
  %v1547 = vld [vmem:[%s1400 + $0x490] sm:$0xff]
  %v1548 = vld [vmem:[%s1400 + $0x498] sm:$0xff]
  %v1549 = vld [vmem:[%s1400 + $0x4a0] sm:$0xff]
  %v1550 = vld [vmem:[%s1400 + $0x4a8] sm:$0xff]
  %v1551 = vld [vmem:[%s1400 + $0x4b0] sm:$0xff]
  %v1552 = vld [vmem:[%s1400 + $0x4b8] sm:$0xff]
  %v1553 = vld [vmem:[%s1400 + $0x4c0] sm:$0xff]
  %v1554 = vld [vmem:[%s1400 + $0x4c8] sm:$0xff]
  %v1555 = vld [vmem:[%s1400 + $0x4d0] sm:$0xff]
  %v1556 = vld [vmem:[%s1400 + $0x4d8] sm:$0xff]
  %v1557 = vld [vmem:[%s1400 + $0x4e0] sm:$0xff]
  %v1558 = vld [vmem:[%s1400 + $0x4e8] sm:$0xff]
  %v1559 = vld [vmem:[%s1400 + $0x4f0] sm:$0xff]
  %v1560 = vld [vmem:[%s1400 + $0x4f8] sm:$0xff]
  %v1561 = vld [vmem:[%s1400 + $0x500] sm:$0xff]
  %v1562 = vld [vmem:[%s1400 + $0x508] sm:$0xff]
  %v1563 = vld [vmem:[%s1400 + $0x510] sm:$0xff]
  %v1564 = vld [vmem:[%s1400 + $0x518] sm:$0xff]
  %v1565 = vld [vmem:[%s1400 + $0x520] sm:$0xff]
  %v1566 = vld [vmem:[%s1400 + $0x528] sm:$0xff]
  %v1567 = vld [vmem:[%s1400 + $0x530] sm:$0xff]
  %v1568 = vld [vmem:[%s1400 + $0x538] sm:$0xff]
  %v1569 = vld [vmem:[%s1400 + $0x540] sm:$0xff]
  %v1570 = vld [vmem:[%s1400 + $0x548] sm:$0xff]
  %v1571 = vld [vmem:[%s1400 + $0x550] sm:$0xff]
  %v1572 = vld [vmem:[%s1400 + $0x558] sm:$0xff]
  %v1573 = vld [vmem:[%s1400 + $0x560] sm:$0xff]
  %v1574 = vld [vmem:[%s1400 + $0x568] sm:$0xff]
  %v1575 = vld [vmem:[%s1400 + $0x570] sm:$0xff]
  %v1576 = vld [vmem:[%s1400 + $0x578] sm:$0xff]
  %v1577 = vld [vmem:[%s1400 + $0x580] sm:$0xff]
  %v1578 = vld [vmem:[%s1400 + $0x588] sm:$0xff]
  %v1579 = vld [vmem:[%s1400 + $0x590] sm:$0xff]
  %v1580 = vld [vmem:[%s1400 + $0x598] sm:$0xff]
  %v1581 = vld [vmem:[%s1400 + $0x5a0] sm:$0xff]
  %v1582 = vld [vmem:[%s1400 + $0x5a8] sm:$0xff]
  %v1583 = vld [vmem:[%s1400 + $0x5b0] sm:$0xff]
  %v1584 = vld [vmem:[%s1400 + $0x5b8] sm:$0xff]
  %v1585 = vld [vmem:[%s1400 + $0x5c0] sm:$0xff]
  %v1586 = vld [vmem:[%s1400 + $0x5c8] sm:$0xff]
  %v1587 = vld [vmem:[%s1400 + $0x5d0] sm:$0xff]
  %v1588 = vld [vmem:[%s1400 + $0x5d8] sm:$0xff]
  %v1589 = vld [vmem:[%s1400 + $0x5e0] sm:$0xff]
  %v1590 = vld [vmem:[%s1400 + $0x5e8] sm:$0xff]
  %v1591 = vld [vmem:[%s1400 + $0x5f0] sm:$0xff]
  %v1592 = vld [vmem:[%s1400 + $0x5f8] sm:$0xff]
  %v1593 = vld [vmem:[%s1400 + $0x600] sm:$0xff]
  %v1594 = vld [vmem:[%s1400 + $0x608] sm:$0xff]
  %v1595 = vld [vmem:[%s1400 + $0x610] sm:$0xff]
  %v1596 = vld [vmem:[%s1400 + $0x618] sm:$0xff]
  %v1597 = vld [vmem:[%s1400 + $0x620] sm:$0xff]
  %v1598 = vld [vmem:[%s1400 + $0x628] sm:$0xff]
  %v1599 = vld [vmem:[%s1400 + $0x630] sm:$0xff]
  %v1600 = vld [vmem:[%s1400 + $0x638] sm:$0xff]
  %v1601 = vld [vmem:[%s1400 + $0x640] sm:$0xff]
  %v1602 = vld [vmem:[%s1400 + $0x648] sm:$0xff]
  %v1603 = vld [vmem:[%s1400 + $0x650] sm:$0xff]
  %v1604 = vld [vmem:[%s1400 + $0x658] sm:$0xff]
  %v1605 = vld [vmem:[%s1400 + $0x660] sm:$0xff]
  %v1606 = vld [vmem:[%s1400 + $0x668] sm:$0xff]
  %v1607 = vld [vmem:[%s1400 + $0x670] sm:$0xff]
  %v1608 = vld [vmem:[%s1400 + $0x678] sm:$0xff]
  %v1609 = vld [vmem:[%s1400 + $0x680] sm:$0xff]
  %v1610 = vld [vmem:[%s1400 + $0x688] sm:$0xff]
  %v1611 = vld [vmem:[%s1400 + $0x690] sm:$0xff]
  %v1612 = vld [vmem:[%s1400 + $0x698] sm:$0xff]
  %v1613 = vld [vmem:[%s1400 + $0x6a0] sm:$0xff]
  %v1614 = vld [vmem:[%s1400 + $0x6a8] sm:$0xff]
  %v1615 = vld [vmem:[%s1400 + $0x6b0] sm:$0xff]
  %v1616 = vld [vmem:[%s1400 + $0x6b8] sm:$0xff]
  %v1617 = vld [vmem:[%s1400 + $0x6c0] sm:$0xff]
  %v1618 = vld [vmem:[%s1400 + $0x6c8] sm:$0xff]
  %v1619 = vld [vmem:[%s1400 + $0x6d0] sm:$0xff]
  %v1620 = vld [vmem:[%s1400 + $0x6d8] sm:$0xff]
  %v1621 = vld [vmem:[%s1400 + $0x6e0] sm:$0xff]
  %v1622 = vld [vmem:[%s1400 + $0x6e8] sm:$0xff]
  %v1623 = vld [vmem:[%s1400 + $0x6f0] sm:$0xff]
  %v1624 = vld [vmem:[%s1400 + $0x6f8] sm:$0xff]
  %v1625 = vld [vmem:[%s1400 + $0x700] sm:$0xff]
  %v1626 = vld [vmem:[%s1400 + $0x708] sm:$0xff]
  %v1627 = vld [vmem:[%s1400 + $0x710] sm:$0xff]
  %v1628 = vld [vmem:[%s1400 + $0x718] sm:$0xff]
  %v1629 = vld [vmem:[%s1400 + $0x720] sm:$0xff]
  %v1630 = vld [vmem:[%s1400 + $0x728] sm:$0xff]
  %v1631 = vld [vmem:[%s1400 + $0x730] sm:$0xff]
  %v1632 = vld [vmem:[%s1400 + $0x738] sm:$0xff]
  %v1633 = vld [vmem:[%s1400 + $0x740] sm:$0xff]
  %v1634 = vld [vmem:[%s1400 + $0x748] sm:$0xff]
  %v1635 = vld [vmem:[%s1400 + $0x750] sm:$0xff]
  %v1636 = vld [vmem:[%s1400 + $0x758] sm:$0xff]
  %v1637 = vld [vmem:[%s1400 + $0x760] sm:$0xff]
  %v1638 = vld [vmem:[%s1400 + $0x768] sm:$0xff]
  %v1639 = vld [vmem:[%s1400 + $0x770] sm:$0xff]
  %v1640 = vld [vmem:[%s1400 + $0x778] sm:$0xff]
  %v1641 = vld [vmem:[%s1400 + $0x780] sm:$0xff]
  %v1642 = vld [vmem:[%s1400 + $0x788] sm:$0xff]
  %v1643 = vld [vmem:[%s1400 + $0x790] sm:$0xff]
  %v1644 = vld [vmem:[%s1400 + $0x798] sm:$0xff]
  %v1645 = vld [vmem:[%s1400 + $0x7a0] sm:$0xff]
  %v1646 = vld [vmem:[%s1400 + $0x7a8] sm:$0xff]
  %v1647 = vld [vmem:[%s1400 + $0x7b0] sm:$0xff]
  %v1648 = vld [vmem:[%s1400 + $0x7b8] sm:$0xff]
  %v1649 = vld [vmem:[%s1400 + $0x7c0] sm:$0xff]
  %v1650 = vld [vmem:[%s1400 + $0x7c8] sm:$0xff]
  %v1651 = vld [vmem:[%s1400 + $0x7d0] sm:$0xff]
  %v1652 = vld [vmem:[%s1400 + $0x7d8] sm:$0xff]
  %v1653 = vld [vmem:[%s1400 + $0x7e0] sm:$0xff]
  %v1654 = vld [vmem:[%s1400 + $0x7e8] sm:$0xff]
  %v1655 = vld [vmem:[%s1400 + $0x7f0] sm:$0xff]
  %v1656 = vld [vmem:[%s1400 + $0x7f8] sm:$0xff]
  %v1657 = vld [vmem:[%s1400 + $0x800] sm:$0xff]
  %v1658 = vld [vmem:[%s1400 + $0x808] sm:$0xff]
  %v1659 = vld [vmem:[%s1400 + $0x810] sm:$0xff]
  %v1660 = vld [vmem:[%s1400 + $0x818] sm:$0xff]
  %v1661 = vld [vmem:[%s1400 + $0x820] sm:$0xff]
  %v1662 = vld [vmem:[%s1400 + $0x828] sm:$0xff]
  %v1663 = vld [vmem:[%s1400 + $0x830] sm:$0xff]
  %v1664 = vld [vmem:[%s1400 + $0x838] sm:$0xff]
  %v1665 = vld [vmem:[%s1400 + $0x840] sm:$0xff]
  %v1666 = vld [vmem:[%s1400 + $0x848] sm:$0xff]
  %v1667 = vld [vmem:[%s1400 + $0x850] sm:$0xff]
  %v1668 = vld [vmem:[%s1400 + $0x858] sm:$0xff]
  %v1669 = vld [vmem:[%s1400 + $0x860] sm:$0xff]
  %v1670 = vld [vmem:[%s1400 + $0x868] sm:$0xff]
  %v1671 = vld [vmem:[%s1400 + $0x870] sm:$0xff]
  %v1672 = vld [vmem:[%s1400 + $0x878] sm:$0xff]
  %v1673 = vld [vmem:[%s1400 + $0x880] sm:$0xff]
  %v1674 = vld [vmem:[%s1400 + $0x888] sm:$0xff]
  %v1675 = vld [vmem:[%s1400 + $0x890] sm:$0xff]
  %v1676 = vld [vmem:[%s1400 + $0x898] sm:$0xff]
  %v1677 = vld [vmem:[%s1400 + $0x8a0] sm:$0xff]
  %v1678 = vld [vmem:[%s1400 + $0x8a8] sm:$0xff]
  %v1679 = vld [vmem:[%s1400 + $0x8b0] sm:$0xff]
  %v1680 = vld [vmem:[%s1400 + $0x8b8] sm:$0xff]
  %v1681 = vld [vmem:[%s1400 + $0x8c0] sm:$0xff]
  %v1682 = vld [vmem:[%s1400 + $0x8c8] sm:$0xff]
  %v1683 = vld [vmem:[%s1400 + $0x8d0] sm:$0xff]
  %v1684 = vld [vmem:[%s1400 + $0x8d8] sm:$0xff]
  %v1685 = vld [vmem:[%s1400 + $0x8e0] sm:$0xff]
  %v1686 = vld [vmem:[%s1400 + $0x8e8] sm:$0xff]
  %v1687 = vld [vmem:[%s1400 + $0x8f0] sm:$0xff]
  %v1688 = vld [vmem:[%s1400 + $0x8f8] sm:$0xff]
  %1689 = vmatpush.msra.mxu0 %v1536
  %1690 = vmatpush.msra.mxu0 %v1527
  %1691 = vmatpush.msra.mxu0 %v1518
  %1692 = vmatpush.msra.mxu0 %v1509
  %1693 = vmatpush.msra.mxu0 %v1500
  %1694 = vmatpush.msra.mxu0 %v1491
  %1695 = vmatpush.msra.mxu0 %v1482
  %1696 = vmatpush.msra.mxu0 %v1473
  %1697 = vmatpush.msra.mxu0 %v1464
  %1698 = vmatpush.msra.mxu0 %v1455
  %1699 = vmatpush.msra.mxu0 %v1446
  %1700 = vmatpush.msra.mxu0 %v1437
  %1701 = vmatpush.msra.mxu0 %v1428
  %1702 = vmatpush.msra.mxu0 %v1419
  %1703 = vmatpush.msra.mxu0 %v1410
  %1704 = vmatpush.msra.mxu0 %v1401
  %1705 = vmatmul.f32.gmra.mxu0 %v34
  %v1706 = vpop.f32.mrf.mxu0
  %v1707 = vadd.f32 %v328, %v1706
  %1708 = vdwg.mxu0
  %1709 = vmatpush.msra.mxu0 %v1680
  %1710 = vmatpush.msra.mxu0 %v1671
  %1711 = vmatpush.msra.mxu0 %v1662
  %1712 = vmatpush.msra.mxu0 %v1653
  %1713 = vmatpush.msra.mxu0 %v1644
  %1714 = vmatpush.msra.mxu0 %v1635
  %1715 = vmatpush.msra.mxu0 %v1626
  %1716 = vmatpush.msra.mxu0 %v1617
  %1717 = vmatpush.msra.mxu0 %v1608
  %1718 = vmatpush.msra.mxu0 %v1599
  %1719 = vmatpush.msra.mxu0 %v1590
  %1720 = vmatpush.msra.mxu0 %v1581
  %1721 = vmatpush.msra.mxu0 %v1572
  %1722 = vmatpush.msra.mxu0 %v1563
  %1723 = vmatpush.msra.mxu0 %v1554
  %1724 = vmatpush.msra.mxu0 %v1545
  %1725 = vmatmul.f32.gmra.mxu0 %v35
  %v1726 = vpop.f32.mrf.mxu0
  %v1727 = vadd.f32 %v1707, %v1726
  %1728 = vdwg.mxu0
  %1729 = vmatpush.msra.mxu0 %v1537
  %1730 = vmatpush.msra.mxu0 %v1528
  %1731 = vmatpush.msra.mxu0 %v1519
  %1732 = vmatpush.msra.mxu0 %v1510
  %1733 = vmatpush.msra.mxu0 %v1501
  %1734 = vmatpush.msra.mxu0 %v1492
  %1735 = vmatpush.msra.mxu0 %v1483
  %1736 = vmatpush.msra.mxu0 %v1474
  %1737 = vmatpush.msra.mxu0 %v1465
  %1738 = vmatpush.msra.mxu0 %v1456
  %1739 = vmatpush.msra.mxu0 %v1447
  %1740 = vmatpush.msra.mxu0 %v1438
  %1741 = vmatpush.msra.mxu0 %v1429
  %1742 = vmatpush.msra.mxu0 %v1420
  %1743 = vmatpush.msra.mxu0 %v1411
  %1744 = vmatpush.msra.mxu0 %v1402
  %1745 = vmatmul.f32.gmra.mxu0 %v34
  %v1746 = vpop.f32.mrf.mxu0
  %v1747 = vadd.f32 %v329, %v1746
  %1748 = vdwg.mxu0
  %1749 = vmatpush.msra.mxu0 %v1681
  %1750 = vmatpush.msra.mxu0 %v1672
  %1751 = vmatpush.msra.mxu0 %v1663
  %1752 = vmatpush.msra.mxu0 %v1654
  %1753 = vmatpush.msra.mxu0 %v1645
  %1754 = vmatpush.msra.mxu0 %v1636
  %1755 = vmatpush.msra.mxu0 %v1627
  %1756 = vmatpush.msra.mxu0 %v1618
  %1757 = vmatpush.msra.mxu0 %v1609
  %1758 = vmatpush.msra.mxu0 %v1600
  %1759 = vmatpush.msra.mxu0 %v1591
  %1760 = vmatpush.msra.mxu0 %v1582
  %1761 = vmatpush.msra.mxu0 %v1573
  %1762 = vmatpush.msra.mxu0 %v1564
  %1763 = vmatpush.msra.mxu0 %v1555
  %1764 = vmatpush.msra.mxu0 %v1546
  %1765 = vmatmul.f32.gmra.mxu0 %v35
  %v1766 = vpop.f32.mrf.mxu0
  %v1767 = vadd.f32 %v1747, %v1766
  %1768 = vdwg.mxu0
  %1769 = vmatpush.msra.mxu0 %v1538
  %1770 = vmatpush.msra.mxu0 %v1529
  %1771 = vmatpush.msra.mxu0 %v1520
  %1772 = vmatpush.msra.mxu0 %v1511
  %1773 = vmatpush.msra.mxu0 %v1502
  %1774 = vmatpush.msra.mxu0 %v1493
  %1775 = vmatpush.msra.mxu0 %v1484
  %1776 = vmatpush.msra.mxu0 %v1475
  %1777 = vmatpush.msra.mxu0 %v1466
  %1778 = vmatpush.msra.mxu0 %v1457
  %1779 = vmatpush.msra.mxu0 %v1448
  %1780 = vmatpush.msra.mxu0 %v1439
  %1781 = vmatpush.msra.mxu0 %v1430
  %1782 = vmatpush.msra.mxu0 %v1421
  %1783 = vmatpush.msra.mxu0 %v1412
  %1784 = vmatpush.msra.mxu0 %v1403
  %1785 = vmatmul.f32.gmra.mxu0 %v34
  %v1786 = vpop.f32.mrf.mxu0
  %v1787 = vadd.f32 %v330, %v1786
  %1788 = vdwg.mxu0
  %1789 = vmatpush.msra.mxu0 %v1682
  %1790 = vmatpush.msra.mxu0 %v1673
  %1791 = vmatpush.msra.mxu0 %v1664
  %1792 = vmatpush.msra.mxu0 %v1655
  %1793 = vmatpush.msra.mxu0 %v1646
  %1794 = vmatpush.msra.mxu0 %v1637
  %1795 = vmatpush.msra.mxu0 %v1628
  %1796 = vmatpush.msra.mxu0 %v1619
  %1797 = vmatpush.msra.mxu0 %v1610
  %1798 = vmatpush.msra.mxu0 %v1601
  %1799 = vmatpush.msra.mxu0 %v1592
  %1800 = vmatpush.msra.mxu0 %v1583
  %1801 = vmatpush.msra.mxu0 %v1574
  %1802 = vmatpush.msra.mxu0 %v1565
  %1803 = vmatpush.msra.mxu0 %v1556
  %1804 = vmatpush.msra.mxu0 %v1547
  %1805 = vmatmul.f32.gmra.mxu0 %v35
  %v1806 = vpop.f32.mrf.mxu0
  %v1807 = vadd.f32 %v1787, %v1806
  %1808 = vdwg.mxu0
  %1809 = vmatpush.msra.mxu0 %v1539
  %1810 = vmatpush.msra.mxu0 %v1530
  %1811 = vmatpush.msra.mxu0 %v1521
  %1812 = vmatpush.msra.mxu0 %v1512
  %1813 = vmatpush.msra.mxu0 %v1503
  %1814 = vmatpush.msra.mxu0 %v1494
  %1815 = vmatpush.msra.mxu0 %v1485
  %1816 = vmatpush.msra.mxu0 %v1476
  %1817 = vmatpush.msra.mxu0 %v1467
  %1818 = vmatpush.msra.mxu0 %v1458
  %1819 = vmatpush.msra.mxu0 %v1449
  %1820 = vmatpush.msra.mxu0 %v1440
  %1821 = vmatpush.msra.mxu0 %v1431
  %1822 = vmatpush.msra.mxu0 %v1422
  %1823 = vmatpush.msra.mxu0 %v1413
  %1824 = vmatpush.msra.mxu0 %v1404
  %1825 = vmatmul.f32.gmra.mxu0 %v34
  %v1826 = vpop.f32.mrf.mxu0
  %v1827 = vadd.f32 %v331, %v1826
  %1828 = vdwg.mxu0
  %1829 = vmatpush.msra.mxu0 %v1683
  %1830 = vmatpush.msra.mxu0 %v1674
  %1831 = vmatpush.msra.mxu0 %v1665
  %1832 = vmatpush.msra.mxu0 %v1656
  %1833 = vmatpush.msra.mxu0 %v1647
  %1834 = vmatpush.msra.mxu0 %v1638
  %1835 = vmatpush.msra.mxu0 %v1629
  %1836 = vmatpush.msra.mxu0 %v1620
  %1837 = vmatpush.msra.mxu0 %v1611
  %1838 = vmatpush.msra.mxu0 %v1602
  %1839 = vmatpush.msra.mxu0 %v1593
  %1840 = vmatpush.msra.mxu0 %v1584
  %1841 = vmatpush.msra.mxu0 %v1575
  %1842 = vmatpush.msra.mxu0 %v1566
  %1843 = vmatpush.msra.mxu0 %v1557
  %1844 = vmatpush.msra.mxu0 %v1548
  %1845 = vmatmul.f32.gmra.mxu0 %v35
  %v1846 = vpop.f32.mrf.mxu0
  %v1847 = vadd.f32 %v1827, %v1846
  %1848 = vdwg.mxu0
  %1849 = vmatpush.msra.mxu0 %v1540
  %1850 = vmatpush.msra.mxu0 %v1531
  %1851 = vmatpush.msra.mxu0 %v1522
  %1852 = vmatpush.msra.mxu0 %v1513
  %1853 = vmatpush.msra.mxu0 %v1504
  %1854 = vmatpush.msra.mxu0 %v1495
  %1855 = vmatpush.msra.mxu0 %v1486
  %1856 = vmatpush.msra.mxu0 %v1477
  %1857 = vmatpush.msra.mxu0 %v1468
  %1858 = vmatpush.msra.mxu0 %v1459
  %1859 = vmatpush.msra.mxu0 %v1450
  %1860 = vmatpush.msra.mxu0 %v1441
  %1861 = vmatpush.msra.mxu0 %v1432
  %1862 = vmatpush.msra.mxu0 %v1423
  %1863 = vmatpush.msra.mxu0 %v1414
  %1864 = vmatpush.msra.mxu0 %v1405
  %1865 = vmatmul.f32.gmra.mxu0 %v34
  %v1866 = vpop.f32.mrf.mxu0
  %v1867 = vadd.f32 %v332, %v1866
  %1868 = vdwg.mxu0
  %1869 = vmatpush.msra.mxu0 %v1684
  %1870 = vmatpush.msra.mxu0 %v1675
  %1871 = vmatpush.msra.mxu0 %v1666
  %1872 = vmatpush.msra.mxu0 %v1657
  %1873 = vmatpush.msra.mxu0 %v1648
  %1874 = vmatpush.msra.mxu0 %v1639
  %1875 = vmatpush.msra.mxu0 %v1630
  %1876 = vmatpush.msra.mxu0 %v1621
  %1877 = vmatpush.msra.mxu0 %v1612
  %1878 = vmatpush.msra.mxu0 %v1603
  %1879 = vmatpush.msra.mxu0 %v1594
  %1880 = vmatpush.msra.mxu0 %v1585
  %1881 = vmatpush.msra.mxu0 %v1576
  %1882 = vmatpush.msra.mxu0 %v1567
  %1883 = vmatpush.msra.mxu0 %v1558
  %1884 = vmatpush.msra.mxu0 %v1549
  %1885 = vmatmul.f32.gmra.mxu0 %v35
  %v1886 = vpop.f32.mrf.mxu0
  %v1887 = vadd.f32 %v1867, %v1886
  %1888 = vdwg.mxu0
  %1889 = vmatpush.msra.mxu0 %v1541
  %1890 = vmatpush.msra.mxu0 %v1532
  %1891 = vmatpush.msra.mxu0 %v1523
  %1892 = vmatpush.msra.mxu0 %v1514
  %1893 = vmatpush.msra.mxu0 %v1505
  %1894 = vmatpush.msra.mxu0 %v1496
  %1895 = vmatpush.msra.mxu0 %v1487
  %1896 = vmatpush.msra.mxu0 %v1478
  %1897 = vmatpush.msra.mxu0 %v1469
  %1898 = vmatpush.msra.mxu0 %v1460
  %1899 = vmatpush.msra.mxu0 %v1451
  %1900 = vmatpush.msra.mxu0 %v1442
  %1901 = vmatpush.msra.mxu0 %v1433
  %1902 = vmatpush.msra.mxu0 %v1424
  %1903 = vmatpush.msra.mxu0 %v1415
  %1904 = vmatpush.msra.mxu0 %v1406
  %1905 = vmatmul.f32.gmra.mxu0 %v34
  %v1906 = vpop.f32.mrf.mxu0
  %v1907 = vadd.f32 %v333, %v1906
  %1908 = vdwg.mxu0
  %1909 = vmatpush.msra.mxu0 %v1685
  %1910 = vmatpush.msra.mxu0 %v1676
  %1911 = vmatpush.msra.mxu0 %v1667
  %1912 = vmatpush.msra.mxu0 %v1658
  %1913 = vmatpush.msra.mxu0 %v1649
  %1914 = vmatpush.msra.mxu0 %v1640
  %1915 = vmatpush.msra.mxu0 %v1631
  %1916 = vmatpush.msra.mxu0 %v1622
  %1917 = vmatpush.msra.mxu0 %v1613
  %1918 = vmatpush.msra.mxu0 %v1604
  %1919 = vmatpush.msra.mxu0 %v1595
  %1920 = vmatpush.msra.mxu0 %v1586
  %1921 = vmatpush.msra.mxu0 %v1577
  %1922 = vmatpush.msra.mxu0 %v1568
  %1923 = vmatpush.msra.mxu0 %v1559
  %1924 = vmatpush.msra.mxu0 %v1550
  %1925 = vmatmul.f32.gmra.mxu0 %v35
  %v1926 = vpop.f32.mrf.mxu0
  %v1927 = vadd.f32 %v1907, %v1926
  %1928 = vdwg.mxu0
  %1929 = vmatpush.msra.mxu0 %v1542
  %1930 = vmatpush.msra.mxu0 %v1533
  %1931 = vmatpush.msra.mxu0 %v1524
  %1932 = vmatpush.msra.mxu0 %v1515
  %1933 = vmatpush.msra.mxu0 %v1506
  %1934 = vmatpush.msra.mxu0 %v1497
  %1935 = vmatpush.msra.mxu0 %v1488
  %1936 = vmatpush.msra.mxu0 %v1479
  %1937 = vmatpush.msra.mxu0 %v1470
  %1938 = vmatpush.msra.mxu0 %v1461
  %1939 = vmatpush.msra.mxu0 %v1452
  %1940 = vmatpush.msra.mxu0 %v1443
  %1941 = vmatpush.msra.mxu0 %v1434
  %1942 = vmatpush.msra.mxu0 %v1425
  %1943 = vmatpush.msra.mxu0 %v1416
  %1944 = vmatpush.msra.mxu0 %v1407
  %1945 = vmatmul.f32.gmra.mxu0 %v34
  %v1946 = vpop.f32.mrf.mxu0
  %v1947 = vadd.f32 %v334, %v1946
  %1948 = vdwg.mxu0
  %1949 = vmatpush.msra.mxu0 %v1686
  %1950 = vmatpush.msra.mxu0 %v1677
  %1951 = vmatpush.msra.mxu0 %v1668
  %1952 = vmatpush.msra.mxu0 %v1659
  %1953 = vmatpush.msra.mxu0 %v1650
  %1954 = vmatpush.msra.mxu0 %v1641
  %1955 = vmatpush.msra.mxu0 %v1632
  %1956 = vmatpush.msra.mxu0 %v1623
  %1957 = vmatpush.msra.mxu0 %v1614
  %1958 = vmatpush.msra.mxu0 %v1605
  %1959 = vmatpush.msra.mxu0 %v1596
  %1960 = vmatpush.msra.mxu0 %v1587
  %1961 = vmatpush.msra.mxu0 %v1578
  %1962 = vmatpush.msra.mxu0 %v1569
  %1963 = vmatpush.msra.mxu0 %v1560
  %1964 = vmatpush.msra.mxu0 %v1551
  %1965 = vmatmul.f32.gmra.mxu0 %v35
  %v1966 = vpop.f32.mrf.mxu0
  %v1967 = vadd.f32 %v1947, %v1966
  %1968 = vdwg.mxu0
  %1969 = vmatpush.msra.mxu0 %v1543
  %1970 = vmatpush.msra.mxu0 %v1534
  %1971 = vmatpush.msra.mxu0 %v1525
  %1972 = vmatpush.msra.mxu0 %v1516
  %1973 = vmatpush.msra.mxu0 %v1507
  %1974 = vmatpush.msra.mxu0 %v1498
  %1975 = vmatpush.msra.mxu0 %v1489
  %1976 = vmatpush.msra.mxu0 %v1480
  %1977 = vmatpush.msra.mxu0 %v1471
  %1978 = vmatpush.msra.mxu0 %v1462
  %1979 = vmatpush.msra.mxu0 %v1453
  %1980 = vmatpush.msra.mxu0 %v1444
  %1981 = vmatpush.msra.mxu0 %v1435
  %1982 = vmatpush.msra.mxu0 %v1426
  %1983 = vmatpush.msra.mxu0 %v1417
  %1984 = vmatpush.msra.mxu0 %v1408
  %1985 = vmatmul.f32.gmra.mxu0 %v34
  %v1986 = vpop.f32.mrf.mxu0
  %v1987 = vadd.f32 %v335, %v1986
  %1988 = vdwg.mxu0
  %1989 = vmatpush.msra.mxu0 %v1687
  %1990 = vmatpush.msra.mxu0 %v1678
  %1991 = vmatpush.msra.mxu0 %v1669
  %1992 = vmatpush.msra.mxu0 %v1660
  %1993 = vmatpush.msra.mxu0 %v1651
  %1994 = vmatpush.msra.mxu0 %v1642
  %1995 = vmatpush.msra.mxu0 %v1633
  %1996 = vmatpush.msra.mxu0 %v1624
  %1997 = vmatpush.msra.mxu0 %v1615
  %1998 = vmatpush.msra.mxu0 %v1606
  %1999 = vmatpush.msra.mxu0 %v1597
  %2000 = vmatpush.msra.mxu0 %v1588
  %2001 = vmatpush.msra.mxu0 %v1579
  %2002 = vmatpush.msra.mxu0 %v1570
  %2003 = vmatpush.msra.mxu0 %v1561
  %2004 = vmatpush.msra.mxu0 %v1552
  %2005 = vmatmul.f32.gmra.mxu0 %v35
  %v2006 = vpop.f32.mrf.mxu0
  %v2007 = vadd.f32 %v1987, %v2006
  %2008 = vdwg.mxu0
  %2009 = vmatpush.msra.mxu0 %v1544
  %2010 = vmatpush.msra.mxu0 %v1535
  %2011 = vmatpush.msra.mxu0 %v1526
  %2012 = vmatpush.msra.mxu0 %v1517
  %2013 = vmatpush.msra.mxu0 %v1508
  %2014 = vmatpush.msra.mxu0 %v1499
  %2015 = vmatpush.msra.mxu0 %v1490
  %2016 = vmatpush.msra.mxu0 %v1481
  %2017 = vmatpush.msra.mxu0 %v1472
  %2018 = vmatpush.msra.mxu0 %v1463
  %2019 = vmatpush.msra.mxu0 %v1454
  %2020 = vmatpush.msra.mxu0 %v1445
  %2021 = vmatpush.msra.mxu0 %v1436
  %2022 = vmatpush.msra.mxu0 %v1427
  %2023 = vmatpush.msra.mxu0 %v1418
  %2024 = vmatpush.msra.mxu0 %v1409
  %2025 = vmatmul.f32.gmra.mxu0 %v34
  %v2026 = vpop.f32.mrf.mxu0
  %v2027 = vadd.f32 %v336, %v2026
  %2028 = vdwg.mxu0
  %2029 = vmatpush.msra.mxu0 %v1688
  %2030 = vmatpush.msra.mxu0 %v1679
  %2031 = vmatpush.msra.mxu0 %v1670
  %2032 = vmatpush.msra.mxu0 %v1661
  %2033 = vmatpush.msra.mxu0 %v1652
  %2034 = vmatpush.msra.mxu0 %v1643
  %2035 = vmatpush.msra.mxu0 %v1634
  %2036 = vmatpush.msra.mxu0 %v1625
  %2037 = vmatpush.msra.mxu0 %v1616
  %2038 = vmatpush.msra.mxu0 %v1607
  %2039 = vmatpush.msra.mxu0 %v1598
  %2040 = vmatpush.msra.mxu0 %v1589
  %2041 = vmatpush.msra.mxu0 %v1580
  %2042 = vmatpush.msra.mxu0 %v1571
  %2043 = vmatpush.msra.mxu0 %v1562
  %2044 = vmatpush.msra.mxu0 %v1553
  %2045 = vmatmul.f32.gmra.mxu0 %v35
  %v2046 = vpop.f32.mrf.mxu0
  %v2047 = vadd.f32 %v2027, %v2046
  %2048 = vdwg.mxu0
  %v2049 = vmax.f32 %v1727, 0.0
  %v2050 = vmax.f32 %v1767, 0.0
  %v2051 = vmax.f32 %v1807, 0.0
  %v2052 = vmax.f32 %v1847, 0.0
  %v2053 = vmax.f32 %v1887, 0.0
  %v2054 = vmax.f32 %v1927, 0.0
  %v2055 = vmax.f32 %v1967, 0.0
  %v2056 = vmax.f32 %v2007, 0.0
  %v2057 = vmax.f32 %v2047, 0.0
  %vm2058 = vcmp.gt.f32.partialorder %v2049, %v1391
  %vm2059 = vcmp.gt.f32.partialorder %v2050, %v1392
  %vm2060 = vcmp.gt.f32.partialorder %v2051, %v1393
  %vm2061 = vcmp.gt.f32.partialorder %v2052, %v1394
  %vm2062 = vcmp.gt.f32.partialorder %v2053, %v1395
  %vm2063 = vcmp.gt.f32.partialorder %v2054, %v1396
  %vm2064 = vcmp.gt.f32.partialorder %v2055, %v1397
  %vm2065 = vcmp.gt.f32.partialorder %v2056, %v1398
  %vm2066 = vcmp.gt.f32.partialorder %v2057, %v1399
  %v2067 = vsel %vm2058, 2.0, %v1382
  %v2068 = vsel %vm2059, 2.0, %v1383
  %v2069 = vsel %vm2060, 2.0, %v1384
  %v2070 = vsel %vm2061, 2.0, %v1385
  %v2071 = vsel %vm2062, 2.0, %v1386
  %v2072 = vsel %vm2063, 2.0, %v1387
  %v2073 = vsel %vm2064, 2.0, %v1388
  %v2074 = vsel %vm2065, 2.0, %v1389
  %v2075 = vsel %vm2066, 2.0, %v1390
  %v2076 = vmax.f32 %v1391, %v2049
  %v2077 = vmax.f32 %v1392, %v2050
  %v2078 = vmax.f32 %v1393, %v2051
  %v2079 = vmax.f32 %v1394, %v2052
  %v2080 = vmax.f32 %v1395, %v2053
  %v2081 = vmax.f32 %v1396, %v2054
  %v2082 = vmax.f32 %v1397, %v2055
  %v2083 = vmax.f32 %v1398, %v2056
  %v2084 = vmax.f32 %v1399, %v2057
  %s2085 = scalar_lea.vmem %s1, 6912
  %v2086 = vld [vmem:[%s2085] sm:$0xff]
  %v2087 = vld [vmem:[%s2085 + $0x8] sm:$0xff]
  %v2088 = vld [vmem:[%s2085 + $0x10] sm:$0xff]
  %v2089 = vld [vmem:[%s2085 + $0x18] sm:$0xff]
  %v2090 = vld [vmem:[%s2085 + $0x20] sm:$0xff]
  %v2091 = vld [vmem:[%s2085 + $0x28] sm:$0xff]
  %v2092 = vld [vmem:[%s2085 + $0x30] sm:$0xff]
  %v2093 = vld [vmem:[%s2085 + $0x38] sm:$0xff]
  %v2094 = vld [vmem:[%s2085 + $0x40] sm:$0xff]
  %v2095 = vld [vmem:[%s2085 + $0x48] sm:$0xff]
  %v2096 = vld [vmem:[%s2085 + $0x50] sm:$0xff]
  %v2097 = vld [vmem:[%s2085 + $0x58] sm:$0xff]
  %v2098 = vld [vmem:[%s2085 + $0x60] sm:$0xff]
  %v2099 = vld [vmem:[%s2085 + $0x68] sm:$0xff]
  %v2100 = vld [vmem:[%s2085 + $0x70] sm:$0xff]
  %v2101 = vld [vmem:[%s2085 + $0x78] sm:$0xff]
  %v2102 = vld [vmem:[%s2085 + $0x80] sm:$0xff]
  %v2103 = vld [vmem:[%s2085 + $0x88] sm:$0xff]
  %v2104 = vld [vmem:[%s2085 + $0x90] sm:$0xff]
  %v2105 = vld [vmem:[%s2085 + $0x98] sm:$0xff]
  %v2106 = vld [vmem:[%s2085 + $0xa0] sm:$0xff]
  %v2107 = vld [vmem:[%s2085 + $0xa8] sm:$0xff]
  %v2108 = vld [vmem:[%s2085 + $0xb0] sm:$0xff]
  %v2109 = vld [vmem:[%s2085 + $0xb8] sm:$0xff]
  %v2110 = vld [vmem:[%s2085 + $0xc0] sm:$0xff]
  %v2111 = vld [vmem:[%s2085 + $0xc8] sm:$0xff]
  %v2112 = vld [vmem:[%s2085 + $0xd0] sm:$0xff]
  %v2113 = vld [vmem:[%s2085 + $0xd8] sm:$0xff]
  %v2114 = vld [vmem:[%s2085 + $0xe0] sm:$0xff]
  %v2115 = vld [vmem:[%s2085 + $0xe8] sm:$0xff]
  %v2116 = vld [vmem:[%s2085 + $0xf0] sm:$0xff]
  %v2117 = vld [vmem:[%s2085 + $0xf8] sm:$0xff]
  %v2118 = vld [vmem:[%s2085 + $0x100] sm:$0xff]
  %v2119 = vld [vmem:[%s2085 + $0x108] sm:$0xff]
  %v2120 = vld [vmem:[%s2085 + $0x110] sm:$0xff]
  %v2121 = vld [vmem:[%s2085 + $0x118] sm:$0xff]
  %v2122 = vld [vmem:[%s2085 + $0x120] sm:$0xff]
  %v2123 = vld [vmem:[%s2085 + $0x128] sm:$0xff]
  %v2124 = vld [vmem:[%s2085 + $0x130] sm:$0xff]
  %v2125 = vld [vmem:[%s2085 + $0x138] sm:$0xff]
  %v2126 = vld [vmem:[%s2085 + $0x140] sm:$0xff]
  %v2127 = vld [vmem:[%s2085 + $0x148] sm:$0xff]
  %v2128 = vld [vmem:[%s2085 + $0x150] sm:$0xff]
  %v2129 = vld [vmem:[%s2085 + $0x158] sm:$0xff]
  %v2130 = vld [vmem:[%s2085 + $0x160] sm:$0xff]
  %v2131 = vld [vmem:[%s2085 + $0x168] sm:$0xff]
  %v2132 = vld [vmem:[%s2085 + $0x170] sm:$0xff]
  %v2133 = vld [vmem:[%s2085 + $0x178] sm:$0xff]
  %v2134 = vld [vmem:[%s2085 + $0x180] sm:$0xff]
  %v2135 = vld [vmem:[%s2085 + $0x188] sm:$0xff]
  %v2136 = vld [vmem:[%s2085 + $0x190] sm:$0xff]
  %v2137 = vld [vmem:[%s2085 + $0x198] sm:$0xff]
  %v2138 = vld [vmem:[%s2085 + $0x1a0] sm:$0xff]
  %v2139 = vld [vmem:[%s2085 + $0x1a8] sm:$0xff]
  %v2140 = vld [vmem:[%s2085 + $0x1b0] sm:$0xff]
  %v2141 = vld [vmem:[%s2085 + $0x1b8] sm:$0xff]
  %v2142 = vld [vmem:[%s2085 + $0x1c0] sm:$0xff]
  %v2143 = vld [vmem:[%s2085 + $0x1c8] sm:$0xff]
  %v2144 = vld [vmem:[%s2085 + $0x1d0] sm:$0xff]
  %v2145 = vld [vmem:[%s2085 + $0x1d8] sm:$0xff]
  %v2146 = vld [vmem:[%s2085 + $0x1e0] sm:$0xff]
  %v2147 = vld [vmem:[%s2085 + $0x1e8] sm:$0xff]
  %v2148 = vld [vmem:[%s2085 + $0x1f0] sm:$0xff]
  %v2149 = vld [vmem:[%s2085 + $0x1f8] sm:$0xff]
  %v2150 = vld [vmem:[%s2085 + $0x200] sm:$0xff]
  %v2151 = vld [vmem:[%s2085 + $0x208] sm:$0xff]
  %v2152 = vld [vmem:[%s2085 + $0x210] sm:$0xff]
  %v2153 = vld [vmem:[%s2085 + $0x218] sm:$0xff]
  %v2154 = vld [vmem:[%s2085 + $0x220] sm:$0xff]
  %v2155 = vld [vmem:[%s2085 + $0x228] sm:$0xff]
  %v2156 = vld [vmem:[%s2085 + $0x230] sm:$0xff]
  %v2157 = vld [vmem:[%s2085 + $0x238] sm:$0xff]
  %v2158 = vld [vmem:[%s2085 + $0x240] sm:$0xff]
  %v2159 = vld [vmem:[%s2085 + $0x248] sm:$0xff]
  %v2160 = vld [vmem:[%s2085 + $0x250] sm:$0xff]
  %v2161 = vld [vmem:[%s2085 + $0x258] sm:$0xff]
  %v2162 = vld [vmem:[%s2085 + $0x260] sm:$0xff]
  %v2163 = vld [vmem:[%s2085 + $0x268] sm:$0xff]
  %v2164 = vld [vmem:[%s2085 + $0x270] sm:$0xff]
  %v2165 = vld [vmem:[%s2085 + $0x278] sm:$0xff]
  %v2166 = vld [vmem:[%s2085 + $0x280] sm:$0xff]
  %v2167 = vld [vmem:[%s2085 + $0x288] sm:$0xff]
  %v2168 = vld [vmem:[%s2085 + $0x290] sm:$0xff]
  %v2169 = vld [vmem:[%s2085 + $0x298] sm:$0xff]
  %v2170 = vld [vmem:[%s2085 + $0x2a0] sm:$0xff]
  %v2171 = vld [vmem:[%s2085 + $0x2a8] sm:$0xff]
  %v2172 = vld [vmem:[%s2085 + $0x2b0] sm:$0xff]
  %v2173 = vld [vmem:[%s2085 + $0x2b8] sm:$0xff]
  %v2174 = vld [vmem:[%s2085 + $0x2c0] sm:$0xff]
  %v2175 = vld [vmem:[%s2085 + $0x2c8] sm:$0xff]
  %v2176 = vld [vmem:[%s2085 + $0x2d0] sm:$0xff]
  %v2177 = vld [vmem:[%s2085 + $0x2d8] sm:$0xff]
  %v2178 = vld [vmem:[%s2085 + $0x2e0] sm:$0xff]
  %v2179 = vld [vmem:[%s2085 + $0x2e8] sm:$0xff]
  %v2180 = vld [vmem:[%s2085 + $0x2f0] sm:$0xff]
  %v2181 = vld [vmem:[%s2085 + $0x2f8] sm:$0xff]
  %v2182 = vld [vmem:[%s2085 + $0x300] sm:$0xff]
  %v2183 = vld [vmem:[%s2085 + $0x308] sm:$0xff]
  %v2184 = vld [vmem:[%s2085 + $0x310] sm:$0xff]
  %v2185 = vld [vmem:[%s2085 + $0x318] sm:$0xff]
  %v2186 = vld [vmem:[%s2085 + $0x320] sm:$0xff]
  %v2187 = vld [vmem:[%s2085 + $0x328] sm:$0xff]
  %v2188 = vld [vmem:[%s2085 + $0x330] sm:$0xff]
  %v2189 = vld [vmem:[%s2085 + $0x338] sm:$0xff]
  %v2190 = vld [vmem:[%s2085 + $0x340] sm:$0xff]
  %v2191 = vld [vmem:[%s2085 + $0x348] sm:$0xff]
  %v2192 = vld [vmem:[%s2085 + $0x350] sm:$0xff]
  %v2193 = vld [vmem:[%s2085 + $0x358] sm:$0xff]
  %v2194 = vld [vmem:[%s2085 + $0x360] sm:$0xff]
  %v2195 = vld [vmem:[%s2085 + $0x368] sm:$0xff]
  %v2196 = vld [vmem:[%s2085 + $0x370] sm:$0xff]
  %v2197 = vld [vmem:[%s2085 + $0x378] sm:$0xff]
  %v2198 = vld [vmem:[%s2085 + $0x380] sm:$0xff]
  %v2199 = vld [vmem:[%s2085 + $0x388] sm:$0xff]
  %v2200 = vld [vmem:[%s2085 + $0x390] sm:$0xff]
  %v2201 = vld [vmem:[%s2085 + $0x398] sm:$0xff]
  %v2202 = vld [vmem:[%s2085 + $0x3a0] sm:$0xff]
  %v2203 = vld [vmem:[%s2085 + $0x3a8] sm:$0xff]
  %v2204 = vld [vmem:[%s2085 + $0x3b0] sm:$0xff]
  %v2205 = vld [vmem:[%s2085 + $0x3b8] sm:$0xff]
  %v2206 = vld [vmem:[%s2085 + $0x3c0] sm:$0xff]
  %v2207 = vld [vmem:[%s2085 + $0x3c8] sm:$0xff]
  %v2208 = vld [vmem:[%s2085 + $0x3d0] sm:$0xff]
  %v2209 = vld [vmem:[%s2085 + $0x3d8] sm:$0xff]
  %v2210 = vld [vmem:[%s2085 + $0x3e0] sm:$0xff]
  %v2211 = vld [vmem:[%s2085 + $0x3e8] sm:$0xff]
  %v2212 = vld [vmem:[%s2085 + $0x3f0] sm:$0xff]
  %v2213 = vld [vmem:[%s2085 + $0x3f8] sm:$0xff]
  %v2214 = vld [vmem:[%s2085 + $0x400] sm:$0xff]
  %v2215 = vld [vmem:[%s2085 + $0x408] sm:$0xff]
  %v2216 = vld [vmem:[%s2085 + $0x410] sm:$0xff]
  %v2217 = vld [vmem:[%s2085 + $0x418] sm:$0xff]
  %v2218 = vld [vmem:[%s2085 + $0x420] sm:$0xff]
  %v2219 = vld [vmem:[%s2085 + $0x428] sm:$0xff]
  %v2220 = vld [vmem:[%s2085 + $0x430] sm:$0xff]
  %v2221 = vld [vmem:[%s2085 + $0x438] sm:$0xff]
  %v2222 = vld [vmem:[%s2085 + $0x440] sm:$0xff]
  %v2223 = vld [vmem:[%s2085 + $0x448] sm:$0xff]
  %v2224 = vld [vmem:[%s2085 + $0x450] sm:$0xff]
  %v2225 = vld [vmem:[%s2085 + $0x458] sm:$0xff]
  %v2226 = vld [vmem:[%s2085 + $0x460] sm:$0xff]
  %v2227 = vld [vmem:[%s2085 + $0x468] sm:$0xff]
  %v2228 = vld [vmem:[%s2085 + $0x470] sm:$0xff]
  %v2229 = vld [vmem:[%s2085 + $0x478] sm:$0xff]
  %v2230 = vld [vmem:[%s2085 + $0x480] sm:$0xff]
  %v2231 = vld [vmem:[%s2085 + $0x488] sm:$0xff]
  %v2232 = vld [vmem:[%s2085 + $0x490] sm:$0xff]
  %v2233 = vld [vmem:[%s2085 + $0x498] sm:$0xff]
  %v2234 = vld [vmem:[%s2085 + $0x4a0] sm:$0xff]
  %v2235 = vld [vmem:[%s2085 + $0x4a8] sm:$0xff]
  %v2236 = vld [vmem:[%s2085 + $0x4b0] sm:$0xff]
  %v2237 = vld [vmem:[%s2085 + $0x4b8] sm:$0xff]
  %v2238 = vld [vmem:[%s2085 + $0x4c0] sm:$0xff]
  %v2239 = vld [vmem:[%s2085 + $0x4c8] sm:$0xff]
  %v2240 = vld [vmem:[%s2085 + $0x4d0] sm:$0xff]
  %v2241 = vld [vmem:[%s2085 + $0x4d8] sm:$0xff]
  %v2242 = vld [vmem:[%s2085 + $0x4e0] sm:$0xff]
  %v2243 = vld [vmem:[%s2085 + $0x4e8] sm:$0xff]
  %v2244 = vld [vmem:[%s2085 + $0x4f0] sm:$0xff]
  %v2245 = vld [vmem:[%s2085 + $0x4f8] sm:$0xff]
  %v2246 = vld [vmem:[%s2085 + $0x500] sm:$0xff]
  %v2247 = vld [vmem:[%s2085 + $0x508] sm:$0xff]
  %v2248 = vld [vmem:[%s2085 + $0x510] sm:$0xff]
  %v2249 = vld [vmem:[%s2085 + $0x518] sm:$0xff]
  %v2250 = vld [vmem:[%s2085 + $0x520] sm:$0xff]
  %v2251 = vld [vmem:[%s2085 + $0x528] sm:$0xff]
  %v2252 = vld [vmem:[%s2085 + $0x530] sm:$0xff]
  %v2253 = vld [vmem:[%s2085 + $0x538] sm:$0xff]
  %v2254 = vld [vmem:[%s2085 + $0x540] sm:$0xff]
  %v2255 = vld [vmem:[%s2085 + $0x548] sm:$0xff]
  %v2256 = vld [vmem:[%s2085 + $0x550] sm:$0xff]
  %v2257 = vld [vmem:[%s2085 + $0x558] sm:$0xff]
  %v2258 = vld [vmem:[%s2085 + $0x560] sm:$0xff]
  %v2259 = vld [vmem:[%s2085 + $0x568] sm:$0xff]
  %v2260 = vld [vmem:[%s2085 + $0x570] sm:$0xff]
  %v2261 = vld [vmem:[%s2085 + $0x578] sm:$0xff]
  %v2262 = vld [vmem:[%s2085 + $0x580] sm:$0xff]
  %v2263 = vld [vmem:[%s2085 + $0x588] sm:$0xff]
  %v2264 = vld [vmem:[%s2085 + $0x590] sm:$0xff]
  %v2265 = vld [vmem:[%s2085 + $0x598] sm:$0xff]
  %v2266 = vld [vmem:[%s2085 + $0x5a0] sm:$0xff]
  %v2267 = vld [vmem:[%s2085 + $0x5a8] sm:$0xff]
  %v2268 = vld [vmem:[%s2085 + $0x5b0] sm:$0xff]
  %v2269 = vld [vmem:[%s2085 + $0x5b8] sm:$0xff]
  %v2270 = vld [vmem:[%s2085 + $0x5c0] sm:$0xff]
  %v2271 = vld [vmem:[%s2085 + $0x5c8] sm:$0xff]
  %v2272 = vld [vmem:[%s2085 + $0x5d0] sm:$0xff]
  %v2273 = vld [vmem:[%s2085 + $0x5d8] sm:$0xff]
  %v2274 = vld [vmem:[%s2085 + $0x5e0] sm:$0xff]
  %v2275 = vld [vmem:[%s2085 + $0x5e8] sm:$0xff]
  %v2276 = vld [vmem:[%s2085 + $0x5f0] sm:$0xff]
  %v2277 = vld [vmem:[%s2085 + $0x5f8] sm:$0xff]
  %v2278 = vld [vmem:[%s2085 + $0x600] sm:$0xff]
  %v2279 = vld [vmem:[%s2085 + $0x608] sm:$0xff]
  %v2280 = vld [vmem:[%s2085 + $0x610] sm:$0xff]
  %v2281 = vld [vmem:[%s2085 + $0x618] sm:$0xff]
  %v2282 = vld [vmem:[%s2085 + $0x620] sm:$0xff]
  %v2283 = vld [vmem:[%s2085 + $0x628] sm:$0xff]
  %v2284 = vld [vmem:[%s2085 + $0x630] sm:$0xff]
  %v2285 = vld [vmem:[%s2085 + $0x638] sm:$0xff]
  %v2286 = vld [vmem:[%s2085 + $0x640] sm:$0xff]
  %v2287 = vld [vmem:[%s2085 + $0x648] sm:$0xff]
  %v2288 = vld [vmem:[%s2085 + $0x650] sm:$0xff]
  %v2289 = vld [vmem:[%s2085 + $0x658] sm:$0xff]
  %v2290 = vld [vmem:[%s2085 + $0x660] sm:$0xff]
  %v2291 = vld [vmem:[%s2085 + $0x668] sm:$0xff]
  %v2292 = vld [vmem:[%s2085 + $0x670] sm:$0xff]
  %v2293 = vld [vmem:[%s2085 + $0x678] sm:$0xff]
  %v2294 = vld [vmem:[%s2085 + $0x680] sm:$0xff]
  %v2295 = vld [vmem:[%s2085 + $0x688] sm:$0xff]
  %v2296 = vld [vmem:[%s2085 + $0x690] sm:$0xff]
  %v2297 = vld [vmem:[%s2085 + $0x698] sm:$0xff]
  %v2298 = vld [vmem:[%s2085 + $0x6a0] sm:$0xff]
  %v2299 = vld [vmem:[%s2085 + $0x6a8] sm:$0xff]
  %v2300 = vld [vmem:[%s2085 + $0x6b0] sm:$0xff]
  %v2301 = vld [vmem:[%s2085 + $0x6b8] sm:$0xff]
  %v2302 = vld [vmem:[%s2085 + $0x6c0] sm:$0xff]
  %v2303 = vld [vmem:[%s2085 + $0x6c8] sm:$0xff]
  %v2304 = vld [vmem:[%s2085 + $0x6d0] sm:$0xff]
  %v2305 = vld [vmem:[%s2085 + $0x6d8] sm:$0xff]
  %v2306 = vld [vmem:[%s2085 + $0x6e0] sm:$0xff]
  %v2307 = vld [vmem:[%s2085 + $0x6e8] sm:$0xff]
  %v2308 = vld [vmem:[%s2085 + $0x6f0] sm:$0xff]
  %v2309 = vld [vmem:[%s2085 + $0x6f8] sm:$0xff]
  %v2310 = vld [vmem:[%s2085 + $0x700] sm:$0xff]
  %v2311 = vld [vmem:[%s2085 + $0x708] sm:$0xff]
  %v2312 = vld [vmem:[%s2085 + $0x710] sm:$0xff]
  %v2313 = vld [vmem:[%s2085 + $0x718] sm:$0xff]
  %v2314 = vld [vmem:[%s2085 + $0x720] sm:$0xff]
  %v2315 = vld [vmem:[%s2085 + $0x728] sm:$0xff]
  %v2316 = vld [vmem:[%s2085 + $0x730] sm:$0xff]
  %v2317 = vld [vmem:[%s2085 + $0x738] sm:$0xff]
  %v2318 = vld [vmem:[%s2085 + $0x740] sm:$0xff]
  %v2319 = vld [vmem:[%s2085 + $0x748] sm:$0xff]
  %v2320 = vld [vmem:[%s2085 + $0x750] sm:$0xff]
  %v2321 = vld [vmem:[%s2085 + $0x758] sm:$0xff]
  %v2322 = vld [vmem:[%s2085 + $0x760] sm:$0xff]
  %v2323 = vld [vmem:[%s2085 + $0x768] sm:$0xff]
  %v2324 = vld [vmem:[%s2085 + $0x770] sm:$0xff]
  %v2325 = vld [vmem:[%s2085 + $0x778] sm:$0xff]
  %v2326 = vld [vmem:[%s2085 + $0x780] sm:$0xff]
  %v2327 = vld [vmem:[%s2085 + $0x788] sm:$0xff]
  %v2328 = vld [vmem:[%s2085 + $0x790] sm:$0xff]
  %v2329 = vld [vmem:[%s2085 + $0x798] sm:$0xff]
  %v2330 = vld [vmem:[%s2085 + $0x7a0] sm:$0xff]
  %v2331 = vld [vmem:[%s2085 + $0x7a8] sm:$0xff]
  %v2332 = vld [vmem:[%s2085 + $0x7b0] sm:$0xff]
  %v2333 = vld [vmem:[%s2085 + $0x7b8] sm:$0xff]
  %v2334 = vld [vmem:[%s2085 + $0x7c0] sm:$0xff]
  %v2335 = vld [vmem:[%s2085 + $0x7c8] sm:$0xff]
  %v2336 = vld [vmem:[%s2085 + $0x7d0] sm:$0xff]
  %v2337 = vld [vmem:[%s2085 + $0x7d8] sm:$0xff]
  %v2338 = vld [vmem:[%s2085 + $0x7e0] sm:$0xff]
  %v2339 = vld [vmem:[%s2085 + $0x7e8] sm:$0xff]
  %v2340 = vld [vmem:[%s2085 + $0x7f0] sm:$0xff]
  %v2341 = vld [vmem:[%s2085 + $0x7f8] sm:$0xff]
  %v2342 = vld [vmem:[%s2085 + $0x800] sm:$0xff]
  %v2343 = vld [vmem:[%s2085 + $0x808] sm:$0xff]
  %v2344 = vld [vmem:[%s2085 + $0x810] sm:$0xff]
  %v2345 = vld [vmem:[%s2085 + $0x818] sm:$0xff]
  %v2346 = vld [vmem:[%s2085 + $0x820] sm:$0xff]
  %v2347 = vld [vmem:[%s2085 + $0x828] sm:$0xff]
  %v2348 = vld [vmem:[%s2085 + $0x830] sm:$0xff]
  %v2349 = vld [vmem:[%s2085 + $0x838] sm:$0xff]
  %v2350 = vld [vmem:[%s2085 + $0x840] sm:$0xff]
  %v2351 = vld [vmem:[%s2085 + $0x848] sm:$0xff]
  %v2352 = vld [vmem:[%s2085 + $0x850] sm:$0xff]
  %v2353 = vld [vmem:[%s2085 + $0x858] sm:$0xff]
  %v2354 = vld [vmem:[%s2085 + $0x860] sm:$0xff]
  %v2355 = vld [vmem:[%s2085 + $0x868] sm:$0xff]
  %v2356 = vld [vmem:[%s2085 + $0x870] sm:$0xff]
  %v2357 = vld [vmem:[%s2085 + $0x878] sm:$0xff]
  %v2358 = vld [vmem:[%s2085 + $0x880] sm:$0xff]
  %v2359 = vld [vmem:[%s2085 + $0x888] sm:$0xff]
  %v2360 = vld [vmem:[%s2085 + $0x890] sm:$0xff]
  %v2361 = vld [vmem:[%s2085 + $0x898] sm:$0xff]
  %v2362 = vld [vmem:[%s2085 + $0x8a0] sm:$0xff]
  %v2363 = vld [vmem:[%s2085 + $0x8a8] sm:$0xff]
  %v2364 = vld [vmem:[%s2085 + $0x8b0] sm:$0xff]
  %v2365 = vld [vmem:[%s2085 + $0x8b8] sm:$0xff]
  %v2366 = vld [vmem:[%s2085 + $0x8c0] sm:$0xff]
  %v2367 = vld [vmem:[%s2085 + $0x8c8] sm:$0xff]
  %v2368 = vld [vmem:[%s2085 + $0x8d0] sm:$0xff]
  %v2369 = vld [vmem:[%s2085 + $0x8d8] sm:$0xff]
  %v2370 = vld [vmem:[%s2085 + $0x8e0] sm:$0xff]
  %v2371 = vld [vmem:[%s2085 + $0x8e8] sm:$0xff]
  %v2372 = vld [vmem:[%s2085 + $0x8f0] sm:$0xff]
  %v2373 = vld [vmem:[%s2085 + $0x8f8] sm:$0xff]
  %2374 = vmatpush.msra.mxu0 %v2221
  %2375 = vmatpush.msra.mxu0 %v2212
  %2376 = vmatpush.msra.mxu0 %v2203
  %2377 = vmatpush.msra.mxu0 %v2194
  %2378 = vmatpush.msra.mxu0 %v2185
  %2379 = vmatpush.msra.mxu0 %v2176
  %2380 = vmatpush.msra.mxu0 %v2167
  %2381 = vmatpush.msra.mxu0 %v2158
  %2382 = vmatpush.msra.mxu0 %v2149
  %2383 = vmatpush.msra.mxu0 %v2140
  %2384 = vmatpush.msra.mxu0 %v2131
  %2385 = vmatpush.msra.mxu0 %v2122
  %2386 = vmatpush.msra.mxu0 %v2113
  %2387 = vmatpush.msra.mxu0 %v2104
  %2388 = vmatpush.msra.mxu0 %v2095
  %2389 = vmatpush.msra.mxu0 %v2086
  %2390 = vmatmul.f32.gmra.mxu0 %v34
  %v2391 = vpop.f32.mrf.mxu0
  %v2392 = vadd.f32 %v328, %v2391
  %2393 = vdwg.mxu0
  %2394 = vmatpush.msra.mxu0 %v2365
  %2395 = vmatpush.msra.mxu0 %v2356
  %2396 = vmatpush.msra.mxu0 %v2347
  %2397 = vmatpush.msra.mxu0 %v2338
  %2398 = vmatpush.msra.mxu0 %v2329
  %2399 = vmatpush.msra.mxu0 %v2320
  %2400 = vmatpush.msra.mxu0 %v2311
  %2401 = vmatpush.msra.mxu0 %v2302
  %2402 = vmatpush.msra.mxu0 %v2293
  %2403 = vmatpush.msra.mxu0 %v2284
  %2404 = vmatpush.msra.mxu0 %v2275
  %2405 = vmatpush.msra.mxu0 %v2266
  %2406 = vmatpush.msra.mxu0 %v2257
  %2407 = vmatpush.msra.mxu0 %v2248
  %2408 = vmatpush.msra.mxu0 %v2239
  %2409 = vmatpush.msra.mxu0 %v2230
  %2410 = vmatmul.f32.gmra.mxu0 %v35
  %v2411 = vpop.f32.mrf.mxu0
  %v2412 = vadd.f32 %v2392, %v2411
  %2413 = vdwg.mxu0
  %2414 = vmatpush.msra.mxu0 %v2222
  %2415 = vmatpush.msra.mxu0 %v2213
  %2416 = vmatpush.msra.mxu0 %v2204
  %2417 = vmatpush.msra.mxu0 %v2195
  %2418 = vmatpush.msra.mxu0 %v2186
  %2419 = vmatpush.msra.mxu0 %v2177
  %2420 = vmatpush.msra.mxu0 %v2168
  %2421 = vmatpush.msra.mxu0 %v2159
  %2422 = vmatpush.msra.mxu0 %v2150
  %2423 = vmatpush.msra.mxu0 %v2141
  %2424 = vmatpush.msra.mxu0 %v2132
  %2425 = vmatpush.msra.mxu0 %v2123
  %2426 = vmatpush.msra.mxu0 %v2114
  %2427 = vmatpush.msra.mxu0 %v2105
  %2428 = vmatpush.msra.mxu0 %v2096
  %2429 = vmatpush.msra.mxu0 %v2087
  %2430 = vmatmul.f32.gmra.mxu0 %v34
  %v2431 = vpop.f32.mrf.mxu0
  %v2432 = vadd.f32 %v329, %v2431
  %2433 = vdwg.mxu0
  %2434 = vmatpush.msra.mxu0 %v2366
  %2435 = vmatpush.msra.mxu0 %v2357
  %2436 = vmatpush.msra.mxu0 %v2348
  %2437 = vmatpush.msra.mxu0 %v2339
  %2438 = vmatpush.msra.mxu0 %v2330
  %2439 = vmatpush.msra.mxu0 %v2321
  %2440 = vmatpush.msra.mxu0 %v2312
  %2441 = vmatpush.msra.mxu0 %v2303
  %2442 = vmatpush.msra.mxu0 %v2294
  %2443 = vmatpush.msra.mxu0 %v2285
  %2444 = vmatpush.msra.mxu0 %v2276
  %2445 = vmatpush.msra.mxu0 %v2267
  %2446 = vmatpush.msra.mxu0 %v2258
  %2447 = vmatpush.msra.mxu0 %v2249
  %2448 = vmatpush.msra.mxu0 %v2240
  %2449 = vmatpush.msra.mxu0 %v2231
  %2450 = vmatmul.f32.gmra.mxu0 %v35
  %v2451 = vpop.f32.mrf.mxu0
  %v2452 = vadd.f32 %v2432, %v2451
  %2453 = vdwg.mxu0
  %2454 = vmatpush.msra.mxu0 %v2223
  %2455 = vmatpush.msra.mxu0 %v2214
  %2456 = vmatpush.msra.mxu0 %v2205
  %2457 = vmatpush.msra.mxu0 %v2196
  %2458 = vmatpush.msra.mxu0 %v2187
  %2459 = vmatpush.msra.mxu0 %v2178
  %2460 = vmatpush.msra.mxu0 %v2169
  %2461 = vmatpush.msra.mxu0 %v2160
  %2462 = vmatpush.msra.mxu0 %v2151
  %2463 = vmatpush.msra.mxu0 %v2142
  %2464 = vmatpush.msra.mxu0 %v2133
  %2465 = vmatpush.msra.mxu0 %v2124
  %2466 = vmatpush.msra.mxu0 %v2115
  %2467 = vmatpush.msra.mxu0 %v2106
  %2468 = vmatpush.msra.mxu0 %v2097
  %2469 = vmatpush.msra.mxu0 %v2088
  %2470 = vmatmul.f32.gmra.mxu0 %v34
  %v2471 = vpop.f32.mrf.mxu0
  %v2472 = vadd.f32 %v330, %v2471
  %2473 = vdwg.mxu0
  %2474 = vmatpush.msra.mxu0 %v2367
  %2475 = vmatpush.msra.mxu0 %v2358
  %2476 = vmatpush.msra.mxu0 %v2349
  %2477 = vmatpush.msra.mxu0 %v2340
  %2478 = vmatpush.msra.mxu0 %v2331
  %2479 = vmatpush.msra.mxu0 %v2322
  %2480 = vmatpush.msra.mxu0 %v2313
  %2481 = vmatpush.msra.mxu0 %v2304
  %2482 = vmatpush.msra.mxu0 %v2295
  %2483 = vmatpush.msra.mxu0 %v2286
  %2484 = vmatpush.msra.mxu0 %v2277
  %2485 = vmatpush.msra.mxu0 %v2268
  %2486 = vmatpush.msra.mxu0 %v2259
  %2487 = vmatpush.msra.mxu0 %v2250
  %2488 = vmatpush.msra.mxu0 %v2241
  %2489 = vmatpush.msra.mxu0 %v2232
  %2490 = vmatmul.f32.gmra.mxu0 %v35
  %v2491 = vpop.f32.mrf.mxu0
  %v2492 = vadd.f32 %v2472, %v2491
  %2493 = vdwg.mxu0
  %2494 = vmatpush.msra.mxu0 %v2224
  %2495 = vmatpush.msra.mxu0 %v2215
  %2496 = vmatpush.msra.mxu0 %v2206
  %2497 = vmatpush.msra.mxu0 %v2197
  %2498 = vmatpush.msra.mxu0 %v2188
  %2499 = vmatpush.msra.mxu0 %v2179
  %2500 = vmatpush.msra.mxu0 %v2170
  %2501 = vmatpush.msra.mxu0 %v2161
  %2502 = vmatpush.msra.mxu0 %v2152
  %2503 = vmatpush.msra.mxu0 %v2143
  %2504 = vmatpush.msra.mxu0 %v2134
  %2505 = vmatpush.msra.mxu0 %v2125
  %2506 = vmatpush.msra.mxu0 %v2116
  %2507 = vmatpush.msra.mxu0 %v2107
  %2508 = vmatpush.msra.mxu0 %v2098
  %2509 = vmatpush.msra.mxu0 %v2089
  %2510 = vmatmul.f32.gmra.mxu0 %v34
  %v2511 = vpop.f32.mrf.mxu0
  %v2512 = vadd.f32 %v331, %v2511
  %2513 = vdwg.mxu0
  %2514 = vmatpush.msra.mxu0 %v2368
  %2515 = vmatpush.msra.mxu0 %v2359
  %2516 = vmatpush.msra.mxu0 %v2350
  %2517 = vmatpush.msra.mxu0 %v2341
  %2518 = vmatpush.msra.mxu0 %v2332
  %2519 = vmatpush.msra.mxu0 %v2323
  %2520 = vmatpush.msra.mxu0 %v2314
  %2521 = vmatpush.msra.mxu0 %v2305
  %2522 = vmatpush.msra.mxu0 %v2296
  %2523 = vmatpush.msra.mxu0 %v2287
  %2524 = vmatpush.msra.mxu0 %v2278
  %2525 = vmatpush.msra.mxu0 %v2269
  %2526 = vmatpush.msra.mxu0 %v2260
  %2527 = vmatpush.msra.mxu0 %v2251
  %2528 = vmatpush.msra.mxu0 %v2242
  %2529 = vmatpush.msra.mxu0 %v2233
  %2530 = vmatmul.f32.gmra.mxu0 %v35
  %v2531 = vpop.f32.mrf.mxu0
  %v2532 = vadd.f32 %v2512, %v2531
  %2533 = vdwg.mxu0
  %2534 = vmatpush.msra.mxu0 %v2225
  %2535 = vmatpush.msra.mxu0 %v2216
  %2536 = vmatpush.msra.mxu0 %v2207
  %2537 = vmatpush.msra.mxu0 %v2198
  %2538 = vmatpush.msra.mxu0 %v2189
  %2539 = vmatpush.msra.mxu0 %v2180
  %2540 = vmatpush.msra.mxu0 %v2171
  %2541 = vmatpush.msra.mxu0 %v2162
  %2542 = vmatpush.msra.mxu0 %v2153
  %2543 = vmatpush.msra.mxu0 %v2144
  %2544 = vmatpush.msra.mxu0 %v2135
  %2545 = vmatpush.msra.mxu0 %v2126
  %2546 = vmatpush.msra.mxu0 %v2117
  %2547 = vmatpush.msra.mxu0 %v2108
  %2548 = vmatpush.msra.mxu0 %v2099
  %2549 = vmatpush.msra.mxu0 %v2090
  %2550 = vmatmul.f32.gmra.mxu0 %v34
  %v2551 = vpop.f32.mrf.mxu0
  %v2552 = vadd.f32 %v332, %v2551
  %2553 = vdwg.mxu0
  %2554 = vmatpush.msra.mxu0 %v2369
  %2555 = vmatpush.msra.mxu0 %v2360
  %2556 = vmatpush.msra.mxu0 %v2351
  %2557 = vmatpush.msra.mxu0 %v2342
  %2558 = vmatpush.msra.mxu0 %v2333
  %2559 = vmatpush.msra.mxu0 %v2324
  %2560 = vmatpush.msra.mxu0 %v2315
  %2561 = vmatpush.msra.mxu0 %v2306
  %2562 = vmatpush.msra.mxu0 %v2297
  %2563 = vmatpush.msra.mxu0 %v2288
  %2564 = vmatpush.msra.mxu0 %v2279
  %2565 = vmatpush.msra.mxu0 %v2270
  %2566 = vmatpush.msra.mxu0 %v2261
  %2567 = vmatpush.msra.mxu0 %v2252
  %2568 = vmatpush.msra.mxu0 %v2243
  %2569 = vmatpush.msra.mxu0 %v2234
  %2570 = vmatmul.f32.gmra.mxu0 %v35
  %v2571 = vpop.f32.mrf.mxu0
  %v2572 = vadd.f32 %v2552, %v2571
  %2573 = vdwg.mxu0
  %2574 = vmatpush.msra.mxu0 %v2226
  %2575 = vmatpush.msra.mxu0 %v2217
  %2576 = vmatpush.msra.mxu0 %v2208
  %2577 = vmatpush.msra.mxu0 %v2199
  %2578 = vmatpush.msra.mxu0 %v2190
  %2579 = vmatpush.msra.mxu0 %v2181
  %2580 = vmatpush.msra.mxu0 %v2172
  %2581 = vmatpush.msra.mxu0 %v2163
  %2582 = vmatpush.msra.mxu0 %v2154
  %2583 = vmatpush.msra.mxu0 %v2145
  %2584 = vmatpush.msra.mxu0 %v2136
  %2585 = vmatpush.msra.mxu0 %v2127
  %2586 = vmatpush.msra.mxu0 %v2118
  %2587 = vmatpush.msra.mxu0 %v2109
  %2588 = vmatpush.msra.mxu0 %v2100
  %2589 = vmatpush.msra.mxu0 %v2091
  %2590 = vmatmul.f32.gmra.mxu0 %v34
  %v2591 = vpop.f32.mrf.mxu0
  %v2592 = vadd.f32 %v333, %v2591
  %2593 = vdwg.mxu0
  %2594 = vmatpush.msra.mxu0 %v2370
  %2595 = vmatpush.msra.mxu0 %v2361
  %2596 = vmatpush.msra.mxu0 %v2352
  %2597 = vmatpush.msra.mxu0 %v2343
  %2598 = vmatpush.msra.mxu0 %v2334
  %2599 = vmatpush.msra.mxu0 %v2325
  %2600 = vmatpush.msra.mxu0 %v2316
  %2601 = vmatpush.msra.mxu0 %v2307
  %2602 = vmatpush.msra.mxu0 %v2298
  %2603 = vmatpush.msra.mxu0 %v2289
  %2604 = vmatpush.msra.mxu0 %v2280
  %2605 = vmatpush.msra.mxu0 %v2271
  %2606 = vmatpush.msra.mxu0 %v2262
  %2607 = vmatpush.msra.mxu0 %v2253
  %2608 = vmatpush.msra.mxu0 %v2244
  %2609 = vmatpush.msra.mxu0 %v2235
  %2610 = vmatmul.f32.gmra.mxu0 %v35
  %v2611 = vpop.f32.mrf.mxu0
  %v2612 = vadd.f32 %v2592, %v2611
  %2613 = vdwg.mxu0
  %2614 = vmatpush.msra.mxu0 %v2227
  %2615 = vmatpush.msra.mxu0 %v2218
  %2616 = vmatpush.msra.mxu0 %v2209
  %2617 = vmatpush.msra.mxu0 %v2200
  %2618 = vmatpush.msra.mxu0 %v2191
  %2619 = vmatpush.msra.mxu0 %v2182
  %2620 = vmatpush.msra.mxu0 %v2173
  %2621 = vmatpush.msra.mxu0 %v2164
  %2622 = vmatpush.msra.mxu0 %v2155
  %2623 = vmatpush.msra.mxu0 %v2146
  %2624 = vmatpush.msra.mxu0 %v2137
  %2625 = vmatpush.msra.mxu0 %v2128
  %2626 = vmatpush.msra.mxu0 %v2119
  %2627 = vmatpush.msra.mxu0 %v2110
  %2628 = vmatpush.msra.mxu0 %v2101
  %2629 = vmatpush.msra.mxu0 %v2092
  %2630 = vmatmul.f32.gmra.mxu0 %v34
  %v2631 = vpop.f32.mrf.mxu0
  %v2632 = vadd.f32 %v334, %v2631
  %2633 = vdwg.mxu0
  %2634 = vmatpush.msra.mxu0 %v2371
  %2635 = vmatpush.msra.mxu0 %v2362
  %2636 = vmatpush.msra.mxu0 %v2353
  %2637 = vmatpush.msra.mxu0 %v2344
  %2638 = vmatpush.msra.mxu0 %v2335
  %2639 = vmatpush.msra.mxu0 %v2326
  %2640 = vmatpush.msra.mxu0 %v2317
  %2641 = vmatpush.msra.mxu0 %v2308
  %2642 = vmatpush.msra.mxu0 %v2299
  %2643 = vmatpush.msra.mxu0 %v2290
  %2644 = vmatpush.msra.mxu0 %v2281
  %2645 = vmatpush.msra.mxu0 %v2272
  %2646 = vmatpush.msra.mxu0 %v2263
  %2647 = vmatpush.msra.mxu0 %v2254
  %2648 = vmatpush.msra.mxu0 %v2245
  %2649 = vmatpush.msra.mxu0 %v2236
  %2650 = vmatmul.f32.gmra.mxu0 %v35
  %v2651 = vpop.f32.mrf.mxu0
  %v2652 = vadd.f32 %v2632, %v2651
  %2653 = vdwg.mxu0
  %2654 = vmatpush.msra.mxu0 %v2228
  %2655 = vmatpush.msra.mxu0 %v2219
  %2656 = vmatpush.msra.mxu0 %v2210
  %2657 = vmatpush.msra.mxu0 %v2201
  %2658 = vmatpush.msra.mxu0 %v2192
  %2659 = vmatpush.msra.mxu0 %v2183
  %2660 = vmatpush.msra.mxu0 %v2174
  %2661 = vmatpush.msra.mxu0 %v2165
  %2662 = vmatpush.msra.mxu0 %v2156
  %2663 = vmatpush.msra.mxu0 %v2147
  %2664 = vmatpush.msra.mxu0 %v2138
  %2665 = vmatpush.msra.mxu0 %v2129
  %2666 = vmatpush.msra.mxu0 %v2120
  %2667 = vmatpush.msra.mxu0 %v2111
  %2668 = vmatpush.msra.mxu0 %v2102
  %2669 = vmatpush.msra.mxu0 %v2093
  %2670 = vmatmul.f32.gmra.mxu0 %v34
  %v2671 = vpop.f32.mrf.mxu0
  %v2672 = vadd.f32 %v335, %v2671
  %2673 = vdwg.mxu0
  %2674 = vmatpush.msra.mxu0 %v2372
  %2675 = vmatpush.msra.mxu0 %v2363
  %2676 = vmatpush.msra.mxu0 %v2354
  %2677 = vmatpush.msra.mxu0 %v2345
  %2678 = vmatpush.msra.mxu0 %v2336
  %2679 = vmatpush.msra.mxu0 %v2327
  %2680 = vmatpush.msra.mxu0 %v2318
  %2681 = vmatpush.msra.mxu0 %v2309
  %2682 = vmatpush.msra.mxu0 %v2300
  %2683 = vmatpush.msra.mxu0 %v2291
  %2684 = vmatpush.msra.mxu0 %v2282
  %2685 = vmatpush.msra.mxu0 %v2273
  %2686 = vmatpush.msra.mxu0 %v2264
  %2687 = vmatpush.msra.mxu0 %v2255
  %2688 = vmatpush.msra.mxu0 %v2246
  %2689 = vmatpush.msra.mxu0 %v2237
  %2690 = vmatmul.f32.gmra.mxu0 %v35
  %v2691 = vpop.f32.mrf.mxu0
  %v2692 = vadd.f32 %v2672, %v2691
  %2693 = vdwg.mxu0
  %2694 = vmatpush.msra.mxu0 %v2229
  %2695 = vmatpush.msra.mxu0 %v2220
  %2696 = vmatpush.msra.mxu0 %v2211
  %2697 = vmatpush.msra.mxu0 %v2202
  %2698 = vmatpush.msra.mxu0 %v2193
  %2699 = vmatpush.msra.mxu0 %v2184
  %2700 = vmatpush.msra.mxu0 %v2175
  %2701 = vmatpush.msra.mxu0 %v2166
  %2702 = vmatpush.msra.mxu0 %v2157
  %2703 = vmatpush.msra.mxu0 %v2148
  %2704 = vmatpush.msra.mxu0 %v2139
  %2705 = vmatpush.msra.mxu0 %v2130
  %2706 = vmatpush.msra.mxu0 %v2121
  %2707 = vmatpush.msra.mxu0 %v2112
  %2708 = vmatpush.msra.mxu0 %v2103
  %2709 = vmatpush.msra.mxu0 %v2094
  %2710 = vmatmul.f32.gmra.mxu0 %v34
  %v2711 = vpop.f32.mrf.mxu0
  %v2712 = vadd.f32 %v336, %v2711
  %2713 = vdwg.mxu0
  %2714 = vmatpush.msra.mxu0 %v2373
  %2715 = vmatpush.msra.mxu0 %v2364
  %2716 = vmatpush.msra.mxu0 %v2355
  %2717 = vmatpush.msra.mxu0 %v2346
  %2718 = vmatpush.msra.mxu0 %v2337
  %2719 = vmatpush.msra.mxu0 %v2328
  %2720 = vmatpush.msra.mxu0 %v2319
  %2721 = vmatpush.msra.mxu0 %v2310
  %2722 = vmatpush.msra.mxu0 %v2301
  %2723 = vmatpush.msra.mxu0 %v2292
  %2724 = vmatpush.msra.mxu0 %v2283
  %2725 = vmatpush.msra.mxu0 %v2274
  %2726 = vmatpush.msra.mxu0 %v2265
  %2727 = vmatpush.msra.mxu0 %v2256
  %2728 = vmatpush.msra.mxu0 %v2247
  %2729 = vmatpush.msra.mxu0 %v2238
  %2730 = vmatmul.f32.gmra.mxu0 %v35
  %v2731 = vpop.f32.mrf.mxu0
  %v2732 = vadd.f32 %v2712, %v2731
  %2733 = vdwg.mxu0
  %v2734 = vmax.f32 %v2412, 0.0
  %v2735 = vmax.f32 %v2452, 0.0
  %v2736 = vmax.f32 %v2492, 0.0
  %v2737 = vmax.f32 %v2532, 0.0
  %v2738 = vmax.f32 %v2572, 0.0
  %v2739 = vmax.f32 %v2612, 0.0
  %v2740 = vmax.f32 %v2652, 0.0
  %v2741 = vmax.f32 %v2692, 0.0
  %v2742 = vmax.f32 %v2732, 0.0
  %vm2743 = vcmp.gt.f32.partialorder %v2734, %v2076
  %vm2744 = vcmp.gt.f32.partialorder %v2735, %v2077
  %vm2745 = vcmp.gt.f32.partialorder %v2736, %v2078
  %vm2746 = vcmp.gt.f32.partialorder %v2737, %v2079
  %vm2747 = vcmp.gt.f32.partialorder %v2738, %v2080
  %vm2748 = vcmp.gt.f32.partialorder %v2739, %v2081
  %vm2749 = vcmp.gt.f32.partialorder %v2740, %v2082
  %vm2750 = vcmp.gt.f32.partialorder %v2741, %v2083
  %vm2751 = vcmp.gt.f32.partialorder %v2742, %v2084
  %v2752 = vsel %vm2743, 3.0, %v2067
  %v2753 = vsel %vm2744, 3.0, %v2068
  %v2754 = vsel %vm2745, 3.0, %v2069
  %v2755 = vsel %vm2746, 3.0, %v2070
  %v2756 = vsel %vm2747, 3.0, %v2071
  %v2757 = vsel %vm2748, 3.0, %v2072
  %v2758 = vsel %vm2749, 3.0, %v2073
  %v2759 = vsel %vm2750, 3.0, %v2074
  %v2760 = vsel %vm2751, 3.0, %v2075
  %v2761 = vmax.f32 %v2076, %v2734
  %v2762 = vmax.f32 %v2077, %v2735
  %v2763 = vmax.f32 %v2078, %v2736
  %v2764 = vmax.f32 %v2079, %v2737
  %v2765 = vmax.f32 %v2080, %v2738
  %v2766 = vmax.f32 %v2081, %v2739
  %v2767 = vmax.f32 %v2082, %v2740
  %v2768 = vmax.f32 %v2083, %v2741
  %v2769 = vmax.f32 %v2084, %v2742
  %v2770 = vpack.c.bf16 %v2761, %v2761
  %v2771 = vpack.c.bf16 %v2762, %v2762
  %v2772 = vpack.c.bf16 %v2763, %v2763
  %v2773 = vpack.c.bf16 %v2764, %v2764
  %v2774 = vpack.c.bf16 %v2765, %v2765
  %v2775 = vpack.c.bf16 %v2766, %v2766
  %v2776 = vpack.c.bf16 %v2767, %v2767
  %v2777 = vpack.c.bf16 %v2768, %v2768
  %v2778 = vpack.c.bf16 %v2769, %v2769
  %v2779 = vld [vmem:[%s3] sm:$0xf]
  %v2780 = vld [vmem:[%s3 + $0x4] sm:$0xf]
  %v2781 = vld [vmem:[%s3 + $0x8] sm:$0xf]
  %v2782 = vld [vmem:[%s3 + $0xc] sm:$0xf]
  %v2783 = vld [vmem:[%s3 + $0x10] sm:$0xf]
  %v2784 = vld [vmem:[%s3 + $0x14] sm:$0xf]
  %v2785 = vld [vmem:[%s3 + $0x18] sm:$0xf]
  %v2786 = vld [vmem:[%s3 + $0x1c] sm:$0xf]
  %v2787 = vld [vmem:[%s3 + $0x20] sm:$0xf]
  %v2788 = vld [vmem:[%s3 + $0x24] sm:$0xf]
  %v2789 = vld [vmem:[%s3 + $0x28] sm:$0xf]
  %v2790 = vld [vmem:[%s3 + $0x2c] sm:$0xf]
  %v2791 = vld [vmem:[%s3 + $0x30] sm:$0xf]
  %v2792 = vld [vmem:[%s3 + $0x34] sm:$0xf]
  %v2793 = vld [vmem:[%s3 + $0x38] sm:$0xf]
  %v2794 = vld [vmem:[%s3 + $0x3c] sm:$0xf]
  %v2795 = vld [vmem:[%s3 + $0x40] sm:$0xf]
  %v2796 = vld [vmem:[%s3 + $0x44] sm:$0xf]
  %v2797 = vld [vmem:[%s3 + $0x48] sm:$0xf]
  %v2798 = vld [vmem:[%s3 + $0x4c] sm:$0xf]
  %v2799 = vld [vmem:[%s3 + $0x50] sm:$0xf]
  %v2800 = vld [vmem:[%s3 + $0x54] sm:$0xf]
  %v2801 = vld [vmem:[%s3 + $0x58] sm:$0xf]
  %v2802 = vld [vmem:[%s3 + $0x5c] sm:$0xf]
  %v2803 = vld [vmem:[%s3 + $0x60] sm:$0xf]
  %v2804 = vld [vmem:[%s3 + $0x64] sm:$0xf]
  %v2805 = vld [vmem:[%s3 + $0x68] sm:$0xf]
  %v2806 = vld [vmem:[%s3 + $0x6c] sm:$0xf]
  %v2807 = vld [vmem:[%s3 + $0x70] sm:$0xf]
  %v2808 = vld [vmem:[%s3 + $0x74] sm:$0xf]
  %v2809 = vld [vmem:[%s3 + $0x78] sm:$0xf]
  %v2810 = vld [vmem:[%s3 + $0x7c] sm:$0xf]
  %v2811 = vld [vmem:[%s3 + $0x80] sm:$0xf]
  %v2812 = vld [vmem:[%s3 + $0x84] sm:$0xf]
  %v2813 = vld [vmem:[%s3 + $0x88] sm:$0xf]
  %v2814 = vld [vmem:[%s3 + $0x8c] sm:$0xf]
  %v2815 = vld [vmem:[%s3 + $0x90] sm:$0xf]
  %v2816 = vld [vmem:[%s3 + $0x94] sm:$0xf]
  %v2817 = vld [vmem:[%s3 + $0x98] sm:$0xf]
  %v2818 = vld [vmem:[%s3 + $0x9c] sm:$0xf]
  %v2819 = vld [vmem:[%s3 + $0xa0] sm:$0xf]
  %v2820 = vld [vmem:[%s3 + $0xa4] sm:$0xf]
  %v2821 = vld [vmem:[%s3 + $0xa8] sm:$0xf]
  %v2822 = vld [vmem:[%s3 + $0xac] sm:$0xf]
  %v2823 = vld [vmem:[%s3 + $0xb0] sm:$0xf]
  %v2824 = vld [vmem:[%s3 + $0xb4] sm:$0xf]
  %v2825 = vld [vmem:[%s3 + $0xb8] sm:$0xf]
  %v2826 = vld [vmem:[%s3 + $0xbc] sm:$0xf]
  %v2827 = vld [vmem:[%s3 + $0xc0] sm:$0xf]
  %v2828 = vld [vmem:[%s3 + $0xc4] sm:$0xf]
  %v2829 = vld [vmem:[%s3 + $0xc8] sm:$0xf]
  %v2830 = vld [vmem:[%s3 + $0xcc] sm:$0xf]
  %v2831 = vld [vmem:[%s3 + $0xd0] sm:$0xf]
  %v2832 = vld [vmem:[%s3 + $0xd4] sm:$0xf]
  %v2833 = vld [vmem:[%s3 + $0xd8] sm:$0xf]
  %v2834 = vld [vmem:[%s3 + $0xdc] sm:$0xf]
  %v2835 = vld [vmem:[%s3 + $0xe0] sm:$0xf]
  %v2836 = vld [vmem:[%s3 + $0xe4] sm:$0xf]
  %v2837 = vld [vmem:[%s3 + $0xe8] sm:$0xf]
  %v2838 = vld [vmem:[%s3 + $0xec] sm:$0xf]
  %v2839 = vld [vmem:[%s3 + $0xf0] sm:$0xf]
  %v2840 = vld [vmem:[%s3 + $0xf4] sm:$0xf]
  %v2841 = vld [vmem:[%s3 + $0xf8] sm:$0xf]
  %v2842 = vld [vmem:[%s3 + $0xfc] sm:$0xf]
  %v2843 = vld [vmem:[%s3 + $0x100] sm:$0xf]
  %v2844 = vld [vmem:[%s3 + $0x104] sm:$0xf]
  %v2845 = vld [vmem:[%s3 + $0x108] sm:$0xf]
  %v2846 = vld [vmem:[%s3 + $0x10c] sm:$0xf]
  %v2847 = vld [vmem:[%s3 + $0x110] sm:$0xf]
  %v2848 = vld [vmem:[%s3 + $0x114] sm:$0xf]
  %v2849 = vld [vmem:[%s3 + $0x118] sm:$0xf]
  %v2850 = vld [vmem:[%s3 + $0x11c] sm:$0xf]
  %v2851 = vld [vmem:[%s3 + $0x120] sm:$0xf]
  %v2852 = vld [vmem:[%s3 + $0x124] sm:$0xf]
  %v2853 = vld [vmem:[%s3 + $0x128] sm:$0xf]
  %v2854 = vld [vmem:[%s3 + $0x12c] sm:$0xf]
  %v2855 = vld [vmem:[%s3 + $0x130] sm:$0xf]
  %v2856 = vld [vmem:[%s3 + $0x134] sm:$0xf]
  %v2857 = vld [vmem:[%s3 + $0x138] sm:$0xf]
  %v2858 = vld [vmem:[%s3 + $0x13c] sm:$0xf]
  %v2859 = vld [vmem:[%s3 + $0x140] sm:$0xf]
  %v2860 = vld [vmem:[%s3 + $0x144] sm:$0xf]
  %v2861 = vld [vmem:[%s3 + $0x148] sm:$0xf]
  %v2862 = vld [vmem:[%s3 + $0x14c] sm:$0xf]
  %v2863 = vld [vmem:[%s3 + $0x150] sm:$0xf]
  %v2864 = vld [vmem:[%s3 + $0x154] sm:$0xf]
  %v2865 = vld [vmem:[%s3 + $0x158] sm:$0xf]
  %v2866 = vld [vmem:[%s3 + $0x15c] sm:$0xf]
  %v2867 = vld [vmem:[%s3 + $0x160] sm:$0xf]
  %v2868 = vld [vmem:[%s3 + $0x164] sm:$0xf]
  %v2869 = vld [vmem:[%s3 + $0x168] sm:$0xf]
  %v2870 = vld [vmem:[%s3 + $0x16c] sm:$0xf]
  %v2871 = vld [vmem:[%s3 + $0x170] sm:$0xf]
  %v2872 = vld [vmem:[%s3 + $0x174] sm:$0xf]
  %v2873 = vld [vmem:[%s3 + $0x178] sm:$0xf]
  %v2874 = vld [vmem:[%s3 + $0x17c] sm:$0xf]
  %v2875 = vld [vmem:[%s3 + $0x180] sm:$0xf]
  %v2876 = vld [vmem:[%s3 + $0x184] sm:$0xf]
  %v2877 = vld [vmem:[%s3 + $0x188] sm:$0xf]
  %v2878 = vld [vmem:[%s3 + $0x18c] sm:$0xf]
  %v2879 = vld [vmem:[%s3 + $0x190] sm:$0xf]
  %v2880 = vld [vmem:[%s3 + $0x194] sm:$0xf]
  %v2881 = vld [vmem:[%s3 + $0x198] sm:$0xf]
  %v2882 = vld [vmem:[%s3 + $0x19c] sm:$0xf]
  %v2883 = vld [vmem:[%s3 + $0x1a0] sm:$0xf]
  %v2884 = vld [vmem:[%s3 + $0x1a4] sm:$0xf]
  %v2885 = vld [vmem:[%s3 + $0x1a8] sm:$0xf]
  %v2886 = vld [vmem:[%s3 + $0x1ac] sm:$0xf]
  %v2887 = vld [vmem:[%s3 + $0x1b0] sm:$0xf]
  %v2888 = vld [vmem:[%s3 + $0x1b4] sm:$0xf]
  %v2889 = vld [vmem:[%s3 + $0x1b8] sm:$0xf]
  %v2890 = vld [vmem:[%s3 + $0x1bc] sm:$0xf]
  %v2891 = vld [vmem:[%s3 + $0x1c0] sm:$0xf]
  %v2892 = vld [vmem:[%s3 + $0x1c4] sm:$0xf]
  %v2893 = vld [vmem:[%s3 + $0x1c8] sm:$0xf]
  %v2894 = vld [vmem:[%s3 + $0x1cc] sm:$0xf]
  %v2895 = vld [vmem:[%s3 + $0x1d0] sm:$0xf]
  %v2896 = vld [vmem:[%s3 + $0x1d4] sm:$0xf]
  %v2897 = vld [vmem:[%s3 + $0x1d8] sm:$0xf]
  %v2898 = vld [vmem:[%s3 + $0x1dc] sm:$0xf]
  %v2899 = vld [vmem:[%s3 + $0x1e0] sm:$0xf]
  %v2900 = vld [vmem:[%s3 + $0x1e4] sm:$0xf]
  %v2901 = vld [vmem:[%s3 + $0x1e8] sm:$0xf]
  %v2902 = vld [vmem:[%s3 + $0x1ec] sm:$0xf]
  %v2903 = vld [vmem:[%s3 + $0x1f0] sm:$0xf]
  %v2904 = vld [vmem:[%s3 + $0x1f4] sm:$0xf]
  %v2905 = vld [vmem:[%s3 + $0x1f8] sm:$0xf]
  %v2906 = vld [vmem:[%s3 + $0x1fc] sm:$0xf]
  %v2907 = vld [vmem:[%s3 + $0x200] sm:$0xf]
  %v2908 = vld [vmem:[%s3 + $0x204] sm:$0xf]
  %v2909 = vld [vmem:[%s3 + $0x208] sm:$0xf]
  %v2910 = vld [vmem:[%s3 + $0x20c] sm:$0xf]
  %v2911 = vld [vmem:[%s3 + $0x210] sm:$0xf]
  %v2912 = vld [vmem:[%s3 + $0x214] sm:$0xf]
  %v2913 = vld [vmem:[%s3 + $0x218] sm:$0xf]
  %v2914 = vld [vmem:[%s3 + $0x21c] sm:$0xf]
  %v2915 = vld [vmem:[%s3 + $0x220] sm:$0xf]
  %v2916 = vld [vmem:[%s3 + $0x224] sm:$0xf]
  %v2917 = vld [vmem:[%s3 + $0x228] sm:$0xf]
  %v2918 = vld [vmem:[%s3 + $0x22c] sm:$0xf]
  %v2919 = vld [vmem:[%s3 + $0x230] sm:$0xf]
  %v2920 = vld [vmem:[%s3 + $0x234] sm:$0xf]
  %v2921 = vld [vmem:[%s3 + $0x238] sm:$0xf]
  %v2922 = vld [vmem:[%s3 + $0x23c] sm:$0xf]
  %v2923 = vld [vmem:[%s4] sm:$0x1]
  %v2925 = vperm.slane %v2923, 0
  %v3071 = vunpack.c.l.b16 %v2779
  %v3072 = vunpack.c.l.b16 %v2780
  %v3073 = vunpack.c.l.b16 %v2781
  %v3074 = vunpack.c.l.b16 %v2782
  %v3075 = vunpack.c.l.b16 %v2783
  %v3076 = vunpack.c.l.b16 %v2784
  %v3077 = vunpack.c.l.b16 %v2785
  %v3078 = vunpack.c.l.b16 %v2786
  %v3079 = vunpack.c.l.b16 %v2787
  %v3080 = vunpack.c.l.b16 %v2788
  %v3081 = vunpack.c.l.b16 %v2789
  %v3082 = vunpack.c.l.b16 %v2790
  %v3083 = vunpack.c.l.b16 %v2791
  %v3084 = vunpack.c.l.b16 %v2792
  %v3085 = vunpack.c.l.b16 %v2793
  %v3086 = vunpack.c.l.b16 %v2794
  %v3087 = vunpack.c.l.b16 %v2795
  %v3088 = vunpack.c.l.b16 %v2796
  %v3089 = vunpack.c.l.b16 %v2797
  %v3090 = vunpack.c.l.b16 %v2798
  %v3091 = vunpack.c.l.b16 %v2799
  %v3092 = vunpack.c.l.b16 %v2800
  %v3093 = vunpack.c.l.b16 %v2801
  %v3094 = vunpack.c.l.b16 %v2802
  %v3095 = vunpack.c.l.b16 %v2803
  %v3096 = vunpack.c.l.b16 %v2804
  %v3097 = vunpack.c.l.b16 %v2805
  %v3098 = vunpack.c.l.b16 %v2806
  %v3099 = vunpack.c.l.b16 %v2807
  %v3100 = vunpack.c.l.b16 %v2808
  %v3101 = vunpack.c.l.b16 %v2809
  %v3102 = vunpack.c.l.b16 %v2810
  %v3103 = vunpack.c.l.b16 %v2811
  %v3104 = vunpack.c.l.b16 %v2812
  %v3105 = vunpack.c.l.b16 %v2813
  %v3106 = vunpack.c.l.b16 %v2814
  %v3107 = vunpack.c.l.b16 %v2815
  %v3108 = vunpack.c.l.b16 %v2816
  %v3109 = vunpack.c.l.b16 %v2817
  %v3110 = vunpack.c.l.b16 %v2818
  %v3111 = vunpack.c.l.b16 %v2819
  %v3112 = vunpack.c.l.b16 %v2820
  %v3113 = vunpack.c.l.b16 %v2821
  %v3114 = vunpack.c.l.b16 %v2822
  %v3115 = vunpack.c.l.b16 %v2823
  %v3116 = vunpack.c.l.b16 %v2824
  %v3117 = vunpack.c.l.b16 %v2825
  %v3118 = vunpack.c.l.b16 %v2826
  %v3119 = vunpack.c.l.b16 %v2827
  %v3120 = vunpack.c.l.b16 %v2828
  %v3121 = vunpack.c.l.b16 %v2829
  %v3122 = vunpack.c.l.b16 %v2830
  %v3123 = vunpack.c.l.b16 %v2831
  %v3124 = vunpack.c.l.b16 %v2832
  %v3125 = vunpack.c.l.b16 %v2833
  %v3126 = vunpack.c.l.b16 %v2834
  %v3127 = vunpack.c.l.b16 %v2835
  %v3128 = vunpack.c.l.b16 %v2836
  %v3129 = vunpack.c.l.b16 %v2837
  %v3130 = vunpack.c.l.b16 %v2838
  %v3131 = vunpack.c.l.b16 %v2839
  %v3132 = vunpack.c.l.b16 %v2840
  %v3133 = vunpack.c.l.b16 %v2841
  %v3134 = vunpack.c.l.b16 %v2842
  %v3135 = vunpack.c.l.b16 %v2843
  %v3136 = vunpack.c.l.b16 %v2844
  %v3137 = vunpack.c.l.b16 %v2845
  %v3138 = vunpack.c.l.b16 %v2846
  %v3139 = vunpack.c.l.b16 %v2847
  %v3140 = vunpack.c.l.b16 %v2848
  %v3141 = vunpack.c.l.b16 %v2849
  %v3142 = vunpack.c.l.b16 %v2850
  %v3143 = vunpack.c.l.b16 %v2851
  %v3144 = vunpack.c.l.b16 %v2852
  %v3145 = vunpack.c.l.b16 %v2853
  %v3146 = vunpack.c.l.b16 %v2854
  %v3147 = vunpack.c.l.b16 %v2855
  %v3148 = vunpack.c.l.b16 %v2856
  %v3149 = vunpack.c.l.b16 %v2857
  %v3150 = vunpack.c.l.b16 %v2858
  %v3151 = vunpack.c.l.b16 %v2859
  %v3152 = vunpack.c.l.b16 %v2860
  %v3153 = vunpack.c.l.b16 %v2861
  %v3154 = vunpack.c.l.b16 %v2862
  %v3155 = vunpack.c.l.b16 %v2863
  %v3156 = vunpack.c.l.b16 %v2864
  %v3157 = vunpack.c.l.b16 %v2865
  %v3158 = vunpack.c.l.b16 %v2866
  %v3159 = vunpack.c.l.b16 %v2867
  %v3160 = vunpack.c.l.b16 %v2868
  %v3161 = vunpack.c.l.b16 %v2869
  %v3162 = vunpack.c.l.b16 %v2870
  %v3163 = vunpack.c.l.b16 %v2871
  %v3164 = vunpack.c.l.b16 %v2872
  %v3165 = vunpack.c.l.b16 %v2873
  %v3166 = vunpack.c.l.b16 %v2874
  %v3167 = vunpack.c.l.b16 %v2875
  %v3168 = vunpack.c.l.b16 %v2876
  %v3169 = vunpack.c.l.b16 %v2877
  %v3170 = vunpack.c.l.b16 %v2878
  %v3171 = vunpack.c.l.b16 %v2879
  %v3172 = vunpack.c.l.b16 %v2880
  %v3173 = vunpack.c.l.b16 %v2881
  %v3174 = vunpack.c.l.b16 %v2882
  %v3175 = vunpack.c.l.b16 %v2883
  %v3176 = vunpack.c.l.b16 %v2884
  %v3177 = vunpack.c.l.b16 %v2885
  %v3178 = vunpack.c.l.b16 %v2886
  %v3179 = vunpack.c.l.b16 %v2887
  %v3180 = vunpack.c.l.b16 %v2888
  %v3181 = vunpack.c.l.b16 %v2889
  %v3182 = vunpack.c.l.b16 %v2890
  %v3183 = vunpack.c.l.b16 %v2891
  %v3184 = vunpack.c.l.b16 %v2892
  %v3185 = vunpack.c.l.b16 %v2893
  %v3186 = vunpack.c.l.b16 %v2894
  %v3187 = vunpack.c.l.b16 %v2895
  %v3188 = vunpack.c.l.b16 %v2896
  %v3189 = vunpack.c.l.b16 %v2897
  %v3190 = vunpack.c.l.b16 %v2898
  %v3191 = vunpack.c.l.b16 %v2899
  %v3192 = vunpack.c.l.b16 %v2900
  %v3193 = vunpack.c.l.b16 %v2901
  %v3194 = vunpack.c.l.b16 %v2902
  %v3195 = vunpack.c.l.b16 %v2903
  %v3196 = vunpack.c.l.b16 %v2904
  %v3197 = vunpack.c.l.b16 %v2905
  %v3198 = vunpack.c.l.b16 %v2906
  %v3199 = vunpack.c.l.b16 %v2907
  %v3200 = vunpack.c.l.b16 %v2908
  %v3201 = vunpack.c.l.b16 %v2909
  %v3202 = vunpack.c.l.b16 %v2910
  %v3203 = vunpack.c.l.b16 %v2911
  %v3204 = vunpack.c.l.b16 %v2912
  %v3205 = vunpack.c.l.b16 %v2913
  %v3206 = vunpack.c.l.b16 %v2914
  %v3207 = vunpack.c.l.b16 %v2915
  %v3208 = vunpack.c.l.b16 %v2916
  %v3209 = vunpack.c.l.b16 %v2917
  %v3210 = vunpack.c.l.b16 %v2918
  %v3211 = vunpack.c.l.b16 %v2919
  %v3212 = vunpack.c.l.b16 %v2920
  %v3213 = vunpack.c.l.b16 %v2921
  %v3214 = vunpack.c.l.b16 %v2922
  %v3215 = vpack.c.b16 %v3072, %v3071
  %v3216 = vpack.c.b16 %v3074, %v3073
  %v3217 = vpack.c.b16 %v3076, %v3075
  %v3218 = vpack.c.b16 %v3078, %v3077
  %v3219 = vpack.c.b16 %v3080, %v3079
  %v3220 = vpack.c.b16 %v3082, %v3081
  %v3221 = vpack.c.b16 %v3084, %v3083
  %v3222 = vpack.c.b16 %v3086, %v3085
  %v3223 = vpack.c.b16 %v3088, %v3087
  %v3224 = vpack.c.b16 %v3090, %v3089
  %v3225 = vpack.c.b16 %v3092, %v3091
  %v3226 = vpack.c.b16 %v3094, %v3093
  %v3227 = vpack.c.b16 %v3096, %v3095
  %v3228 = vpack.c.b16 %v3098, %v3097
  %v3229 = vpack.c.b16 %v3100, %v3099
  %v3230 = vpack.c.b16 %v3102, %v3101
  %v3231 = vpack.c.b16 %v3104, %v3103
  %v3232 = vpack.c.b16 %v3106, %v3105
  %v3233 = vpack.c.b16 %v3108, %v3107
  %v3234 = vpack.c.b16 %v3110, %v3109
  %v3235 = vpack.c.b16 %v3112, %v3111
  %v3236 = vpack.c.b16 %v3114, %v3113
  %v3237 = vpack.c.b16 %v3116, %v3115
  %v3238 = vpack.c.b16 %v3118, %v3117
  %v3239 = vpack.c.b16 %v3120, %v3119
  %v3240 = vpack.c.b16 %v3122, %v3121
  %v3241 = vpack.c.b16 %v3124, %v3123
  %v3242 = vpack.c.b16 %v3126, %v3125
  %v3243 = vpack.c.b16 %v3128, %v3127
  %v3244 = vpack.c.b16 %v3130, %v3129
  %v3245 = vpack.c.b16 %v3132, %v3131
  %v3246 = vpack.c.b16 %v3134, %v3133
  %v3247 = vpack.c.b16 %v3136, %v3135
  %v3248 = vpack.c.b16 %v3138, %v3137
  %v3249 = vpack.c.b16 %v3140, %v3139
  %v3250 = vpack.c.b16 %v3142, %v3141
  %v3251 = vpack.c.b16 %v3144, %v3143
  %v3252 = vpack.c.b16 %v3146, %v3145
  %v3253 = vpack.c.b16 %v3148, %v3147
  %v3254 = vpack.c.b16 %v3150, %v3149
  %v3255 = vpack.c.b16 %v3152, %v3151
  %v3256 = vpack.c.b16 %v3154, %v3153
  %v3257 = vpack.c.b16 %v3156, %v3155
  %v3258 = vpack.c.b16 %v3158, %v3157
  %v3259 = vpack.c.b16 %v3160, %v3159
  %v3260 = vpack.c.b16 %v3162, %v3161
  %v3261 = vpack.c.b16 %v3164, %v3163
  %v3262 = vpack.c.b16 %v3166, %v3165
  %v3263 = vpack.c.b16 %v3168, %v3167
  %v3264 = vpack.c.b16 %v3170, %v3169
  %v3265 = vpack.c.b16 %v3172, %v3171
  %v3266 = vpack.c.b16 %v3174, %v3173
  %v3267 = vpack.c.b16 %v3176, %v3175
  %v3268 = vpack.c.b16 %v3178, %v3177
  %v3269 = vpack.c.b16 %v3180, %v3179
  %v3270 = vpack.c.b16 %v3182, %v3181
  %v3271 = vpack.c.b16 %v3184, %v3183
  %v3272 = vpack.c.b16 %v3186, %v3185
  %v3273 = vpack.c.b16 %v3188, %v3187
  %v3274 = vpack.c.b16 %v3190, %v3189
  %v3275 = vpack.c.b16 %v3192, %v3191
  %v3276 = vpack.c.b16 %v3194, %v3193
  %v3277 = vpack.c.b16 %v3196, %v3195
  %v3278 = vpack.c.b16 %v3198, %v3197
  %v3279 = vpack.c.b16 %v3200, %v3199
  %v3280 = vpack.c.b16 %v3202, %v3201
  %v3281 = vpack.c.b16 %v3204, %v3203
  %v3282 = vpack.c.b16 %v3206, %v3205
  %v3283 = vpack.c.b16 %v3208, %v3207
  %v3284 = vpack.c.b16 %v3210, %v3209
  %v3285 = vpack.c.b16 %v3212, %v3211
  %v3286 = vpack.c.b16 %v3214, %v3213
  %3359 = vmatpush.bf16.msra.mxu0 %v3222
  %3360 = vmatpush.bf16.msra.mxu0 %v3221
  %3361 = vmatpush.bf16.msra.mxu0 %v3220
  %3362 = vmatpush.bf16.msra.mxu0 %v3219
  %3363 = vmatpush.bf16.msra.mxu0 %v3218
  %3364 = vmatpush.bf16.msra.mxu0 %v3217
  %3365 = vmatpush.bf16.msra.mxu0 %v3216
  %3366 = vmatpush.bf16.msra.mxu0 %v3215
  %3367 = vmatmul.bf16.gmra.mxu0 %v2770
  %v3368 = vpop.f32.mrf.mxu0
  %v3369 = vadd.f32 %v2925, %v3368
  %v3370 = vpop.f32.mrf.mxu0
  %3371 = vdwg.mxu0
  %3372 = vmatpush.bf16.msra.mxu0 %v3230
  %3373 = vmatpush.bf16.msra.mxu0 %v3229
  %3374 = vmatpush.bf16.msra.mxu0 %v3228
  %3375 = vmatpush.bf16.msra.mxu0 %v3227
  %3376 = vmatpush.bf16.msra.mxu0 %v3226
  %3377 = vmatpush.bf16.msra.mxu0 %v3225
  %3378 = vmatpush.bf16.msra.mxu0 %v3224
  %3379 = vmatpush.bf16.msra.mxu0 %v3223
  %3380 = vmatmul.bf16.gmra.mxu0 %v2771
  %v3381 = vpop.f32.mrf.mxu0
  %v3382 = vadd.f32 %v3369, %v3381
  %v3383 = vpop.f32.mrf.mxu0
  %3384 = vdwg.mxu0
  %3385 = vmatpush.bf16.msra.mxu0 %v3238
  %3386 = vmatpush.bf16.msra.mxu0 %v3237
  %3387 = vmatpush.bf16.msra.mxu0 %v3236
  %3388 = vmatpush.bf16.msra.mxu0 %v3235
  %3389 = vmatpush.bf16.msra.mxu0 %v3234
  %3390 = vmatpush.bf16.msra.mxu0 %v3233
  %3391 = vmatpush.bf16.msra.mxu0 %v3232
  %3392 = vmatpush.bf16.msra.mxu0 %v3231
  %3393 = vmatmul.bf16.gmra.mxu0 %v2772
  %v3394 = vpop.f32.mrf.mxu0
  %v3395 = vadd.f32 %v3382, %v3394
  %v3396 = vpop.f32.mrf.mxu0
  %3397 = vdwg.mxu0
  %3398 = vmatpush.bf16.msra.mxu0 %v3246
  %3399 = vmatpush.bf16.msra.mxu0 %v3245
  %3400 = vmatpush.bf16.msra.mxu0 %v3244
  %3401 = vmatpush.bf16.msra.mxu0 %v3243
  %3402 = vmatpush.bf16.msra.mxu0 %v3242
  %3403 = vmatpush.bf16.msra.mxu0 %v3241
  %3404 = vmatpush.bf16.msra.mxu0 %v3240
  %3405 = vmatpush.bf16.msra.mxu0 %v3239
  %3406 = vmatmul.bf16.gmra.mxu0 %v2773
  %v3407 = vpop.f32.mrf.mxu0
  %v3408 = vadd.f32 %v3395, %v3407
  %v3409 = vpop.f32.mrf.mxu0
  %3410 = vdwg.mxu0
  %3411 = vmatpush.bf16.msra.mxu0 %v3254
  %3412 = vmatpush.bf16.msra.mxu0 %v3253
  %3413 = vmatpush.bf16.msra.mxu0 %v3252
  %3414 = vmatpush.bf16.msra.mxu0 %v3251
  %3415 = vmatpush.bf16.msra.mxu0 %v3250
  %3416 = vmatpush.bf16.msra.mxu0 %v3249
  %3417 = vmatpush.bf16.msra.mxu0 %v3248
  %3418 = vmatpush.bf16.msra.mxu0 %v3247
  %3419 = vmatmul.bf16.gmra.mxu0 %v2774
  %v3420 = vpop.f32.mrf.mxu0
  %v3421 = vadd.f32 %v3408, %v3420
  %v3422 = vpop.f32.mrf.mxu0
  %3423 = vdwg.mxu0
  %3424 = vmatpush.bf16.msra.mxu0 %v3262
  %3425 = vmatpush.bf16.msra.mxu0 %v3261
  %3426 = vmatpush.bf16.msra.mxu0 %v3260
  %3427 = vmatpush.bf16.msra.mxu0 %v3259
  %3428 = vmatpush.bf16.msra.mxu0 %v3258
  %3429 = vmatpush.bf16.msra.mxu0 %v3257
  %3430 = vmatpush.bf16.msra.mxu0 %v3256
  %3431 = vmatpush.bf16.msra.mxu0 %v3255
  %3432 = vmatmul.bf16.gmra.mxu0 %v2775
  %v3433 = vpop.f32.mrf.mxu0
  %v3434 = vadd.f32 %v3421, %v3433
  %v3435 = vpop.f32.mrf.mxu0
  %3436 = vdwg.mxu0
  %3437 = vmatpush.bf16.msra.mxu0 %v3270
  %3438 = vmatpush.bf16.msra.mxu0 %v3269
  %3439 = vmatpush.bf16.msra.mxu0 %v3268
  %3440 = vmatpush.bf16.msra.mxu0 %v3267
  %3441 = vmatpush.bf16.msra.mxu0 %v3266
  %3442 = vmatpush.bf16.msra.mxu0 %v3265
  %3443 = vmatpush.bf16.msra.mxu0 %v3264
  %3444 = vmatpush.bf16.msra.mxu0 %v3263
  %3445 = vmatmul.bf16.gmra.mxu0 %v2776
  %v3446 = vpop.f32.mrf.mxu0
  %v3447 = vadd.f32 %v3434, %v3446
  %v3448 = vpop.f32.mrf.mxu0
  %3449 = vdwg.mxu0
  %3450 = vmatpush.bf16.msra.mxu0 %v3278
  %3451 = vmatpush.bf16.msra.mxu0 %v3277
  %3452 = vmatpush.bf16.msra.mxu0 %v3276
  %3453 = vmatpush.bf16.msra.mxu0 %v3275
  %3454 = vmatpush.bf16.msra.mxu0 %v3274
  %3455 = vmatpush.bf16.msra.mxu0 %v3273
  %3456 = vmatpush.bf16.msra.mxu0 %v3272
  %3457 = vmatpush.bf16.msra.mxu0 %v3271
  %3458 = vmatmul.bf16.gmra.mxu0 %v2777
  %v3459 = vpop.f32.mrf.mxu0
  %v3460 = vadd.f32 %v3447, %v3459
  %v3461 = vpop.f32.mrf.mxu0
  %3462 = vdwg.mxu0
  %3463 = vmatpush.bf16.msra.mxu0 %v3286
  %3464 = vmatpush.bf16.msra.mxu0 %v3285
  %3465 = vmatpush.bf16.msra.mxu0 %v3284
  %3466 = vmatpush.bf16.msra.mxu0 %v3283
  %3467 = vmatpush.bf16.msra.mxu0 %v3282
  %3468 = vmatpush.bf16.msra.mxu0 %v3281
  %3469 = vmatpush.bf16.msra.mxu0 %v3280
  %3470 = vmatpush.bf16.msra.mxu0 %v3279
  %3471 = vmatmul.bf16.gmra.mxu0 %v2778
  %v3472 = vpop.f32.mrf.mxu0
  %v3473 = vadd.f32 %v3460, %v3472
  %v3474 = vpop.f32.mrf.mxu0
  %3475 = vdwg.mxu0
  %3476 = vst [vmem:[%s10] sm:$0xff] %v3473
  %v3477 = vpack.c.bf16 %v3473, %v3473
  %v3478 = vld [vmem:[%s5] sm:$0xff]
  %v3479 = vld [vmem:[%s5 + $0x8] sm:$0xff]
  %v3480 = vld [vmem:[%s5 + $0x10] sm:$0xff]
  %v3481 = vld [vmem:[%s5 + $0x18] sm:$0xff]
  %v3482 = vld [vmem:[%s5 + $0x20] sm:$0xf]
  %v3483 = vld [vmem:[%s5 + $0x24] sm:$0xff]
  %v3484 = vld [vmem:[%s5 + $0x2c] sm:$0xff]
  %v3485 = vld [vmem:[%s5 + $0x34] sm:$0xff]
  %v3486 = vld [vmem:[%s5 + $0x3c] sm:$0xff]
  %v3487 = vld [vmem:[%s5 + $0x44] sm:$0xf]
  %v3488 = vld [vmem:[%s5 + $0x48] sm:$0xff]
  %v3489 = vld [vmem:[%s5 + $0x50] sm:$0xff]
  %v3490 = vld [vmem:[%s5 + $0x58] sm:$0xff]
  %v3491 = vld [vmem:[%s5 + $0x60] sm:$0xff]
  %v3492 = vld [vmem:[%s5 + $0x68] sm:$0xf]
  %v3493 = vld [vmem:[%s5 + $0x6c] sm:$0xff]
  %v3494 = vld [vmem:[%s5 + $0x74] sm:$0xff]
  %v3495 = vld [vmem:[%s5 + $0x7c] sm:$0xff]
  %v3496 = vld [vmem:[%s5 + $0x84] sm:$0xff]
  %v3497 = vld [vmem:[%s5 + $0x8c] sm:$0xf]
  %v3498 = vld [vmem:[%s5 + $0x90] sm:$0xff]
  %v3499 = vld [vmem:[%s5 + $0x98] sm:$0xff]
  %v3500 = vld [vmem:[%s5 + $0xa0] sm:$0xff]
  %v3501 = vld [vmem:[%s5 + $0xa8] sm:$0xff]
  %v3502 = vld [vmem:[%s5 + $0xb0] sm:$0xf]
  %v3503 = vld [vmem:[%s5 + $0xb4] sm:$0xff]
  %v3504 = vld [vmem:[%s5 + $0xbc] sm:$0xff]
  %v3505 = vld [vmem:[%s5 + $0xc4] sm:$0xff]
  %v3506 = vld [vmem:[%s5 + $0xcc] sm:$0xff]
  %v3507 = vld [vmem:[%s5 + $0xd4] sm:$0xf]
  %v3508 = vld [vmem:[%s5 + $0xd8] sm:$0xff]
  %v3509 = vld [vmem:[%s5 + $0xe0] sm:$0xff]
  %v3510 = vld [vmem:[%s5 + $0xe8] sm:$0xff]
  %v3511 = vld [vmem:[%s5 + $0xf0] sm:$0xff]
  %v3512 = vld [vmem:[%s5 + $0xf8] sm:$0xf]
  %v3513 = vld [vmem:[%s5 + $0xfc] sm:$0xff]
  %v3514 = vld [vmem:[%s5 + $0x104] sm:$0xff]
  %v3515 = vld [vmem:[%s5 + $0x10c] sm:$0xff]
  %v3516 = vld [vmem:[%s5 + $0x114] sm:$0xff]
  %v3517 = vld [vmem:[%s5 + $0x11c] sm:$0xf]
  %v3518 = vld [vmem:[%s5 + $0x120] sm:$0xff]
  %v3519 = vld [vmem:[%s5 + $0x128] sm:$0xff]
  %v3520 = vld [vmem:[%s5 + $0x130] sm:$0xff]
  %v3521 = vld [vmem:[%s5 + $0x138] sm:$0xff]
  %v3522 = vld [vmem:[%s5 + $0x140] sm:$0xf]
  %v3523 = vld [vmem:[%s5 + $0x144] sm:$0xff]
  %v3524 = vld [vmem:[%s5 + $0x14c] sm:$0xff]
  %v3525 = vld [vmem:[%s5 + $0x154] sm:$0xff]
  %v3526 = vld [vmem:[%s5 + $0x15c] sm:$0xff]
  %v3527 = vld [vmem:[%s5 + $0x164] sm:$0xf]
  %v3528 = vld [vmem:[%s5 + $0x168] sm:$0xff]
  %v3529 = vld [vmem:[%s5 + $0x170] sm:$0xff]
  %v3530 = vld [vmem:[%s5 + $0x178] sm:$0xff]
  %v3531 = vld [vmem:[%s5 + $0x180] sm:$0xff]
  %v3532 = vld [vmem:[%s5 + $0x188] sm:$0xf]
  %v3533 = vld [vmem:[%s5 + $0x18c] sm:$0xff]
  %v3534 = vld [vmem:[%s5 + $0x194] sm:$0xff]
  %v3535 = vld [vmem:[%s5 + $0x19c] sm:$0xff]
  %v3536 = vld [vmem:[%s5 + $0x1a4] sm:$0xff]
  %v3537 = vld [vmem:[%s5 + $0x1ac] sm:$0xf]
  %v3538 = vld [vmem:[%s5 + $0x1b0] sm:$0xff]
  %v3539 = vld [vmem:[%s5 + $0x1b8] sm:$0xff]
  %v3540 = vld [vmem:[%s5 + $0x1c0] sm:$0xff]
  %v3541 = vld [vmem:[%s5 + $0x1c8] sm:$0xff]
  %v3542 = vld [vmem:[%s5 + $0x1d0] sm:$0xf]
  %v3543 = vld [vmem:[%s5 + $0x1d4] sm:$0xff]
  %v3544 = vld [vmem:[%s5 + $0x1dc] sm:$0xff]
  %v3545 = vld [vmem:[%s5 + $0x1e4] sm:$0xff]
  %v3546 = vld [vmem:[%s5 + $0x1ec] sm:$0xff]
  %v3547 = vld [vmem:[%s5 + $0x1f4] sm:$0xf]
  %v3548 = vld [vmem:[%s5 + $0x1f8] sm:$0xff]
  %v3549 = vld [vmem:[%s5 + $0x200] sm:$0xff]
  %v3550 = vld [vmem:[%s5 + $0x208] sm:$0xff]
  %v3551 = vld [vmem:[%s5 + $0x210] sm:$0xff]
  %v3552 = vld [vmem:[%s5 + $0x218] sm:$0xf]
  %v3553 = vld [vmem:[%s5 + $0x21c] sm:$0xff]
  %v3554 = vld [vmem:[%s5 + $0x224] sm:$0xff]
  %v3555 = vld [vmem:[%s5 + $0x22c] sm:$0xff]
  %v3556 = vld [vmem:[%s5 + $0x234] sm:$0xff]
  %v3557 = vld [vmem:[%s5 + $0x23c] sm:$0xf]
  %v3558 = vld [vmem:[%s6] sm:$0xff]
  %v3559 = vld [vmem:[%s6 + $0x8] sm:$0x1]
  %v3562 = vperm.slane %v3558, 0
  %v3563 = vperm.slane %v3558, 1
  %v3564 = vperm.slane %v3558, 2
  %v3565 = vperm.slane %v3558, 3
  %v3566 = vperm.slane %v3558, 4
  %v3567 = vperm.slane %v3558, 5
  %v3568 = vperm.slane %v3558, 6
  %v3569 = vperm.slane %v3558, 7
  %v3570 = vperm.slane %v3559, 0
  %v3660 = vunpack.c.l.b16 %v3478
  %v3661 = vunpack.c.h.b16 %v3478
  %v3662 = vunpack.c.l.b16 %v3479
  %v3663 = vunpack.c.h.b16 %v3479
  %v3664 = vunpack.c.l.b16 %v3480
  %v3665 = vunpack.c.h.b16 %v3480
  %v3666 = vunpack.c.l.b16 %v3481
  %v3667 = vunpack.c.h.b16 %v3481
  %v3668 = vunpack.c.l.b16 %v3482
  %v3669 = vunpack.c.l.b16 %v3483
  %v3670 = vunpack.c.h.b16 %v3483
  %v3671 = vunpack.c.l.b16 %v3484
  %v3672 = vunpack.c.h.b16 %v3484
  %v3673 = vunpack.c.l.b16 %v3485
  %v3674 = vunpack.c.h.b16 %v3485
  %v3675 = vunpack.c.l.b16 %v3486
  %v3676 = vunpack.c.h.b16 %v3486
  %v3677 = vunpack.c.l.b16 %v3487
  %v3678 = vunpack.c.l.b16 %v3488
  %v3679 = vunpack.c.h.b16 %v3488
  %v3680 = vunpack.c.l.b16 %v3489
  %v3681 = vunpack.c.h.b16 %v3489
  %v3682 = vunpack.c.l.b16 %v3490
  %v3683 = vunpack.c.h.b16 %v3490
  %v3684 = vunpack.c.l.b16 %v3491
  %v3685 = vunpack.c.h.b16 %v3491
  %v3686 = vunpack.c.l.b16 %v3492
  %v3687 = vunpack.c.l.b16 %v3493
  %v3688 = vunpack.c.h.b16 %v3493
  %v3689 = vunpack.c.l.b16 %v3494
  %v3690 = vunpack.c.h.b16 %v3494
  %v3691 = vunpack.c.l.b16 %v3495
  %v3692 = vunpack.c.h.b16 %v3495
  %v3693 = vunpack.c.l.b16 %v3496
  %v3694 = vunpack.c.h.b16 %v3496
  %v3695 = vunpack.c.l.b16 %v3497
  %v3696 = vunpack.c.l.b16 %v3498
  %v3697 = vunpack.c.h.b16 %v3498
  %v3698 = vunpack.c.l.b16 %v3499
  %v3699 = vunpack.c.h.b16 %v3499
  %v3700 = vunpack.c.l.b16 %v3500
  %v3701 = vunpack.c.h.b16 %v3500
  %v3702 = vunpack.c.l.b16 %v3501
  %v3703 = vunpack.c.h.b16 %v3501
  %v3704 = vunpack.c.l.b16 %v3502
  %v3705 = vunpack.c.l.b16 %v3503
  %v3706 = vunpack.c.h.b16 %v3503
  %v3707 = vunpack.c.l.b16 %v3504
  %v3708 = vunpack.c.h.b16 %v3504
  %v3709 = vunpack.c.l.b16 %v3505
  %v3710 = vunpack.c.h.b16 %v3505
  %v3711 = vunpack.c.l.b16 %v3506
  %v3712 = vunpack.c.h.b16 %v3506
  %v3713 = vunpack.c.l.b16 %v3507
  %v3714 = vunpack.c.l.b16 %v3508
  %v3715 = vunpack.c.h.b16 %v3508
  %v3716 = vunpack.c.l.b16 %v3509
  %v3717 = vunpack.c.h.b16 %v3509
  %v3718 = vunpack.c.l.b16 %v3510
  %v3719 = vunpack.c.h.b16 %v3510
  %v3720 = vunpack.c.l.b16 %v3511
  %v3721 = vunpack.c.h.b16 %v3511
  %v3722 = vunpack.c.l.b16 %v3512
  %v3723 = vunpack.c.l.b16 %v3513
  %v3724 = vunpack.c.h.b16 %v3513
  %v3725 = vunpack.c.l.b16 %v3514
  %v3726 = vunpack.c.h.b16 %v3514
  %v3727 = vunpack.c.l.b16 %v3515
  %v3728 = vunpack.c.h.b16 %v3515
  %v3729 = vunpack.c.l.b16 %v3516
  %v3730 = vunpack.c.h.b16 %v3516
  %v3731 = vunpack.c.l.b16 %v3517
  %v3732 = vunpack.c.l.b16 %v3518
  %v3733 = vunpack.c.h.b16 %v3518
  %v3734 = vunpack.c.l.b16 %v3519
  %v3735 = vunpack.c.h.b16 %v3519
  %v3736 = vunpack.c.l.b16 %v3520
  %v3737 = vunpack.c.h.b16 %v3520
  %v3738 = vunpack.c.l.b16 %v3521
  %v3739 = vunpack.c.h.b16 %v3521
  %v3740 = vunpack.c.l.b16 %v3522
  %v3741 = vunpack.c.l.b16 %v3523
  %v3742 = vunpack.c.h.b16 %v3523
  %v3743 = vunpack.c.l.b16 %v3524
  %v3744 = vunpack.c.h.b16 %v3524
  %v3745 = vunpack.c.l.b16 %v3525
  %v3746 = vunpack.c.h.b16 %v3525
  %v3747 = vunpack.c.l.b16 %v3526
  %v3748 = vunpack.c.h.b16 %v3526
  %v3749 = vunpack.c.l.b16 %v3527
  %v3750 = vunpack.c.l.b16 %v3528
  %v3751 = vunpack.c.h.b16 %v3528
  %v3752 = vunpack.c.l.b16 %v3529
  %v3753 = vunpack.c.h.b16 %v3529
  %v3754 = vunpack.c.l.b16 %v3530
  %v3755 = vunpack.c.h.b16 %v3530
  %v3756 = vunpack.c.l.b16 %v3531
  %v3757 = vunpack.c.h.b16 %v3531
  %v3758 = vunpack.c.l.b16 %v3532
  %v3759 = vunpack.c.l.b16 %v3533
  %v3760 = vunpack.c.h.b16 %v3533
  %v3761 = vunpack.c.l.b16 %v3534
  %v3762 = vunpack.c.h.b16 %v3534
  %v3763 = vunpack.c.l.b16 %v3535
  %v3764 = vunpack.c.h.b16 %v3535
  %v3765 = vunpack.c.l.b16 %v3536
  %v3766 = vunpack.c.h.b16 %v3536
  %v3767 = vunpack.c.l.b16 %v3537
  %v3768 = vunpack.c.l.b16 %v3538
  %v3769 = vunpack.c.h.b16 %v3538
  %v3770 = vunpack.c.l.b16 %v3539
  %v3771 = vunpack.c.h.b16 %v3539
  %v3772 = vunpack.c.l.b16 %v3540
  %v3773 = vunpack.c.h.b16 %v3540
  %v3774 = vunpack.c.l.b16 %v3541
  %v3775 = vunpack.c.h.b16 %v3541
  %v3776 = vunpack.c.l.b16 %v3542
  %v3777 = vunpack.c.l.b16 %v3543
  %v3778 = vunpack.c.h.b16 %v3543
  %v3779 = vunpack.c.l.b16 %v3544
  %v3780 = vunpack.c.h.b16 %v3544
  %v3781 = vunpack.c.l.b16 %v3545
  %v3782 = vunpack.c.h.b16 %v3545
  %v3783 = vunpack.c.l.b16 %v3546
  %v3784 = vunpack.c.h.b16 %v3546
  %v3785 = vunpack.c.l.b16 %v3547
  %v3786 = vunpack.c.l.b16 %v3548
  %v3787 = vunpack.c.h.b16 %v3548
  %v3788 = vunpack.c.l.b16 %v3549
  %v3789 = vunpack.c.h.b16 %v3549
  %v3790 = vunpack.c.l.b16 %v3550
  %v3791 = vunpack.c.h.b16 %v3550
  %v3792 = vunpack.c.l.b16 %v3551
  %v3793 = vunpack.c.h.b16 %v3551
  %v3794 = vunpack.c.l.b16 %v3552
  %v3795 = vunpack.c.l.b16 %v3553
  %v3796 = vunpack.c.h.b16 %v3553
  %v3797 = vunpack.c.l.b16 %v3554
  %v3798 = vunpack.c.h.b16 %v3554
  %v3799 = vunpack.c.l.b16 %v3555
  %v3800 = vunpack.c.h.b16 %v3555
  %v3801 = vunpack.c.l.b16 %v3556
  %v3802 = vunpack.c.h.b16 %v3556
  %v3803 = vunpack.c.l.b16 %v3557
  %v3804 = vpack.c.b16 %v3669, %v3660
  %v3805 = vpack.c.b16 %v3670, %v3661
  %v3806 = vpack.c.b16 %v3671, %v3662
  %v3807 = vpack.c.b16 %v3672, %v3663
  %v3808 = vpack.c.b16 %v3673, %v3664
  %v3809 = vpack.c.b16 %v3674, %v3665
  %v3810 = vpack.c.b16 %v3675, %v3666
  %v3811 = vpack.c.b16 %v3676, %v3667
  %v3812 = vpack.c.b16 %v3677, %v3668
  %v3813 = vpack.c.b16 %v3687, %v3678
  %v3814 = vpack.c.b16 %v3688, %v3679
  %v3815 = vpack.c.b16 %v3689, %v3680
  %v3816 = vpack.c.b16 %v3690, %v3681
  %v3817 = vpack.c.b16 %v3691, %v3682
  %v3818 = vpack.c.b16 %v3692, %v3683
  %v3819 = vpack.c.b16 %v3693, %v3684
  %v3820 = vpack.c.b16 %v3694, %v3685
  %v3821 = vpack.c.b16 %v3695, %v3686
  %v3822 = vpack.c.b16 %v3705, %v3696
  %v3823 = vpack.c.b16 %v3706, %v3697
  %v3824 = vpack.c.b16 %v3707, %v3698
  %v3825 = vpack.c.b16 %v3708, %v3699
  %v3826 = vpack.c.b16 %v3709, %v3700
  %v3827 = vpack.c.b16 %v3710, %v3701
  %v3828 = vpack.c.b16 %v3711, %v3702
  %v3829 = vpack.c.b16 %v3712, %v3703
  %v3830 = vpack.c.b16 %v3713, %v3704
  %v3831 = vpack.c.b16 %v3723, %v3714
  %v3832 = vpack.c.b16 %v3724, %v3715
  %v3833 = vpack.c.b16 %v3725, %v3716
  %v3834 = vpack.c.b16 %v3726, %v3717
  %v3835 = vpack.c.b16 %v3727, %v3718
  %v3836 = vpack.c.b16 %v3728, %v3719
  %v3837 = vpack.c.b16 %v3729, %v3720
  %v3838 = vpack.c.b16 %v3730, %v3721
  %v3839 = vpack.c.b16 %v3731, %v3722
  %v3840 = vpack.c.b16 %v3741, %v3732
  %v3841 = vpack.c.b16 %v3742, %v3733
  %v3842 = vpack.c.b16 %v3743, %v3734
  %v3843 = vpack.c.b16 %v3744, %v3735
  %v3844 = vpack.c.b16 %v3745, %v3736
  %v3845 = vpack.c.b16 %v3746, %v3737
  %v3846 = vpack.c.b16 %v3747, %v3738
  %v3847 = vpack.c.b16 %v3748, %v3739
  %v3848 = vpack.c.b16 %v3749, %v3740
  %v3849 = vpack.c.b16 %v3759, %v3750
  %v3850 = vpack.c.b16 %v3760, %v3751
  %v3851 = vpack.c.b16 %v3761, %v3752
  %v3852 = vpack.c.b16 %v3762, %v3753
  %v3853 = vpack.c.b16 %v3763, %v3754
  %v3854 = vpack.c.b16 %v3764, %v3755
  %v3855 = vpack.c.b16 %v3765, %v3756
  %v3856 = vpack.c.b16 %v3766, %v3757
  %v3857 = vpack.c.b16 %v3767, %v3758
  %v3858 = vpack.c.b16 %v3777, %v3768
  %v3859 = vpack.c.b16 %v3778, %v3769
  %v3860 = vpack.c.b16 %v3779, %v3770
  %v3861 = vpack.c.b16 %v3780, %v3771
  %v3862 = vpack.c.b16 %v3781, %v3772
  %v3863 = vpack.c.b16 %v3782, %v3773
  %v3864 = vpack.c.b16 %v3783, %v3774
  %v3865 = vpack.c.b16 %v3784, %v3775
  %v3866 = vpack.c.b16 %v3785, %v3776
  %v3867 = vpack.c.b16 %v3795, %v3786
  %v3868 = vpack.c.b16 %v3796, %v3787
  %v3869 = vpack.c.b16 %v3797, %v3788
  %v3870 = vpack.c.b16 %v3798, %v3789
  %v3871 = vpack.c.b16 %v3799, %v3790
  %v3872 = vpack.c.b16 %v3800, %v3791
  %v3873 = vpack.c.b16 %v3801, %v3792
  %v3874 = vpack.c.b16 %v3802, %v3793
  %v3875 = vpack.c.b16 %v3803, %v3794
  %3948 = vmatpush.bf16.msra.mxu0 %v3867
  %3949 = vmatpush.bf16.msra.mxu0 %v3858
  %3950 = vmatpush.bf16.msra.mxu0 %v3849
  %3951 = vmatpush.bf16.msra.mxu0 %v3840
  %3952 = vmatpush.bf16.msra.mxu0 %v3831
  %3953 = vmatpush.bf16.msra.mxu0 %v3822
  %3954 = vmatpush.bf16.msra.mxu0 %v3813
  %3955 = vmatpush.bf16.msra.mxu0 %v3804
  %3956 = vmatmul.bf16.gmra.mxu0 %v3477
  %v3957 = vpop.f32.mrf.mxu0
  %v3958 = vadd.f32 %v3562, %v3957
  %v3959 = vpop.f32.mrf.mxu0
  %3960 = vdwg.mxu0
  %3961 = vmatpush.bf16.msra.mxu0 %v3868
  %3962 = vmatpush.bf16.msra.mxu0 %v3859
  %3963 = vmatpush.bf16.msra.mxu0 %v3850
  %3964 = vmatpush.bf16.msra.mxu0 %v3841
  %3965 = vmatpush.bf16.msra.mxu0 %v3832
  %3966 = vmatpush.bf16.msra.mxu0 %v3823
  %3967 = vmatpush.bf16.msra.mxu0 %v3814
  %3968 = vmatpush.bf16.msra.mxu0 %v3805
  %3969 = vmatmul.bf16.gmra.mxu0 %v3477
  %v3970 = vpop.f32.mrf.mxu0
  %v3971 = vadd.f32 %v3563, %v3970
  %v3972 = vpop.f32.mrf.mxu0
  %3973 = vdwg.mxu0
  %3974 = vmatpush.bf16.msra.mxu0 %v3869
  %3975 = vmatpush.bf16.msra.mxu0 %v3860
  %3976 = vmatpush.bf16.msra.mxu0 %v3851
  %3977 = vmatpush.bf16.msra.mxu0 %v3842
  %3978 = vmatpush.bf16.msra.mxu0 %v3833
  %3979 = vmatpush.bf16.msra.mxu0 %v3824
  %3980 = vmatpush.bf16.msra.mxu0 %v3815
  %3981 = vmatpush.bf16.msra.mxu0 %v3806
  %3982 = vmatmul.bf16.gmra.mxu0 %v3477
  %v3983 = vpop.f32.mrf.mxu0
  %v3984 = vadd.f32 %v3564, %v3983
  %v3985 = vpop.f32.mrf.mxu0
  %3986 = vdwg.mxu0
  %3987 = vmatpush.bf16.msra.mxu0 %v3870
  %3988 = vmatpush.bf16.msra.mxu0 %v3861
  %3989 = vmatpush.bf16.msra.mxu0 %v3852
  %3990 = vmatpush.bf16.msra.mxu0 %v3843
  %3991 = vmatpush.bf16.msra.mxu0 %v3834
  %3992 = vmatpush.bf16.msra.mxu0 %v3825
  %3993 = vmatpush.bf16.msra.mxu0 %v3816
  %3994 = vmatpush.bf16.msra.mxu0 %v3807
  %3995 = vmatmul.bf16.gmra.mxu0 %v3477
  %v3996 = vpop.f32.mrf.mxu0
  %v3997 = vadd.f32 %v3565, %v3996
  %v3998 = vpop.f32.mrf.mxu0
  %3999 = vdwg.mxu0
  %4000 = vmatpush.bf16.msra.mxu0 %v3871
  %4001 = vmatpush.bf16.msra.mxu0 %v3862
  %4002 = vmatpush.bf16.msra.mxu0 %v3853
  %4003 = vmatpush.bf16.msra.mxu0 %v3844
  %4004 = vmatpush.bf16.msra.mxu0 %v3835
  %4005 = vmatpush.bf16.msra.mxu0 %v3826
  %4006 = vmatpush.bf16.msra.mxu0 %v3817
  %4007 = vmatpush.bf16.msra.mxu0 %v3808
  %4008 = vmatmul.bf16.gmra.mxu0 %v3477
  %v4009 = vpop.f32.mrf.mxu0
  %v4010 = vadd.f32 %v3566, %v4009
  %v4011 = vpop.f32.mrf.mxu0
  %4012 = vdwg.mxu0
  %4013 = vmatpush.bf16.msra.mxu0 %v3872
  %4014 = vmatpush.bf16.msra.mxu0 %v3863
  %4015 = vmatpush.bf16.msra.mxu0 %v3854
  %4016 = vmatpush.bf16.msra.mxu0 %v3845
  %4017 = vmatpush.bf16.msra.mxu0 %v3836
  %4018 = vmatpush.bf16.msra.mxu0 %v3827
  %4019 = vmatpush.bf16.msra.mxu0 %v3818
  %4020 = vmatpush.bf16.msra.mxu0 %v3809
  %4021 = vmatmul.bf16.gmra.mxu0 %v3477
  %v4022 = vpop.f32.mrf.mxu0
  %v4023 = vadd.f32 %v3567, %v4022
  %v4024 = vpop.f32.mrf.mxu0
  %4025 = vdwg.mxu0
  %4026 = vmatpush.bf16.msra.mxu0 %v3873
  %4027 = vmatpush.bf16.msra.mxu0 %v3864
  %4028 = vmatpush.bf16.msra.mxu0 %v3855
  %4029 = vmatpush.bf16.msra.mxu0 %v3846
  %4030 = vmatpush.bf16.msra.mxu0 %v3837
  %4031 = vmatpush.bf16.msra.mxu0 %v3828
  %4032 = vmatpush.bf16.msra.mxu0 %v3819
  %4033 = vmatpush.bf16.msra.mxu0 %v3810
  %4034 = vmatmul.bf16.gmra.mxu0 %v3477
  %v4035 = vpop.f32.mrf.mxu0
  %v4036 = vadd.f32 %v3568, %v4035
  %v4037 = vpop.f32.mrf.mxu0
  %4038 = vdwg.mxu0
  %4039 = vmatpush.bf16.msra.mxu0 %v3874
  %4040 = vmatpush.bf16.msra.mxu0 %v3865
  %4041 = vmatpush.bf16.msra.mxu0 %v3856
  %4042 = vmatpush.bf16.msra.mxu0 %v3847
  %4043 = vmatpush.bf16.msra.mxu0 %v3838
  %4044 = vmatpush.bf16.msra.mxu0 %v3829
  %4045 = vmatpush.bf16.msra.mxu0 %v3820
  %4046 = vmatpush.bf16.msra.mxu0 %v3811
  %4047 = vmatmul.bf16.gmra.mxu0 %v3477
  %v4048 = vpop.f32.mrf.mxu0
  %v4049 = vadd.f32 %v3569, %v4048
  %v4050 = vpop.f32.mrf.mxu0
  %4051 = vdwg.mxu0
  %4052 = vmatpush.bf16.msra.mxu0 %v3875
  %4053 = vmatpush.bf16.msra.mxu0 %v3866
  %4054 = vmatpush.bf16.msra.mxu0 %v3857
  %4055 = vmatpush.bf16.msra.mxu0 %v3848
  %4056 = vmatpush.bf16.msra.mxu0 %v3839
  %4057 = vmatpush.bf16.msra.mxu0 %v3830
  %4058 = vmatpush.bf16.msra.mxu0 %v3821
  %4059 = vmatpush.bf16.msra.mxu0 %v3812
  %4060 = vmatmul.bf16.gmra.mxu0 %v3477
  %v4061 = vpop.f32.mrf.mxu0
  %v4062 = vadd.f32 %v3570, %v4061
  %v4063 = vpop.f32.mrf.mxu0
  %4064 = vdwg.mxu0
  %vm4065 = vcmp.eq.f32.partialorder %v2752, 0.0
  %vm4066 = vcmp.eq.f32.partialorder %v2753, 0.0
  %vm4067 = vcmp.eq.f32.partialorder %v2754, 0.0
  %vm4068 = vcmp.eq.f32.partialorder %v2755, 0.0
  %vm4069 = vcmp.eq.f32.partialorder %v2756, 0.0
  %vm4070 = vcmp.eq.f32.partialorder %v2757, 0.0
  %vm4071 = vcmp.eq.f32.partialorder %v2758, 0.0
  %vm4072 = vcmp.eq.f32.partialorder %v2759, 0.0
  %vm4073 = vcmp.eq.f32.partialorder %v2760, 0.0
  %v4074 = vsel %vm4065, %v3958, 0.0
  %v4075 = vsel %vm4066, %v3971, 0.0
  %v4076 = vsel %vm4067, %v3984, 0.0
  %v4077 = vsel %vm4068, %v3997, 0.0
  %v4078 = vsel %vm4069, %v4010, 0.0
  %v4079 = vsel %vm4070, %v4023, 0.0
  %v4080 = vsel %vm4071, %v4036, 0.0
  %v4081 = vsel %vm4072, %v4049, 0.0
  %v4082 = vsel %vm4073, %v4062, 0.0
  %v4083 = vmax.f32 %v4074, 0.0
  %v4084 = vmax.f32 %v4075, 0.0
  %v4085 = vmax.f32 %v4076, 0.0
  %v4086 = vmax.f32 %v4077, 0.0
  %v4087 = vmax.f32 %v4078, 0.0
  %v4088 = vmax.f32 %v4079, 0.0
  %v4089 = vmax.f32 %v4080, 0.0
  %v4090 = vmax.f32 %v4081, 0.0
  %v4091 = vmax.f32 %v4082, 0.0
  %v4092 = vpack.c.bf16 %v4083, %v4083
  %v4093 = vpack.c.bf16 %v4084, %v4084
  %v4094 = vpack.c.bf16 %v4085, %v4085
  %v4095 = vpack.c.bf16 %v4086, %v4086
  %v4096 = vpack.c.bf16 %v4087, %v4087
  %v4097 = vpack.c.bf16 %v4088, %v4088
  %v4098 = vpack.c.bf16 %v4089, %v4089
  %v4099 = vpack.c.bf16 %v4090, %v4090
  %v4100 = vpack.c.bf16 %v4091, %v4091
  %v4101 = vld [vmem:[%s7] sm:$0xff]
  %v4102 = vld [vmem:[%s7 + $0x8] sm:$0xff]
  %v4103 = vld [vmem:[%s7 + $0x10] sm:$0xff]
  %v4104 = vld [vmem:[%s7 + $0x18] sm:$0xff]
  %v4105 = vld [vmem:[%s7 + $0x20] sm:$0xff]
  %v4106 = vld [vmem:[%s7 + $0x28] sm:$0xff]
  %v4107 = vld [vmem:[%s7 + $0x30] sm:$0xff]
  %v4108 = vld [vmem:[%s7 + $0x38] sm:$0xff]
  %v4109 = vld [vmem:[%s7 + $0x40] sm:$0xff]
  %v4110 = vld [vmem:[%s7 + $0x48] sm:$0xff]
  %v4111 = vld [vmem:[%s7 + $0x50] sm:$0xff]
  %v4112 = vld [vmem:[%s7 + $0x58] sm:$0xff]
  %v4113 = vld [vmem:[%s7 + $0x60] sm:$0xff]
  %v4114 = vld [vmem:[%s7 + $0x68] sm:$0xff]
  %v4115 = vld [vmem:[%s7 + $0x70] sm:$0xff]
  %v4116 = vld [vmem:[%s7 + $0x78] sm:$0xff]
  %v4117 = vld [vmem:[%s7 + $0x80] sm:$0xff]
  %v4118 = vld [vmem:[%s7 + $0x88] sm:$0xff]
  %v4119 = vld [vmem:[%s7 + $0x90] sm:$0xff]
  %v4120 = vld [vmem:[%s7 + $0x98] sm:$0xff]
  %v4121 = vld [vmem:[%s7 + $0xa0] sm:$0xff]
  %v4122 = vld [vmem:[%s7 + $0xa8] sm:$0xff]
  %v4123 = vld [vmem:[%s7 + $0xb0] sm:$0xff]
  %v4124 = vld [vmem:[%s7 + $0xb8] sm:$0xff]
  %v4125 = vld [vmem:[%s7 + $0xc0] sm:$0xff]
  %v4126 = vld [vmem:[%s7 + $0xc8] sm:$0xff]
  %v4127 = vld [vmem:[%s7 + $0xd0] sm:$0xff]
  %v4128 = vld [vmem:[%s7 + $0xd8] sm:$0xff]
  %v4129 = vld [vmem:[%s7 + $0xe0] sm:$0xff]
  %v4130 = vld [vmem:[%s7 + $0xe8] sm:$0xff]
  %v4131 = vld [vmem:[%s7 + $0xf0] sm:$0xff]
  %v4132 = vld [vmem:[%s7 + $0xf8] sm:$0xff]
  %v4133 = vld [vmem:[%s7 + $0x100] sm:$0xff]
  %v4134 = vld [vmem:[%s7 + $0x108] sm:$0xff]
  %v4135 = vld [vmem:[%s7 + $0x110] sm:$0xff]
  %v4136 = vld [vmem:[%s7 + $0x118] sm:$0xff]
  %v4137 = vld [vmem:[%s7 + $0x120] sm:$0xff]
  %v4138 = vld [vmem:[%s7 + $0x128] sm:$0xff]
  %v4139 = vld [vmem:[%s7 + $0x130] sm:$0xff]
  %v4140 = vld [vmem:[%s7 + $0x138] sm:$0xff]
  %v4141 = vld [vmem:[%s7 + $0x140] sm:$0xff]
  %v4142 = vld [vmem:[%s7 + $0x148] sm:$0xff]
  %v4143 = vld [vmem:[%s7 + $0x150] sm:$0xff]
  %v4144 = vld [vmem:[%s7 + $0x158] sm:$0xff]
  %v4145 = vld [vmem:[%s7 + $0x160] sm:$0xff]
  %v4146 = vld [vmem:[%s7 + $0x168] sm:$0xff]
  %v4147 = vld [vmem:[%s7 + $0x170] sm:$0xff]
  %v4148 = vld [vmem:[%s7 + $0x178] sm:$0xff]
  %v4149 = vld [vmem:[%s7 + $0x180] sm:$0xff]
  %v4150 = vld [vmem:[%s7 + $0x188] sm:$0xff]
  %v4151 = vld [vmem:[%s7 + $0x190] sm:$0xff]
  %v4152 = vld [vmem:[%s7 + $0x198] sm:$0xff]
  %v4153 = vld [vmem:[%s7 + $0x1a0] sm:$0xff]
  %v4154 = vld [vmem:[%s7 + $0x1a8] sm:$0xff]
  %v4155 = vld [vmem:[%s7 + $0x1b0] sm:$0xff]
  %v4156 = vld [vmem:[%s7 + $0x1b8] sm:$0xff]
  %v4157 = vld [vmem:[%s7 + $0x1c0] sm:$0xff]
  %v4158 = vld [vmem:[%s7 + $0x1c8] sm:$0xff]
  %v4159 = vld [vmem:[%s7 + $0x1d0] sm:$0xff]
  %v4160 = vld [vmem:[%s7 + $0x1d8] sm:$0xff]
  %v4161 = vld [vmem:[%s7 + $0x1e0] sm:$0xff]
  %v4162 = vld [vmem:[%s7 + $0x1e8] sm:$0xff]
  %v4163 = vld [vmem:[%s7 + $0x1f0] sm:$0xff]
  %v4164 = vld [vmem:[%s7 + $0x1f8] sm:$0xff]
  %v4165 = vld [vmem:[%s7 + $0x200] sm:$0xff]
  %v4166 = vld [vmem:[%s7 + $0x208] sm:$0xff]
  %v4167 = vld [vmem:[%s7 + $0x210] sm:$0xff]
  %v4168 = vld [vmem:[%s7 + $0x218] sm:$0xff]
  %v4169 = vld [vmem:[%s7 + $0x220] sm:$0xff]
  %v4170 = vld [vmem:[%s7 + $0x228] sm:$0xff]
  %v4171 = vld [vmem:[%s7 + $0x230] sm:$0xff]
  %v4172 = vld [vmem:[%s7 + $0x238] sm:$0xff]
  %v4173 = vld [vmem:[%s7 + $0x240] sm:$0xff]
  %v4174 = vld [vmem:[%s7 + $0x248] sm:$0xff]
  %v4175 = vld [vmem:[%s7 + $0x250] sm:$0xff]
  %v4176 = vld [vmem:[%s7 + $0x258] sm:$0xff]
  %v4177 = vld [vmem:[%s7 + $0x260] sm:$0xff]
  %v4178 = vld [vmem:[%s7 + $0x268] sm:$0xff]
  %v4179 = vld [vmem:[%s7 + $0x270] sm:$0xff]
  %v4180 = vld [vmem:[%s7 + $0x278] sm:$0xff]
  %v4181 = vld [vmem:[%s7 + $0x280] sm:$0xff]
  %v4182 = vld [vmem:[%s7 + $0x288] sm:$0xff]
  %v4183 = vld [vmem:[%s7 + $0x290] sm:$0xff]
  %v4184 = vld [vmem:[%s7 + $0x298] sm:$0xff]
  %v4185 = vld [vmem:[%s7 + $0x2a0] sm:$0xff]
  %v4186 = vld [vmem:[%s7 + $0x2a8] sm:$0xff]
  %v4187 = vld [vmem:[%s7 + $0x2b0] sm:$0xff]
  %v4188 = vld [vmem:[%s7 + $0x2b8] sm:$0xff]
  %v4189 = vld [vmem:[%s7 + $0x2c0] sm:$0xff]
  %v4190 = vld [vmem:[%s7 + $0x2c8] sm:$0xff]
  %v4191 = vld [vmem:[%s7 + $0x2d0] sm:$0xff]
  %v4192 = vld [vmem:[%s7 + $0x2d8] sm:$0xff]
  %v4193 = vld [vmem:[%s7 + $0x2e0] sm:$0xff]
  %v4194 = vld [vmem:[%s7 + $0x2e8] sm:$0xff]
  %v4195 = vld [vmem:[%s7 + $0x2f0] sm:$0xff]
  %v4196 = vld [vmem:[%s7 + $0x2f8] sm:$0xff]
  %v4197 = vld [vmem:[%s7 + $0x300] sm:$0xff]
  %v4198 = vld [vmem:[%s7 + $0x308] sm:$0xff]
  %v4199 = vld [vmem:[%s7 + $0x310] sm:$0xff]
  %v4200 = vld [vmem:[%s7 + $0x318] sm:$0xff]
  %v4201 = vld [vmem:[%s7 + $0x320] sm:$0xff]
  %v4202 = vld [vmem:[%s7 + $0x328] sm:$0xff]
  %v4203 = vld [vmem:[%s7 + $0x330] sm:$0xff]
  %v4204 = vld [vmem:[%s7 + $0x338] sm:$0xff]
  %v4205 = vld [vmem:[%s7 + $0x340] sm:$0xff]
  %v4206 = vld [vmem:[%s7 + $0x348] sm:$0xff]
  %v4207 = vld [vmem:[%s7 + $0x350] sm:$0xff]
  %v4208 = vld [vmem:[%s7 + $0x358] sm:$0xff]
  %v4209 = vld [vmem:[%s7 + $0x360] sm:$0xff]
  %v4210 = vld [vmem:[%s7 + $0x368] sm:$0xff]
  %v4211 = vld [vmem:[%s7 + $0x370] sm:$0xff]
  %v4212 = vld [vmem:[%s7 + $0x378] sm:$0xff]
  %v4213 = vld [vmem:[%s7 + $0x380] sm:$0xff]
  %v4214 = vld [vmem:[%s7 + $0x388] sm:$0xff]
  %v4215 = vld [vmem:[%s7 + $0x390] sm:$0xff]
  %v4216 = vld [vmem:[%s7 + $0x398] sm:$0xff]
  %v4217 = vld [vmem:[%s7 + $0x3a0] sm:$0xff]
  %v4218 = vld [vmem:[%s7 + $0x3a8] sm:$0xff]
  %v4219 = vld [vmem:[%s7 + $0x3b0] sm:$0xff]
  %v4220 = vld [vmem:[%s7 + $0x3b8] sm:$0xff]
  %v4221 = vld [vmem:[%s7 + $0x3c0] sm:$0xff]
  %v4222 = vld [vmem:[%s7 + $0x3c8] sm:$0xff]
  %v4223 = vld [vmem:[%s7 + $0x3d0] sm:$0xff]
  %v4224 = vld [vmem:[%s7 + $0x3d8] sm:$0xff]
  %v4225 = vld [vmem:[%s7 + $0x3e0] sm:$0xff]
  %v4226 = vld [vmem:[%s7 + $0x3e8] sm:$0xff]
  %v4227 = vld [vmem:[%s7 + $0x3f0] sm:$0xff]
  %v4228 = vld [vmem:[%s7 + $0x3f8] sm:$0xff]
  %v4229 = vld [vmem:[%s7 + $0x400] sm:$0xff]
  %v4230 = vld [vmem:[%s7 + $0x408] sm:$0xff]
  %v4231 = vld [vmem:[%s7 + $0x410] sm:$0xff]
  %v4232 = vld [vmem:[%s7 + $0x418] sm:$0xff]
  %v4233 = vld [vmem:[%s7 + $0x420] sm:$0xff]
  %v4234 = vld [vmem:[%s7 + $0x428] sm:$0xff]
  %v4235 = vld [vmem:[%s7 + $0x430] sm:$0xff]
  %v4236 = vld [vmem:[%s7 + $0x438] sm:$0xff]
  %v4237 = vld [vmem:[%s7 + $0x440] sm:$0xff]
  %v4238 = vld [vmem:[%s7 + $0x448] sm:$0xff]
  %v4239 = vld [vmem:[%s7 + $0x450] sm:$0xff]
  %v4240 = vld [vmem:[%s7 + $0x458] sm:$0xff]
  %v4241 = vld [vmem:[%s7 + $0x460] sm:$0xff]
  %v4242 = vld [vmem:[%s7 + $0x468] sm:$0xff]
  %v4243 = vld [vmem:[%s7 + $0x470] sm:$0xff]
  %v4244 = vld [vmem:[%s7 + $0x478] sm:$0xff]
  %vm4245 = vcmp.eq.f32.partialorder %v2752, 1.0
  %vm4246 = vcmp.eq.f32.partialorder %v2753, 1.0
  %vm4247 = vcmp.eq.f32.partialorder %v2754, 1.0
  %vm4248 = vcmp.eq.f32.partialorder %v2755, 1.0
  %vm4249 = vcmp.eq.f32.partialorder %v2756, 1.0
  %vm4250 = vcmp.eq.f32.partialorder %v2757, 1.0
  %vm4251 = vcmp.eq.f32.partialorder %v2758, 1.0
  %vm4252 = vcmp.eq.f32.partialorder %v2759, 1.0
  %vm4253 = vcmp.eq.f32.partialorder %v2760, 1.0
  %v4254 = vsel %vm4245, %v3958, 0.0
  %v4255 = vsel %vm4246, %v3971, 0.0
  %v4256 = vsel %vm4247, %v3984, 0.0
  %v4257 = vsel %vm4248, %v3997, 0.0
  %v4258 = vsel %vm4249, %v4010, 0.0
  %v4259 = vsel %vm4250, %v4023, 0.0
  %v4260 = vsel %vm4251, %v4036, 0.0
  %v4261 = vsel %vm4252, %v4049, 0.0
  %v4262 = vsel %vm4253, %v4062, 0.0
  %v4263 = vmax.f32 %v4254, 0.0
  %v4264 = vmax.f32 %v4255, 0.0
  %v4265 = vmax.f32 %v4256, 0.0
  %v4266 = vmax.f32 %v4257, 0.0
  %v4267 = vmax.f32 %v4258, 0.0
  %v4268 = vmax.f32 %v4259, 0.0
  %v4269 = vmax.f32 %v4260, 0.0
  %v4270 = vmax.f32 %v4261, 0.0
  %v4271 = vmax.f32 %v4262, 0.0
  %v4272 = vpack.c.bf16 %v4263, %v4263
  %v4273 = vpack.c.bf16 %v4264, %v4264
  %v4274 = vpack.c.bf16 %v4265, %v4265
  %v4275 = vpack.c.bf16 %v4266, %v4266
  %v4276 = vpack.c.bf16 %v4267, %v4267
  %v4277 = vpack.c.bf16 %v4268, %v4268
  %v4278 = vpack.c.bf16 %v4269, %v4269
  %v4279 = vpack.c.bf16 %v4270, %v4270
  %v4280 = vpack.c.bf16 %v4271, %v4271
  %s4281 = scalar_lea.vmem %s7, 1152
  %v4282 = vld [vmem:[%s4281] sm:$0xff]
  %v4283 = vld [vmem:[%s4281 + $0x8] sm:$0xff]
  %v4284 = vld [vmem:[%s4281 + $0x10] sm:$0xff]
  %v4285 = vld [vmem:[%s4281 + $0x18] sm:$0xff]
  %v4286 = vld [vmem:[%s4281 + $0x20] sm:$0xff]
  %v4287 = vld [vmem:[%s4281 + $0x28] sm:$0xff]
  %v4288 = vld [vmem:[%s4281 + $0x30] sm:$0xff]
  %v4289 = vld [vmem:[%s4281 + $0x38] sm:$0xff]
  %v4290 = vld [vmem:[%s4281 + $0x40] sm:$0xff]
  %v4291 = vld [vmem:[%s4281 + $0x48] sm:$0xff]
  %v4292 = vld [vmem:[%s4281 + $0x50] sm:$0xff]
  %v4293 = vld [vmem:[%s4281 + $0x58] sm:$0xff]
  %v4294 = vld [vmem:[%s4281 + $0x60] sm:$0xff]
  %v4295 = vld [vmem:[%s4281 + $0x68] sm:$0xff]
  %v4296 = vld [vmem:[%s4281 + $0x70] sm:$0xff]
  %v4297 = vld [vmem:[%s4281 + $0x78] sm:$0xff]
  %v4298 = vld [vmem:[%s4281 + $0x80] sm:$0xff]
  %v4299 = vld [vmem:[%s4281 + $0x88] sm:$0xff]
  %v4300 = vld [vmem:[%s4281 + $0x90] sm:$0xff]
  %v4301 = vld [vmem:[%s4281 + $0x98] sm:$0xff]
  %v4302 = vld [vmem:[%s4281 + $0xa0] sm:$0xff]
  %v4303 = vld [vmem:[%s4281 + $0xa8] sm:$0xff]
  %v4304 = vld [vmem:[%s4281 + $0xb0] sm:$0xff]
  %v4305 = vld [vmem:[%s4281 + $0xb8] sm:$0xff]
  %v4306 = vld [vmem:[%s4281 + $0xc0] sm:$0xff]
  %v4307 = vld [vmem:[%s4281 + $0xc8] sm:$0xff]
  %v4308 = vld [vmem:[%s4281 + $0xd0] sm:$0xff]
  %v4309 = vld [vmem:[%s4281 + $0xd8] sm:$0xff]
  %v4310 = vld [vmem:[%s4281 + $0xe0] sm:$0xff]
  %v4311 = vld [vmem:[%s4281 + $0xe8] sm:$0xff]
  %v4312 = vld [vmem:[%s4281 + $0xf0] sm:$0xff]
  %v4313 = vld [vmem:[%s4281 + $0xf8] sm:$0xff]
  %v4314 = vld [vmem:[%s4281 + $0x100] sm:$0xff]
  %v4315 = vld [vmem:[%s4281 + $0x108] sm:$0xff]
  %v4316 = vld [vmem:[%s4281 + $0x110] sm:$0xff]
  %v4317 = vld [vmem:[%s4281 + $0x118] sm:$0xff]
  %v4318 = vld [vmem:[%s4281 + $0x120] sm:$0xff]
  %v4319 = vld [vmem:[%s4281 + $0x128] sm:$0xff]
  %v4320 = vld [vmem:[%s4281 + $0x130] sm:$0xff]
  %v4321 = vld [vmem:[%s4281 + $0x138] sm:$0xff]
  %v4322 = vld [vmem:[%s4281 + $0x140] sm:$0xff]
  %v4323 = vld [vmem:[%s4281 + $0x148] sm:$0xff]
  %v4324 = vld [vmem:[%s4281 + $0x150] sm:$0xff]
  %v4325 = vld [vmem:[%s4281 + $0x158] sm:$0xff]
  %v4326 = vld [vmem:[%s4281 + $0x160] sm:$0xff]
  %v4327 = vld [vmem:[%s4281 + $0x168] sm:$0xff]
  %v4328 = vld [vmem:[%s4281 + $0x170] sm:$0xff]
  %v4329 = vld [vmem:[%s4281 + $0x178] sm:$0xff]
  %v4330 = vld [vmem:[%s4281 + $0x180] sm:$0xff]
  %v4331 = vld [vmem:[%s4281 + $0x188] sm:$0xff]
  %v4332 = vld [vmem:[%s4281 + $0x190] sm:$0xff]
  %v4333 = vld [vmem:[%s4281 + $0x198] sm:$0xff]
  %v4334 = vld [vmem:[%s4281 + $0x1a0] sm:$0xff]
  %v4335 = vld [vmem:[%s4281 + $0x1a8] sm:$0xff]
  %v4336 = vld [vmem:[%s4281 + $0x1b0] sm:$0xff]
  %v4337 = vld [vmem:[%s4281 + $0x1b8] sm:$0xff]
  %v4338 = vld [vmem:[%s4281 + $0x1c0] sm:$0xff]
  %v4339 = vld [vmem:[%s4281 + $0x1c8] sm:$0xff]
  %v4340 = vld [vmem:[%s4281 + $0x1d0] sm:$0xff]
  %v4341 = vld [vmem:[%s4281 + $0x1d8] sm:$0xff]
  %v4342 = vld [vmem:[%s4281 + $0x1e0] sm:$0xff]
  %v4343 = vld [vmem:[%s4281 + $0x1e8] sm:$0xff]
  %v4344 = vld [vmem:[%s4281 + $0x1f0] sm:$0xff]
  %v4345 = vld [vmem:[%s4281 + $0x1f8] sm:$0xff]
  %v4346 = vld [vmem:[%s4281 + $0x200] sm:$0xff]
  %v4347 = vld [vmem:[%s4281 + $0x208] sm:$0xff]
  %v4348 = vld [vmem:[%s4281 + $0x210] sm:$0xff]
  %v4349 = vld [vmem:[%s4281 + $0x218] sm:$0xff]
  %v4350 = vld [vmem:[%s4281 + $0x220] sm:$0xff]
  %v4351 = vld [vmem:[%s4281 + $0x228] sm:$0xff]
  %v4352 = vld [vmem:[%s4281 + $0x230] sm:$0xff]
  %v4353 = vld [vmem:[%s4281 + $0x238] sm:$0xff]
  %v4354 = vld [vmem:[%s4281 + $0x240] sm:$0xff]
  %v4355 = vld [vmem:[%s4281 + $0x248] sm:$0xff]
  %v4356 = vld [vmem:[%s4281 + $0x250] sm:$0xff]
  %v4357 = vld [vmem:[%s4281 + $0x258] sm:$0xff]
  %v4358 = vld [vmem:[%s4281 + $0x260] sm:$0xff]
  %v4359 = vld [vmem:[%s4281 + $0x268] sm:$0xff]
  %v4360 = vld [vmem:[%s4281 + $0x270] sm:$0xff]
  %v4361 = vld [vmem:[%s4281 + $0x278] sm:$0xff]
  %v4362 = vld [vmem:[%s4281 + $0x280] sm:$0xff]
  %v4363 = vld [vmem:[%s4281 + $0x288] sm:$0xff]
  %v4364 = vld [vmem:[%s4281 + $0x290] sm:$0xff]
  %v4365 = vld [vmem:[%s4281 + $0x298] sm:$0xff]
  %v4366 = vld [vmem:[%s4281 + $0x2a0] sm:$0xff]
  %v4367 = vld [vmem:[%s4281 + $0x2a8] sm:$0xff]
  %v4368 = vld [vmem:[%s4281 + $0x2b0] sm:$0xff]
  %v4369 = vld [vmem:[%s4281 + $0x2b8] sm:$0xff]
  %v4370 = vld [vmem:[%s4281 + $0x2c0] sm:$0xff]
  %v4371 = vld [vmem:[%s4281 + $0x2c8] sm:$0xff]
  %v4372 = vld [vmem:[%s4281 + $0x2d0] sm:$0xff]
  %v4373 = vld [vmem:[%s4281 + $0x2d8] sm:$0xff]
  %v4374 = vld [vmem:[%s4281 + $0x2e0] sm:$0xff]
  %v4375 = vld [vmem:[%s4281 + $0x2e8] sm:$0xff]
  %v4376 = vld [vmem:[%s4281 + $0x2f0] sm:$0xff]
  %v4377 = vld [vmem:[%s4281 + $0x2f8] sm:$0xff]
  %v4378 = vld [vmem:[%s4281 + $0x300] sm:$0xff]
  %v4379 = vld [vmem:[%s4281 + $0x308] sm:$0xff]
  %v4380 = vld [vmem:[%s4281 + $0x310] sm:$0xff]
  %v4381 = vld [vmem:[%s4281 + $0x318] sm:$0xff]
  %v4382 = vld [vmem:[%s4281 + $0x320] sm:$0xff]
  %v4383 = vld [vmem:[%s4281 + $0x328] sm:$0xff]
  %v4384 = vld [vmem:[%s4281 + $0x330] sm:$0xff]
  %v4385 = vld [vmem:[%s4281 + $0x338] sm:$0xff]
  %v4386 = vld [vmem:[%s4281 + $0x340] sm:$0xff]
  %v4387 = vld [vmem:[%s4281 + $0x348] sm:$0xff]
  %v4388 = vld [vmem:[%s4281 + $0x350] sm:$0xff]
  %v4389 = vld [vmem:[%s4281 + $0x358] sm:$0xff]
  %v4390 = vld [vmem:[%s4281 + $0x360] sm:$0xff]
  %v4391 = vld [vmem:[%s4281 + $0x368] sm:$0xff]
  %v4392 = vld [vmem:[%s4281 + $0x370] sm:$0xff]
  %v4393 = vld [vmem:[%s4281 + $0x378] sm:$0xff]
  %v4394 = vld [vmem:[%s4281 + $0x380] sm:$0xff]
  %v4395 = vld [vmem:[%s4281 + $0x388] sm:$0xff]
  %v4396 = vld [vmem:[%s4281 + $0x390] sm:$0xff]
  %v4397 = vld [vmem:[%s4281 + $0x398] sm:$0xff]
  %v4398 = vld [vmem:[%s4281 + $0x3a0] sm:$0xff]
  %v4399 = vld [vmem:[%s4281 + $0x3a8] sm:$0xff]
  %v4400 = vld [vmem:[%s4281 + $0x3b0] sm:$0xff]
  %v4401 = vld [vmem:[%s4281 + $0x3b8] sm:$0xff]
  %v4402 = vld [vmem:[%s4281 + $0x3c0] sm:$0xff]
  %v4403 = vld [vmem:[%s4281 + $0x3c8] sm:$0xff]
  %v4404 = vld [vmem:[%s4281 + $0x3d0] sm:$0xff]
  %v4405 = vld [vmem:[%s4281 + $0x3d8] sm:$0xff]
  %v4406 = vld [vmem:[%s4281 + $0x3e0] sm:$0xff]
  %v4407 = vld [vmem:[%s4281 + $0x3e8] sm:$0xff]
  %v4408 = vld [vmem:[%s4281 + $0x3f0] sm:$0xff]
  %v4409 = vld [vmem:[%s4281 + $0x3f8] sm:$0xff]
  %v4410 = vld [vmem:[%s4281 + $0x400] sm:$0xff]
  %v4411 = vld [vmem:[%s4281 + $0x408] sm:$0xff]
  %v4412 = vld [vmem:[%s4281 + $0x410] sm:$0xff]
  %v4413 = vld [vmem:[%s4281 + $0x418] sm:$0xff]
  %v4414 = vld [vmem:[%s4281 + $0x420] sm:$0xff]
  %v4415 = vld [vmem:[%s4281 + $0x428] sm:$0xff]
  %v4416 = vld [vmem:[%s4281 + $0x430] sm:$0xff]
  %v4417 = vld [vmem:[%s4281 + $0x438] sm:$0xff]
  %v4418 = vld [vmem:[%s4281 + $0x440] sm:$0xff]
  %v4419 = vld [vmem:[%s4281 + $0x448] sm:$0xff]
  %v4420 = vld [vmem:[%s4281 + $0x450] sm:$0xff]
  %v4421 = vld [vmem:[%s4281 + $0x458] sm:$0xff]
  %v4422 = vld [vmem:[%s4281 + $0x460] sm:$0xff]
  %v4423 = vld [vmem:[%s4281 + $0x468] sm:$0xff]
  %v4424 = vld [vmem:[%s4281 + $0x470] sm:$0xff]
  %v4425 = vld [vmem:[%s4281 + $0x478] sm:$0xff]
  %v4570 = vunpack.c.l.b16 %v4282
  %v4571 = vunpack.c.h.b16 %v4282
  %v4572 = vunpack.c.l.b16 %v4283
  %v4573 = vunpack.c.h.b16 %v4283
  %v4574 = vunpack.c.l.b16 %v4284
  %v4575 = vunpack.c.h.b16 %v4284
  %v4576 = vunpack.c.l.b16 %v4285
  %v4577 = vunpack.c.h.b16 %v4285
  %v4578 = vunpack.c.l.b16 %v4286
  %v4579 = vunpack.c.h.b16 %v4286
  %v4580 = vunpack.c.l.b16 %v4287
  %v4581 = vunpack.c.h.b16 %v4287
  %v4582 = vunpack.c.l.b16 %v4288
  %v4583 = vunpack.c.h.b16 %v4288
  %v4584 = vunpack.c.l.b16 %v4289
  %v4585 = vunpack.c.h.b16 %v4289
  %v4586 = vunpack.c.l.b16 %v4290
  %v4587 = vunpack.c.h.b16 %v4290
  %v4588 = vunpack.c.l.b16 %v4291
  %v4589 = vunpack.c.h.b16 %v4291
  %v4590 = vunpack.c.l.b16 %v4292
  %v4591 = vunpack.c.h.b16 %v4292
  %v4592 = vunpack.c.l.b16 %v4293
  %v4593 = vunpack.c.h.b16 %v4293
  %v4594 = vunpack.c.l.b16 %v4294
  %v4595 = vunpack.c.h.b16 %v4294
  %v4596 = vunpack.c.l.b16 %v4295
  %v4597 = vunpack.c.h.b16 %v4295
  %v4598 = vunpack.c.l.b16 %v4296
  %v4599 = vunpack.c.h.b16 %v4296
  %v4600 = vunpack.c.l.b16 %v4297
  %v4601 = vunpack.c.h.b16 %v4297
  %v4602 = vunpack.c.l.b16 %v4298
  %v4603 = vunpack.c.h.b16 %v4298
  %v4604 = vunpack.c.l.b16 %v4299
  %v4605 = vunpack.c.h.b16 %v4299
  %v4606 = vunpack.c.l.b16 %v4300
  %v4607 = vunpack.c.h.b16 %v4300
  %v4608 = vunpack.c.l.b16 %v4301
  %v4609 = vunpack.c.h.b16 %v4301
  %v4610 = vunpack.c.l.b16 %v4302
  %v4611 = vunpack.c.h.b16 %v4302
  %v4612 = vunpack.c.l.b16 %v4303
  %v4613 = vunpack.c.h.b16 %v4303
  %v4614 = vunpack.c.l.b16 %v4304
  %v4615 = vunpack.c.h.b16 %v4304
  %v4616 = vunpack.c.l.b16 %v4305
  %v4617 = vunpack.c.h.b16 %v4305
  %v4618 = vunpack.c.l.b16 %v4306
  %v4619 = vunpack.c.h.b16 %v4306
  %v4620 = vunpack.c.l.b16 %v4307
  %v4621 = vunpack.c.h.b16 %v4307
  %v4622 = vunpack.c.l.b16 %v4308
  %v4623 = vunpack.c.h.b16 %v4308
  %v4624 = vunpack.c.l.b16 %v4309
  %v4625 = vunpack.c.h.b16 %v4309
  %v4626 = vunpack.c.l.b16 %v4310
  %v4627 = vunpack.c.h.b16 %v4310
  %v4628 = vunpack.c.l.b16 %v4311
  %v4629 = vunpack.c.h.b16 %v4311
  %v4630 = vunpack.c.l.b16 %v4312
  %v4631 = vunpack.c.h.b16 %v4312
  %v4632 = vunpack.c.l.b16 %v4313
  %v4633 = vunpack.c.h.b16 %v4313
  %v4634 = vunpack.c.l.b16 %v4314
  %v4635 = vunpack.c.h.b16 %v4314
  %v4636 = vunpack.c.l.b16 %v4315
  %v4637 = vunpack.c.h.b16 %v4315
  %v4638 = vunpack.c.l.b16 %v4316
  %v4639 = vunpack.c.h.b16 %v4316
  %v4640 = vunpack.c.l.b16 %v4317
  %v4641 = vunpack.c.h.b16 %v4317
  %v4642 = vunpack.c.l.b16 %v4318
  %v4643 = vunpack.c.h.b16 %v4318
  %v4644 = vunpack.c.l.b16 %v4319
  %v4645 = vunpack.c.h.b16 %v4319
  %v4646 = vunpack.c.l.b16 %v4320
  %v4647 = vunpack.c.h.b16 %v4320
  %v4648 = vunpack.c.l.b16 %v4321
  %v4649 = vunpack.c.h.b16 %v4321
  %v4650 = vunpack.c.l.b16 %v4322
  %v4651 = vunpack.c.h.b16 %v4322
  %v4652 = vunpack.c.l.b16 %v4323
  %v4653 = vunpack.c.h.b16 %v4323
  %v4654 = vunpack.c.l.b16 %v4324
  %v4655 = vunpack.c.h.b16 %v4324
  %v4656 = vunpack.c.l.b16 %v4325
  %v4657 = vunpack.c.h.b16 %v4325
  %v4658 = vunpack.c.l.b16 %v4326
  %v4659 = vunpack.c.h.b16 %v4326
  %v4660 = vunpack.c.l.b16 %v4327
  %v4661 = vunpack.c.h.b16 %v4327
  %v4662 = vunpack.c.l.b16 %v4328
  %v4663 = vunpack.c.h.b16 %v4328
  %v4664 = vunpack.c.l.b16 %v4329
  %v4665 = vunpack.c.h.b16 %v4329
  %v4666 = vunpack.c.l.b16 %v4330
  %v4667 = vunpack.c.h.b16 %v4330
  %v4668 = vunpack.c.l.b16 %v4331
  %v4669 = vunpack.c.h.b16 %v4331
  %v4670 = vunpack.c.l.b16 %v4332
  %v4671 = vunpack.c.h.b16 %v4332
  %v4672 = vunpack.c.l.b16 %v4333
  %v4673 = vunpack.c.h.b16 %v4333
  %v4674 = vunpack.c.l.b16 %v4334
  %v4675 = vunpack.c.h.b16 %v4334
  %v4676 = vunpack.c.l.b16 %v4335
  %v4677 = vunpack.c.h.b16 %v4335
  %v4678 = vunpack.c.l.b16 %v4336
  %v4679 = vunpack.c.h.b16 %v4336
  %v4680 = vunpack.c.l.b16 %v4337
  %v4681 = vunpack.c.h.b16 %v4337
  %v4682 = vunpack.c.l.b16 %v4338
  %v4683 = vunpack.c.h.b16 %v4338
  %v4684 = vunpack.c.l.b16 %v4339
  %v4685 = vunpack.c.h.b16 %v4339
  %v4686 = vunpack.c.l.b16 %v4340
  %v4687 = vunpack.c.h.b16 %v4340
  %v4688 = vunpack.c.l.b16 %v4341
  %v4689 = vunpack.c.h.b16 %v4341
  %v4690 = vunpack.c.l.b16 %v4342
  %v4691 = vunpack.c.h.b16 %v4342
  %v4692 = vunpack.c.l.b16 %v4343
  %v4693 = vunpack.c.h.b16 %v4343
  %v4694 = vunpack.c.l.b16 %v4344
  %v4695 = vunpack.c.h.b16 %v4344
  %v4696 = vunpack.c.l.b16 %v4345
  %v4697 = vunpack.c.h.b16 %v4345
  %v4698 = vunpack.c.l.b16 %v4346
  %v4699 = vunpack.c.h.b16 %v4346
  %v4700 = vunpack.c.l.b16 %v4347
  %v4701 = vunpack.c.h.b16 %v4347
  %v4702 = vunpack.c.l.b16 %v4348
  %v4703 = vunpack.c.h.b16 %v4348
  %v4704 = vunpack.c.l.b16 %v4349
  %v4705 = vunpack.c.h.b16 %v4349
  %v4706 = vunpack.c.l.b16 %v4350
  %v4707 = vunpack.c.h.b16 %v4350
  %v4708 = vunpack.c.l.b16 %v4351
  %v4709 = vunpack.c.h.b16 %v4351
  %v4710 = vunpack.c.l.b16 %v4352
  %v4711 = vunpack.c.h.b16 %v4352
  %v4712 = vunpack.c.l.b16 %v4353
  %v4713 = vunpack.c.h.b16 %v4353
  %v4714 = vunpack.c.l.b16 %v4354
  %v4715 = vunpack.c.h.b16 %v4354
  %v4716 = vunpack.c.l.b16 %v4355
  %v4717 = vunpack.c.h.b16 %v4355
  %v4718 = vunpack.c.l.b16 %v4356
  %v4719 = vunpack.c.h.b16 %v4356
  %v4720 = vunpack.c.l.b16 %v4357
  %v4721 = vunpack.c.h.b16 %v4357
  %v4722 = vunpack.c.l.b16 %v4358
  %v4723 = vunpack.c.h.b16 %v4358
  %v4724 = vunpack.c.l.b16 %v4359
  %v4725 = vunpack.c.h.b16 %v4359
  %v4726 = vunpack.c.l.b16 %v4360
  %v4727 = vunpack.c.h.b16 %v4360
  %v4728 = vunpack.c.l.b16 %v4361
  %v4729 = vunpack.c.h.b16 %v4361
  %v4730 = vunpack.c.l.b16 %v4362
  %v4731 = vunpack.c.h.b16 %v4362
  %v4732 = vunpack.c.l.b16 %v4363
  %v4733 = vunpack.c.h.b16 %v4363
  %v4734 = vunpack.c.l.b16 %v4364
  %v4735 = vunpack.c.h.b16 %v4364
  %v4736 = vunpack.c.l.b16 %v4365
  %v4737 = vunpack.c.h.b16 %v4365
  %v4738 = vunpack.c.l.b16 %v4366
  %v4739 = vunpack.c.h.b16 %v4366
  %v4740 = vunpack.c.l.b16 %v4367
  %v4741 = vunpack.c.h.b16 %v4367
  %v4742 = vunpack.c.l.b16 %v4368
  %v4743 = vunpack.c.h.b16 %v4368
  %v4744 = vunpack.c.l.b16 %v4369
  %v4745 = vunpack.c.h.b16 %v4369
  %v4746 = vunpack.c.l.b16 %v4370
  %v4747 = vunpack.c.h.b16 %v4370
  %v4748 = vunpack.c.l.b16 %v4371
  %v4749 = vunpack.c.h.b16 %v4371
  %v4750 = vunpack.c.l.b16 %v4372
  %v4751 = vunpack.c.h.b16 %v4372
  %v4752 = vunpack.c.l.b16 %v4373
  %v4753 = vunpack.c.h.b16 %v4373
  %v4754 = vunpack.c.l.b16 %v4374
  %v4755 = vunpack.c.h.b16 %v4374
  %v4756 = vunpack.c.l.b16 %v4375
  %v4757 = vunpack.c.h.b16 %v4375
  %v4758 = vunpack.c.l.b16 %v4376
  %v4759 = vunpack.c.h.b16 %v4376
  %v4760 = vunpack.c.l.b16 %v4377
  %v4761 = vunpack.c.h.b16 %v4377
  %v4762 = vunpack.c.l.b16 %v4378
  %v4763 = vunpack.c.h.b16 %v4378
  %v4764 = vunpack.c.l.b16 %v4379
  %v4765 = vunpack.c.h.b16 %v4379
  %v4766 = vunpack.c.l.b16 %v4380
  %v4767 = vunpack.c.h.b16 %v4380
  %v4768 = vunpack.c.l.b16 %v4381
  %v4769 = vunpack.c.h.b16 %v4381
  %v4770 = vunpack.c.l.b16 %v4382
  %v4771 = vunpack.c.h.b16 %v4382
  %v4772 = vunpack.c.l.b16 %v4383
  %v4773 = vunpack.c.h.b16 %v4383
  %v4774 = vunpack.c.l.b16 %v4384
  %v4775 = vunpack.c.h.b16 %v4384
  %v4776 = vunpack.c.l.b16 %v4385
  %v4777 = vunpack.c.h.b16 %v4385
  %v4778 = vunpack.c.l.b16 %v4386
  %v4779 = vunpack.c.h.b16 %v4386
  %v4780 = vunpack.c.l.b16 %v4387
  %v4781 = vunpack.c.h.b16 %v4387
  %v4782 = vunpack.c.l.b16 %v4388
  %v4783 = vunpack.c.h.b16 %v4388
  %v4784 = vunpack.c.l.b16 %v4389
  %v4785 = vunpack.c.h.b16 %v4389
  %v4786 = vunpack.c.l.b16 %v4390
  %v4787 = vunpack.c.h.b16 %v4390
  %v4788 = vunpack.c.l.b16 %v4391
  %v4789 = vunpack.c.h.b16 %v4391
  %v4790 = vunpack.c.l.b16 %v4392
  %v4791 = vunpack.c.h.b16 %v4392
  %v4792 = vunpack.c.l.b16 %v4393
  %v4793 = vunpack.c.h.b16 %v4393
  %v4794 = vunpack.c.l.b16 %v4394
  %v4795 = vunpack.c.h.b16 %v4394
  %v4796 = vunpack.c.l.b16 %v4395
  %v4797 = vunpack.c.h.b16 %v4395
  %v4798 = vunpack.c.l.b16 %v4396
  %v4799 = vunpack.c.h.b16 %v4396
  %v4800 = vunpack.c.l.b16 %v4397
  %v4801 = vunpack.c.h.b16 %v4397
  %v4802 = vunpack.c.l.b16 %v4398
  %v4803 = vunpack.c.h.b16 %v4398
  %v4804 = vunpack.c.l.b16 %v4399
  %v4805 = vunpack.c.h.b16 %v4399
  %v4806 = vunpack.c.l.b16 %v4400
  %v4807 = vunpack.c.h.b16 %v4400
  %v4808 = vunpack.c.l.b16 %v4401
  %v4809 = vunpack.c.h.b16 %v4401
  %v4810 = vunpack.c.l.b16 %v4402
  %v4811 = vunpack.c.h.b16 %v4402
  %v4812 = vunpack.c.l.b16 %v4403
  %v4813 = vunpack.c.h.b16 %v4403
  %v4814 = vunpack.c.l.b16 %v4404
  %v4815 = vunpack.c.h.b16 %v4404
  %v4816 = vunpack.c.l.b16 %v4405
  %v4817 = vunpack.c.h.b16 %v4405
  %v4818 = vunpack.c.l.b16 %v4406
  %v4819 = vunpack.c.h.b16 %v4406
  %v4820 = vunpack.c.l.b16 %v4407
  %v4821 = vunpack.c.h.b16 %v4407
  %v4822 = vunpack.c.l.b16 %v4408
  %v4823 = vunpack.c.h.b16 %v4408
  %v4824 = vunpack.c.l.b16 %v4409
  %v4825 = vunpack.c.h.b16 %v4409
  %v4826 = vunpack.c.l.b16 %v4410
  %v4827 = vunpack.c.h.b16 %v4410
  %v4828 = vunpack.c.l.b16 %v4411
  %v4829 = vunpack.c.h.b16 %v4411
  %v4830 = vunpack.c.l.b16 %v4412
  %v4831 = vunpack.c.h.b16 %v4412
  %v4832 = vunpack.c.l.b16 %v4413
  %v4833 = vunpack.c.h.b16 %v4413
  %v4834 = vunpack.c.l.b16 %v4414
  %v4835 = vunpack.c.h.b16 %v4414
  %v4836 = vunpack.c.l.b16 %v4415
  %v4837 = vunpack.c.h.b16 %v4415
  %v4838 = vunpack.c.l.b16 %v4416
  %v4839 = vunpack.c.h.b16 %v4416
  %v4840 = vunpack.c.l.b16 %v4417
  %v4841 = vunpack.c.h.b16 %v4417
  %v4842 = vunpack.c.l.b16 %v4418
  %v4843 = vunpack.c.h.b16 %v4418
  %v4844 = vunpack.c.l.b16 %v4419
  %v4845 = vunpack.c.h.b16 %v4419
  %v4846 = vunpack.c.l.b16 %v4420
  %v4847 = vunpack.c.h.b16 %v4420
  %v4848 = vunpack.c.l.b16 %v4421
  %v4849 = vunpack.c.h.b16 %v4421
  %v4850 = vunpack.c.l.b16 %v4422
  %v4851 = vunpack.c.h.b16 %v4422
  %v4852 = vunpack.c.l.b16 %v4423
  %v4853 = vunpack.c.h.b16 %v4423
  %v4854 = vunpack.c.l.b16 %v4424
  %v4855 = vunpack.c.h.b16 %v4424
  %v4856 = vunpack.c.l.b16 %v4425
  %v4857 = vunpack.c.h.b16 %v4425
  %v4858 = vpack.c.b16 %v4572, %v4570
  %v4859 = vpack.c.b16 %v4573, %v4571
  %v4860 = vpack.c.b16 %v4576, %v4574
  %v4861 = vpack.c.b16 %v4577, %v4575
  %v4862 = vpack.c.b16 %v4580, %v4578
  %v4863 = vpack.c.b16 %v4581, %v4579
  %v4864 = vpack.c.b16 %v4584, %v4582
  %v4865 = vpack.c.b16 %v4585, %v4583
  %v4866 = vpack.c.b16 %v4588, %v4586
  %v4867 = vpack.c.b16 %v4589, %v4587
  %v4868 = vpack.c.b16 %v4592, %v4590
  %v4869 = vpack.c.b16 %v4593, %v4591
  %v4870 = vpack.c.b16 %v4596, %v4594
  %v4871 = vpack.c.b16 %v4597, %v4595
  %v4872 = vpack.c.b16 %v4600, %v4598
  %v4873 = vpack.c.b16 %v4601, %v4599
  %v4874 = vpack.c.b16 %v4604, %v4602
  %v4875 = vpack.c.b16 %v4605, %v4603
  %v4876 = vpack.c.b16 %v4608, %v4606
  %v4877 = vpack.c.b16 %v4609, %v4607
  %v4878 = vpack.c.b16 %v4612, %v4610
  %v4879 = vpack.c.b16 %v4613, %v4611
  %v4880 = vpack.c.b16 %v4616, %v4614
  %v4881 = vpack.c.b16 %v4617, %v4615
  %v4882 = vpack.c.b16 %v4620, %v4618
  %v4883 = vpack.c.b16 %v4621, %v4619
  %v4884 = vpack.c.b16 %v4624, %v4622
  %v4885 = vpack.c.b16 %v4625, %v4623
  %v4886 = vpack.c.b16 %v4628, %v4626
  %v4887 = vpack.c.b16 %v4629, %v4627
  %v4888 = vpack.c.b16 %v4632, %v4630
  %v4889 = vpack.c.b16 %v4633, %v4631
  %v4890 = vpack.c.b16 %v4636, %v4634
  %v4891 = vpack.c.b16 %v4637, %v4635
  %v4892 = vpack.c.b16 %v4640, %v4638
  %v4893 = vpack.c.b16 %v4641, %v4639
  %v4894 = vpack.c.b16 %v4644, %v4642
  %v4895 = vpack.c.b16 %v4645, %v4643
  %v4896 = vpack.c.b16 %v4648, %v4646
  %v4897 = vpack.c.b16 %v4649, %v4647
  %v4898 = vpack.c.b16 %v4652, %v4650
  %v4899 = vpack.c.b16 %v4653, %v4651
  %v4900 = vpack.c.b16 %v4656, %v4654
  %v4901 = vpack.c.b16 %v4657, %v4655
  %v4902 = vpack.c.b16 %v4660, %v4658
  %v4903 = vpack.c.b16 %v4661, %v4659
  %v4904 = vpack.c.b16 %v4664, %v4662
  %v4905 = vpack.c.b16 %v4665, %v4663
  %v4906 = vpack.c.b16 %v4668, %v4666
  %v4907 = vpack.c.b16 %v4669, %v4667
  %v4908 = vpack.c.b16 %v4672, %v4670
  %v4909 = vpack.c.b16 %v4673, %v4671
  %v4910 = vpack.c.b16 %v4676, %v4674
  %v4911 = vpack.c.b16 %v4677, %v4675
  %v4912 = vpack.c.b16 %v4680, %v4678
  %v4913 = vpack.c.b16 %v4681, %v4679
  %v4914 = vpack.c.b16 %v4684, %v4682
  %v4915 = vpack.c.b16 %v4685, %v4683
  %v4916 = vpack.c.b16 %v4688, %v4686
  %v4917 = vpack.c.b16 %v4689, %v4687
  %v4918 = vpack.c.b16 %v4692, %v4690
  %v4919 = vpack.c.b16 %v4693, %v4691
  %v4920 = vpack.c.b16 %v4696, %v4694
  %v4921 = vpack.c.b16 %v4697, %v4695
  %v4922 = vpack.c.b16 %v4700, %v4698
  %v4923 = vpack.c.b16 %v4701, %v4699
  %v4924 = vpack.c.b16 %v4704, %v4702
  %v4925 = vpack.c.b16 %v4705, %v4703
  %v4926 = vpack.c.b16 %v4708, %v4706
  %v4927 = vpack.c.b16 %v4709, %v4707
  %v4928 = vpack.c.b16 %v4712, %v4710
  %v4929 = vpack.c.b16 %v4713, %v4711
  %v4930 = vpack.c.b16 %v4716, %v4714
  %v4931 = vpack.c.b16 %v4717, %v4715
  %v4932 = vpack.c.b16 %v4720, %v4718
  %v4933 = vpack.c.b16 %v4721, %v4719
  %v4934 = vpack.c.b16 %v4724, %v4722
  %v4935 = vpack.c.b16 %v4725, %v4723
  %v4936 = vpack.c.b16 %v4728, %v4726
  %v4937 = vpack.c.b16 %v4729, %v4727
  %v4938 = vpack.c.b16 %v4732, %v4730
  %v4939 = vpack.c.b16 %v4733, %v4731
  %v4940 = vpack.c.b16 %v4736, %v4734
  %v4941 = vpack.c.b16 %v4737, %v4735
  %v4942 = vpack.c.b16 %v4740, %v4738
  %v4943 = vpack.c.b16 %v4741, %v4739
  %v4944 = vpack.c.b16 %v4744, %v4742
  %v4945 = vpack.c.b16 %v4745, %v4743
  %v4946 = vpack.c.b16 %v4748, %v4746
  %v4947 = vpack.c.b16 %v4749, %v4747
  %v4948 = vpack.c.b16 %v4752, %v4750
  %v4949 = vpack.c.b16 %v4753, %v4751
  %v4950 = vpack.c.b16 %v4756, %v4754
  %v4951 = vpack.c.b16 %v4757, %v4755
  %v4952 = vpack.c.b16 %v4760, %v4758
  %v4953 = vpack.c.b16 %v4761, %v4759
  %v4954 = vpack.c.b16 %v4764, %v4762
  %v4955 = vpack.c.b16 %v4765, %v4763
  %v4956 = vpack.c.b16 %v4768, %v4766
  %v4957 = vpack.c.b16 %v4769, %v4767
  %v4958 = vpack.c.b16 %v4772, %v4770
  %v4959 = vpack.c.b16 %v4773, %v4771
  %v4960 = vpack.c.b16 %v4776, %v4774
  %v4961 = vpack.c.b16 %v4777, %v4775
  %v4962 = vpack.c.b16 %v4780, %v4778
  %v4963 = vpack.c.b16 %v4781, %v4779
  %v4964 = vpack.c.b16 %v4784, %v4782
  %v4965 = vpack.c.b16 %v4785, %v4783
  %v4966 = vpack.c.b16 %v4788, %v4786
  %v4967 = vpack.c.b16 %v4789, %v4787
  %v4968 = vpack.c.b16 %v4792, %v4790
  %v4969 = vpack.c.b16 %v4793, %v4791
  %v4970 = vpack.c.b16 %v4796, %v4794
  %v4971 = vpack.c.b16 %v4797, %v4795
  %v4972 = vpack.c.b16 %v4800, %v4798
  %v4973 = vpack.c.b16 %v4801, %v4799
  %v4974 = vpack.c.b16 %v4804, %v4802
  %v4975 = vpack.c.b16 %v4805, %v4803
  %v4976 = vpack.c.b16 %v4808, %v4806
  %v4977 = vpack.c.b16 %v4809, %v4807
  %v4978 = vpack.c.b16 %v4812, %v4810
  %v4979 = vpack.c.b16 %v4813, %v4811
  %v4980 = vpack.c.b16 %v4816, %v4814
  %v4981 = vpack.c.b16 %v4817, %v4815
  %v4982 = vpack.c.b16 %v4820, %v4818
  %v4983 = vpack.c.b16 %v4821, %v4819
  %v4984 = vpack.c.b16 %v4824, %v4822
  %v4985 = vpack.c.b16 %v4825, %v4823
  %v4986 = vpack.c.b16 %v4828, %v4826
  %v4987 = vpack.c.b16 %v4829, %v4827
  %v4988 = vpack.c.b16 %v4832, %v4830
  %v4989 = vpack.c.b16 %v4833, %v4831
  %v4990 = vpack.c.b16 %v4836, %v4834
  %v4991 = vpack.c.b16 %v4837, %v4835
  %v4992 = vpack.c.b16 %v4840, %v4838
  %v4993 = vpack.c.b16 %v4841, %v4839
  %v4994 = vpack.c.b16 %v4844, %v4842
  %v4995 = vpack.c.b16 %v4845, %v4843
  %v4996 = vpack.c.b16 %v4848, %v4846
  %v4997 = vpack.c.b16 %v4849, %v4847
  %v4998 = vpack.c.b16 %v4852, %v4850
  %v4999 = vpack.c.b16 %v4853, %v4851
  %v5000 = vpack.c.b16 %v4856, %v4854
  %v5001 = vpack.c.b16 %v4857, %v4855
  %5146 = vmatpush.bf16.msra.mxu0 %v4872
  %5147 = vmatpush.bf16.msra.mxu0 %v4870
  %5148 = vmatpush.bf16.msra.mxu0 %v4868
  %5149 = vmatpush.bf16.msra.mxu0 %v4866
  %5150 = vmatpush.bf16.msra.mxu0 %v4864
  %5151 = vmatpush.bf16.msra.mxu0 %v4862
  %5152 = vmatpush.bf16.msra.mxu0 %v4860
  %5153 = vmatpush.bf16.msra.mxu0 %v4858
  %5154 = vmatmul.bf16.gmra.mxu0 %v4272
  %v5155 = vpop.f32.mrf.mxu0
  %v5156 = vadd.f32 0.0, %v5155
  %v5157 = vpop.f32.mrf.mxu0
  %5158 = vdwg.mxu0
  %5159 = vmatpush.bf16.msra.mxu0 %v4888
  %5160 = vmatpush.bf16.msra.mxu0 %v4886
  %5161 = vmatpush.bf16.msra.mxu0 %v4884
  %5162 = vmatpush.bf16.msra.mxu0 %v4882
  %5163 = vmatpush.bf16.msra.mxu0 %v4880
  %5164 = vmatpush.bf16.msra.mxu0 %v4878
  %5165 = vmatpush.bf16.msra.mxu0 %v4876
  %5166 = vmatpush.bf16.msra.mxu0 %v4874
  %5167 = vmatmul.bf16.gmra.mxu0 %v4273
  %v5168 = vpop.f32.mrf.mxu0
  %v5169 = vadd.f32 %v5156, %v5168
  %v5170 = vpop.f32.mrf.mxu0
  %5171 = vdwg.mxu0
  %5172 = vmatpush.bf16.msra.mxu0 %v4904
  %5173 = vmatpush.bf16.msra.mxu0 %v4902
  %5174 = vmatpush.bf16.msra.mxu0 %v4900
  %5175 = vmatpush.bf16.msra.mxu0 %v4898
  %5176 = vmatpush.bf16.msra.mxu0 %v4896
  %5177 = vmatpush.bf16.msra.mxu0 %v4894
  %5178 = vmatpush.bf16.msra.mxu0 %v4892
  %5179 = vmatpush.bf16.msra.mxu0 %v4890
  %5180 = vmatmul.bf16.gmra.mxu0 %v4274
  %v5181 = vpop.f32.mrf.mxu0
  %v5182 = vadd.f32 %v5169, %v5181
  %v5183 = vpop.f32.mrf.mxu0
  %5184 = vdwg.mxu0
  %5185 = vmatpush.bf16.msra.mxu0 %v4920
  %5186 = vmatpush.bf16.msra.mxu0 %v4918
  %5187 = vmatpush.bf16.msra.mxu0 %v4916
  %5188 = vmatpush.bf16.msra.mxu0 %v4914
  %5189 = vmatpush.bf16.msra.mxu0 %v4912
  %5190 = vmatpush.bf16.msra.mxu0 %v4910
  %5191 = vmatpush.bf16.msra.mxu0 %v4908
  %5192 = vmatpush.bf16.msra.mxu0 %v4906
  %5193 = vmatmul.bf16.gmra.mxu0 %v4275
  %v5194 = vpop.f32.mrf.mxu0
  %v5195 = vadd.f32 %v5182, %v5194
  %v5196 = vpop.f32.mrf.mxu0
  %5197 = vdwg.mxu0
  %5198 = vmatpush.bf16.msra.mxu0 %v4936
  %5199 = vmatpush.bf16.msra.mxu0 %v4934
  %5200 = vmatpush.bf16.msra.mxu0 %v4932
  %5201 = vmatpush.bf16.msra.mxu0 %v4930
  %5202 = vmatpush.bf16.msra.mxu0 %v4928
  %5203 = vmatpush.bf16.msra.mxu0 %v4926
  %5204 = vmatpush.bf16.msra.mxu0 %v4924
  %5205 = vmatpush.bf16.msra.mxu0 %v4922
  %5206 = vmatmul.bf16.gmra.mxu0 %v4276
  %v5207 = vpop.f32.mrf.mxu0
  %v5208 = vadd.f32 %v5195, %v5207
  %v5209 = vpop.f32.mrf.mxu0
  %5210 = vdwg.mxu0
  %5211 = vmatpush.bf16.msra.mxu0 %v4952
  %5212 = vmatpush.bf16.msra.mxu0 %v4950
  %5213 = vmatpush.bf16.msra.mxu0 %v4948
  %5214 = vmatpush.bf16.msra.mxu0 %v4946
  %5215 = vmatpush.bf16.msra.mxu0 %v4944
  %5216 = vmatpush.bf16.msra.mxu0 %v4942
  %5217 = vmatpush.bf16.msra.mxu0 %v4940
  %5218 = vmatpush.bf16.msra.mxu0 %v4938
  %5219 = vmatmul.bf16.gmra.mxu0 %v4277
  %v5220 = vpop.f32.mrf.mxu0
  %v5221 = vadd.f32 %v5208, %v5220
  %v5222 = vpop.f32.mrf.mxu0
  %5223 = vdwg.mxu0
  %5224 = vmatpush.bf16.msra.mxu0 %v4968
  %5225 = vmatpush.bf16.msra.mxu0 %v4966
  %5226 = vmatpush.bf16.msra.mxu0 %v4964
  %5227 = vmatpush.bf16.msra.mxu0 %v4962
  %5228 = vmatpush.bf16.msra.mxu0 %v4960
  %5229 = vmatpush.bf16.msra.mxu0 %v4958
  %5230 = vmatpush.bf16.msra.mxu0 %v4956
  %5231 = vmatpush.bf16.msra.mxu0 %v4954
  %5232 = vmatmul.bf16.gmra.mxu0 %v4278
  %v5233 = vpop.f32.mrf.mxu0
  %v5234 = vadd.f32 %v5221, %v5233
  %v5235 = vpop.f32.mrf.mxu0
  %5236 = vdwg.mxu0
  %5237 = vmatpush.bf16.msra.mxu0 %v4984
  %5238 = vmatpush.bf16.msra.mxu0 %v4982
  %5239 = vmatpush.bf16.msra.mxu0 %v4980
  %5240 = vmatpush.bf16.msra.mxu0 %v4978
  %5241 = vmatpush.bf16.msra.mxu0 %v4976
  %5242 = vmatpush.bf16.msra.mxu0 %v4974
  %5243 = vmatpush.bf16.msra.mxu0 %v4972
  %5244 = vmatpush.bf16.msra.mxu0 %v4970
  %5245 = vmatmul.bf16.gmra.mxu0 %v4279
  %v5246 = vpop.f32.mrf.mxu0
  %v5247 = vadd.f32 %v5234, %v5246
  %v5248 = vpop.f32.mrf.mxu0
  %5249 = vdwg.mxu0
  %5250 = vmatpush.bf16.msra.mxu0 %v5000
  %5251 = vmatpush.bf16.msra.mxu0 %v4998
  %5252 = vmatpush.bf16.msra.mxu0 %v4996
  %5253 = vmatpush.bf16.msra.mxu0 %v4994
  %5254 = vmatpush.bf16.msra.mxu0 %v4992
  %5255 = vmatpush.bf16.msra.mxu0 %v4990
  %5256 = vmatpush.bf16.msra.mxu0 %v4988
  %5257 = vmatpush.bf16.msra.mxu0 %v4986
  %5258 = vmatmul.bf16.gmra.mxu0 %v4280
  %v5259 = vpop.f32.mrf.mxu0
  %v5260 = vadd.f32 %v5247, %v5259
  %v5261 = vpop.f32.mrf.mxu0
  %5262 = vdwg.mxu0
  %5263 = vmatpush.bf16.msra.mxu0 %v4873
  %5264 = vmatpush.bf16.msra.mxu0 %v4871
  %5265 = vmatpush.bf16.msra.mxu0 %v4869
  %5266 = vmatpush.bf16.msra.mxu0 %v4867
  %5267 = vmatpush.bf16.msra.mxu0 %v4865
  %5268 = vmatpush.bf16.msra.mxu0 %v4863
  %5269 = vmatpush.bf16.msra.mxu0 %v4861
  %5270 = vmatpush.bf16.msra.mxu0 %v4859
  %5271 = vmatmul.bf16.gmra.mxu0 %v4272
  %v5272 = vpop.f32.mrf.mxu0
  %v5273 = vadd.f32 0.0, %v5272
  %v5274 = vpop.f32.mrf.mxu0
  %5275 = vdwg.mxu0
  %5276 = vmatpush.bf16.msra.mxu0 %v4889
  %5277 = vmatpush.bf16.msra.mxu0 %v4887
  %5278 = vmatpush.bf16.msra.mxu0 %v4885
  %5279 = vmatpush.bf16.msra.mxu0 %v4883
  %5280 = vmatpush.bf16.msra.mxu0 %v4881
  %5281 = vmatpush.bf16.msra.mxu0 %v4879
  %5282 = vmatpush.bf16.msra.mxu0 %v4877
  %5283 = vmatpush.bf16.msra.mxu0 %v4875
  %5284 = vmatmul.bf16.gmra.mxu0 %v4273
  %v5285 = vpop.f32.mrf.mxu0
  %v5286 = vadd.f32 %v5273, %v5285
  %v5287 = vpop.f32.mrf.mxu0
  %5288 = vdwg.mxu0
  %5289 = vmatpush.bf16.msra.mxu0 %v4905
  %5290 = vmatpush.bf16.msra.mxu0 %v4903
  %5291 = vmatpush.bf16.msra.mxu0 %v4901
  %5292 = vmatpush.bf16.msra.mxu0 %v4899
  %5293 = vmatpush.bf16.msra.mxu0 %v4897
  %5294 = vmatpush.bf16.msra.mxu0 %v4895
  %5295 = vmatpush.bf16.msra.mxu0 %v4893
  %5296 = vmatpush.bf16.msra.mxu0 %v4891
  %5297 = vmatmul.bf16.gmra.mxu0 %v4274
  %v5298 = vpop.f32.mrf.mxu0
  %v5299 = vadd.f32 %v5286, %v5298
  %v5300 = vpop.f32.mrf.mxu0
  %5301 = vdwg.mxu0
  %5302 = vmatpush.bf16.msra.mxu0 %v4921
  %5303 = vmatpush.bf16.msra.mxu0 %v4919
  %5304 = vmatpush.bf16.msra.mxu0 %v4917
  %5305 = vmatpush.bf16.msra.mxu0 %v4915
  %5306 = vmatpush.bf16.msra.mxu0 %v4913
  %5307 = vmatpush.bf16.msra.mxu0 %v4911
  %5308 = vmatpush.bf16.msra.mxu0 %v4909
  %5309 = vmatpush.bf16.msra.mxu0 %v4907
  %5310 = vmatmul.bf16.gmra.mxu0 %v4275
  %v5311 = vpop.f32.mrf.mxu0
  %v5312 = vadd.f32 %v5299, %v5311
  %v5313 = vpop.f32.mrf.mxu0
  %5314 = vdwg.mxu0
  %5315 = vmatpush.bf16.msra.mxu0 %v4937
  %5316 = vmatpush.bf16.msra.mxu0 %v4935
  %5317 = vmatpush.bf16.msra.mxu0 %v4933
  %5318 = vmatpush.bf16.msra.mxu0 %v4931
  %5319 = vmatpush.bf16.msra.mxu0 %v4929
  %5320 = vmatpush.bf16.msra.mxu0 %v4927
  %5321 = vmatpush.bf16.msra.mxu0 %v4925
  %5322 = vmatpush.bf16.msra.mxu0 %v4923
  %5323 = vmatmul.bf16.gmra.mxu0 %v4276
  %v5324 = vpop.f32.mrf.mxu0
  %v5325 = vadd.f32 %v5312, %v5324
  %v5326 = vpop.f32.mrf.mxu0
  %5327 = vdwg.mxu0
  %5328 = vmatpush.bf16.msra.mxu0 %v4953
  %5329 = vmatpush.bf16.msra.mxu0 %v4951
  %5330 = vmatpush.bf16.msra.mxu0 %v4949
  %5331 = vmatpush.bf16.msra.mxu0 %v4947
  %5332 = vmatpush.bf16.msra.mxu0 %v4945
  %5333 = vmatpush.bf16.msra.mxu0 %v4943
  %5334 = vmatpush.bf16.msra.mxu0 %v4941
  %5335 = vmatpush.bf16.msra.mxu0 %v4939
  %5336 = vmatmul.bf16.gmra.mxu0 %v4277
  %v5337 = vpop.f32.mrf.mxu0
  %v5338 = vadd.f32 %v5325, %v5337
  %v5339 = vpop.f32.mrf.mxu0
  %5340 = vdwg.mxu0
  %5341 = vmatpush.bf16.msra.mxu0 %v4969
  %5342 = vmatpush.bf16.msra.mxu0 %v4967
  %5343 = vmatpush.bf16.msra.mxu0 %v4965
  %5344 = vmatpush.bf16.msra.mxu0 %v4963
  %5345 = vmatpush.bf16.msra.mxu0 %v4961
  %5346 = vmatpush.bf16.msra.mxu0 %v4959
  %5347 = vmatpush.bf16.msra.mxu0 %v4957
  %5348 = vmatpush.bf16.msra.mxu0 %v4955
  %5349 = vmatmul.bf16.gmra.mxu0 %v4278
  %v5350 = vpop.f32.mrf.mxu0
  %v5351 = vadd.f32 %v5338, %v5350
  %v5352 = vpop.f32.mrf.mxu0
  %5353 = vdwg.mxu0
  %5354 = vmatpush.bf16.msra.mxu0 %v4985
  %5355 = vmatpush.bf16.msra.mxu0 %v4983
  %5356 = vmatpush.bf16.msra.mxu0 %v4981
  %5357 = vmatpush.bf16.msra.mxu0 %v4979
  %5358 = vmatpush.bf16.msra.mxu0 %v4977
  %5359 = vmatpush.bf16.msra.mxu0 %v4975
  %5360 = vmatpush.bf16.msra.mxu0 %v4973
  %5361 = vmatpush.bf16.msra.mxu0 %v4971
  %5362 = vmatmul.bf16.gmra.mxu0 %v4279
  %v5363 = vpop.f32.mrf.mxu0
  %v5364 = vadd.f32 %v5351, %v5363
  %v5365 = vpop.f32.mrf.mxu0
  %5366 = vdwg.mxu0
  %5367 = vmatpush.bf16.msra.mxu0 %v5001
  %5368 = vmatpush.bf16.msra.mxu0 %v4999
  %5369 = vmatpush.bf16.msra.mxu0 %v4997
  %5370 = vmatpush.bf16.msra.mxu0 %v4995
  %5371 = vmatpush.bf16.msra.mxu0 %v4993
  %5372 = vmatpush.bf16.msra.mxu0 %v4991
  %5373 = vmatpush.bf16.msra.mxu0 %v4989
  %5374 = vmatpush.bf16.msra.mxu0 %v4987
  %5375 = vmatmul.bf16.gmra.mxu0 %v4280
  %v5376 = vpop.f32.mrf.mxu0
  %v5377 = vadd.f32 %v5364, %v5376
  %v5378 = vpop.f32.mrf.mxu0
  %5379 = vdwg.mxu0
  %v5524 = vunpack.c.l.b16 %v4101
  %v5525 = vunpack.c.h.b16 %v4101
  %v5526 = vunpack.c.l.b16 %v4102
  %v5527 = vunpack.c.h.b16 %v4102
  %v5528 = vunpack.c.l.b16 %v4103
  %v5529 = vunpack.c.h.b16 %v4103
  %v5530 = vunpack.c.l.b16 %v4104
  %v5531 = vunpack.c.h.b16 %v4104
  %v5532 = vunpack.c.l.b16 %v4105
  %v5533 = vunpack.c.h.b16 %v4105
  %v5534 = vunpack.c.l.b16 %v4106
  %v5535 = vunpack.c.h.b16 %v4106
  %v5536 = vunpack.c.l.b16 %v4107
  %v5537 = vunpack.c.h.b16 %v4107
  %v5538 = vunpack.c.l.b16 %v4108
  %v5539 = vunpack.c.h.b16 %v4108
  %v5540 = vunpack.c.l.b16 %v4109
  %v5541 = vunpack.c.h.b16 %v4109
  %v5542 = vunpack.c.l.b16 %v4110
  %v5543 = vunpack.c.h.b16 %v4110
  %v5544 = vunpack.c.l.b16 %v4111
  %v5545 = vunpack.c.h.b16 %v4111
  %v5546 = vunpack.c.l.b16 %v4112
  %v5547 = vunpack.c.h.b16 %v4112
  %v5548 = vunpack.c.l.b16 %v4113
  %v5549 = vunpack.c.h.b16 %v4113
  %v5550 = vunpack.c.l.b16 %v4114
  %v5551 = vunpack.c.h.b16 %v4114
  %v5552 = vunpack.c.l.b16 %v4115
  %v5553 = vunpack.c.h.b16 %v4115
  %v5554 = vunpack.c.l.b16 %v4116
  %v5555 = vunpack.c.h.b16 %v4116
  %v5556 = vunpack.c.l.b16 %v4117
  %v5557 = vunpack.c.h.b16 %v4117
  %v5558 = vunpack.c.l.b16 %v4118
  %v5559 = vunpack.c.h.b16 %v4118
  %v5560 = vunpack.c.l.b16 %v4119
  %v5561 = vunpack.c.h.b16 %v4119
  %v5562 = vunpack.c.l.b16 %v4120
  %v5563 = vunpack.c.h.b16 %v4120
  %v5564 = vunpack.c.l.b16 %v4121
  %v5565 = vunpack.c.h.b16 %v4121
  %v5566 = vunpack.c.l.b16 %v4122
  %v5567 = vunpack.c.h.b16 %v4122
  %v5568 = vunpack.c.l.b16 %v4123
  %v5569 = vunpack.c.h.b16 %v4123
  %v5570 = vunpack.c.l.b16 %v4124
  %v5571 = vunpack.c.h.b16 %v4124
  %v5572 = vunpack.c.l.b16 %v4125
  %v5573 = vunpack.c.h.b16 %v4125
  %v5574 = vunpack.c.l.b16 %v4126
  %v5575 = vunpack.c.h.b16 %v4126
  %v5576 = vunpack.c.l.b16 %v4127
  %v5577 = vunpack.c.h.b16 %v4127
  %v5578 = vunpack.c.l.b16 %v4128
  %v5579 = vunpack.c.h.b16 %v4128
  %v5580 = vunpack.c.l.b16 %v4129
  %v5581 = vunpack.c.h.b16 %v4129
  %v5582 = vunpack.c.l.b16 %v4130
  %v5583 = vunpack.c.h.b16 %v4130
  %v5584 = vunpack.c.l.b16 %v4131
  %v5585 = vunpack.c.h.b16 %v4131
  %v5586 = vunpack.c.l.b16 %v4132
  %v5587 = vunpack.c.h.b16 %v4132
  %v5588 = vunpack.c.l.b16 %v4133
  %v5589 = vunpack.c.h.b16 %v4133
  %v5590 = vunpack.c.l.b16 %v4134
  %v5591 = vunpack.c.h.b16 %v4134
  %v5592 = vunpack.c.l.b16 %v4135
  %v5593 = vunpack.c.h.b16 %v4135
  %v5594 = vunpack.c.l.b16 %v4136
  %v5595 = vunpack.c.h.b16 %v4136
  %v5596 = vunpack.c.l.b16 %v4137
  %v5597 = vunpack.c.h.b16 %v4137
  %v5598 = vunpack.c.l.b16 %v4138
  %v5599 = vunpack.c.h.b16 %v4138
  %v5600 = vunpack.c.l.b16 %v4139
  %v5601 = vunpack.c.h.b16 %v4139
  %v5602 = vunpack.c.l.b16 %v4140
  %v5603 = vunpack.c.h.b16 %v4140
  %v5604 = vunpack.c.l.b16 %v4141
  %v5605 = vunpack.c.h.b16 %v4141
  %v5606 = vunpack.c.l.b16 %v4142
  %v5607 = vunpack.c.h.b16 %v4142
  %v5608 = vunpack.c.l.b16 %v4143
  %v5609 = vunpack.c.h.b16 %v4143
  %v5610 = vunpack.c.l.b16 %v4144
  %v5611 = vunpack.c.h.b16 %v4144
  %v5612 = vunpack.c.l.b16 %v4145
  %v5613 = vunpack.c.h.b16 %v4145
  %v5614 = vunpack.c.l.b16 %v4146
  %v5615 = vunpack.c.h.b16 %v4146
  %v5616 = vunpack.c.l.b16 %v4147
  %v5617 = vunpack.c.h.b16 %v4147
  %v5618 = vunpack.c.l.b16 %v4148
  %v5619 = vunpack.c.h.b16 %v4148
  %v5620 = vunpack.c.l.b16 %v4149
  %v5621 = vunpack.c.h.b16 %v4149
  %v5622 = vunpack.c.l.b16 %v4150
  %v5623 = vunpack.c.h.b16 %v4150
  %v5624 = vunpack.c.l.b16 %v4151
  %v5625 = vunpack.c.h.b16 %v4151
  %v5626 = vunpack.c.l.b16 %v4152
  %v5627 = vunpack.c.h.b16 %v4152
  %v5628 = vunpack.c.l.b16 %v4153
  %v5629 = vunpack.c.h.b16 %v4153
  %v5630 = vunpack.c.l.b16 %v4154
  %v5631 = vunpack.c.h.b16 %v4154
  %v5632 = vunpack.c.l.b16 %v4155
  %v5633 = vunpack.c.h.b16 %v4155
  %v5634 = vunpack.c.l.b16 %v4156
  %v5635 = vunpack.c.h.b16 %v4156
  %v5636 = vunpack.c.l.b16 %v4157
  %v5637 = vunpack.c.h.b16 %v4157
  %v5638 = vunpack.c.l.b16 %v4158
  %v5639 = vunpack.c.h.b16 %v4158
  %v5640 = vunpack.c.l.b16 %v4159
  %v5641 = vunpack.c.h.b16 %v4159
  %v5642 = vunpack.c.l.b16 %v4160
  %v5643 = vunpack.c.h.b16 %v4160
  %v5644 = vunpack.c.l.b16 %v4161
  %v5645 = vunpack.c.h.b16 %v4161
  %v5646 = vunpack.c.l.b16 %v4162
  %v5647 = vunpack.c.h.b16 %v4162
  %v5648 = vunpack.c.l.b16 %v4163
  %v5649 = vunpack.c.h.b16 %v4163
  %v5650 = vunpack.c.l.b16 %v4164
  %v5651 = vunpack.c.h.b16 %v4164
  %v5652 = vunpack.c.l.b16 %v4165
  %v5653 = vunpack.c.h.b16 %v4165
  %v5654 = vunpack.c.l.b16 %v4166
  %v5655 = vunpack.c.h.b16 %v4166
  %v5656 = vunpack.c.l.b16 %v4167
  %v5657 = vunpack.c.h.b16 %v4167
  %v5658 = vunpack.c.l.b16 %v4168
  %v5659 = vunpack.c.h.b16 %v4168
  %v5660 = vunpack.c.l.b16 %v4169
  %v5661 = vunpack.c.h.b16 %v4169
  %v5662 = vunpack.c.l.b16 %v4170
  %v5663 = vunpack.c.h.b16 %v4170
  %v5664 = vunpack.c.l.b16 %v4171
  %v5665 = vunpack.c.h.b16 %v4171
  %v5666 = vunpack.c.l.b16 %v4172
  %v5667 = vunpack.c.h.b16 %v4172
  %v5668 = vunpack.c.l.b16 %v4173
  %v5669 = vunpack.c.h.b16 %v4173
  %v5670 = vunpack.c.l.b16 %v4174
  %v5671 = vunpack.c.h.b16 %v4174
  %v5672 = vunpack.c.l.b16 %v4175
  %v5673 = vunpack.c.h.b16 %v4175
  %v5674 = vunpack.c.l.b16 %v4176
  %v5675 = vunpack.c.h.b16 %v4176
  %v5676 = vunpack.c.l.b16 %v4177
  %v5677 = vunpack.c.h.b16 %v4177
  %v5678 = vunpack.c.l.b16 %v4178
  %v5679 = vunpack.c.h.b16 %v4178
  %v5680 = vunpack.c.l.b16 %v4179
  %v5681 = vunpack.c.h.b16 %v4179
  %v5682 = vunpack.c.l.b16 %v4180
  %v5683 = vunpack.c.h.b16 %v4180
  %v5684 = vunpack.c.l.b16 %v4181
  %v5685 = vunpack.c.h.b16 %v4181
  %v5686 = vunpack.c.l.b16 %v4182
  %v5687 = vunpack.c.h.b16 %v4182
  %v5688 = vunpack.c.l.b16 %v4183
  %v5689 = vunpack.c.h.b16 %v4183
  %v5690 = vunpack.c.l.b16 %v4184
  %v5691 = vunpack.c.h.b16 %v4184
  %v5692 = vunpack.c.l.b16 %v4185
  %v5693 = vunpack.c.h.b16 %v4185
  %v5694 = vunpack.c.l.b16 %v4186
  %v5695 = vunpack.c.h.b16 %v4186
  %v5696 = vunpack.c.l.b16 %v4187
  %v5697 = vunpack.c.h.b16 %v4187
  %v5698 = vunpack.c.l.b16 %v4188
  %v5699 = vunpack.c.h.b16 %v4188
  %v5700 = vunpack.c.l.b16 %v4189
  %v5701 = vunpack.c.h.b16 %v4189
  %v5702 = vunpack.c.l.b16 %v4190
  %v5703 = vunpack.c.h.b16 %v4190
  %v5704 = vunpack.c.l.b16 %v4191
  %v5705 = vunpack.c.h.b16 %v4191
  %v5706 = vunpack.c.l.b16 %v4192
  %v5707 = vunpack.c.h.b16 %v4192
  %v5708 = vunpack.c.l.b16 %v4193
  %v5709 = vunpack.c.h.b16 %v4193
  %v5710 = vunpack.c.l.b16 %v4194
  %v5711 = vunpack.c.h.b16 %v4194
  %v5712 = vunpack.c.l.b16 %v4195
  %v5713 = vunpack.c.h.b16 %v4195
  %v5714 = vunpack.c.l.b16 %v4196
  %v5715 = vunpack.c.h.b16 %v4196
  %v5716 = vunpack.c.l.b16 %v4197
  %v5717 = vunpack.c.h.b16 %v4197
  %v5718 = vunpack.c.l.b16 %v4198
  %v5719 = vunpack.c.h.b16 %v4198
  %v5720 = vunpack.c.l.b16 %v4199
  %v5721 = vunpack.c.h.b16 %v4199
  %v5722 = vunpack.c.l.b16 %v4200
  %v5723 = vunpack.c.h.b16 %v4200
  %v5724 = vunpack.c.l.b16 %v4201
  %v5725 = vunpack.c.h.b16 %v4201
  %v5726 = vunpack.c.l.b16 %v4202
  %v5727 = vunpack.c.h.b16 %v4202
  %v5728 = vunpack.c.l.b16 %v4203
  %v5729 = vunpack.c.h.b16 %v4203
  %v5730 = vunpack.c.l.b16 %v4204
  %v5731 = vunpack.c.h.b16 %v4204
  %v5732 = vunpack.c.l.b16 %v4205
  %v5733 = vunpack.c.h.b16 %v4205
  %v5734 = vunpack.c.l.b16 %v4206
  %v5735 = vunpack.c.h.b16 %v4206
  %v5736 = vunpack.c.l.b16 %v4207
  %v5737 = vunpack.c.h.b16 %v4207
  %v5738 = vunpack.c.l.b16 %v4208
  %v5739 = vunpack.c.h.b16 %v4208
  %v5740 = vunpack.c.l.b16 %v4209
  %v5741 = vunpack.c.h.b16 %v4209
  %v5742 = vunpack.c.l.b16 %v4210
  %v5743 = vunpack.c.h.b16 %v4210
  %v5744 = vunpack.c.l.b16 %v4211
  %v5745 = vunpack.c.h.b16 %v4211
  %v5746 = vunpack.c.l.b16 %v4212
  %v5747 = vunpack.c.h.b16 %v4212
  %v5748 = vunpack.c.l.b16 %v4213
  %v5749 = vunpack.c.h.b16 %v4213
  %v5750 = vunpack.c.l.b16 %v4214
  %v5751 = vunpack.c.h.b16 %v4214
  %v5752 = vunpack.c.l.b16 %v4215
  %v5753 = vunpack.c.h.b16 %v4215
  %v5754 = vunpack.c.l.b16 %v4216
  %v5755 = vunpack.c.h.b16 %v4216
  %v5756 = vunpack.c.l.b16 %v4217
  %v5757 = vunpack.c.h.b16 %v4217
  %v5758 = vunpack.c.l.b16 %v4218
  %v5759 = vunpack.c.h.b16 %v4218
  %v5760 = vunpack.c.l.b16 %v4219
  %v5761 = vunpack.c.h.b16 %v4219
  %v5762 = vunpack.c.l.b16 %v4220
  %v5763 = vunpack.c.h.b16 %v4220
  %v5764 = vunpack.c.l.b16 %v4221
  %v5765 = vunpack.c.h.b16 %v4221
  %v5766 = vunpack.c.l.b16 %v4222
  %v5767 = vunpack.c.h.b16 %v4222
  %v5768 = vunpack.c.l.b16 %v4223
  %v5769 = vunpack.c.h.b16 %v4223
  %v5770 = vunpack.c.l.b16 %v4224
  %v5771 = vunpack.c.h.b16 %v4224
  %v5772 = vunpack.c.l.b16 %v4225
  %v5773 = vunpack.c.h.b16 %v4225
  %v5774 = vunpack.c.l.b16 %v4226
  %v5775 = vunpack.c.h.b16 %v4226
  %v5776 = vunpack.c.l.b16 %v4227
  %v5777 = vunpack.c.h.b16 %v4227
  %v5778 = vunpack.c.l.b16 %v4228
  %v5779 = vunpack.c.h.b16 %v4228
  %v5780 = vunpack.c.l.b16 %v4229
  %v5781 = vunpack.c.h.b16 %v4229
  %v5782 = vunpack.c.l.b16 %v4230
  %v5783 = vunpack.c.h.b16 %v4230
  %v5784 = vunpack.c.l.b16 %v4231
  %v5785 = vunpack.c.h.b16 %v4231
  %v5786 = vunpack.c.l.b16 %v4232
  %v5787 = vunpack.c.h.b16 %v4232
  %v5788 = vunpack.c.l.b16 %v4233
  %v5789 = vunpack.c.h.b16 %v4233
  %v5790 = vunpack.c.l.b16 %v4234
  %v5791 = vunpack.c.h.b16 %v4234
  %v5792 = vunpack.c.l.b16 %v4235
  %v5793 = vunpack.c.h.b16 %v4235
  %v5794 = vunpack.c.l.b16 %v4236
  %v5795 = vunpack.c.h.b16 %v4236
  %v5796 = vunpack.c.l.b16 %v4237
  %v5797 = vunpack.c.h.b16 %v4237
  %v5798 = vunpack.c.l.b16 %v4238
  %v5799 = vunpack.c.h.b16 %v4238
  %v5800 = vunpack.c.l.b16 %v4239
  %v5801 = vunpack.c.h.b16 %v4239
  %v5802 = vunpack.c.l.b16 %v4240
  %v5803 = vunpack.c.h.b16 %v4240
  %v5804 = vunpack.c.l.b16 %v4241
  %v5805 = vunpack.c.h.b16 %v4241
  %v5806 = vunpack.c.l.b16 %v4242
  %v5807 = vunpack.c.h.b16 %v4242
  %v5808 = vunpack.c.l.b16 %v4243
  %v5809 = vunpack.c.h.b16 %v4243
  %v5810 = vunpack.c.l.b16 %v4244
  %v5811 = vunpack.c.h.b16 %v4244
  %v5812 = vpack.c.b16 %v5526, %v5524
  %v5813 = vpack.c.b16 %v5527, %v5525
  %v5814 = vpack.c.b16 %v5530, %v5528
  %v5815 = vpack.c.b16 %v5531, %v5529
  %v5816 = vpack.c.b16 %v5534, %v5532
  %v5817 = vpack.c.b16 %v5535, %v5533
  %v5818 = vpack.c.b16 %v5538, %v5536
  %v5819 = vpack.c.b16 %v5539, %v5537
  %v5820 = vpack.c.b16 %v5542, %v5540
  %v5821 = vpack.c.b16 %v5543, %v5541
  %v5822 = vpack.c.b16 %v5546, %v5544
  %v5823 = vpack.c.b16 %v5547, %v5545
  %v5824 = vpack.c.b16 %v5550, %v5548
  %v5825 = vpack.c.b16 %v5551, %v5549
  %v5826 = vpack.c.b16 %v5554, %v5552
  %v5827 = vpack.c.b16 %v5555, %v5553
  %v5828 = vpack.c.b16 %v5558, %v5556
  %v5829 = vpack.c.b16 %v5559, %v5557
  %v5830 = vpack.c.b16 %v5562, %v5560
  %v5831 = vpack.c.b16 %v5563, %v5561
  %v5832 = vpack.c.b16 %v5566, %v5564
  %v5833 = vpack.c.b16 %v5567, %v5565
  %v5834 = vpack.c.b16 %v5570, %v5568
  %v5835 = vpack.c.b16 %v5571, %v5569
  %v5836 = vpack.c.b16 %v5574, %v5572
  %v5837 = vpack.c.b16 %v5575, %v5573
  %v5838 = vpack.c.b16 %v5578, %v5576
  %v5839 = vpack.c.b16 %v5579, %v5577
  %v5840 = vpack.c.b16 %v5582, %v5580
  %v5841 = vpack.c.b16 %v5583, %v5581
  %v5842 = vpack.c.b16 %v5586, %v5584
  %v5843 = vpack.c.b16 %v5587, %v5585
  %v5844 = vpack.c.b16 %v5590, %v5588
  %v5845 = vpack.c.b16 %v5591, %v5589
  %v5846 = vpack.c.b16 %v5594, %v5592
  %v5847 = vpack.c.b16 %v5595, %v5593
  %v5848 = vpack.c.b16 %v5598, %v5596
  %v5849 = vpack.c.b16 %v5599, %v5597
  %v5850 = vpack.c.b16 %v5602, %v5600
  %v5851 = vpack.c.b16 %v5603, %v5601
  %v5852 = vpack.c.b16 %v5606, %v5604
  %v5853 = vpack.c.b16 %v5607, %v5605
  %v5854 = vpack.c.b16 %v5610, %v5608
  %v5855 = vpack.c.b16 %v5611, %v5609
  %v5856 = vpack.c.b16 %v5614, %v5612
  %v5857 = vpack.c.b16 %v5615, %v5613
  %v5858 = vpack.c.b16 %v5618, %v5616
  %v5859 = vpack.c.b16 %v5619, %v5617
  %v5860 = vpack.c.b16 %v5622, %v5620
  %v5861 = vpack.c.b16 %v5623, %v5621
  %v5862 = vpack.c.b16 %v5626, %v5624
  %v5863 = vpack.c.b16 %v5627, %v5625
  %v5864 = vpack.c.b16 %v5630, %v5628
  %v5865 = vpack.c.b16 %v5631, %v5629
  %v5866 = vpack.c.b16 %v5634, %v5632
  %v5867 = vpack.c.b16 %v5635, %v5633
  %v5868 = vpack.c.b16 %v5638, %v5636
  %v5869 = vpack.c.b16 %v5639, %v5637
  %v5870 = vpack.c.b16 %v5642, %v5640
  %v5871 = vpack.c.b16 %v5643, %v5641
  %v5872 = vpack.c.b16 %v5646, %v5644
  %v5873 = vpack.c.b16 %v5647, %v5645
  %v5874 = vpack.c.b16 %v5650, %v5648
  %v5875 = vpack.c.b16 %v5651, %v5649
  %v5876 = vpack.c.b16 %v5654, %v5652
  %v5877 = vpack.c.b16 %v5655, %v5653
  %v5878 = vpack.c.b16 %v5658, %v5656
  %v5879 = vpack.c.b16 %v5659, %v5657
  %v5880 = vpack.c.b16 %v5662, %v5660
  %v5881 = vpack.c.b16 %v5663, %v5661
  %v5882 = vpack.c.b16 %v5666, %v5664
  %v5883 = vpack.c.b16 %v5667, %v5665
  %v5884 = vpack.c.b16 %v5670, %v5668
  %v5885 = vpack.c.b16 %v5671, %v5669
  %v5886 = vpack.c.b16 %v5674, %v5672
  %v5887 = vpack.c.b16 %v5675, %v5673
  %v5888 = vpack.c.b16 %v5678, %v5676
  %v5889 = vpack.c.b16 %v5679, %v5677
  %v5890 = vpack.c.b16 %v5682, %v5680
  %v5891 = vpack.c.b16 %v5683, %v5681
  %v5892 = vpack.c.b16 %v5686, %v5684
  %v5893 = vpack.c.b16 %v5687, %v5685
  %v5894 = vpack.c.b16 %v5690, %v5688
  %v5895 = vpack.c.b16 %v5691, %v5689
  %v5896 = vpack.c.b16 %v5694, %v5692
  %v5897 = vpack.c.b16 %v5695, %v5693
  %v5898 = vpack.c.b16 %v5698, %v5696
  %v5899 = vpack.c.b16 %v5699, %v5697
  %v5900 = vpack.c.b16 %v5702, %v5700
  %v5901 = vpack.c.b16 %v5703, %v5701
  %v5902 = vpack.c.b16 %v5706, %v5704
  %v5903 = vpack.c.b16 %v5707, %v5705
  %v5904 = vpack.c.b16 %v5710, %v5708
  %v5905 = vpack.c.b16 %v5711, %v5709
  %v5906 = vpack.c.b16 %v5714, %v5712
  %v5907 = vpack.c.b16 %v5715, %v5713
  %v5908 = vpack.c.b16 %v5718, %v5716
  %v5909 = vpack.c.b16 %v5719, %v5717
  %v5910 = vpack.c.b16 %v5722, %v5720
  %v5911 = vpack.c.b16 %v5723, %v5721
  %v5912 = vpack.c.b16 %v5726, %v5724
  %v5913 = vpack.c.b16 %v5727, %v5725
  %v5914 = vpack.c.b16 %v5730, %v5728
  %v5915 = vpack.c.b16 %v5731, %v5729
  %v5916 = vpack.c.b16 %v5734, %v5732
  %v5917 = vpack.c.b16 %v5735, %v5733
  %v5918 = vpack.c.b16 %v5738, %v5736
  %v5919 = vpack.c.b16 %v5739, %v5737
  %v5920 = vpack.c.b16 %v5742, %v5740
  %v5921 = vpack.c.b16 %v5743, %v5741
  %v5922 = vpack.c.b16 %v5746, %v5744
  %v5923 = vpack.c.b16 %v5747, %v5745
  %v5924 = vpack.c.b16 %v5750, %v5748
  %v5925 = vpack.c.b16 %v5751, %v5749
  %v5926 = vpack.c.b16 %v5754, %v5752
  %v5927 = vpack.c.b16 %v5755, %v5753
  %v5928 = vpack.c.b16 %v5758, %v5756
  %v5929 = vpack.c.b16 %v5759, %v5757
  %v5930 = vpack.c.b16 %v5762, %v5760
  %v5931 = vpack.c.b16 %v5763, %v5761
  %v5932 = vpack.c.b16 %v5766, %v5764
  %v5933 = vpack.c.b16 %v5767, %v5765
  %v5934 = vpack.c.b16 %v5770, %v5768
  %v5935 = vpack.c.b16 %v5771, %v5769
  %v5936 = vpack.c.b16 %v5774, %v5772
  %v5937 = vpack.c.b16 %v5775, %v5773
  %v5938 = vpack.c.b16 %v5778, %v5776
  %v5939 = vpack.c.b16 %v5779, %v5777
  %v5940 = vpack.c.b16 %v5782, %v5780
  %v5941 = vpack.c.b16 %v5783, %v5781
  %v5942 = vpack.c.b16 %v5786, %v5784
  %v5943 = vpack.c.b16 %v5787, %v5785
  %v5944 = vpack.c.b16 %v5790, %v5788
  %v5945 = vpack.c.b16 %v5791, %v5789
  %v5946 = vpack.c.b16 %v5794, %v5792
  %v5947 = vpack.c.b16 %v5795, %v5793
  %v5948 = vpack.c.b16 %v5798, %v5796
  %v5949 = vpack.c.b16 %v5799, %v5797
  %v5950 = vpack.c.b16 %v5802, %v5800
  %v5951 = vpack.c.b16 %v5803, %v5801
  %v5952 = vpack.c.b16 %v5806, %v5804
  %v5953 = vpack.c.b16 %v5807, %v5805
  %v5954 = vpack.c.b16 %v5810, %v5808
  %v5955 = vpack.c.b16 %v5811, %v5809
  %6100 = vmatpush.bf16.msra.mxu0 %v5826
  %6101 = vmatpush.bf16.msra.mxu0 %v5824
  %6102 = vmatpush.bf16.msra.mxu0 %v5822
  %6103 = vmatpush.bf16.msra.mxu0 %v5820
  %6104 = vmatpush.bf16.msra.mxu0 %v5818
  %6105 = vmatpush.bf16.msra.mxu0 %v5816
  %6106 = vmatpush.bf16.msra.mxu0 %v5814
  %6107 = vmatpush.bf16.msra.mxu0 %v5812
  %6108 = vmatmul.bf16.gmra.mxu0 %v4092
  %v6109 = vpop.f32.mrf.mxu0
  %v6110 = vadd.f32 %v5260, %v6109
  %v6111 = vpop.f32.mrf.mxu0
  %6112 = vdwg.mxu0
  %6113 = vmatpush.bf16.msra.mxu0 %v5842
  %6114 = vmatpush.bf16.msra.mxu0 %v5840
  %6115 = vmatpush.bf16.msra.mxu0 %v5838
  %6116 = vmatpush.bf16.msra.mxu0 %v5836
  %6117 = vmatpush.bf16.msra.mxu0 %v5834
  %6118 = vmatpush.bf16.msra.mxu0 %v5832
  %6119 = vmatpush.bf16.msra.mxu0 %v5830
  %6120 = vmatpush.bf16.msra.mxu0 %v5828
  %6121 = vmatmul.bf16.gmra.mxu0 %v4093
  %v6122 = vpop.f32.mrf.mxu0
  %v6123 = vadd.f32 %v6110, %v6122
  %v6124 = vpop.f32.mrf.mxu0
  %6125 = vdwg.mxu0
  %6126 = vmatpush.bf16.msra.mxu0 %v5858
  %6127 = vmatpush.bf16.msra.mxu0 %v5856
  %6128 = vmatpush.bf16.msra.mxu0 %v5854
  %6129 = vmatpush.bf16.msra.mxu0 %v5852
  %6130 = vmatpush.bf16.msra.mxu0 %v5850
  %6131 = vmatpush.bf16.msra.mxu0 %v5848
  %6132 = vmatpush.bf16.msra.mxu0 %v5846
  %6133 = vmatpush.bf16.msra.mxu0 %v5844
  %6134 = vmatmul.bf16.gmra.mxu0 %v4094
  %v6135 = vpop.f32.mrf.mxu0
  %v6136 = vadd.f32 %v6123, %v6135
  %v6137 = vpop.f32.mrf.mxu0
  %6138 = vdwg.mxu0
  %6139 = vmatpush.bf16.msra.mxu0 %v5874
  %6140 = vmatpush.bf16.msra.mxu0 %v5872
  %6141 = vmatpush.bf16.msra.mxu0 %v5870
  %6142 = vmatpush.bf16.msra.mxu0 %v5868
  %6143 = vmatpush.bf16.msra.mxu0 %v5866
  %6144 = vmatpush.bf16.msra.mxu0 %v5864
  %6145 = vmatpush.bf16.msra.mxu0 %v5862
  %6146 = vmatpush.bf16.msra.mxu0 %v5860
  %6147 = vmatmul.bf16.gmra.mxu0 %v4095
  %v6148 = vpop.f32.mrf.mxu0
  %v6149 = vadd.f32 %v6136, %v6148
  %v6150 = vpop.f32.mrf.mxu0
  %6151 = vdwg.mxu0
  %6152 = vmatpush.bf16.msra.mxu0 %v5890
  %6153 = vmatpush.bf16.msra.mxu0 %v5888
  %6154 = vmatpush.bf16.msra.mxu0 %v5886
  %6155 = vmatpush.bf16.msra.mxu0 %v5884
  %6156 = vmatpush.bf16.msra.mxu0 %v5882
  %6157 = vmatpush.bf16.msra.mxu0 %v5880
  %6158 = vmatpush.bf16.msra.mxu0 %v5878
  %6159 = vmatpush.bf16.msra.mxu0 %v5876
  %6160 = vmatmul.bf16.gmra.mxu0 %v4096
  %v6161 = vpop.f32.mrf.mxu0
  %v6162 = vadd.f32 %v6149, %v6161
  %v6163 = vpop.f32.mrf.mxu0
  %6164 = vdwg.mxu0
  %6165 = vmatpush.bf16.msra.mxu0 %v5906
  %6166 = vmatpush.bf16.msra.mxu0 %v5904
  %6167 = vmatpush.bf16.msra.mxu0 %v5902
  %6168 = vmatpush.bf16.msra.mxu0 %v5900
  %6169 = vmatpush.bf16.msra.mxu0 %v5898
  %6170 = vmatpush.bf16.msra.mxu0 %v5896
  %6171 = vmatpush.bf16.msra.mxu0 %v5894
  %6172 = vmatpush.bf16.msra.mxu0 %v5892
  %6173 = vmatmul.bf16.gmra.mxu0 %v4097
  %v6174 = vpop.f32.mrf.mxu0
  %v6175 = vadd.f32 %v6162, %v6174
  %v6176 = vpop.f32.mrf.mxu0
  %6177 = vdwg.mxu0
  %6178 = vmatpush.bf16.msra.mxu0 %v5922
  %6179 = vmatpush.bf16.msra.mxu0 %v5920
  %6180 = vmatpush.bf16.msra.mxu0 %v5918
  %6181 = vmatpush.bf16.msra.mxu0 %v5916
  %6182 = vmatpush.bf16.msra.mxu0 %v5914
  %6183 = vmatpush.bf16.msra.mxu0 %v5912
  %6184 = vmatpush.bf16.msra.mxu0 %v5910
  %6185 = vmatpush.bf16.msra.mxu0 %v5908
  %6186 = vmatmul.bf16.gmra.mxu0 %v4098
  %v6187 = vpop.f32.mrf.mxu0
  %v6188 = vadd.f32 %v6175, %v6187
  %v6189 = vpop.f32.mrf.mxu0
  %6190 = vdwg.mxu0
  %6191 = vmatpush.bf16.msra.mxu0 %v5938
  %6192 = vmatpush.bf16.msra.mxu0 %v5936
  %6193 = vmatpush.bf16.msra.mxu0 %v5934
  %6194 = vmatpush.bf16.msra.mxu0 %v5932
  %6195 = vmatpush.bf16.msra.mxu0 %v5930
  %6196 = vmatpush.bf16.msra.mxu0 %v5928
  %6197 = vmatpush.bf16.msra.mxu0 %v5926
  %6198 = vmatpush.bf16.msra.mxu0 %v5924
  %6199 = vmatmul.bf16.gmra.mxu0 %v4099
  %v6200 = vpop.f32.mrf.mxu0
  %v6201 = vadd.f32 %v6188, %v6200
  %v6202 = vpop.f32.mrf.mxu0
  %6203 = vdwg.mxu0
  %6204 = vmatpush.bf16.msra.mxu0 %v5954
  %6205 = vmatpush.bf16.msra.mxu0 %v5952
  %6206 = vmatpush.bf16.msra.mxu0 %v5950
  %6207 = vmatpush.bf16.msra.mxu0 %v5948
  %6208 = vmatpush.bf16.msra.mxu0 %v5946
  %6209 = vmatpush.bf16.msra.mxu0 %v5944
  %6210 = vmatpush.bf16.msra.mxu0 %v5942
  %6211 = vmatpush.bf16.msra.mxu0 %v5940
  %6212 = vmatmul.bf16.gmra.mxu0 %v4100
  %v6213 = vpop.f32.mrf.mxu0
  %v6214 = vadd.f32 %v6201, %v6213
  %v6215 = vpop.f32.mrf.mxu0
  %6216 = vdwg.mxu0
  %6217 = vmatpush.bf16.msra.mxu0 %v5827
  %6218 = vmatpush.bf16.msra.mxu0 %v5825
  %6219 = vmatpush.bf16.msra.mxu0 %v5823
  %6220 = vmatpush.bf16.msra.mxu0 %v5821
  %6221 = vmatpush.bf16.msra.mxu0 %v5819
  %6222 = vmatpush.bf16.msra.mxu0 %v5817
  %6223 = vmatpush.bf16.msra.mxu0 %v5815
  %6224 = vmatpush.bf16.msra.mxu0 %v5813
  %6225 = vmatmul.bf16.gmra.mxu0 %v4092
  %v6226 = vpop.f32.mrf.mxu0
  %v6227 = vadd.f32 %v5377, %v6226
  %v6228 = vpop.f32.mrf.mxu0
  %6229 = vdwg.mxu0
  %6230 = vmatpush.bf16.msra.mxu0 %v5843
  %6231 = vmatpush.bf16.msra.mxu0 %v5841
  %6232 = vmatpush.bf16.msra.mxu0 %v5839
  %6233 = vmatpush.bf16.msra.mxu0 %v5837
  %6234 = vmatpush.bf16.msra.mxu0 %v5835
  %6235 = vmatpush.bf16.msra.mxu0 %v5833
  %6236 = vmatpush.bf16.msra.mxu0 %v5831
  %6237 = vmatpush.bf16.msra.mxu0 %v5829
  %6238 = vmatmul.bf16.gmra.mxu0 %v4093
  %v6239 = vpop.f32.mrf.mxu0
  %v6240 = vadd.f32 %v6227, %v6239
  %v6241 = vpop.f32.mrf.mxu0
  %6242 = vdwg.mxu0
  %6243 = vmatpush.bf16.msra.mxu0 %v5859
  %6244 = vmatpush.bf16.msra.mxu0 %v5857
  %6245 = vmatpush.bf16.msra.mxu0 %v5855
  %6246 = vmatpush.bf16.msra.mxu0 %v5853
  %6247 = vmatpush.bf16.msra.mxu0 %v5851
  %6248 = vmatpush.bf16.msra.mxu0 %v5849
  %6249 = vmatpush.bf16.msra.mxu0 %v5847
  %6250 = vmatpush.bf16.msra.mxu0 %v5845
  %6251 = vmatmul.bf16.gmra.mxu0 %v4094
  %v6252 = vpop.f32.mrf.mxu0
  %v6253 = vadd.f32 %v6240, %v6252
  %v6254 = vpop.f32.mrf.mxu0
  %6255 = vdwg.mxu0
  %6256 = vmatpush.bf16.msra.mxu0 %v5875
  %6257 = vmatpush.bf16.msra.mxu0 %v5873
  %6258 = vmatpush.bf16.msra.mxu0 %v5871
  %6259 = vmatpush.bf16.msra.mxu0 %v5869
  %6260 = vmatpush.bf16.msra.mxu0 %v5867
  %6261 = vmatpush.bf16.msra.mxu0 %v5865
  %6262 = vmatpush.bf16.msra.mxu0 %v5863
  %6263 = vmatpush.bf16.msra.mxu0 %v5861
  %6264 = vmatmul.bf16.gmra.mxu0 %v4095
  %v6265 = vpop.f32.mrf.mxu0
  %v6266 = vadd.f32 %v6253, %v6265
  %v6267 = vpop.f32.mrf.mxu0
  %6268 = vdwg.mxu0
  %6269 = vmatpush.bf16.msra.mxu0 %v5891
  %6270 = vmatpush.bf16.msra.mxu0 %v5889
  %6271 = vmatpush.bf16.msra.mxu0 %v5887
  %6272 = vmatpush.bf16.msra.mxu0 %v5885
  %6273 = vmatpush.bf16.msra.mxu0 %v5883
  %6274 = vmatpush.bf16.msra.mxu0 %v5881
  %6275 = vmatpush.bf16.msra.mxu0 %v5879
  %6276 = vmatpush.bf16.msra.mxu0 %v5877
  %6277 = vmatmul.bf16.gmra.mxu0 %v4096
  %v6278 = vpop.f32.mrf.mxu0
  %v6279 = vadd.f32 %v6266, %v6278
  %v6280 = vpop.f32.mrf.mxu0
  %6281 = vdwg.mxu0
  %6282 = vmatpush.bf16.msra.mxu0 %v5907
  %6283 = vmatpush.bf16.msra.mxu0 %v5905
  %6284 = vmatpush.bf16.msra.mxu0 %v5903
  %6285 = vmatpush.bf16.msra.mxu0 %v5901
  %6286 = vmatpush.bf16.msra.mxu0 %v5899
  %6287 = vmatpush.bf16.msra.mxu0 %v5897
  %6288 = vmatpush.bf16.msra.mxu0 %v5895
  %6289 = vmatpush.bf16.msra.mxu0 %v5893
  %6290 = vmatmul.bf16.gmra.mxu0 %v4097
  %v6291 = vpop.f32.mrf.mxu0
  %v6292 = vadd.f32 %v6279, %v6291
  %v6293 = vpop.f32.mrf.mxu0
  %6294 = vdwg.mxu0
  %6295 = vmatpush.bf16.msra.mxu0 %v5923
  %6296 = vmatpush.bf16.msra.mxu0 %v5921
  %6297 = vmatpush.bf16.msra.mxu0 %v5919
  %6298 = vmatpush.bf16.msra.mxu0 %v5917
  %6299 = vmatpush.bf16.msra.mxu0 %v5915
  %6300 = vmatpush.bf16.msra.mxu0 %v5913
  %6301 = vmatpush.bf16.msra.mxu0 %v5911
  %6302 = vmatpush.bf16.msra.mxu0 %v5909
  %6303 = vmatmul.bf16.gmra.mxu0 %v4098
  %v6304 = vpop.f32.mrf.mxu0
  %v6305 = vadd.f32 %v6292, %v6304
  %v6306 = vpop.f32.mrf.mxu0
  %6307 = vdwg.mxu0
  %6308 = vmatpush.bf16.msra.mxu0 %v5939
  %6309 = vmatpush.bf16.msra.mxu0 %v5937
  %6310 = vmatpush.bf16.msra.mxu0 %v5935
  %6311 = vmatpush.bf16.msra.mxu0 %v5933
  %6312 = vmatpush.bf16.msra.mxu0 %v5931
  %6313 = vmatpush.bf16.msra.mxu0 %v5929
  %6314 = vmatpush.bf16.msra.mxu0 %v5927
  %6315 = vmatpush.bf16.msra.mxu0 %v5925
  %6316 = vmatmul.bf16.gmra.mxu0 %v4099
  %v6317 = vpop.f32.mrf.mxu0
  %v6318 = vadd.f32 %v6305, %v6317
  %v6319 = vpop.f32.mrf.mxu0
  %6320 = vdwg.mxu0
  %6321 = vmatpush.bf16.msra.mxu0 %v5955
  %6322 = vmatpush.bf16.msra.mxu0 %v5953
  %6323 = vmatpush.bf16.msra.mxu0 %v5951
  %6324 = vmatpush.bf16.msra.mxu0 %v5949
  %6325 = vmatpush.bf16.msra.mxu0 %v5947
  %6326 = vmatpush.bf16.msra.mxu0 %v5945
  %6327 = vmatpush.bf16.msra.mxu0 %v5943
  %6328 = vmatpush.bf16.msra.mxu0 %v5941
  %6329 = vmatmul.bf16.gmra.mxu0 %v4100
  %v6330 = vpop.f32.mrf.mxu0
  %v6331 = vadd.f32 %v6318, %v6330
  %v6332 = vpop.f32.mrf.mxu0
  %6333 = vdwg.mxu0
  %vm6334 = vcmp.eq.f32.partialorder %v2752, 2.0
  %vm6335 = vcmp.eq.f32.partialorder %v2753, 2.0
  %vm6336 = vcmp.eq.f32.partialorder %v2754, 2.0
  %vm6337 = vcmp.eq.f32.partialorder %v2755, 2.0
  %vm6338 = vcmp.eq.f32.partialorder %v2756, 2.0
  %vm6339 = vcmp.eq.f32.partialorder %v2757, 2.0
  %vm6340 = vcmp.eq.f32.partialorder %v2758, 2.0
  %vm6341 = vcmp.eq.f32.partialorder %v2759, 2.0
  %vm6342 = vcmp.eq.f32.partialorder %v2760, 2.0
  %v6343 = vsel %vm6334, %v3958, 0.0
  %v6344 = vsel %vm6335, %v3971, 0.0
  %v6345 = vsel %vm6336, %v3984, 0.0
  %v6346 = vsel %vm6337, %v3997, 0.0
  %v6347 = vsel %vm6338, %v4010, 0.0
  %v6348 = vsel %vm6339, %v4023, 0.0
  %v6349 = vsel %vm6340, %v4036, 0.0
  %v6350 = vsel %vm6341, %v4049, 0.0
  %v6351 = vsel %vm6342, %v4062, 0.0
  %v6352 = vmax.f32 %v6343, 0.0
  %v6353 = vmax.f32 %v6344, 0.0
  %v6354 = vmax.f32 %v6345, 0.0
  %v6355 = vmax.f32 %v6346, 0.0
  %v6356 = vmax.f32 %v6347, 0.0
  %v6357 = vmax.f32 %v6348, 0.0
  %v6358 = vmax.f32 %v6349, 0.0
  %v6359 = vmax.f32 %v6350, 0.0
  %v6360 = vmax.f32 %v6351, 0.0
  %v6361 = vpack.c.bf16 %v6352, %v6352
  %v6362 = vpack.c.bf16 %v6353, %v6353
  %v6363 = vpack.c.bf16 %v6354, %v6354
  %v6364 = vpack.c.bf16 %v6355, %v6355
  %v6365 = vpack.c.bf16 %v6356, %v6356
  %v6366 = vpack.c.bf16 %v6357, %v6357
  %v6367 = vpack.c.bf16 %v6358, %v6358
  %v6368 = vpack.c.bf16 %v6359, %v6359
  %v6369 = vpack.c.bf16 %v6360, %v6360
  %s6370 = scalar_lea.vmem %s7, 2304
  %v6371 = vld [vmem:[%s6370] sm:$0xff]
  %v6372 = vld [vmem:[%s6370 + $0x8] sm:$0xff]
  %v6373 = vld [vmem:[%s6370 + $0x10] sm:$0xff]
  %v6374 = vld [vmem:[%s6370 + $0x18] sm:$0xff]
  %v6375 = vld [vmem:[%s6370 + $0x20] sm:$0xff]
  %v6376 = vld [vmem:[%s6370 + $0x28] sm:$0xff]
  %v6377 = vld [vmem:[%s6370 + $0x30] sm:$0xff]
  %v6378 = vld [vmem:[%s6370 + $0x38] sm:$0xff]
  %v6379 = vld [vmem:[%s6370 + $0x40] sm:$0xff]
  %v6380 = vld [vmem:[%s6370 + $0x48] sm:$0xff]
  %v6381 = vld [vmem:[%s6370 + $0x50] sm:$0xff]
  %v6382 = vld [vmem:[%s6370 + $0x58] sm:$0xff]
  %v6383 = vld [vmem:[%s6370 + $0x60] sm:$0xff]
  %v6384 = vld [vmem:[%s6370 + $0x68] sm:$0xff]
  %v6385 = vld [vmem:[%s6370 + $0x70] sm:$0xff]
  %v6386 = vld [vmem:[%s6370 + $0x78] sm:$0xff]
  %v6387 = vld [vmem:[%s6370 + $0x80] sm:$0xff]
  %v6388 = vld [vmem:[%s6370 + $0x88] sm:$0xff]
  %v6389 = vld [vmem:[%s6370 + $0x90] sm:$0xff]
  %v6390 = vld [vmem:[%s6370 + $0x98] sm:$0xff]
  %v6391 = vld [vmem:[%s6370 + $0xa0] sm:$0xff]
  %v6392 = vld [vmem:[%s6370 + $0xa8] sm:$0xff]
  %v6393 = vld [vmem:[%s6370 + $0xb0] sm:$0xff]
  %v6394 = vld [vmem:[%s6370 + $0xb8] sm:$0xff]
  %v6395 = vld [vmem:[%s6370 + $0xc0] sm:$0xff]
  %v6396 = vld [vmem:[%s6370 + $0xc8] sm:$0xff]
  %v6397 = vld [vmem:[%s6370 + $0xd0] sm:$0xff]
  %v6398 = vld [vmem:[%s6370 + $0xd8] sm:$0xff]
  %v6399 = vld [vmem:[%s6370 + $0xe0] sm:$0xff]
  %v6400 = vld [vmem:[%s6370 + $0xe8] sm:$0xff]
  %v6401 = vld [vmem:[%s6370 + $0xf0] sm:$0xff]
  %v6402 = vld [vmem:[%s6370 + $0xf8] sm:$0xff]
  %v6403 = vld [vmem:[%s6370 + $0x100] sm:$0xff]
  %v6404 = vld [vmem:[%s6370 + $0x108] sm:$0xff]
  %v6405 = vld [vmem:[%s6370 + $0x110] sm:$0xff]
  %v6406 = vld [vmem:[%s6370 + $0x118] sm:$0xff]
  %v6407 = vld [vmem:[%s6370 + $0x120] sm:$0xff]
  %v6408 = vld [vmem:[%s6370 + $0x128] sm:$0xff]
  %v6409 = vld [vmem:[%s6370 + $0x130] sm:$0xff]
  %v6410 = vld [vmem:[%s6370 + $0x138] sm:$0xff]
  %v6411 = vld [vmem:[%s6370 + $0x140] sm:$0xff]
  %v6412 = vld [vmem:[%s6370 + $0x148] sm:$0xff]
  %v6413 = vld [vmem:[%s6370 + $0x150] sm:$0xff]
  %v6414 = vld [vmem:[%s6370 + $0x158] sm:$0xff]
  %v6415 = vld [vmem:[%s6370 + $0x160] sm:$0xff]
  %v6416 = vld [vmem:[%s6370 + $0x168] sm:$0xff]
  %v6417 = vld [vmem:[%s6370 + $0x170] sm:$0xff]
  %v6418 = vld [vmem:[%s6370 + $0x178] sm:$0xff]
  %v6419 = vld [vmem:[%s6370 + $0x180] sm:$0xff]
  %v6420 = vld [vmem:[%s6370 + $0x188] sm:$0xff]
  %v6421 = vld [vmem:[%s6370 + $0x190] sm:$0xff]
  %v6422 = vld [vmem:[%s6370 + $0x198] sm:$0xff]
  %v6423 = vld [vmem:[%s6370 + $0x1a0] sm:$0xff]
  %v6424 = vld [vmem:[%s6370 + $0x1a8] sm:$0xff]
  %v6425 = vld [vmem:[%s6370 + $0x1b0] sm:$0xff]
  %v6426 = vld [vmem:[%s6370 + $0x1b8] sm:$0xff]
  %v6427 = vld [vmem:[%s6370 + $0x1c0] sm:$0xff]
  %v6428 = vld [vmem:[%s6370 + $0x1c8] sm:$0xff]
  %v6429 = vld [vmem:[%s6370 + $0x1d0] sm:$0xff]
  %v6430 = vld [vmem:[%s6370 + $0x1d8] sm:$0xff]
  %v6431 = vld [vmem:[%s6370 + $0x1e0] sm:$0xff]
  %v6432 = vld [vmem:[%s6370 + $0x1e8] sm:$0xff]
  %v6433 = vld [vmem:[%s6370 + $0x1f0] sm:$0xff]
  %v6434 = vld [vmem:[%s6370 + $0x1f8] sm:$0xff]
  %v6435 = vld [vmem:[%s6370 + $0x200] sm:$0xff]
  %v6436 = vld [vmem:[%s6370 + $0x208] sm:$0xff]
  %v6437 = vld [vmem:[%s6370 + $0x210] sm:$0xff]
  %v6438 = vld [vmem:[%s6370 + $0x218] sm:$0xff]
  %v6439 = vld [vmem:[%s6370 + $0x220] sm:$0xff]
  %v6440 = vld [vmem:[%s6370 + $0x228] sm:$0xff]
  %v6441 = vld [vmem:[%s6370 + $0x230] sm:$0xff]
  %v6442 = vld [vmem:[%s6370 + $0x238] sm:$0xff]
  %v6443 = vld [vmem:[%s6370 + $0x240] sm:$0xff]
  %v6444 = vld [vmem:[%s6370 + $0x248] sm:$0xff]
  %v6445 = vld [vmem:[%s6370 + $0x250] sm:$0xff]
  %v6446 = vld [vmem:[%s6370 + $0x258] sm:$0xff]
  %v6447 = vld [vmem:[%s6370 + $0x260] sm:$0xff]
  %v6448 = vld [vmem:[%s6370 + $0x268] sm:$0xff]
  %v6449 = vld [vmem:[%s6370 + $0x270] sm:$0xff]
  %v6450 = vld [vmem:[%s6370 + $0x278] sm:$0xff]
  %v6451 = vld [vmem:[%s6370 + $0x280] sm:$0xff]
  %v6452 = vld [vmem:[%s6370 + $0x288] sm:$0xff]
  %v6453 = vld [vmem:[%s6370 + $0x290] sm:$0xff]
  %v6454 = vld [vmem:[%s6370 + $0x298] sm:$0xff]
  %v6455 = vld [vmem:[%s6370 + $0x2a0] sm:$0xff]
  %v6456 = vld [vmem:[%s6370 + $0x2a8] sm:$0xff]
  %v6457 = vld [vmem:[%s6370 + $0x2b0] sm:$0xff]
  %v6458 = vld [vmem:[%s6370 + $0x2b8] sm:$0xff]
  %v6459 = vld [vmem:[%s6370 + $0x2c0] sm:$0xff]
  %v6460 = vld [vmem:[%s6370 + $0x2c8] sm:$0xff]
  %v6461 = vld [vmem:[%s6370 + $0x2d0] sm:$0xff]
  %v6462 = vld [vmem:[%s6370 + $0x2d8] sm:$0xff]
  %v6463 = vld [vmem:[%s6370 + $0x2e0] sm:$0xff]
  %v6464 = vld [vmem:[%s6370 + $0x2e8] sm:$0xff]
  %v6465 = vld [vmem:[%s6370 + $0x2f0] sm:$0xff]
  %v6466 = vld [vmem:[%s6370 + $0x2f8] sm:$0xff]
  %v6467 = vld [vmem:[%s6370 + $0x300] sm:$0xff]
  %v6468 = vld [vmem:[%s6370 + $0x308] sm:$0xff]
  %v6469 = vld [vmem:[%s6370 + $0x310] sm:$0xff]
  %v6470 = vld [vmem:[%s6370 + $0x318] sm:$0xff]
  %v6471 = vld [vmem:[%s6370 + $0x320] sm:$0xff]
  %v6472 = vld [vmem:[%s6370 + $0x328] sm:$0xff]
  %v6473 = vld [vmem:[%s6370 + $0x330] sm:$0xff]
  %v6474 = vld [vmem:[%s6370 + $0x338] sm:$0xff]
  %v6475 = vld [vmem:[%s6370 + $0x340] sm:$0xff]
  %v6476 = vld [vmem:[%s6370 + $0x348] sm:$0xff]
  %v6477 = vld [vmem:[%s6370 + $0x350] sm:$0xff]
  %v6478 = vld [vmem:[%s6370 + $0x358] sm:$0xff]
  %v6479 = vld [vmem:[%s6370 + $0x360] sm:$0xff]
  %v6480 = vld [vmem:[%s6370 + $0x368] sm:$0xff]
  %v6481 = vld [vmem:[%s6370 + $0x370] sm:$0xff]
  %v6482 = vld [vmem:[%s6370 + $0x378] sm:$0xff]
  %v6483 = vld [vmem:[%s6370 + $0x380] sm:$0xff]
  %v6484 = vld [vmem:[%s6370 + $0x388] sm:$0xff]
  %v6485 = vld [vmem:[%s6370 + $0x390] sm:$0xff]
  %v6486 = vld [vmem:[%s6370 + $0x398] sm:$0xff]
  %v6487 = vld [vmem:[%s6370 + $0x3a0] sm:$0xff]
  %v6488 = vld [vmem:[%s6370 + $0x3a8] sm:$0xff]
  %v6489 = vld [vmem:[%s6370 + $0x3b0] sm:$0xff]
  %v6490 = vld [vmem:[%s6370 + $0x3b8] sm:$0xff]
  %v6491 = vld [vmem:[%s6370 + $0x3c0] sm:$0xff]
  %v6492 = vld [vmem:[%s6370 + $0x3c8] sm:$0xff]
  %v6493 = vld [vmem:[%s6370 + $0x3d0] sm:$0xff]
  %v6494 = vld [vmem:[%s6370 + $0x3d8] sm:$0xff]
  %v6495 = vld [vmem:[%s6370 + $0x3e0] sm:$0xff]
  %v6496 = vld [vmem:[%s6370 + $0x3e8] sm:$0xff]
  %v6497 = vld [vmem:[%s6370 + $0x3f0] sm:$0xff]
  %v6498 = vld [vmem:[%s6370 + $0x3f8] sm:$0xff]
  %v6499 = vld [vmem:[%s6370 + $0x400] sm:$0xff]
  %v6500 = vld [vmem:[%s6370 + $0x408] sm:$0xff]
  %v6501 = vld [vmem:[%s6370 + $0x410] sm:$0xff]
  %v6502 = vld [vmem:[%s6370 + $0x418] sm:$0xff]
  %v6503 = vld [vmem:[%s6370 + $0x420] sm:$0xff]
  %v6504 = vld [vmem:[%s6370 + $0x428] sm:$0xff]
  %v6505 = vld [vmem:[%s6370 + $0x430] sm:$0xff]
  %v6506 = vld [vmem:[%s6370 + $0x438] sm:$0xff]
  %v6507 = vld [vmem:[%s6370 + $0x440] sm:$0xff]
  %v6508 = vld [vmem:[%s6370 + $0x448] sm:$0xff]
  %v6509 = vld [vmem:[%s6370 + $0x450] sm:$0xff]
  %v6510 = vld [vmem:[%s6370 + $0x458] sm:$0xff]
  %v6511 = vld [vmem:[%s6370 + $0x460] sm:$0xff]
  %v6512 = vld [vmem:[%s6370 + $0x468] sm:$0xff]
  %v6513 = vld [vmem:[%s6370 + $0x470] sm:$0xff]
  %v6514 = vld [vmem:[%s6370 + $0x478] sm:$0xff]
  %v6659 = vunpack.c.l.b16 %v6371
  %v6660 = vunpack.c.h.b16 %v6371
  %v6661 = vunpack.c.l.b16 %v6372
  %v6662 = vunpack.c.h.b16 %v6372
  %v6663 = vunpack.c.l.b16 %v6373
  %v6664 = vunpack.c.h.b16 %v6373
  %v6665 = vunpack.c.l.b16 %v6374
  %v6666 = vunpack.c.h.b16 %v6374
  %v6667 = vunpack.c.l.b16 %v6375
  %v6668 = vunpack.c.h.b16 %v6375
  %v6669 = vunpack.c.l.b16 %v6376
  %v6670 = vunpack.c.h.b16 %v6376
  %v6671 = vunpack.c.l.b16 %v6377
  %v6672 = vunpack.c.h.b16 %v6377
  %v6673 = vunpack.c.l.b16 %v6378
  %v6674 = vunpack.c.h.b16 %v6378
  %v6675 = vunpack.c.l.b16 %v6379
  %v6676 = vunpack.c.h.b16 %v6379
  %v6677 = vunpack.c.l.b16 %v6380
  %v6678 = vunpack.c.h.b16 %v6380
  %v6679 = vunpack.c.l.b16 %v6381
  %v6680 = vunpack.c.h.b16 %v6381
  %v6681 = vunpack.c.l.b16 %v6382
  %v6682 = vunpack.c.h.b16 %v6382
  %v6683 = vunpack.c.l.b16 %v6383
  %v6684 = vunpack.c.h.b16 %v6383
  %v6685 = vunpack.c.l.b16 %v6384
  %v6686 = vunpack.c.h.b16 %v6384
  %v6687 = vunpack.c.l.b16 %v6385
  %v6688 = vunpack.c.h.b16 %v6385
  %v6689 = vunpack.c.l.b16 %v6386
  %v6690 = vunpack.c.h.b16 %v6386
  %v6691 = vunpack.c.l.b16 %v6387
  %v6692 = vunpack.c.h.b16 %v6387
  %v6693 = vunpack.c.l.b16 %v6388
  %v6694 = vunpack.c.h.b16 %v6388
  %v6695 = vunpack.c.l.b16 %v6389
  %v6696 = vunpack.c.h.b16 %v6389
  %v6697 = vunpack.c.l.b16 %v6390
  %v6698 = vunpack.c.h.b16 %v6390
  %v6699 = vunpack.c.l.b16 %v6391
  %v6700 = vunpack.c.h.b16 %v6391
  %v6701 = vunpack.c.l.b16 %v6392
  %v6702 = vunpack.c.h.b16 %v6392
  %v6703 = vunpack.c.l.b16 %v6393
  %v6704 = vunpack.c.h.b16 %v6393
  %v6705 = vunpack.c.l.b16 %v6394
  %v6706 = vunpack.c.h.b16 %v6394
  %v6707 = vunpack.c.l.b16 %v6395
  %v6708 = vunpack.c.h.b16 %v6395
  %v6709 = vunpack.c.l.b16 %v6396
  %v6710 = vunpack.c.h.b16 %v6396
  %v6711 = vunpack.c.l.b16 %v6397
  %v6712 = vunpack.c.h.b16 %v6397
  %v6713 = vunpack.c.l.b16 %v6398
  %v6714 = vunpack.c.h.b16 %v6398
  %v6715 = vunpack.c.l.b16 %v6399
  %v6716 = vunpack.c.h.b16 %v6399
  %v6717 = vunpack.c.l.b16 %v6400
  %v6718 = vunpack.c.h.b16 %v6400
  %v6719 = vunpack.c.l.b16 %v6401
  %v6720 = vunpack.c.h.b16 %v6401
  %v6721 = vunpack.c.l.b16 %v6402
  %v6722 = vunpack.c.h.b16 %v6402
  %v6723 = vunpack.c.l.b16 %v6403
  %v6724 = vunpack.c.h.b16 %v6403
  %v6725 = vunpack.c.l.b16 %v6404
  %v6726 = vunpack.c.h.b16 %v6404
  %v6727 = vunpack.c.l.b16 %v6405
  %v6728 = vunpack.c.h.b16 %v6405
  %v6729 = vunpack.c.l.b16 %v6406
  %v6730 = vunpack.c.h.b16 %v6406
  %v6731 = vunpack.c.l.b16 %v6407
  %v6732 = vunpack.c.h.b16 %v6407
  %v6733 = vunpack.c.l.b16 %v6408
  %v6734 = vunpack.c.h.b16 %v6408
  %v6735 = vunpack.c.l.b16 %v6409
  %v6736 = vunpack.c.h.b16 %v6409
  %v6737 = vunpack.c.l.b16 %v6410
  %v6738 = vunpack.c.h.b16 %v6410
  %v6739 = vunpack.c.l.b16 %v6411
  %v6740 = vunpack.c.h.b16 %v6411
  %v6741 = vunpack.c.l.b16 %v6412
  %v6742 = vunpack.c.h.b16 %v6412
  %v6743 = vunpack.c.l.b16 %v6413
  %v6744 = vunpack.c.h.b16 %v6413
  %v6745 = vunpack.c.l.b16 %v6414
  %v6746 = vunpack.c.h.b16 %v6414
  %v6747 = vunpack.c.l.b16 %v6415
  %v6748 = vunpack.c.h.b16 %v6415
  %v6749 = vunpack.c.l.b16 %v6416
  %v6750 = vunpack.c.h.b16 %v6416
  %v6751 = vunpack.c.l.b16 %v6417
  %v6752 = vunpack.c.h.b16 %v6417
  %v6753 = vunpack.c.l.b16 %v6418
  %v6754 = vunpack.c.h.b16 %v6418
  %v6755 = vunpack.c.l.b16 %v6419
  %v6756 = vunpack.c.h.b16 %v6419
  %v6757 = vunpack.c.l.b16 %v6420
  %v6758 = vunpack.c.h.b16 %v6420
  %v6759 = vunpack.c.l.b16 %v6421
  %v6760 = vunpack.c.h.b16 %v6421
  %v6761 = vunpack.c.l.b16 %v6422
  %v6762 = vunpack.c.h.b16 %v6422
  %v6763 = vunpack.c.l.b16 %v6423
  %v6764 = vunpack.c.h.b16 %v6423
  %v6765 = vunpack.c.l.b16 %v6424
  %v6766 = vunpack.c.h.b16 %v6424
  %v6767 = vunpack.c.l.b16 %v6425
  %v6768 = vunpack.c.h.b16 %v6425
  %v6769 = vunpack.c.l.b16 %v6426
  %v6770 = vunpack.c.h.b16 %v6426
  %v6771 = vunpack.c.l.b16 %v6427
  %v6772 = vunpack.c.h.b16 %v6427
  %v6773 = vunpack.c.l.b16 %v6428
  %v6774 = vunpack.c.h.b16 %v6428
  %v6775 = vunpack.c.l.b16 %v6429
  %v6776 = vunpack.c.h.b16 %v6429
  %v6777 = vunpack.c.l.b16 %v6430
  %v6778 = vunpack.c.h.b16 %v6430
  %v6779 = vunpack.c.l.b16 %v6431
  %v6780 = vunpack.c.h.b16 %v6431
  %v6781 = vunpack.c.l.b16 %v6432
  %v6782 = vunpack.c.h.b16 %v6432
  %v6783 = vunpack.c.l.b16 %v6433
  %v6784 = vunpack.c.h.b16 %v6433
  %v6785 = vunpack.c.l.b16 %v6434
  %v6786 = vunpack.c.h.b16 %v6434
  %v6787 = vunpack.c.l.b16 %v6435
  %v6788 = vunpack.c.h.b16 %v6435
  %v6789 = vunpack.c.l.b16 %v6436
  %v6790 = vunpack.c.h.b16 %v6436
  %v6791 = vunpack.c.l.b16 %v6437
  %v6792 = vunpack.c.h.b16 %v6437
  %v6793 = vunpack.c.l.b16 %v6438
  %v6794 = vunpack.c.h.b16 %v6438
  %v6795 = vunpack.c.l.b16 %v6439
  %v6796 = vunpack.c.h.b16 %v6439
  %v6797 = vunpack.c.l.b16 %v6440
  %v6798 = vunpack.c.h.b16 %v6440
  %v6799 = vunpack.c.l.b16 %v6441
  %v6800 = vunpack.c.h.b16 %v6441
  %v6801 = vunpack.c.l.b16 %v6442
  %v6802 = vunpack.c.h.b16 %v6442
  %v6803 = vunpack.c.l.b16 %v6443
  %v6804 = vunpack.c.h.b16 %v6443
  %v6805 = vunpack.c.l.b16 %v6444
  %v6806 = vunpack.c.h.b16 %v6444
  %v6807 = vunpack.c.l.b16 %v6445
  %v6808 = vunpack.c.h.b16 %v6445
  %v6809 = vunpack.c.l.b16 %v6446
  %v6810 = vunpack.c.h.b16 %v6446
  %v6811 = vunpack.c.l.b16 %v6447
  %v6812 = vunpack.c.h.b16 %v6447
  %v6813 = vunpack.c.l.b16 %v6448
  %v6814 = vunpack.c.h.b16 %v6448
  %v6815 = vunpack.c.l.b16 %v6449
  %v6816 = vunpack.c.h.b16 %v6449
  %v6817 = vunpack.c.l.b16 %v6450
  %v6818 = vunpack.c.h.b16 %v6450
  %v6819 = vunpack.c.l.b16 %v6451
  %v6820 = vunpack.c.h.b16 %v6451
  %v6821 = vunpack.c.l.b16 %v6452
  %v6822 = vunpack.c.h.b16 %v6452
  %v6823 = vunpack.c.l.b16 %v6453
  %v6824 = vunpack.c.h.b16 %v6453
  %v6825 = vunpack.c.l.b16 %v6454
  %v6826 = vunpack.c.h.b16 %v6454
  %v6827 = vunpack.c.l.b16 %v6455
  %v6828 = vunpack.c.h.b16 %v6455
  %v6829 = vunpack.c.l.b16 %v6456
  %v6830 = vunpack.c.h.b16 %v6456
  %v6831 = vunpack.c.l.b16 %v6457
  %v6832 = vunpack.c.h.b16 %v6457
  %v6833 = vunpack.c.l.b16 %v6458
  %v6834 = vunpack.c.h.b16 %v6458
  %v6835 = vunpack.c.l.b16 %v6459
  %v6836 = vunpack.c.h.b16 %v6459
  %v6837 = vunpack.c.l.b16 %v6460
  %v6838 = vunpack.c.h.b16 %v6460
  %v6839 = vunpack.c.l.b16 %v6461
  %v6840 = vunpack.c.h.b16 %v6461
  %v6841 = vunpack.c.l.b16 %v6462
  %v6842 = vunpack.c.h.b16 %v6462
  %v6843 = vunpack.c.l.b16 %v6463
  %v6844 = vunpack.c.h.b16 %v6463
  %v6845 = vunpack.c.l.b16 %v6464
  %v6846 = vunpack.c.h.b16 %v6464
  %v6847 = vunpack.c.l.b16 %v6465
  %v6848 = vunpack.c.h.b16 %v6465
  %v6849 = vunpack.c.l.b16 %v6466
  %v6850 = vunpack.c.h.b16 %v6466
  %v6851 = vunpack.c.l.b16 %v6467
  %v6852 = vunpack.c.h.b16 %v6467
  %v6853 = vunpack.c.l.b16 %v6468
  %v6854 = vunpack.c.h.b16 %v6468
  %v6855 = vunpack.c.l.b16 %v6469
  %v6856 = vunpack.c.h.b16 %v6469
  %v6857 = vunpack.c.l.b16 %v6470
  %v6858 = vunpack.c.h.b16 %v6470
  %v6859 = vunpack.c.l.b16 %v6471
  %v6860 = vunpack.c.h.b16 %v6471
  %v6861 = vunpack.c.l.b16 %v6472
  %v6862 = vunpack.c.h.b16 %v6472
  %v6863 = vunpack.c.l.b16 %v6473
  %v6864 = vunpack.c.h.b16 %v6473
  %v6865 = vunpack.c.l.b16 %v6474
  %v6866 = vunpack.c.h.b16 %v6474
  %v6867 = vunpack.c.l.b16 %v6475
  %v6868 = vunpack.c.h.b16 %v6475
  %v6869 = vunpack.c.l.b16 %v6476
  %v6870 = vunpack.c.h.b16 %v6476
  %v6871 = vunpack.c.l.b16 %v6477
  %v6872 = vunpack.c.h.b16 %v6477
  %v6873 = vunpack.c.l.b16 %v6478
  %v6874 = vunpack.c.h.b16 %v6478
  %v6875 = vunpack.c.l.b16 %v6479
  %v6876 = vunpack.c.h.b16 %v6479
  %v6877 = vunpack.c.l.b16 %v6480
  %v6878 = vunpack.c.h.b16 %v6480
  %v6879 = vunpack.c.l.b16 %v6481
  %v6880 = vunpack.c.h.b16 %v6481
  %v6881 = vunpack.c.l.b16 %v6482
  %v6882 = vunpack.c.h.b16 %v6482
  %v6883 = vunpack.c.l.b16 %v6483
  %v6884 = vunpack.c.h.b16 %v6483
  %v6885 = vunpack.c.l.b16 %v6484
  %v6886 = vunpack.c.h.b16 %v6484
  %v6887 = vunpack.c.l.b16 %v6485
  %v6888 = vunpack.c.h.b16 %v6485
  %v6889 = vunpack.c.l.b16 %v6486
  %v6890 = vunpack.c.h.b16 %v6486
  %v6891 = vunpack.c.l.b16 %v6487
  %v6892 = vunpack.c.h.b16 %v6487
  %v6893 = vunpack.c.l.b16 %v6488
  %v6894 = vunpack.c.h.b16 %v6488
  %v6895 = vunpack.c.l.b16 %v6489
  %v6896 = vunpack.c.h.b16 %v6489
  %v6897 = vunpack.c.l.b16 %v6490
  %v6898 = vunpack.c.h.b16 %v6490
  %v6899 = vunpack.c.l.b16 %v6491
  %v6900 = vunpack.c.h.b16 %v6491
  %v6901 = vunpack.c.l.b16 %v6492
  %v6902 = vunpack.c.h.b16 %v6492
  %v6903 = vunpack.c.l.b16 %v6493
  %v6904 = vunpack.c.h.b16 %v6493
  %v6905 = vunpack.c.l.b16 %v6494
  %v6906 = vunpack.c.h.b16 %v6494
  %v6907 = vunpack.c.l.b16 %v6495
  %v6908 = vunpack.c.h.b16 %v6495
  %v6909 = vunpack.c.l.b16 %v6496
  %v6910 = vunpack.c.h.b16 %v6496
  %v6911 = vunpack.c.l.b16 %v6497
  %v6912 = vunpack.c.h.b16 %v6497
  %v6913 = vunpack.c.l.b16 %v6498
  %v6914 = vunpack.c.h.b16 %v6498
  %v6915 = vunpack.c.l.b16 %v6499
  %v6916 = vunpack.c.h.b16 %v6499
  %v6917 = vunpack.c.l.b16 %v6500
  %v6918 = vunpack.c.h.b16 %v6500
  %v6919 = vunpack.c.l.b16 %v6501
  %v6920 = vunpack.c.h.b16 %v6501
  %v6921 = vunpack.c.l.b16 %v6502
  %v6922 = vunpack.c.h.b16 %v6502
  %v6923 = vunpack.c.l.b16 %v6503
  %v6924 = vunpack.c.h.b16 %v6503
  %v6925 = vunpack.c.l.b16 %v6504
  %v6926 = vunpack.c.h.b16 %v6504
  %v6927 = vunpack.c.l.b16 %v6505
  %v6928 = vunpack.c.h.b16 %v6505
  %v6929 = vunpack.c.l.b16 %v6506
  %v6930 = vunpack.c.h.b16 %v6506
  %v6931 = vunpack.c.l.b16 %v6507
  %v6932 = vunpack.c.h.b16 %v6507
  %v6933 = vunpack.c.l.b16 %v6508
  %v6934 = vunpack.c.h.b16 %v6508
  %v6935 = vunpack.c.l.b16 %v6509
  %v6936 = vunpack.c.h.b16 %v6509
  %v6937 = vunpack.c.l.b16 %v6510
  %v6938 = vunpack.c.h.b16 %v6510
  %v6939 = vunpack.c.l.b16 %v6511
  %v6940 = vunpack.c.h.b16 %v6511
  %v6941 = vunpack.c.l.b16 %v6512
  %v6942 = vunpack.c.h.b16 %v6512
  %v6943 = vunpack.c.l.b16 %v6513
  %v6944 = vunpack.c.h.b16 %v6513
  %v6945 = vunpack.c.l.b16 %v6514
  %v6946 = vunpack.c.h.b16 %v6514
  %v6947 = vpack.c.b16 %v6661, %v6659
  %v6948 = vpack.c.b16 %v6662, %v6660
  %v6949 = vpack.c.b16 %v6665, %v6663
  %v6950 = vpack.c.b16 %v6666, %v6664
  %v6951 = vpack.c.b16 %v6669, %v6667
  %v6952 = vpack.c.b16 %v6670, %v6668
  %v6953 = vpack.c.b16 %v6673, %v6671
  %v6954 = vpack.c.b16 %v6674, %v6672
  %v6955 = vpack.c.b16 %v6677, %v6675
  %v6956 = vpack.c.b16 %v6678, %v6676
  %v6957 = vpack.c.b16 %v6681, %v6679
  %v6958 = vpack.c.b16 %v6682, %v6680
  %v6959 = vpack.c.b16 %v6685, %v6683
  %v6960 = vpack.c.b16 %v6686, %v6684
  %v6961 = vpack.c.b16 %v6689, %v6687
  %v6962 = vpack.c.b16 %v6690, %v6688
  %v6963 = vpack.c.b16 %v6693, %v6691
  %v6964 = vpack.c.b16 %v6694, %v6692
  %v6965 = vpack.c.b16 %v6697, %v6695
  %v6966 = vpack.c.b16 %v6698, %v6696
  %v6967 = vpack.c.b16 %v6701, %v6699
  %v6968 = vpack.c.b16 %v6702, %v6700
  %v6969 = vpack.c.b16 %v6705, %v6703
  %v6970 = vpack.c.b16 %v6706, %v6704
  %v6971 = vpack.c.b16 %v6709, %v6707
  %v6972 = vpack.c.b16 %v6710, %v6708
  %v6973 = vpack.c.b16 %v6713, %v6711
  %v6974 = vpack.c.b16 %v6714, %v6712
  %v6975 = vpack.c.b16 %v6717, %v6715
  %v6976 = vpack.c.b16 %v6718, %v6716
  %v6977 = vpack.c.b16 %v6721, %v6719
  %v6978 = vpack.c.b16 %v6722, %v6720
  %v6979 = vpack.c.b16 %v6725, %v6723
  %v6980 = vpack.c.b16 %v6726, %v6724
  %v6981 = vpack.c.b16 %v6729, %v6727
  %v6982 = vpack.c.b16 %v6730, %v6728
  %v6983 = vpack.c.b16 %v6733, %v6731
  %v6984 = vpack.c.b16 %v6734, %v6732
  %v6985 = vpack.c.b16 %v6737, %v6735
  %v6986 = vpack.c.b16 %v6738, %v6736
  %v6987 = vpack.c.b16 %v6741, %v6739
  %v6988 = vpack.c.b16 %v6742, %v6740
  %v6989 = vpack.c.b16 %v6745, %v6743
  %v6990 = vpack.c.b16 %v6746, %v6744
  %v6991 = vpack.c.b16 %v6749, %v6747
  %v6992 = vpack.c.b16 %v6750, %v6748
  %v6993 = vpack.c.b16 %v6753, %v6751
  %v6994 = vpack.c.b16 %v6754, %v6752
  %v6995 = vpack.c.b16 %v6757, %v6755
  %v6996 = vpack.c.b16 %v6758, %v6756
  %v6997 = vpack.c.b16 %v6761, %v6759
  %v6998 = vpack.c.b16 %v6762, %v6760
  %v6999 = vpack.c.b16 %v6765, %v6763
  %v7000 = vpack.c.b16 %v6766, %v6764
  %v7001 = vpack.c.b16 %v6769, %v6767
  %v7002 = vpack.c.b16 %v6770, %v6768
  %v7003 = vpack.c.b16 %v6773, %v6771
  %v7004 = vpack.c.b16 %v6774, %v6772
  %v7005 = vpack.c.b16 %v6777, %v6775
  %v7006 = vpack.c.b16 %v6778, %v6776
  %v7007 = vpack.c.b16 %v6781, %v6779
  %v7008 = vpack.c.b16 %v6782, %v6780
  %v7009 = vpack.c.b16 %v6785, %v6783
  %v7010 = vpack.c.b16 %v6786, %v6784
  %v7011 = vpack.c.b16 %v6789, %v6787
  %v7012 = vpack.c.b16 %v6790, %v6788
  %v7013 = vpack.c.b16 %v6793, %v6791
  %v7014 = vpack.c.b16 %v6794, %v6792
  %v7015 = vpack.c.b16 %v6797, %v6795
  %v7016 = vpack.c.b16 %v6798, %v6796
  %v7017 = vpack.c.b16 %v6801, %v6799
  %v7018 = vpack.c.b16 %v6802, %v6800
  %v7019 = vpack.c.b16 %v6805, %v6803
  %v7020 = vpack.c.b16 %v6806, %v6804
  %v7021 = vpack.c.b16 %v6809, %v6807
  %v7022 = vpack.c.b16 %v6810, %v6808
  %v7023 = vpack.c.b16 %v6813, %v6811
  %v7024 = vpack.c.b16 %v6814, %v6812
  %v7025 = vpack.c.b16 %v6817, %v6815
  %v7026 = vpack.c.b16 %v6818, %v6816
  %v7027 = vpack.c.b16 %v6821, %v6819
  %v7028 = vpack.c.b16 %v6822, %v6820
  %v7029 = vpack.c.b16 %v6825, %v6823
  %v7030 = vpack.c.b16 %v6826, %v6824
  %v7031 = vpack.c.b16 %v6829, %v6827
  %v7032 = vpack.c.b16 %v6830, %v6828
  %v7033 = vpack.c.b16 %v6833, %v6831
  %v7034 = vpack.c.b16 %v6834, %v6832
  %v7035 = vpack.c.b16 %v6837, %v6835
  %v7036 = vpack.c.b16 %v6838, %v6836
  %v7037 = vpack.c.b16 %v6841, %v6839
  %v7038 = vpack.c.b16 %v6842, %v6840
  %v7039 = vpack.c.b16 %v6845, %v6843
  %v7040 = vpack.c.b16 %v6846, %v6844
  %v7041 = vpack.c.b16 %v6849, %v6847
  %v7042 = vpack.c.b16 %v6850, %v6848
  %v7043 = vpack.c.b16 %v6853, %v6851
  %v7044 = vpack.c.b16 %v6854, %v6852
  %v7045 = vpack.c.b16 %v6857, %v6855
  %v7046 = vpack.c.b16 %v6858, %v6856
  %v7047 = vpack.c.b16 %v6861, %v6859
  %v7048 = vpack.c.b16 %v6862, %v6860
  %v7049 = vpack.c.b16 %v6865, %v6863
  %v7050 = vpack.c.b16 %v6866, %v6864
  %v7051 = vpack.c.b16 %v6869, %v6867
  %v7052 = vpack.c.b16 %v6870, %v6868
  %v7053 = vpack.c.b16 %v6873, %v6871
  %v7054 = vpack.c.b16 %v6874, %v6872
  %v7055 = vpack.c.b16 %v6877, %v6875
  %v7056 = vpack.c.b16 %v6878, %v6876
  %v7057 = vpack.c.b16 %v6881, %v6879
  %v7058 = vpack.c.b16 %v6882, %v6880
  %v7059 = vpack.c.b16 %v6885, %v6883
  %v7060 = vpack.c.b16 %v6886, %v6884
  %v7061 = vpack.c.b16 %v6889, %v6887
  %v7062 = vpack.c.b16 %v6890, %v6888
  %v7063 = vpack.c.b16 %v6893, %v6891
  %v7064 = vpack.c.b16 %v6894, %v6892
  %v7065 = vpack.c.b16 %v6897, %v6895
  %v7066 = vpack.c.b16 %v6898, %v6896
  %v7067 = vpack.c.b16 %v6901, %v6899
  %v7068 = vpack.c.b16 %v6902, %v6900
  %v7069 = vpack.c.b16 %v6905, %v6903
  %v7070 = vpack.c.b16 %v6906, %v6904
  %v7071 = vpack.c.b16 %v6909, %v6907
  %v7072 = vpack.c.b16 %v6910, %v6908
  %v7073 = vpack.c.b16 %v6913, %v6911
  %v7074 = vpack.c.b16 %v6914, %v6912
  %v7075 = vpack.c.b16 %v6917, %v6915
  %v7076 = vpack.c.b16 %v6918, %v6916
  %v7077 = vpack.c.b16 %v6921, %v6919
  %v7078 = vpack.c.b16 %v6922, %v6920
  %v7079 = vpack.c.b16 %v6925, %v6923
  %v7080 = vpack.c.b16 %v6926, %v6924
  %v7081 = vpack.c.b16 %v6929, %v6927
  %v7082 = vpack.c.b16 %v6930, %v6928
  %v7083 = vpack.c.b16 %v6933, %v6931
  %v7084 = vpack.c.b16 %v6934, %v6932
  %v7085 = vpack.c.b16 %v6937, %v6935
  %v7086 = vpack.c.b16 %v6938, %v6936
  %v7087 = vpack.c.b16 %v6941, %v6939
  %v7088 = vpack.c.b16 %v6942, %v6940
  %v7089 = vpack.c.b16 %v6945, %v6943
  %v7090 = vpack.c.b16 %v6946, %v6944
  %7235 = vmatpush.bf16.msra.mxu0 %v6961
  %7236 = vmatpush.bf16.msra.mxu0 %v6959
  %7237 = vmatpush.bf16.msra.mxu0 %v6957
  %7238 = vmatpush.bf16.msra.mxu0 %v6955
  %7239 = vmatpush.bf16.msra.mxu0 %v6953
  %7240 = vmatpush.bf16.msra.mxu0 %v6951
  %7241 = vmatpush.bf16.msra.mxu0 %v6949
  %7242 = vmatpush.bf16.msra.mxu0 %v6947
  %7243 = vmatmul.bf16.gmra.mxu0 %v6361
  %v7244 = vpop.f32.mrf.mxu0
  %v7245 = vadd.f32 0.0, %v7244
  %v7246 = vpop.f32.mrf.mxu0
  %7247 = vdwg.mxu0
  %7248 = vmatpush.bf16.msra.mxu0 %v6977
  %7249 = vmatpush.bf16.msra.mxu0 %v6975
  %7250 = vmatpush.bf16.msra.mxu0 %v6973
  %7251 = vmatpush.bf16.msra.mxu0 %v6971
  %7252 = vmatpush.bf16.msra.mxu0 %v6969
  %7253 = vmatpush.bf16.msra.mxu0 %v6967
  %7254 = vmatpush.bf16.msra.mxu0 %v6965
  %7255 = vmatpush.bf16.msra.mxu0 %v6963
  %7256 = vmatmul.bf16.gmra.mxu0 %v6362
  %v7257 = vpop.f32.mrf.mxu0
  %v7258 = vadd.f32 %v7245, %v7257
  %v7259 = vpop.f32.mrf.mxu0
  %7260 = vdwg.mxu0
  %7261 = vmatpush.bf16.msra.mxu0 %v6993
  %7262 = vmatpush.bf16.msra.mxu0 %v6991
  %7263 = vmatpush.bf16.msra.mxu0 %v6989
  %7264 = vmatpush.bf16.msra.mxu0 %v6987
  %7265 = vmatpush.bf16.msra.mxu0 %v6985
  %7266 = vmatpush.bf16.msra.mxu0 %v6983
  %7267 = vmatpush.bf16.msra.mxu0 %v6981
  %7268 = vmatpush.bf16.msra.mxu0 %v6979
  %7269 = vmatmul.bf16.gmra.mxu0 %v6363
  %v7270 = vpop.f32.mrf.mxu0
  %v7271 = vadd.f32 %v7258, %v7270
  %v7272 = vpop.f32.mrf.mxu0
  %7273 = vdwg.mxu0
  %7274 = vmatpush.bf16.msra.mxu0 %v7009
  %7275 = vmatpush.bf16.msra.mxu0 %v7007
  %7276 = vmatpush.bf16.msra.mxu0 %v7005
  %7277 = vmatpush.bf16.msra.mxu0 %v7003
  %7278 = vmatpush.bf16.msra.mxu0 %v7001
  %7279 = vmatpush.bf16.msra.mxu0 %v6999
  %7280 = vmatpush.bf16.msra.mxu0 %v6997
  %7281 = vmatpush.bf16.msra.mxu0 %v6995
  %7282 = vmatmul.bf16.gmra.mxu0 %v6364
  %v7283 = vpop.f32.mrf.mxu0
  %v7284 = vadd.f32 %v7271, %v7283
  %v7285 = vpop.f32.mrf.mxu0
  %7286 = vdwg.mxu0
  %7287 = vmatpush.bf16.msra.mxu0 %v7025
  %7288 = vmatpush.bf16.msra.mxu0 %v7023
  %7289 = vmatpush.bf16.msra.mxu0 %v7021
  %7290 = vmatpush.bf16.msra.mxu0 %v7019
  %7291 = vmatpush.bf16.msra.mxu0 %v7017
  %7292 = vmatpush.bf16.msra.mxu0 %v7015
  %7293 = vmatpush.bf16.msra.mxu0 %v7013
  %7294 = vmatpush.bf16.msra.mxu0 %v7011
  %7295 = vmatmul.bf16.gmra.mxu0 %v6365
  %v7296 = vpop.f32.mrf.mxu0
  %v7297 = vadd.f32 %v7284, %v7296
  %v7298 = vpop.f32.mrf.mxu0
  %7299 = vdwg.mxu0
  %7300 = vmatpush.bf16.msra.mxu0 %v7041
  %7301 = vmatpush.bf16.msra.mxu0 %v7039
  %7302 = vmatpush.bf16.msra.mxu0 %v7037
  %7303 = vmatpush.bf16.msra.mxu0 %v7035
  %7304 = vmatpush.bf16.msra.mxu0 %v7033
  %7305 = vmatpush.bf16.msra.mxu0 %v7031
  %7306 = vmatpush.bf16.msra.mxu0 %v7029
  %7307 = vmatpush.bf16.msra.mxu0 %v7027
  %7308 = vmatmul.bf16.gmra.mxu0 %v6366
  %v7309 = vpop.f32.mrf.mxu0
  %v7310 = vadd.f32 %v7297, %v7309
  %v7311 = vpop.f32.mrf.mxu0
  %7312 = vdwg.mxu0
  %7313 = vmatpush.bf16.msra.mxu0 %v7057
  %7314 = vmatpush.bf16.msra.mxu0 %v7055
  %7315 = vmatpush.bf16.msra.mxu0 %v7053
  %7316 = vmatpush.bf16.msra.mxu0 %v7051
  %7317 = vmatpush.bf16.msra.mxu0 %v7049
  %7318 = vmatpush.bf16.msra.mxu0 %v7047
  %7319 = vmatpush.bf16.msra.mxu0 %v7045
  %7320 = vmatpush.bf16.msra.mxu0 %v7043
  %7321 = vmatmul.bf16.gmra.mxu0 %v6367
  %v7322 = vpop.f32.mrf.mxu0
  %v7323 = vadd.f32 %v7310, %v7322
  %v7324 = vpop.f32.mrf.mxu0
  %7325 = vdwg.mxu0
  %7326 = vmatpush.bf16.msra.mxu0 %v7073
  %7327 = vmatpush.bf16.msra.mxu0 %v7071
  %7328 = vmatpush.bf16.msra.mxu0 %v7069
  %7329 = vmatpush.bf16.msra.mxu0 %v7067
  %7330 = vmatpush.bf16.msra.mxu0 %v7065
  %7331 = vmatpush.bf16.msra.mxu0 %v7063
  %7332 = vmatpush.bf16.msra.mxu0 %v7061
  %7333 = vmatpush.bf16.msra.mxu0 %v7059
  %7334 = vmatmul.bf16.gmra.mxu0 %v6368
  %v7335 = vpop.f32.mrf.mxu0
  %v7336 = vadd.f32 %v7323, %v7335
  %v7337 = vpop.f32.mrf.mxu0
  %7338 = vdwg.mxu0
  %7339 = vmatpush.bf16.msra.mxu0 %v7089
  %7340 = vmatpush.bf16.msra.mxu0 %v7087
  %7341 = vmatpush.bf16.msra.mxu0 %v7085
  %7342 = vmatpush.bf16.msra.mxu0 %v7083
  %7343 = vmatpush.bf16.msra.mxu0 %v7081
  %7344 = vmatpush.bf16.msra.mxu0 %v7079
  %7345 = vmatpush.bf16.msra.mxu0 %v7077
  %7346 = vmatpush.bf16.msra.mxu0 %v7075
  %7347 = vmatmul.bf16.gmra.mxu0 %v6369
  %v7348 = vpop.f32.mrf.mxu0
  %v7349 = vadd.f32 %v7336, %v7348
  %v7350 = vpop.f32.mrf.mxu0
  %7351 = vdwg.mxu0
  %7352 = vmatpush.bf16.msra.mxu0 %v6962
  %7353 = vmatpush.bf16.msra.mxu0 %v6960
  %7354 = vmatpush.bf16.msra.mxu0 %v6958
  %7355 = vmatpush.bf16.msra.mxu0 %v6956
  %7356 = vmatpush.bf16.msra.mxu0 %v6954
  %7357 = vmatpush.bf16.msra.mxu0 %v6952
  %7358 = vmatpush.bf16.msra.mxu0 %v6950
  %7359 = vmatpush.bf16.msra.mxu0 %v6948
  %7360 = vmatmul.bf16.gmra.mxu0 %v6361
  %v7361 = vpop.f32.mrf.mxu0
  %v7362 = vadd.f32 0.0, %v7361
  %v7363 = vpop.f32.mrf.mxu0
  %7364 = vdwg.mxu0
  %7365 = vmatpush.bf16.msra.mxu0 %v6978
  %7366 = vmatpush.bf16.msra.mxu0 %v6976
  %7367 = vmatpush.bf16.msra.mxu0 %v6974
  %7368 = vmatpush.bf16.msra.mxu0 %v6972
  %7369 = vmatpush.bf16.msra.mxu0 %v6970
  %7370 = vmatpush.bf16.msra.mxu0 %v6968
  %7371 = vmatpush.bf16.msra.mxu0 %v6966
  %7372 = vmatpush.bf16.msra.mxu0 %v6964
  %7373 = vmatmul.bf16.gmra.mxu0 %v6362
  %v7374 = vpop.f32.mrf.mxu0
  %v7375 = vadd.f32 %v7362, %v7374
  %v7376 = vpop.f32.mrf.mxu0
  %7377 = vdwg.mxu0
  %7378 = vmatpush.bf16.msra.mxu0 %v6994
  %7379 = vmatpush.bf16.msra.mxu0 %v6992
  %7380 = vmatpush.bf16.msra.mxu0 %v6990
  %7381 = vmatpush.bf16.msra.mxu0 %v6988
  %7382 = vmatpush.bf16.msra.mxu0 %v6986
  %7383 = vmatpush.bf16.msra.mxu0 %v6984
  %7384 = vmatpush.bf16.msra.mxu0 %v6982
  %7385 = vmatpush.bf16.msra.mxu0 %v6980
  %7386 = vmatmul.bf16.gmra.mxu0 %v6363
  %v7387 = vpop.f32.mrf.mxu0
  %v7388 = vadd.f32 %v7375, %v7387
  %v7389 = vpop.f32.mrf.mxu0
  %7390 = vdwg.mxu0
  %7391 = vmatpush.bf16.msra.mxu0 %v7010
  %7392 = vmatpush.bf16.msra.mxu0 %v7008
  %7393 = vmatpush.bf16.msra.mxu0 %v7006
  %7394 = vmatpush.bf16.msra.mxu0 %v7004
  %7395 = vmatpush.bf16.msra.mxu0 %v7002
  %7396 = vmatpush.bf16.msra.mxu0 %v7000
  %7397 = vmatpush.bf16.msra.mxu0 %v6998
  %7398 = vmatpush.bf16.msra.mxu0 %v6996
  %7399 = vmatmul.bf16.gmra.mxu0 %v6364
  %v7400 = vpop.f32.mrf.mxu0
  %v7401 = vadd.f32 %v7388, %v7400
  %v7402 = vpop.f32.mrf.mxu0
  %7403 = vdwg.mxu0
  %7404 = vmatpush.bf16.msra.mxu0 %v7026
  %7405 = vmatpush.bf16.msra.mxu0 %v7024
  %7406 = vmatpush.bf16.msra.mxu0 %v7022
  %7407 = vmatpush.bf16.msra.mxu0 %v7020
  %7408 = vmatpush.bf16.msra.mxu0 %v7018
  %7409 = vmatpush.bf16.msra.mxu0 %v7016
  %7410 = vmatpush.bf16.msra.mxu0 %v7014
  %7411 = vmatpush.bf16.msra.mxu0 %v7012
  %7412 = vmatmul.bf16.gmra.mxu0 %v6365
  %v7413 = vpop.f32.mrf.mxu0
  %v7414 = vadd.f32 %v7401, %v7413
  %v7415 = vpop.f32.mrf.mxu0
  %7416 = vdwg.mxu0
  %7417 = vmatpush.bf16.msra.mxu0 %v7042
  %7418 = vmatpush.bf16.msra.mxu0 %v7040
  %7419 = vmatpush.bf16.msra.mxu0 %v7038
  %7420 = vmatpush.bf16.msra.mxu0 %v7036
  %7421 = vmatpush.bf16.msra.mxu0 %v7034
  %7422 = vmatpush.bf16.msra.mxu0 %v7032
  %7423 = vmatpush.bf16.msra.mxu0 %v7030
  %7424 = vmatpush.bf16.msra.mxu0 %v7028
  %7425 = vmatmul.bf16.gmra.mxu0 %v6366
  %v7426 = vpop.f32.mrf.mxu0
  %v7427 = vadd.f32 %v7414, %v7426
  %v7428 = vpop.f32.mrf.mxu0
  %7429 = vdwg.mxu0
  %7430 = vmatpush.bf16.msra.mxu0 %v7058
  %7431 = vmatpush.bf16.msra.mxu0 %v7056
  %7432 = vmatpush.bf16.msra.mxu0 %v7054
  %7433 = vmatpush.bf16.msra.mxu0 %v7052
  %7434 = vmatpush.bf16.msra.mxu0 %v7050
  %7435 = vmatpush.bf16.msra.mxu0 %v7048
  %7436 = vmatpush.bf16.msra.mxu0 %v7046
  %7437 = vmatpush.bf16.msra.mxu0 %v7044
  %7438 = vmatmul.bf16.gmra.mxu0 %v6367
  %v7439 = vpop.f32.mrf.mxu0
  %v7440 = vadd.f32 %v7427, %v7439
  %v7441 = vpop.f32.mrf.mxu0
  %7442 = vdwg.mxu0
  %7443 = vmatpush.bf16.msra.mxu0 %v7074
  %7444 = vmatpush.bf16.msra.mxu0 %v7072
  %7445 = vmatpush.bf16.msra.mxu0 %v7070
  %7446 = vmatpush.bf16.msra.mxu0 %v7068
  %7447 = vmatpush.bf16.msra.mxu0 %v7066
  %7448 = vmatpush.bf16.msra.mxu0 %v7064
  %7449 = vmatpush.bf16.msra.mxu0 %v7062
  %7450 = vmatpush.bf16.msra.mxu0 %v7060
  %7451 = vmatmul.bf16.gmra.mxu0 %v6368
  %v7452 = vpop.f32.mrf.mxu0
  %v7453 = vadd.f32 %v7440, %v7452
  %v7454 = vpop.f32.mrf.mxu0
  %7455 = vdwg.mxu0
  %7456 = vmatpush.bf16.msra.mxu0 %v7090
  %7457 = vmatpush.bf16.msra.mxu0 %v7088
  %7458 = vmatpush.bf16.msra.mxu0 %v7086
  %7459 = vmatpush.bf16.msra.mxu0 %v7084
  %7460 = vmatpush.bf16.msra.mxu0 %v7082
  %7461 = vmatpush.bf16.msra.mxu0 %v7080
  %7462 = vmatpush.bf16.msra.mxu0 %v7078
  %7463 = vmatpush.bf16.msra.mxu0 %v7076
  %7464 = vmatmul.bf16.gmra.mxu0 %v6369
  %v7465 = vpop.f32.mrf.mxu0
  %v7466 = vadd.f32 %v7453, %v7465
  %v7467 = vpop.f32.mrf.mxu0
  %7468 = vdwg.mxu0
  %v7469 = vadd.f32 %v6214, %v7349
  %v7470 = vadd.f32 %v6331, %v7466
  %vm7471 = vcmp.eq.f32.partialorder %v2752, 3.0
  %vm7472 = vcmp.eq.f32.partialorder %v2753, 3.0
  %vm7473 = vcmp.eq.f32.partialorder %v2754, 3.0
  %vm7474 = vcmp.eq.f32.partialorder %v2755, 3.0
  %vm7475 = vcmp.eq.f32.partialorder %v2756, 3.0
  %vm7476 = vcmp.eq.f32.partialorder %v2757, 3.0
  %vm7477 = vcmp.eq.f32.partialorder %v2758, 3.0
  %vm7478 = vcmp.eq.f32.partialorder %v2759, 3.0
  %vm7479 = vcmp.eq.f32.partialorder %v2760, 3.0
  %v7480 = vsel %vm7471, %v3958, 0.0
  %v7481 = vsel %vm7472, %v3971, 0.0
  %v7482 = vsel %vm7473, %v3984, 0.0
  %v7483 = vsel %vm7474, %v3997, 0.0
  %v7484 = vsel %vm7475, %v4010, 0.0
  %v7485 = vsel %vm7476, %v4023, 0.0
  %v7486 = vsel %vm7477, %v4036, 0.0
  %v7487 = vsel %vm7478, %v4049, 0.0
  %v7488 = vsel %vm7479, %v4062, 0.0
  %v7489 = vmax.f32 %v7480, 0.0
  %v7490 = vmax.f32 %v7481, 0.0
  %v7491 = vmax.f32 %v7482, 0.0
  %v7492 = vmax.f32 %v7483, 0.0
  %v7493 = vmax.f32 %v7484, 0.0
  %v7494 = vmax.f32 %v7485, 0.0
  %v7495 = vmax.f32 %v7486, 0.0
  %v7496 = vmax.f32 %v7487, 0.0
  %v7497 = vmax.f32 %v7488, 0.0
  %v7498 = vpack.c.bf16 %v7489, %v7489
  %v7499 = vpack.c.bf16 %v7490, %v7490
  %v7500 = vpack.c.bf16 %v7491, %v7491
  %v7501 = vpack.c.bf16 %v7492, %v7492
  %v7502 = vpack.c.bf16 %v7493, %v7493
  %v7503 = vpack.c.bf16 %v7494, %v7494
  %v7504 = vpack.c.bf16 %v7495, %v7495
  %v7505 = vpack.c.bf16 %v7496, %v7496
  %v7506 = vpack.c.bf16 %v7497, %v7497
  %s7507 = scalar_lea.vmem %s7, 3456
  %v7508 = vld [vmem:[%s7507] sm:$0xff]
  %v7509 = vld [vmem:[%s7507 + $0x8] sm:$0xff]
  %v7510 = vld [vmem:[%s7507 + $0x10] sm:$0xff]
  %v7511 = vld [vmem:[%s7507 + $0x18] sm:$0xff]
  %v7512 = vld [vmem:[%s7507 + $0x20] sm:$0xff]
  %v7513 = vld [vmem:[%s7507 + $0x28] sm:$0xff]
  %v7514 = vld [vmem:[%s7507 + $0x30] sm:$0xff]
  %v7515 = vld [vmem:[%s7507 + $0x38] sm:$0xff]
  %v7516 = vld [vmem:[%s7507 + $0x40] sm:$0xff]
  %v7517 = vld [vmem:[%s7507 + $0x48] sm:$0xff]
  %v7518 = vld [vmem:[%s7507 + $0x50] sm:$0xff]
  %v7519 = vld [vmem:[%s7507 + $0x58] sm:$0xff]
  %v7520 = vld [vmem:[%s7507 + $0x60] sm:$0xff]
  %v7521 = vld [vmem:[%s7507 + $0x68] sm:$0xff]
  %v7522 = vld [vmem:[%s7507 + $0x70] sm:$0xff]
  %v7523 = vld [vmem:[%s7507 + $0x78] sm:$0xff]
  %v7524 = vld [vmem:[%s7507 + $0x80] sm:$0xff]
  %v7525 = vld [vmem:[%s7507 + $0x88] sm:$0xff]
  %v7526 = vld [vmem:[%s7507 + $0x90] sm:$0xff]
  %v7527 = vld [vmem:[%s7507 + $0x98] sm:$0xff]
  %v7528 = vld [vmem:[%s7507 + $0xa0] sm:$0xff]
  %v7529 = vld [vmem:[%s7507 + $0xa8] sm:$0xff]
  %v7530 = vld [vmem:[%s7507 + $0xb0] sm:$0xff]
  %v7531 = vld [vmem:[%s7507 + $0xb8] sm:$0xff]
  %v7532 = vld [vmem:[%s7507 + $0xc0] sm:$0xff]
  %v7533 = vld [vmem:[%s7507 + $0xc8] sm:$0xff]
  %v7534 = vld [vmem:[%s7507 + $0xd0] sm:$0xff]
  %v7535 = vld [vmem:[%s7507 + $0xd8] sm:$0xff]
  %v7536 = vld [vmem:[%s7507 + $0xe0] sm:$0xff]
  %v7537 = vld [vmem:[%s7507 + $0xe8] sm:$0xff]
  %v7538 = vld [vmem:[%s7507 + $0xf0] sm:$0xff]
  %v7539 = vld [vmem:[%s7507 + $0xf8] sm:$0xff]
  %v7540 = vld [vmem:[%s7507 + $0x100] sm:$0xff]
  %v7541 = vld [vmem:[%s7507 + $0x108] sm:$0xff]
  %v7542 = vld [vmem:[%s7507 + $0x110] sm:$0xff]
  %v7543 = vld [vmem:[%s7507 + $0x118] sm:$0xff]
  %v7544 = vld [vmem:[%s7507 + $0x120] sm:$0xff]
  %v7545 = vld [vmem:[%s7507 + $0x128] sm:$0xff]
  %v7546 = vld [vmem:[%s7507 + $0x130] sm:$0xff]
  %v7547 = vld [vmem:[%s7507 + $0x138] sm:$0xff]
  %v7548 = vld [vmem:[%s7507 + $0x140] sm:$0xff]
  %v7549 = vld [vmem:[%s7507 + $0x148] sm:$0xff]
  %v7550 = vld [vmem:[%s7507 + $0x150] sm:$0xff]
  %v7551 = vld [vmem:[%s7507 + $0x158] sm:$0xff]
  %v7552 = vld [vmem:[%s7507 + $0x160] sm:$0xff]
  %v7553 = vld [vmem:[%s7507 + $0x168] sm:$0xff]
  %v7554 = vld [vmem:[%s7507 + $0x170] sm:$0xff]
  %v7555 = vld [vmem:[%s7507 + $0x178] sm:$0xff]
  %v7556 = vld [vmem:[%s7507 + $0x180] sm:$0xff]
  %v7557 = vld [vmem:[%s7507 + $0x188] sm:$0xff]
  %v7558 = vld [vmem:[%s7507 + $0x190] sm:$0xff]
  %v7559 = vld [vmem:[%s7507 + $0x198] sm:$0xff]
  %v7560 = vld [vmem:[%s7507 + $0x1a0] sm:$0xff]
  %v7561 = vld [vmem:[%s7507 + $0x1a8] sm:$0xff]
  %v7562 = vld [vmem:[%s7507 + $0x1b0] sm:$0xff]
  %v7563 = vld [vmem:[%s7507 + $0x1b8] sm:$0xff]
  %v7564 = vld [vmem:[%s7507 + $0x1c0] sm:$0xff]
  %v7565 = vld [vmem:[%s7507 + $0x1c8] sm:$0xff]
  %v7566 = vld [vmem:[%s7507 + $0x1d0] sm:$0xff]
  %v7567 = vld [vmem:[%s7507 + $0x1d8] sm:$0xff]
  %v7568 = vld [vmem:[%s7507 + $0x1e0] sm:$0xff]
  %v7569 = vld [vmem:[%s7507 + $0x1e8] sm:$0xff]
  %v7570 = vld [vmem:[%s7507 + $0x1f0] sm:$0xff]
  %v7571 = vld [vmem:[%s7507 + $0x1f8] sm:$0xff]
  %v7572 = vld [vmem:[%s7507 + $0x200] sm:$0xff]
  %v7573 = vld [vmem:[%s7507 + $0x208] sm:$0xff]
  %v7574 = vld [vmem:[%s7507 + $0x210] sm:$0xff]
  %v7575 = vld [vmem:[%s7507 + $0x218] sm:$0xff]
  %v7576 = vld [vmem:[%s7507 + $0x220] sm:$0xff]
  %v7577 = vld [vmem:[%s7507 + $0x228] sm:$0xff]
  %v7578 = vld [vmem:[%s7507 + $0x230] sm:$0xff]
  %v7579 = vld [vmem:[%s7507 + $0x238] sm:$0xff]
  %v7580 = vld [vmem:[%s7507 + $0x240] sm:$0xff]
  %v7581 = vld [vmem:[%s7507 + $0x248] sm:$0xff]
  %v7582 = vld [vmem:[%s7507 + $0x250] sm:$0xff]
  %v7583 = vld [vmem:[%s7507 + $0x258] sm:$0xff]
  %v7584 = vld [vmem:[%s7507 + $0x260] sm:$0xff]
  %v7585 = vld [vmem:[%s7507 + $0x268] sm:$0xff]
  %v7586 = vld [vmem:[%s7507 + $0x270] sm:$0xff]
  %v7587 = vld [vmem:[%s7507 + $0x278] sm:$0xff]
  %v7588 = vld [vmem:[%s7507 + $0x280] sm:$0xff]
  %v7589 = vld [vmem:[%s7507 + $0x288] sm:$0xff]
  %v7590 = vld [vmem:[%s7507 + $0x290] sm:$0xff]
  %v7591 = vld [vmem:[%s7507 + $0x298] sm:$0xff]
  %v7592 = vld [vmem:[%s7507 + $0x2a0] sm:$0xff]
  %v7593 = vld [vmem:[%s7507 + $0x2a8] sm:$0xff]
  %v7594 = vld [vmem:[%s7507 + $0x2b0] sm:$0xff]
  %v7595 = vld [vmem:[%s7507 + $0x2b8] sm:$0xff]
  %v7596 = vld [vmem:[%s7507 + $0x2c0] sm:$0xff]
  %v7597 = vld [vmem:[%s7507 + $0x2c8] sm:$0xff]
  %v7598 = vld [vmem:[%s7507 + $0x2d0] sm:$0xff]
  %v7599 = vld [vmem:[%s7507 + $0x2d8] sm:$0xff]
  %v7600 = vld [vmem:[%s7507 + $0x2e0] sm:$0xff]
  %v7601 = vld [vmem:[%s7507 + $0x2e8] sm:$0xff]
  %v7602 = vld [vmem:[%s7507 + $0x2f0] sm:$0xff]
  %v7603 = vld [vmem:[%s7507 + $0x2f8] sm:$0xff]
  %v7604 = vld [vmem:[%s7507 + $0x300] sm:$0xff]
  %v7605 = vld [vmem:[%s7507 + $0x308] sm:$0xff]
  %v7606 = vld [vmem:[%s7507 + $0x310] sm:$0xff]
  %v7607 = vld [vmem:[%s7507 + $0x318] sm:$0xff]
  %v7608 = vld [vmem:[%s7507 + $0x320] sm:$0xff]
  %v7609 = vld [vmem:[%s7507 + $0x328] sm:$0xff]
  %v7610 = vld [vmem:[%s7507 + $0x330] sm:$0xff]
  %v7611 = vld [vmem:[%s7507 + $0x338] sm:$0xff]
  %v7612 = vld [vmem:[%s7507 + $0x340] sm:$0xff]
  %v7613 = vld [vmem:[%s7507 + $0x348] sm:$0xff]
  %v7614 = vld [vmem:[%s7507 + $0x350] sm:$0xff]
  %v7615 = vld [vmem:[%s7507 + $0x358] sm:$0xff]
  %v7616 = vld [vmem:[%s7507 + $0x360] sm:$0xff]
  %v7617 = vld [vmem:[%s7507 + $0x368] sm:$0xff]
  %v7618 = vld [vmem:[%s7507 + $0x370] sm:$0xff]
  %v7619 = vld [vmem:[%s7507 + $0x378] sm:$0xff]
  %v7620 = vld [vmem:[%s7507 + $0x380] sm:$0xff]
  %v7621 = vld [vmem:[%s7507 + $0x388] sm:$0xff]
  %v7622 = vld [vmem:[%s7507 + $0x390] sm:$0xff]
  %v7623 = vld [vmem:[%s7507 + $0x398] sm:$0xff]
  %v7624 = vld [vmem:[%s7507 + $0x3a0] sm:$0xff]
  %v7625 = vld [vmem:[%s7507 + $0x3a8] sm:$0xff]
  %v7626 = vld [vmem:[%s7507 + $0x3b0] sm:$0xff]
  %v7627 = vld [vmem:[%s7507 + $0x3b8] sm:$0xff]
  %v7628 = vld [vmem:[%s7507 + $0x3c0] sm:$0xff]
  %v7629 = vld [vmem:[%s7507 + $0x3c8] sm:$0xff]
  %v7630 = vld [vmem:[%s7507 + $0x3d0] sm:$0xff]
  %v7631 = vld [vmem:[%s7507 + $0x3d8] sm:$0xff]
  %v7632 = vld [vmem:[%s7507 + $0x3e0] sm:$0xff]
  %v7633 = vld [vmem:[%s7507 + $0x3e8] sm:$0xff]
  %v7634 = vld [vmem:[%s7507 + $0x3f0] sm:$0xff]
  %v7635 = vld [vmem:[%s7507 + $0x3f8] sm:$0xff]
  %v7636 = vld [vmem:[%s7507 + $0x400] sm:$0xff]
  %v7637 = vld [vmem:[%s7507 + $0x408] sm:$0xff]
  %v7638 = vld [vmem:[%s7507 + $0x410] sm:$0xff]
  %v7639 = vld [vmem:[%s7507 + $0x418] sm:$0xff]
  %v7640 = vld [vmem:[%s7507 + $0x420] sm:$0xff]
  %v7641 = vld [vmem:[%s7507 + $0x428] sm:$0xff]
  %v7642 = vld [vmem:[%s7507 + $0x430] sm:$0xff]
  %v7643 = vld [vmem:[%s7507 + $0x438] sm:$0xff]
  %v7644 = vld [vmem:[%s7507 + $0x440] sm:$0xff]
  %v7645 = vld [vmem:[%s7507 + $0x448] sm:$0xff]
  %v7646 = vld [vmem:[%s7507 + $0x450] sm:$0xff]
  %v7647 = vld [vmem:[%s7507 + $0x458] sm:$0xff]
  %v7648 = vld [vmem:[%s7507 + $0x460] sm:$0xff]
  %v7649 = vld [vmem:[%s7507 + $0x468] sm:$0xff]
  %v7650 = vld [vmem:[%s7507 + $0x470] sm:$0xff]
  %v7651 = vld [vmem:[%s7507 + $0x478] sm:$0xff]
  %v7796 = vunpack.c.l.b16 %v7508
  %v7797 = vunpack.c.h.b16 %v7508
  %v7798 = vunpack.c.l.b16 %v7509
  %v7799 = vunpack.c.h.b16 %v7509
  %v7800 = vunpack.c.l.b16 %v7510
  %v7801 = vunpack.c.h.b16 %v7510
  %v7802 = vunpack.c.l.b16 %v7511
  %v7803 = vunpack.c.h.b16 %v7511
  %v7804 = vunpack.c.l.b16 %v7512
  %v7805 = vunpack.c.h.b16 %v7512
  %v7806 = vunpack.c.l.b16 %v7513
  %v7807 = vunpack.c.h.b16 %v7513
  %v7808 = vunpack.c.l.b16 %v7514
  %v7809 = vunpack.c.h.b16 %v7514
  %v7810 = vunpack.c.l.b16 %v7515
  %v7811 = vunpack.c.h.b16 %v7515
  %v7812 = vunpack.c.l.b16 %v7516
  %v7813 = vunpack.c.h.b16 %v7516
  %v7814 = vunpack.c.l.b16 %v7517
  %v7815 = vunpack.c.h.b16 %v7517
  %v7816 = vunpack.c.l.b16 %v7518
  %v7817 = vunpack.c.h.b16 %v7518
  %v7818 = vunpack.c.l.b16 %v7519
  %v7819 = vunpack.c.h.b16 %v7519
  %v7820 = vunpack.c.l.b16 %v7520
  %v7821 = vunpack.c.h.b16 %v7520
  %v7822 = vunpack.c.l.b16 %v7521
  %v7823 = vunpack.c.h.b16 %v7521
  %v7824 = vunpack.c.l.b16 %v7522
  %v7825 = vunpack.c.h.b16 %v7522
  %v7826 = vunpack.c.l.b16 %v7523
  %v7827 = vunpack.c.h.b16 %v7523
  %v7828 = vunpack.c.l.b16 %v7524
  %v7829 = vunpack.c.h.b16 %v7524
  %v7830 = vunpack.c.l.b16 %v7525
  %v7831 = vunpack.c.h.b16 %v7525
  %v7832 = vunpack.c.l.b16 %v7526
  %v7833 = vunpack.c.h.b16 %v7526
  %v7834 = vunpack.c.l.b16 %v7527
  %v7835 = vunpack.c.h.b16 %v7527
  %v7836 = vunpack.c.l.b16 %v7528
  %v7837 = vunpack.c.h.b16 %v7528
  %v7838 = vunpack.c.l.b16 %v7529
  %v7839 = vunpack.c.h.b16 %v7529
  %v7840 = vunpack.c.l.b16 %v7530
  %v7841 = vunpack.c.h.b16 %v7530
  %v7842 = vunpack.c.l.b16 %v7531
  %v7843 = vunpack.c.h.b16 %v7531
  %v7844 = vunpack.c.l.b16 %v7532
  %v7845 = vunpack.c.h.b16 %v7532
  %v7846 = vunpack.c.l.b16 %v7533
  %v7847 = vunpack.c.h.b16 %v7533
  %v7848 = vunpack.c.l.b16 %v7534
  %v7849 = vunpack.c.h.b16 %v7534
  %v7850 = vunpack.c.l.b16 %v7535
  %v7851 = vunpack.c.h.b16 %v7535
  %v7852 = vunpack.c.l.b16 %v7536
  %v7853 = vunpack.c.h.b16 %v7536
  %v7854 = vunpack.c.l.b16 %v7537
  %v7855 = vunpack.c.h.b16 %v7537
  %v7856 = vunpack.c.l.b16 %v7538
  %v7857 = vunpack.c.h.b16 %v7538
  %v7858 = vunpack.c.l.b16 %v7539
  %v7859 = vunpack.c.h.b16 %v7539
  %v7860 = vunpack.c.l.b16 %v7540
  %v7861 = vunpack.c.h.b16 %v7540
  %v7862 = vunpack.c.l.b16 %v7541
  %v7863 = vunpack.c.h.b16 %v7541
  %v7864 = vunpack.c.l.b16 %v7542
  %v7865 = vunpack.c.h.b16 %v7542
  %v7866 = vunpack.c.l.b16 %v7543
  %v7867 = vunpack.c.h.b16 %v7543
  %v7868 = vunpack.c.l.b16 %v7544
  %v7869 = vunpack.c.h.b16 %v7544
  %v7870 = vunpack.c.l.b16 %v7545
  %v7871 = vunpack.c.h.b16 %v7545
  %v7872 = vunpack.c.l.b16 %v7546
  %v7873 = vunpack.c.h.b16 %v7546
  %v7874 = vunpack.c.l.b16 %v7547
  %v7875 = vunpack.c.h.b16 %v7547
  %v7876 = vunpack.c.l.b16 %v7548
  %v7877 = vunpack.c.h.b16 %v7548
  %v7878 = vunpack.c.l.b16 %v7549
  %v7879 = vunpack.c.h.b16 %v7549
  %v7880 = vunpack.c.l.b16 %v7550
  %v7881 = vunpack.c.h.b16 %v7550
  %v7882 = vunpack.c.l.b16 %v7551
  %v7883 = vunpack.c.h.b16 %v7551
  %v7884 = vunpack.c.l.b16 %v7552
  %v7885 = vunpack.c.h.b16 %v7552
  %v7886 = vunpack.c.l.b16 %v7553
  %v7887 = vunpack.c.h.b16 %v7553
  %v7888 = vunpack.c.l.b16 %v7554
  %v7889 = vunpack.c.h.b16 %v7554
  %v7890 = vunpack.c.l.b16 %v7555
  %v7891 = vunpack.c.h.b16 %v7555
  %v7892 = vunpack.c.l.b16 %v7556
  %v7893 = vunpack.c.h.b16 %v7556
  %v7894 = vunpack.c.l.b16 %v7557
  %v7895 = vunpack.c.h.b16 %v7557
  %v7896 = vunpack.c.l.b16 %v7558
  %v7897 = vunpack.c.h.b16 %v7558
  %v7898 = vunpack.c.l.b16 %v7559
  %v7899 = vunpack.c.h.b16 %v7559
  %v7900 = vunpack.c.l.b16 %v7560
  %v7901 = vunpack.c.h.b16 %v7560
  %v7902 = vunpack.c.l.b16 %v7561
  %v7903 = vunpack.c.h.b16 %v7561
  %v7904 = vunpack.c.l.b16 %v7562
  %v7905 = vunpack.c.h.b16 %v7562
  %v7906 = vunpack.c.l.b16 %v7563
  %v7907 = vunpack.c.h.b16 %v7563
  %v7908 = vunpack.c.l.b16 %v7564
  %v7909 = vunpack.c.h.b16 %v7564
  %v7910 = vunpack.c.l.b16 %v7565
  %v7911 = vunpack.c.h.b16 %v7565
  %v7912 = vunpack.c.l.b16 %v7566
  %v7913 = vunpack.c.h.b16 %v7566
  %v7914 = vunpack.c.l.b16 %v7567
  %v7915 = vunpack.c.h.b16 %v7567
  %v7916 = vunpack.c.l.b16 %v7568
  %v7917 = vunpack.c.h.b16 %v7568
  %v7918 = vunpack.c.l.b16 %v7569
  %v7919 = vunpack.c.h.b16 %v7569
  %v7920 = vunpack.c.l.b16 %v7570
  %v7921 = vunpack.c.h.b16 %v7570
  %v7922 = vunpack.c.l.b16 %v7571
  %v7923 = vunpack.c.h.b16 %v7571
  %v7924 = vunpack.c.l.b16 %v7572
  %v7925 = vunpack.c.h.b16 %v7572
  %v7926 = vunpack.c.l.b16 %v7573
  %v7927 = vunpack.c.h.b16 %v7573
  %v7928 = vunpack.c.l.b16 %v7574
  %v7929 = vunpack.c.h.b16 %v7574
  %v7930 = vunpack.c.l.b16 %v7575
  %v7931 = vunpack.c.h.b16 %v7575
  %v7932 = vunpack.c.l.b16 %v7576
  %v7933 = vunpack.c.h.b16 %v7576
  %v7934 = vunpack.c.l.b16 %v7577
  %v7935 = vunpack.c.h.b16 %v7577
  %v7936 = vunpack.c.l.b16 %v7578
  %v7937 = vunpack.c.h.b16 %v7578
  %v7938 = vunpack.c.l.b16 %v7579
  %v7939 = vunpack.c.h.b16 %v7579
  %v7940 = vunpack.c.l.b16 %v7580
  %v7941 = vunpack.c.h.b16 %v7580
  %v7942 = vunpack.c.l.b16 %v7581
  %v7943 = vunpack.c.h.b16 %v7581
  %v7944 = vunpack.c.l.b16 %v7582
  %v7945 = vunpack.c.h.b16 %v7582
  %v7946 = vunpack.c.l.b16 %v7583
  %v7947 = vunpack.c.h.b16 %v7583
  %v7948 = vunpack.c.l.b16 %v7584
  %v7949 = vunpack.c.h.b16 %v7584
  %v7950 = vunpack.c.l.b16 %v7585
  %v7951 = vunpack.c.h.b16 %v7585
  %v7952 = vunpack.c.l.b16 %v7586
  %v7953 = vunpack.c.h.b16 %v7586
  %v7954 = vunpack.c.l.b16 %v7587
  %v7955 = vunpack.c.h.b16 %v7587
  %v7956 = vunpack.c.l.b16 %v7588
  %v7957 = vunpack.c.h.b16 %v7588
  %v7958 = vunpack.c.l.b16 %v7589
  %v7959 = vunpack.c.h.b16 %v7589
  %v7960 = vunpack.c.l.b16 %v7590
  %v7961 = vunpack.c.h.b16 %v7590
  %v7962 = vunpack.c.l.b16 %v7591
  %v7963 = vunpack.c.h.b16 %v7591
  %v7964 = vunpack.c.l.b16 %v7592
  %v7965 = vunpack.c.h.b16 %v7592
  %v7966 = vunpack.c.l.b16 %v7593
  %v7967 = vunpack.c.h.b16 %v7593
  %v7968 = vunpack.c.l.b16 %v7594
  %v7969 = vunpack.c.h.b16 %v7594
  %v7970 = vunpack.c.l.b16 %v7595
  %v7971 = vunpack.c.h.b16 %v7595
  %v7972 = vunpack.c.l.b16 %v7596
  %v7973 = vunpack.c.h.b16 %v7596
  %v7974 = vunpack.c.l.b16 %v7597
  %v7975 = vunpack.c.h.b16 %v7597
  %v7976 = vunpack.c.l.b16 %v7598
  %v7977 = vunpack.c.h.b16 %v7598
  %v7978 = vunpack.c.l.b16 %v7599
  %v7979 = vunpack.c.h.b16 %v7599
  %v7980 = vunpack.c.l.b16 %v7600
  %v7981 = vunpack.c.h.b16 %v7600
  %v7982 = vunpack.c.l.b16 %v7601
  %v7983 = vunpack.c.h.b16 %v7601
  %v7984 = vunpack.c.l.b16 %v7602
  %v7985 = vunpack.c.h.b16 %v7602
  %v7986 = vunpack.c.l.b16 %v7603
  %v7987 = vunpack.c.h.b16 %v7603
  %v7988 = vunpack.c.l.b16 %v7604
  %v7989 = vunpack.c.h.b16 %v7604
  %v7990 = vunpack.c.l.b16 %v7605
  %v7991 = vunpack.c.h.b16 %v7605
  %v7992 = vunpack.c.l.b16 %v7606
  %v7993 = vunpack.c.h.b16 %v7606
  %v7994 = vunpack.c.l.b16 %v7607
  %v7995 = vunpack.c.h.b16 %v7607
  %v7996 = vunpack.c.l.b16 %v7608
  %v7997 = vunpack.c.h.b16 %v7608
  %v7998 = vunpack.c.l.b16 %v7609
  %v7999 = vunpack.c.h.b16 %v7609
  %v8000 = vunpack.c.l.b16 %v7610
  %v8001 = vunpack.c.h.b16 %v7610
  %v8002 = vunpack.c.l.b16 %v7611
  %v8003 = vunpack.c.h.b16 %v7611
  %v8004 = vunpack.c.l.b16 %v7612
  %v8005 = vunpack.c.h.b16 %v7612
  %v8006 = vunpack.c.l.b16 %v7613
  %v8007 = vunpack.c.h.b16 %v7613
  %v8008 = vunpack.c.l.b16 %v7614
  %v8009 = vunpack.c.h.b16 %v7614
  %v8010 = vunpack.c.l.b16 %v7615
  %v8011 = vunpack.c.h.b16 %v7615
  %v8012 = vunpack.c.l.b16 %v7616
  %v8013 = vunpack.c.h.b16 %v7616
  %v8014 = vunpack.c.l.b16 %v7617
  %v8015 = vunpack.c.h.b16 %v7617
  %v8016 = vunpack.c.l.b16 %v7618
  %v8017 = vunpack.c.h.b16 %v7618
  %v8018 = vunpack.c.l.b16 %v7619
  %v8019 = vunpack.c.h.b16 %v7619
  %v8020 = vunpack.c.l.b16 %v7620
  %v8021 = vunpack.c.h.b16 %v7620
  %v8022 = vunpack.c.l.b16 %v7621
  %v8023 = vunpack.c.h.b16 %v7621
  %v8024 = vunpack.c.l.b16 %v7622
  %v8025 = vunpack.c.h.b16 %v7622
  %v8026 = vunpack.c.l.b16 %v7623
  %v8027 = vunpack.c.h.b16 %v7623
  %v8028 = vunpack.c.l.b16 %v7624
  %v8029 = vunpack.c.h.b16 %v7624
  %v8030 = vunpack.c.l.b16 %v7625
  %v8031 = vunpack.c.h.b16 %v7625
  %v8032 = vunpack.c.l.b16 %v7626
  %v8033 = vunpack.c.h.b16 %v7626
  %v8034 = vunpack.c.l.b16 %v7627
  %v8035 = vunpack.c.h.b16 %v7627
  %v8036 = vunpack.c.l.b16 %v7628
  %v8037 = vunpack.c.h.b16 %v7628
  %v8038 = vunpack.c.l.b16 %v7629
  %v8039 = vunpack.c.h.b16 %v7629
  %v8040 = vunpack.c.l.b16 %v7630
  %v8041 = vunpack.c.h.b16 %v7630
  %v8042 = vunpack.c.l.b16 %v7631
  %v8043 = vunpack.c.h.b16 %v7631
  %v8044 = vunpack.c.l.b16 %v7632
  %v8045 = vunpack.c.h.b16 %v7632
  %v8046 = vunpack.c.l.b16 %v7633
  %v8047 = vunpack.c.h.b16 %v7633
  %v8048 = vunpack.c.l.b16 %v7634
  %v8049 = vunpack.c.h.b16 %v7634
  %v8050 = vunpack.c.l.b16 %v7635
  %v8051 = vunpack.c.h.b16 %v7635
  %v8052 = vunpack.c.l.b16 %v7636
  %v8053 = vunpack.c.h.b16 %v7636
  %v8054 = vunpack.c.l.b16 %v7637
  %v8055 = vunpack.c.h.b16 %v7637
  %v8056 = vunpack.c.l.b16 %v7638
  %v8057 = vunpack.c.h.b16 %v7638
  %v8058 = vunpack.c.l.b16 %v7639
  %v8059 = vunpack.c.h.b16 %v7639
  %v8060 = vunpack.c.l.b16 %v7640
  %v8061 = vunpack.c.h.b16 %v7640
  %v8062 = vunpack.c.l.b16 %v7641
  %v8063 = vunpack.c.h.b16 %v7641
  %v8064 = vunpack.c.l.b16 %v7642
  %v8065 = vunpack.c.h.b16 %v7642
  %v8066 = vunpack.c.l.b16 %v7643
  %v8067 = vunpack.c.h.b16 %v7643
  %v8068 = vunpack.c.l.b16 %v7644
  %v8069 = vunpack.c.h.b16 %v7644
  %v8070 = vunpack.c.l.b16 %v7645
  %v8071 = vunpack.c.h.b16 %v7645
  %v8072 = vunpack.c.l.b16 %v7646
  %v8073 = vunpack.c.h.b16 %v7646
  %v8074 = vunpack.c.l.b16 %v7647
  %v8075 = vunpack.c.h.b16 %v7647
  %v8076 = vunpack.c.l.b16 %v7648
  %v8077 = vunpack.c.h.b16 %v7648
  %v8078 = vunpack.c.l.b16 %v7649
  %v8079 = vunpack.c.h.b16 %v7649
  %v8080 = vunpack.c.l.b16 %v7650
  %v8081 = vunpack.c.h.b16 %v7650
  %v8082 = vunpack.c.l.b16 %v7651
  %v8083 = vunpack.c.h.b16 %v7651
  %v8084 = vpack.c.b16 %v7798, %v7796
  %v8085 = vpack.c.b16 %v7799, %v7797
  %v8086 = vpack.c.b16 %v7802, %v7800
  %v8087 = vpack.c.b16 %v7803, %v7801
  %v8088 = vpack.c.b16 %v7806, %v7804
  %v8089 = vpack.c.b16 %v7807, %v7805
  %v8090 = vpack.c.b16 %v7810, %v7808
  %v8091 = vpack.c.b16 %v7811, %v7809
  %v8092 = vpack.c.b16 %v7814, %v7812
  %v8093 = vpack.c.b16 %v7815, %v7813
  %v8094 = vpack.c.b16 %v7818, %v7816
  %v8095 = vpack.c.b16 %v7819, %v7817
  %v8096 = vpack.c.b16 %v7822, %v7820
  %v8097 = vpack.c.b16 %v7823, %v7821
  %v8098 = vpack.c.b16 %v7826, %v7824
  %v8099 = vpack.c.b16 %v7827, %v7825
  %v8100 = vpack.c.b16 %v7830, %v7828
  %v8101 = vpack.c.b16 %v7831, %v7829
  %v8102 = vpack.c.b16 %v7834, %v7832
  %v8103 = vpack.c.b16 %v7835, %v7833
  %v8104 = vpack.c.b16 %v7838, %v7836
  %v8105 = vpack.c.b16 %v7839, %v7837
  %v8106 = vpack.c.b16 %v7842, %v7840
  %v8107 = vpack.c.b16 %v7843, %v7841
  %v8108 = vpack.c.b16 %v7846, %v7844
  %v8109 = vpack.c.b16 %v7847, %v7845
  %v8110 = vpack.c.b16 %v7850, %v7848
  %v8111 = vpack.c.b16 %v7851, %v7849
  %v8112 = vpack.c.b16 %v7854, %v7852
  %v8113 = vpack.c.b16 %v7855, %v7853
  %v8114 = vpack.c.b16 %v7858, %v7856
  %v8115 = vpack.c.b16 %v7859, %v7857
  %v8116 = vpack.c.b16 %v7862, %v7860
  %v8117 = vpack.c.b16 %v7863, %v7861
  %v8118 = vpack.c.b16 %v7866, %v7864
  %v8119 = vpack.c.b16 %v7867, %v7865
  %v8120 = vpack.c.b16 %v7870, %v7868
  %v8121 = vpack.c.b16 %v7871, %v7869
  %v8122 = vpack.c.b16 %v7874, %v7872
  %v8123 = vpack.c.b16 %v7875, %v7873
  %v8124 = vpack.c.b16 %v7878, %v7876
  %v8125 = vpack.c.b16 %v7879, %v7877
  %v8126 = vpack.c.b16 %v7882, %v7880
  %v8127 = vpack.c.b16 %v7883, %v7881
  %v8128 = vpack.c.b16 %v7886, %v7884
  %v8129 = vpack.c.b16 %v7887, %v7885
  %v8130 = vpack.c.b16 %v7890, %v7888
  %v8131 = vpack.c.b16 %v7891, %v7889
  %v8132 = vpack.c.b16 %v7894, %v7892
  %v8133 = vpack.c.b16 %v7895, %v7893
  %v8134 = vpack.c.b16 %v7898, %v7896
  %v8135 = vpack.c.b16 %v7899, %v7897
  %v8136 = vpack.c.b16 %v7902, %v7900
  %v8137 = vpack.c.b16 %v7903, %v7901
  %v8138 = vpack.c.b16 %v7906, %v7904
  %v8139 = vpack.c.b16 %v7907, %v7905
  %v8140 = vpack.c.b16 %v7910, %v7908
  %v8141 = vpack.c.b16 %v7911, %v7909
  %v8142 = vpack.c.b16 %v7914, %v7912
  %v8143 = vpack.c.b16 %v7915, %v7913
  %v8144 = vpack.c.b16 %v7918, %v7916
  %v8145 = vpack.c.b16 %v7919, %v7917
  %v8146 = vpack.c.b16 %v7922, %v7920
  %v8147 = vpack.c.b16 %v7923, %v7921
  %v8148 = vpack.c.b16 %v7926, %v7924
  %v8149 = vpack.c.b16 %v7927, %v7925
  %v8150 = vpack.c.b16 %v7930, %v7928
  %v8151 = vpack.c.b16 %v7931, %v7929
  %v8152 = vpack.c.b16 %v7934, %v7932
  %v8153 = vpack.c.b16 %v7935, %v7933
  %v8154 = vpack.c.b16 %v7938, %v7936
  %v8155 = vpack.c.b16 %v7939, %v7937
  %v8156 = vpack.c.b16 %v7942, %v7940
  %v8157 = vpack.c.b16 %v7943, %v7941
  %v8158 = vpack.c.b16 %v7946, %v7944
  %v8159 = vpack.c.b16 %v7947, %v7945
  %v8160 = vpack.c.b16 %v7950, %v7948
  %v8161 = vpack.c.b16 %v7951, %v7949
  %v8162 = vpack.c.b16 %v7954, %v7952
  %v8163 = vpack.c.b16 %v7955, %v7953
  %v8164 = vpack.c.b16 %v7958, %v7956
  %v8165 = vpack.c.b16 %v7959, %v7957
  %v8166 = vpack.c.b16 %v7962, %v7960
  %v8167 = vpack.c.b16 %v7963, %v7961
  %v8168 = vpack.c.b16 %v7966, %v7964
  %v8169 = vpack.c.b16 %v7967, %v7965
  %v8170 = vpack.c.b16 %v7970, %v7968
  %v8171 = vpack.c.b16 %v7971, %v7969
  %v8172 = vpack.c.b16 %v7974, %v7972
  %v8173 = vpack.c.b16 %v7975, %v7973
  %v8174 = vpack.c.b16 %v7978, %v7976
  %v8175 = vpack.c.b16 %v7979, %v7977
  %v8176 = vpack.c.b16 %v7982, %v7980
  %v8177 = vpack.c.b16 %v7983, %v7981
  %v8178 = vpack.c.b16 %v7986, %v7984
  %v8179 = vpack.c.b16 %v7987, %v7985
  %v8180 = vpack.c.b16 %v7990, %v7988
  %v8181 = vpack.c.b16 %v7991, %v7989
  %v8182 = vpack.c.b16 %v7994, %v7992
  %v8183 = vpack.c.b16 %v7995, %v7993
  %v8184 = vpack.c.b16 %v7998, %v7996
  %v8185 = vpack.c.b16 %v7999, %v7997
  %v8186 = vpack.c.b16 %v8002, %v8000
  %v8187 = vpack.c.b16 %v8003, %v8001
  %v8188 = vpack.c.b16 %v8006, %v8004
  %v8189 = vpack.c.b16 %v8007, %v8005
  %v8190 = vpack.c.b16 %v8010, %v8008
  %v8191 = vpack.c.b16 %v8011, %v8009
  %v8192 = vpack.c.b16 %v8014, %v8012
  %v8193 = vpack.c.b16 %v8015, %v8013
  %v8194 = vpack.c.b16 %v8018, %v8016
  %v8195 = vpack.c.b16 %v8019, %v8017
  %v8196 = vpack.c.b16 %v8022, %v8020
  %v8197 = vpack.c.b16 %v8023, %v8021
  %v8198 = vpack.c.b16 %v8026, %v8024
  %v8199 = vpack.c.b16 %v8027, %v8025
  %v8200 = vpack.c.b16 %v8030, %v8028
  %v8201 = vpack.c.b16 %v8031, %v8029
  %v8202 = vpack.c.b16 %v8034, %v8032
  %v8203 = vpack.c.b16 %v8035, %v8033
  %v8204 = vpack.c.b16 %v8038, %v8036
  %v8205 = vpack.c.b16 %v8039, %v8037
  %v8206 = vpack.c.b16 %v8042, %v8040
  %v8207 = vpack.c.b16 %v8043, %v8041
  %v8208 = vpack.c.b16 %v8046, %v8044
  %v8209 = vpack.c.b16 %v8047, %v8045
  %v8210 = vpack.c.b16 %v8050, %v8048
  %v8211 = vpack.c.b16 %v8051, %v8049
  %v8212 = vpack.c.b16 %v8054, %v8052
  %v8213 = vpack.c.b16 %v8055, %v8053
  %v8214 = vpack.c.b16 %v8058, %v8056
  %v8215 = vpack.c.b16 %v8059, %v8057
  %v8216 = vpack.c.b16 %v8062, %v8060
  %v8217 = vpack.c.b16 %v8063, %v8061
  %v8218 = vpack.c.b16 %v8066, %v8064
  %v8219 = vpack.c.b16 %v8067, %v8065
  %v8220 = vpack.c.b16 %v8070, %v8068
  %v8221 = vpack.c.b16 %v8071, %v8069
  %v8222 = vpack.c.b16 %v8074, %v8072
  %v8223 = vpack.c.b16 %v8075, %v8073
  %v8224 = vpack.c.b16 %v8078, %v8076
  %v8225 = vpack.c.b16 %v8079, %v8077
  %v8226 = vpack.c.b16 %v8082, %v8080
  %v8227 = vpack.c.b16 %v8083, %v8081
  %8372 = vmatpush.bf16.msra.mxu0 %v8098
  %8373 = vmatpush.bf16.msra.mxu0 %v8096
  %8374 = vmatpush.bf16.msra.mxu0 %v8094
  %8375 = vmatpush.bf16.msra.mxu0 %v8092
  %8376 = vmatpush.bf16.msra.mxu0 %v8090
  %8377 = vmatpush.bf16.msra.mxu0 %v8088
  %8378 = vmatpush.bf16.msra.mxu0 %v8086
  %8379 = vmatpush.bf16.msra.mxu0 %v8084
  %8380 = vmatmul.bf16.gmra.mxu0 %v7498
  %v8381 = vpop.f32.mrf.mxu0
  %v8382 = vadd.f32 0.0, %v8381
  %v8383 = vpop.f32.mrf.mxu0
  %8384 = vdwg.mxu0
  %8385 = vmatpush.bf16.msra.mxu0 %v8114
  %8386 = vmatpush.bf16.msra.mxu0 %v8112
  %8387 = vmatpush.bf16.msra.mxu0 %v8110
  %8388 = vmatpush.bf16.msra.mxu0 %v8108
  %8389 = vmatpush.bf16.msra.mxu0 %v8106
  %8390 = vmatpush.bf16.msra.mxu0 %v8104
  %8391 = vmatpush.bf16.msra.mxu0 %v8102
  %8392 = vmatpush.bf16.msra.mxu0 %v8100
  %8393 = vmatmul.bf16.gmra.mxu0 %v7499
  %v8394 = vpop.f32.mrf.mxu0
  %v8395 = vadd.f32 %v8382, %v8394
  %v8396 = vpop.f32.mrf.mxu0
  %8397 = vdwg.mxu0
  %8398 = vmatpush.bf16.msra.mxu0 %v8130
  %8399 = vmatpush.bf16.msra.mxu0 %v8128
  %8400 = vmatpush.bf16.msra.mxu0 %v8126
  %8401 = vmatpush.bf16.msra.mxu0 %v8124
  %8402 = vmatpush.bf16.msra.mxu0 %v8122
  %8403 = vmatpush.bf16.msra.mxu0 %v8120
  %8404 = vmatpush.bf16.msra.mxu0 %v8118
  %8405 = vmatpush.bf16.msra.mxu0 %v8116
  %8406 = vmatmul.bf16.gmra.mxu0 %v7500
  %v8407 = vpop.f32.mrf.mxu0
  %v8408 = vadd.f32 %v8395, %v8407
  %v8409 = vpop.f32.mrf.mxu0
  %8410 = vdwg.mxu0
  %8411 = vmatpush.bf16.msra.mxu0 %v8146
  %8412 = vmatpush.bf16.msra.mxu0 %v8144
  %8413 = vmatpush.bf16.msra.mxu0 %v8142
  %8414 = vmatpush.bf16.msra.mxu0 %v8140
  %8415 = vmatpush.bf16.msra.mxu0 %v8138
  %8416 = vmatpush.bf16.msra.mxu0 %v8136
  %8417 = vmatpush.bf16.msra.mxu0 %v8134
  %8418 = vmatpush.bf16.msra.mxu0 %v8132
  %8419 = vmatmul.bf16.gmra.mxu0 %v7501
  %v8420 = vpop.f32.mrf.mxu0
  %v8421 = vadd.f32 %v8408, %v8420
  %v8422 = vpop.f32.mrf.mxu0
  %8423 = vdwg.mxu0
  %8424 = vmatpush.bf16.msra.mxu0 %v8162
  %8425 = vmatpush.bf16.msra.mxu0 %v8160
  %8426 = vmatpush.bf16.msra.mxu0 %v8158
  %8427 = vmatpush.bf16.msra.mxu0 %v8156
  %8428 = vmatpush.bf16.msra.mxu0 %v8154
  %8429 = vmatpush.bf16.msra.mxu0 %v8152
  %8430 = vmatpush.bf16.msra.mxu0 %v8150
  %8431 = vmatpush.bf16.msra.mxu0 %v8148
  %8432 = vmatmul.bf16.gmra.mxu0 %v7502
  %v8433 = vpop.f32.mrf.mxu0
  %v8434 = vadd.f32 %v8421, %v8433
  %v8435 = vpop.f32.mrf.mxu0
  %8436 = vdwg.mxu0
  %8437 = vmatpush.bf16.msra.mxu0 %v8178
  %8438 = vmatpush.bf16.msra.mxu0 %v8176
  %8439 = vmatpush.bf16.msra.mxu0 %v8174
  %8440 = vmatpush.bf16.msra.mxu0 %v8172
  %8441 = vmatpush.bf16.msra.mxu0 %v8170
  %8442 = vmatpush.bf16.msra.mxu0 %v8168
  %8443 = vmatpush.bf16.msra.mxu0 %v8166
  %8444 = vmatpush.bf16.msra.mxu0 %v8164
  %8445 = vmatmul.bf16.gmra.mxu0 %v7503
  %v8446 = vpop.f32.mrf.mxu0
  %v8447 = vadd.f32 %v8434, %v8446
  %v8448 = vpop.f32.mrf.mxu0
  %8449 = vdwg.mxu0
  %8450 = vmatpush.bf16.msra.mxu0 %v8194
  %8451 = vmatpush.bf16.msra.mxu0 %v8192
  %8452 = vmatpush.bf16.msra.mxu0 %v8190
  %8453 = vmatpush.bf16.msra.mxu0 %v8188
  %8454 = vmatpush.bf16.msra.mxu0 %v8186
  %8455 = vmatpush.bf16.msra.mxu0 %v8184
  %8456 = vmatpush.bf16.msra.mxu0 %v8182
  %8457 = vmatpush.bf16.msra.mxu0 %v8180
  %8458 = vmatmul.bf16.gmra.mxu0 %v7504
  %v8459 = vpop.f32.mrf.mxu0
  %v8460 = vadd.f32 %v8447, %v8459
  %v8461 = vpop.f32.mrf.mxu0
  %8462 = vdwg.mxu0
  %8463 = vmatpush.bf16.msra.mxu0 %v8210
  %8464 = vmatpush.bf16.msra.mxu0 %v8208
  %8465 = vmatpush.bf16.msra.mxu0 %v8206
  %8466 = vmatpush.bf16.msra.mxu0 %v8204
  %8467 = vmatpush.bf16.msra.mxu0 %v8202
  %8468 = vmatpush.bf16.msra.mxu0 %v8200
  %8469 = vmatpush.bf16.msra.mxu0 %v8198
  %8470 = vmatpush.bf16.msra.mxu0 %v8196
  %8471 = vmatmul.bf16.gmra.mxu0 %v7505
  %v8472 = vpop.f32.mrf.mxu0
  %v8473 = vadd.f32 %v8460, %v8472
  %v8474 = vpop.f32.mrf.mxu0
  %8475 = vdwg.mxu0
  %8476 = vmatpush.bf16.msra.mxu0 %v8226
  %8477 = vmatpush.bf16.msra.mxu0 %v8224
  %8478 = vmatpush.bf16.msra.mxu0 %v8222
  %8479 = vmatpush.bf16.msra.mxu0 %v8220
  %8480 = vmatpush.bf16.msra.mxu0 %v8218
  %8481 = vmatpush.bf16.msra.mxu0 %v8216
  %8482 = vmatpush.bf16.msra.mxu0 %v8214
  %8483 = vmatpush.bf16.msra.mxu0 %v8212
  %8484 = vmatmul.bf16.gmra.mxu0 %v7506
  %v8485 = vpop.f32.mrf.mxu0
  %v8486 = vadd.f32 %v8473, %v8485
  %v8487 = vpop.f32.mrf.mxu0
  %8488 = vdwg.mxu0
  %8489 = vmatpush.bf16.msra.mxu0 %v8099
  %8490 = vmatpush.bf16.msra.mxu0 %v8097
  %8491 = vmatpush.bf16.msra.mxu0 %v8095
  %8492 = vmatpush.bf16.msra.mxu0 %v8093
  %8493 = vmatpush.bf16.msra.mxu0 %v8091
  %8494 = vmatpush.bf16.msra.mxu0 %v8089
  %8495 = vmatpush.bf16.msra.mxu0 %v8087
  %8496 = vmatpush.bf16.msra.mxu0 %v8085
  %8497 = vmatmul.bf16.gmra.mxu0 %v7498
  %v8498 = vpop.f32.mrf.mxu0
  %v8499 = vadd.f32 0.0, %v8498
  %v8500 = vpop.f32.mrf.mxu0
  %8501 = vdwg.mxu0
  %8502 = vmatpush.bf16.msra.mxu0 %v8115
  %8503 = vmatpush.bf16.msra.mxu0 %v8113
  %8504 = vmatpush.bf16.msra.mxu0 %v8111
  %8505 = vmatpush.bf16.msra.mxu0 %v8109
  %8506 = vmatpush.bf16.msra.mxu0 %v8107
  %8507 = vmatpush.bf16.msra.mxu0 %v8105
  %8508 = vmatpush.bf16.msra.mxu0 %v8103
  %8509 = vmatpush.bf16.msra.mxu0 %v8101
  %8510 = vmatmul.bf16.gmra.mxu0 %v7499
  %v8511 = vpop.f32.mrf.mxu0
  %v8512 = vadd.f32 %v8499, %v8511
  %v8513 = vpop.f32.mrf.mxu0
  %8514 = vdwg.mxu0
  %8515 = vmatpush.bf16.msra.mxu0 %v8131
  %8516 = vmatpush.bf16.msra.mxu0 %v8129
  %8517 = vmatpush.bf16.msra.mxu0 %v8127
  %8518 = vmatpush.bf16.msra.mxu0 %v8125
  %8519 = vmatpush.bf16.msra.mxu0 %v8123
  %8520 = vmatpush.bf16.msra.mxu0 %v8121
  %8521 = vmatpush.bf16.msra.mxu0 %v8119
  %8522 = vmatpush.bf16.msra.mxu0 %v8117
  %8523 = vmatmul.bf16.gmra.mxu0 %v7500
  %v8524 = vpop.f32.mrf.mxu0
  %v8525 = vadd.f32 %v8512, %v8524
  %v8526 = vpop.f32.mrf.mxu0
  %8527 = vdwg.mxu0
  %8528 = vmatpush.bf16.msra.mxu0 %v8147
  %8529 = vmatpush.bf16.msra.mxu0 %v8145
  %8530 = vmatpush.bf16.msra.mxu0 %v8143
  %8531 = vmatpush.bf16.msra.mxu0 %v8141
  %8532 = vmatpush.bf16.msra.mxu0 %v8139
  %8533 = vmatpush.bf16.msra.mxu0 %v8137
  %8534 = vmatpush.bf16.msra.mxu0 %v8135
  %8535 = vmatpush.bf16.msra.mxu0 %v8133
  %8536 = vmatmul.bf16.gmra.mxu0 %v7501
  %v8537 = vpop.f32.mrf.mxu0
  %v8538 = vadd.f32 %v8525, %v8537
  %v8539 = vpop.f32.mrf.mxu0
  %8540 = vdwg.mxu0
  %8541 = vmatpush.bf16.msra.mxu0 %v8163
  %8542 = vmatpush.bf16.msra.mxu0 %v8161
  %8543 = vmatpush.bf16.msra.mxu0 %v8159
  %8544 = vmatpush.bf16.msra.mxu0 %v8157
  %8545 = vmatpush.bf16.msra.mxu0 %v8155
  %8546 = vmatpush.bf16.msra.mxu0 %v8153
  %8547 = vmatpush.bf16.msra.mxu0 %v8151
  %8548 = vmatpush.bf16.msra.mxu0 %v8149
  %8549 = vmatmul.bf16.gmra.mxu0 %v7502
  %v8550 = vpop.f32.mrf.mxu0
  %v8551 = vadd.f32 %v8538, %v8550
  %v8552 = vpop.f32.mrf.mxu0
  %8553 = vdwg.mxu0
  %8554 = vmatpush.bf16.msra.mxu0 %v8179
  %8555 = vmatpush.bf16.msra.mxu0 %v8177
  %8556 = vmatpush.bf16.msra.mxu0 %v8175
  %8557 = vmatpush.bf16.msra.mxu0 %v8173
  %8558 = vmatpush.bf16.msra.mxu0 %v8171
  %8559 = vmatpush.bf16.msra.mxu0 %v8169
  %8560 = vmatpush.bf16.msra.mxu0 %v8167
  %8561 = vmatpush.bf16.msra.mxu0 %v8165
  %8562 = vmatmul.bf16.gmra.mxu0 %v7503
  %v8563 = vpop.f32.mrf.mxu0
  %v8564 = vadd.f32 %v8551, %v8563
  %v8565 = vpop.f32.mrf.mxu0
  %8566 = vdwg.mxu0
  %8567 = vmatpush.bf16.msra.mxu0 %v8195
  %8568 = vmatpush.bf16.msra.mxu0 %v8193
  %8569 = vmatpush.bf16.msra.mxu0 %v8191
  %8570 = vmatpush.bf16.msra.mxu0 %v8189
  %8571 = vmatpush.bf16.msra.mxu0 %v8187
  %8572 = vmatpush.bf16.msra.mxu0 %v8185
  %8573 = vmatpush.bf16.msra.mxu0 %v8183
  %8574 = vmatpush.bf16.msra.mxu0 %v8181
  %8575 = vmatmul.bf16.gmra.mxu0 %v7504
  %v8576 = vpop.f32.mrf.mxu0
  %v8577 = vadd.f32 %v8564, %v8576
  %v8578 = vpop.f32.mrf.mxu0
  %8579 = vdwg.mxu0
  %8580 = vmatpush.bf16.msra.mxu0 %v8211
  %8581 = vmatpush.bf16.msra.mxu0 %v8209
  %8582 = vmatpush.bf16.msra.mxu0 %v8207
  %8583 = vmatpush.bf16.msra.mxu0 %v8205
  %8584 = vmatpush.bf16.msra.mxu0 %v8203
  %8585 = vmatpush.bf16.msra.mxu0 %v8201
  %8586 = vmatpush.bf16.msra.mxu0 %v8199
  %8587 = vmatpush.bf16.msra.mxu0 %v8197
  %8588 = vmatmul.bf16.gmra.mxu0 %v7505
  %v8589 = vpop.f32.mrf.mxu0
  %v8590 = vadd.f32 %v8577, %v8589
  %v8591 = vpop.f32.mrf.mxu0
  %8592 = vdwg.mxu0
  %8593 = vmatpush.bf16.msra.mxu0 %v8227
  %8594 = vmatpush.bf16.msra.mxu0 %v8225
  %8595 = vmatpush.bf16.msra.mxu0 %v8223
  %8596 = vmatpush.bf16.msra.mxu0 %v8221
  %8597 = vmatpush.bf16.msra.mxu0 %v8219
  %8598 = vmatpush.bf16.msra.mxu0 %v8217
  %8599 = vmatpush.bf16.msra.mxu0 %v8215
  %8600 = vmatpush.bf16.msra.mxu0 %v8213
  %8601 = vmatmul.bf16.gmra.mxu0 %v7506
  %v8602 = vpop.f32.mrf.mxu0
  %v8603 = vadd.f32 %v8590, %v8602
  %v8604 = vpop.f32.mrf.mxu0
  %8605 = vdwg.mxu0
  %v8606 = vadd.f32 %v7469, %v8486
  %v8607 = vadd.f32 %v7470, %v8603
  %v8608 = vld [vmem:[%s8] sm:$0x3]
  %v8610 = vperm.slane %v8608, 0
  %v8611 = vperm.slane %v8608, 1
  %v8614 = vadd.f32 %v8606, %v8610
  %v8615 = vadd.f32 %v8607, %v8611
  %8616 = vst [vmem:[%s9] sm:$0xff] %v8614
  %8617 = vst [vmem:[%s9 + $0x8] sm:$0xff] %v8615
  // Predicated region
  $region38: #{conv_autoencoder_forward.1} parent=0 // pred_check
    _
  $region39: #{conv_autoencoder_forward.1} parent=0 // pred_check_branch
    %8619 = sbr.rel (0) target = $region41
  $region40: #{conv_autoencoder_forward.1} parent=0 // pred_region
    _
  $region41: #{conv_autoencoder_forward.1} parent=0 // pred_fallthru
    _
  // Predicated region
  $region42: #{conv_autoencoder_forward.1} parent=0 // pred_check
    _
  $region43: #{conv_autoencoder_forward.1} parent=0 // pred_check_branch
    %8621 = sbr.rel (0) target = $region45
  $region44: #{conv_autoencoder_forward.1} parent=0 // pred_region
    _
  $region45: #{conv_autoencoder_forward.1} parent=0 // pred_fallthru
    _
  // Predicated region
  $region46: #{conv_autoencoder_forward.1} parent=0 // pred_check
    _
  $region47: #{conv_autoencoder_forward.1} parent=0 // pred_check_branch
    %8623 = sbr.rel (0) target = $region49
  $region48: #{conv_autoencoder_forward.1} parent=0 // pred_region
    _
  $region49: #{conv_autoencoder_forward.1} parent=0 // pred_fallthru
    _
  // Predicated region
  $region50: #{conv_autoencoder_forward.1} parent=0 // pred_check
    _
  $region51: #{conv_autoencoder_forward.1} parent=0 // pred_check_branch
    %8625 = sbr.rel (0) target = $region53
  $region52: #{conv_autoencoder_forward.1} parent=0 // pred_region
    _
  $region53: #{conv_autoencoder_forward.1} parent=0 // pred_fallthru
    _

</llo_original>
